<compile_context>
chip_gen: v7x
topology: tpu7x:2x2x1
jax: 0.10.0
libtpu: 0.0.40
codegen_flags: <defaults>
</compile_context>

<pallas_src>
import functools

import jax
import jax.numpy as jnp
from jax.experimental import pallas as pl
from jax.experimental.pallas import tpu as pltpu


LANES = 128


def _round_up(x, m):
    return ((x + m - 1) // m) * m


# ----------------------------- fused Pallas kernel ---------------------------

def _middleflow_kernel(x_ref, dw_ref, pw_ref, gamma_ref, beta_ref, o_ref,
                       hpad_ref, *, eps):
    """Whole MiddleFlow block (3x [ReLU -> dw3x3 -> pw1x1 -> BN] + residual).

    x_ref     : (N, H, W, C)    input activation, NHWC, C lane-padded to 128, f32
    dw_ref    : (9, C)          shared depthwise 3x3 taps (row-major di*3+dj), f32
    pw_ref    : (C, C)          shared pointwise weights (Cin, Cout), bf16
    gamma_ref : (1, C)          shared BN gamma (zeros in padded lanes), f32
    beta_ref  : (1, C)          shared BN beta  (zeros in padded lanes), f32
    o_ref     : (N, H, W, C)    output, f32
    hpad_ref  : (N, H+2, W, C)  VMEM scratch: H-only halo buffer, f32
    """
    n, h, w, c = o_ref.shape
    m = n * h * w
    inv_m = 1.0 / m

    # Zero ONLY the two H-halo rows; the interior is overwritten each rep.
    zrow = jnp.zeros((n, 1, w, c), jnp.float32)
    hpad_ref[:, 0:1, :, :] = zrow
    hpad_ref[:, h + 1:h + 2, :, :] = zrow

    dw = dw_ref[...]        # (9, C)   weights stay resident in VMEM/vregs
    pw = pw_ref[...]        # (C, C)   bf16
    gamma = gamma_ref[...]  # (1, C)
    beta = beta_ref[...]    # (1, C)

    # W-edge masks for the wrapped columns of the rolled slabs (loop invariant).
    col = jax.lax.broadcasted_iota(jnp.int32, (n, h + 2, w, c), 2)
    lmask = col > 0          # zero wrapped column 0   of the "j-1" slab
    rmask = col < (w - 1)    # zero wrapped column W-1 of the "j+1" slab

    t = x_ref[...]           # pre-activation input of repetition 0
    for _rep in range(3):
        a = jnp.maximum(t, 0.0)                   # ReLU (inplace in torch)
        # Interior store: H is an outer dim -> whole-tile, no masked stores.
        hpad_ref[:, 1:1 + h, :, :] = a
        xc = hpad_ref[...]                        # (N, H+2, W, C)

        # W shifts via XLU roll (+ edge masks), hoisted once per repetition and
        # reused for all three di rows.
        xl = jnp.where(lmask, pltpu.roll(xc, shift=1, axis=2), 0.0)      # col j-1
        xr = jnp.where(rmask, pltpu.roll(xc, shift=w - 1, axis=2), 0.0)  # col j+1

        # Depthwise 3x3, stride 1, pad 1: di shifts are free outer-dim offsets.
        acc = None
        for di in range(3):
            s = (xl[:, di:di + h] * dw[3 * di + 0:3 * di + 1]
                 + xc[:, di:di + h] * dw[3 * di + 1:3 * di + 2]
                 + xr[:, di:di + h] * dw[3 * di + 2:3 * di + 3])
            acc = s if acc is None else acc + s

        # Pointwise 1x1 conv: lane-dense bf16 MXU matmul with f32 accumulation.
        y = jnp.dot(acc.reshape(m, c).astype(jnp.bfloat16), pw,
                    preferred_element_type=jnp.float32)

        # BatchNorm2d (training-mode batch stats), single pass over y:
        #   var = E[y^2] - mean^2   (safe here: y is freshly normalized-scale).
        s1 = jnp.sum(y, axis=0, keepdims=True)
        s2 = jnp.sum(y * y, axis=0, keepdims=True)
        mean = s1 * inv_m
        var = s2 * inv_m - mean * mean
        # Padded lanes: var==0 -> rsqrt(eps) is large, but gamma==0 there zeroes
        # it out (invariant maintained by the wrapper's zero padding).
        scale = gamma * jax.lax.rsqrt(var + eps)
        shift = beta - mean * scale
        t = (y * scale + shift).reshape(n, h, w, c)

    # Residual: the inplace ReLU rewrote x, so the skip branch is relu(x).
    o_ref[...] = t + jnp.maximum(x_ref[...], 0.0)


# --------------------------------- wrapper -----------------------------------

def middleflow_pallas(x_nchw, params, eps=1e-5):
    """MiddleFlow forward.  x_nchw: (N, C, H, W) with C = 91 * widen_factor."""
    dw, pw = params["dw"], params["pw"]              # (3,3,C), (C,C)
    gamma, beta = params["gamma"], params["beta"]    # (C,), (C,)

    n, c, h, w = x_nchw.shape
    cp = _round_up(c, LANES)
    pad_c = cp - c

    # NCHW -> NHWC, lane-pad channels with exact zeros (e.g. 91 -> 128).
    x = jnp.transpose(x_nchw, (0, 2, 3, 1)).astype(jnp.float32)
    x = jnp.pad(x, ((0, 0), (0, 0), (0, 0), (0, pad_c)))

    dw_p = jnp.pad(dw.reshape(9, c).astype(jnp.float32), ((0, 0), (0, pad_c)))
    pw_p = jnp.pad(pw.astype(jnp.float32),
                   ((0, pad_c), (0, pad_c))).astype(jnp.bfloat16)
    # Padded lanes MUST carry gamma == 0 (kills the rsqrt(eps) blow-up in-kernel).
    gamma_p = jnp.pad(gamma.astype(jnp.float32), (0, pad_c)).reshape(1, cp)
    beta_p = jnp.pad(beta.astype(jnp.float32), (0, pad_c)).reshape(1, cp)

    # --- VMEM budget derived from the actual resident buffers (+ headroom) ---
    f32 = 4
    act_bytes = n * h * w * cp * f32
    scratch_bytes = n * (h + 2) * w * cp * f32
    weight_bytes = cp * cp * 2 + (9 + 2) * cp * f32
    need = 4 * act_bytes + scratch_bytes + weight_bytes + 6 * act_bytes  # temporaries
    vmem_limit = int(min(max(need, 16 * 1024 * 1024), 48 * 1024 * 1024))

    # --- advisory cost estimate so XLA can schedule around this custom call ---
    m = n * h * w
    flops = 3 * (2 * m * cp * cp          # pointwise matmul
                 + 18 * m * cp            # depthwise 9 taps (mul+add)
                 + 10 * m * cp)           # relu / masks / BN epilogue (approx)
    cost = pl.CostEstimate(
        flops=int(flops),
        transcendentals=int(3 * cp),      # rsqrt per channel per rep
        bytes_accessed=int(2 * act_bytes + weight_bytes))

    kern = functools.partial(_middleflow_kernel, eps=eps)
    out = pl.pallas_call(
        kern,
        out_shape=jax.ShapeDtypeStruct((n, h, w, cp), jnp.float32),
        scratch_shapes=[pltpu.VMEM((n, h + 2, w, cp), jnp.float32)],
        compiler_params=pltpu.CompilerParams(vmem_limit_bytes=vmem_limit),
        cost_estimate=cost,
    )(x, dw_p, pw_p, gamma_p, beta_p)

    # Drop the lane padding and return in the PyTorch NCHW convention.
    return jnp.transpose(out[..., :c], (0, 3, 1, 2))


# ----------------------- pure-JAX reference (self-check) ---------------------

def middleflow_reference(x_nchw, params, eps=1e-5):
    dw, pw = params["dw"], params["pw"]
    gamma, beta = params["gamma"], params["beta"]
    x = jnp.transpose(x_nchw, (0, 2, 3, 1)).astype(jnp.float32)
    n, h, w, c = x.shape
    t = x
    for _rep in range(3):
        a = jnp.maximum(t, 0.0)
        ap = jnp.pad(a, ((0, 0), (1, 1), (1, 1), (0, 0)))
        acc = jnp.zeros_like(a)
        for di in range(3):
            for dj in range(3):
                acc = acc + ap[:, di:di + h, dj:dj + w, :] * dw[di, dj]
        y = jnp.einsum("nhwc,cd->nhwd", acc, pw,
                       preferred_element_type=jnp.float32)
        mean = jnp.mean(y, axis=(0, 1, 2), keepdims=True)
        var = jnp.mean(jnp.square(y - mean), axis=(0, 1, 2), keepdims=True)
        t = (y - mean) * (gamma * jax.lax.rsqrt(var + eps)) + beta
    return jnp.transpose(t + jnp.maximum(x, 0.0), (0, 3, 1, 2))


# ------------------------------ parameters -----------------------------------

def init_params(c, key):
    k_dw, k_pw, k_g, k_b = jax.random.split(key, 4)
    return {
        "dw": jax.random.normal(k_dw, (3, 3, c), jnp.float32) * (2.0 / 9.0) ** 0.5,
        "pw": jax.random.normal(k_pw, (c, c), jnp.float32) * (2.0 / c) ** 0.5,
        "gamma": 1.0 + 0.1 * jax.random.normal(k_g, (c,), jnp.float32),
        "beta": 0.1 * jax.random.normal(k_b, (c,), jnp.float32),
    }


# --------------------------------- main ---------------------------------------

if __name__ == "__main__":
    key = jax.random.PRNGKey(0)
    k_x, k_p = jax.random.split(key)

    widen_factor = 1
    C = 91 * widen_factor                     # MiddleFlow channel count
    # PyTorch-convention NCHW input: batch=2, C=91, 16x16 spatial.
    x = jax.random.normal(k_x, (2, C, 16, 16), jnp.float32)
    params = init_params(C, k_p)

    fwd = jax.jit(middleflow_pallas)
    out = jax.block_until_ready(fwd(x, params))
    assert out.shape == x.shape, out.shape
    assert bool(jnp.all(jnp.isfinite(out)))

    # Sanity check against a plain-JAX f32 reference.  Tolerances absorb the
    # explicit bf16 MXU operands in the kernel (BN renormalizes each rep, so the
    # error stays small relative to the O(1) output scale).
    ref = jax.block_until_ready(jax.jit(middleflow_reference)(x, params))
    err = jnp.abs(out - ref)
    max_err = float(jnp.max(err))
    mean_err = float(jnp.mean(err))
    assert max_err < 1e-1, f"max mismatch vs reference: {max_err}"
    assert mean_err < 1.5e-2, f"mean mismatch vs reference: {mean_err}"

    print("KERNEL_OK")
</pallas_src>

<mosaic_0001>
module attributes {stable_mosaic.version = 11 : i64} {
  func.func @_middleflow_kernel(%arg0: memref<2x16x16x128xf32, #tpu.memory_space<vmem>>, %arg1: memref<9x128xf32, #tpu.memory_space<vmem>>, %arg2: memref<128x128xbf16, #tpu.memory_space<vmem>>, %arg3: memref<1x128xf32, #tpu.memory_space<vmem>>, %arg4: memref<1x128xf32, #tpu.memory_space<vmem>>, %arg5: memref<2x16x16x128xf32, #tpu.memory_space<vmem>>, %arg6: memref<2x18x16x128xf32, #tpu.memory_space<vmem>>) attributes {dimension_semantics = [], scalar_prefetch = 0 : i64, scratch_operands = 1 : i64, tpu.core_type = #tpu.core_type<tc>} {
    %cst = arith.constant 0.000000e+00 : f32
    %0 = vector.broadcast %cst : f32 to vector<2x1x16x128xf32>
    %c0 = arith.constant 0 : index
    %c0_0 = arith.constant 0 : index
    %c0_1 = arith.constant 0 : index
    %c0_2 = arith.constant 0 : index
    %1 = vector.load %arg6[%c0, %c0_0, %c0_1, %c0_2] : memref<2x18x16x128xf32, #tpu.memory_space<vmem>>, vector<2x1x16x128xf32>
    tpu.vector_store %arg6[%c0, %c0_0, %c0_1, %c0_2], %0 {strides = array<i32>} : memref<2x18x16x128xf32, #tpu.memory_space<vmem>>, vector<2x1x16x128xf32>,
    %c0_3 = arith.constant 0 : index
    %c17 = arith.constant 17 : index
    %c0_4 = arith.constant 0 : index
    %c0_5 = arith.constant 0 : index
    %2 = vector.load %arg6[%c0_3, %c17, %c0_4, %c0_5] : memref<2x18x16x128xf32, #tpu.memory_space<vmem>>, vector<2x1x16x128xf32>
    tpu.vector_store %arg6[%c0_3, %c17, %c0_4, %c0_5], %0 {strides = array<i32>} : memref<2x18x16x128xf32, #tpu.memory_space<vmem>>, vector<2x1x16x128xf32>,
    %c0_6 = arith.constant 0 : index
    %c0_7 = arith.constant 0 : index
    %3 = vector.load %arg1[%c0_6, %c0_7] : memref<9x128xf32, #tpu.memory_space<vmem>>, vector<9x128xf32>
    %c0_8 = arith.constant 0 : index
    %c0_9 = arith.constant 0 : index
    %4 = vector.load %arg2[%c0_8, %c0_9] : memref<128x128xbf16, #tpu.memory_space<vmem>>, vector<128x128xbf16>
    %c0_10 = arith.constant 0 : index
    %c0_11 = arith.constant 0 : index
    %5 = vector.load %arg3[%c0_10, %c0_11] : memref<1x128xf32, #tpu.memory_space<vmem>>, vector<1x128xf32>
    %c0_12 = arith.constant 0 : index
    %c0_13 = arith.constant 0 : index
    %6 = vector.load %arg4[%c0_12, %c0_13] : memref<1x128xf32, #tpu.memory_space<vmem>>, vector<1x128xf32>
    %7 = tpu.iota {dimensions = array<i32: 2>} : vector<2x18x16x128xi32>
    %c0_i32 = arith.constant 0 : i32
    %8 = vector.broadcast %c0_i32 : i32 to vector<2x18x16x128xi32>
    %9 = arith.cmpi sgt, %7, %8 : vector<2x18x16x128xi32>
    %c15_i32 = arith.constant 15 : i32
    %10 = vector.broadcast %c15_i32 : i32 to vector<2x18x16x128xi32>
    %11 = arith.cmpi slt, %7, %10 : vector<2x18x16x128xi32>
    %c0_14 = arith.constant 0 : index
    %c0_15 = arith.constant 0 : index
    %c0_16 = arith.constant 0 : index
    %c0_17 = arith.constant 0 : index
    %12 = vector.load %arg0[%c0_14, %c0_15, %c0_16, %c0_17] : memref<2x16x16x128xf32, #tpu.memory_space<vmem>>, vector<2x16x16x128xf32>
    %cst_18 = arith.constant 0.000000e+00 : f32
    %13 = vector.broadcast %cst_18 : f32 to vector<2x16x16x128xf32>
    %14 = arith.maximumf %12, %13 : vector<2x16x16x128xf32>
    %c0_19 = arith.constant 0 : index
    %c1 = arith.constant 1 : index
    %c0_20 = arith.constant 0 : index
    %c0_21 = arith.constant 0 : index
    %15 = vector.load %arg6[%c0_19, %c1, %c0_20, %c0_21] : memref<2x18x16x128xf32, #tpu.memory_space<vmem>>, vector<2x16x16x128xf32>
    tpu.vector_store %arg6[%c0_19, %c1, %c0_20, %c0_21], %14 {strides = array<i32>} : memref<2x18x16x128xf32, #tpu.memory_space<vmem>>, vector<2x16x16x128xf32>,
    %c0_22 = arith.constant 0 : index
    %c0_23 = arith.constant 0 : index
    %c0_24 = arith.constant 0 : index
    %c0_25 = arith.constant 0 : index
    %16 = vector.load %arg6[%c0_22, %c0_23, %c0_24, %c0_25] : memref<2x18x16x128xf32, #tpu.memory_space<vmem>>, vector<2x18x16x128xf32>
    %c1_i32 = arith.constant 1 : i32
    %17 = tpu.dynamic_rotate %16 by %c1_i32 dim 2 : vector<2x18x16x128xf32>, i32 -> vector<2x18x16x128xf32>
    %cst_26 = arith.constant 0.000000e+00 : f32
    %18 = vector.broadcast %cst_26 : f32 to vector<2x18x16x128xf32>
    %19 = arith.select %9, %17, %18 : vector<2x18x16x128xi1>, vector<2x18x16x128xf32>
    %c15_i32_27 = arith.constant 15 : i32
    %20 = tpu.dynamic_rotate %16 by %c15_i32_27 dim 2 : vector<2x18x16x128xf32>, i32 -> vector<2x18x16x128xf32>
    %cst_28 = arith.constant 0.000000e+00 : f32
    %21 = vector.broadcast %cst_28 : f32 to vector<2x18x16x128xf32>
    %22 = arith.select %11, %20, %21 : vector<2x18x16x128xi1>, vector<2x18x16x128xf32>
    %23 = vector.extract_strided_slice %19 {offsets = [0, 0, 0, 0], sizes = [2, 16, 16, 128], strides = [1, 1, 1, 1]} : vector<2x18x16x128xf32> to vector<2x16x16x128xf32>
    %24 = vector.extract_strided_slice %3 {offsets = [0, 0], sizes = [1, 128], strides = [1, 1]} : vector<9x128xf32> to vector<1x128xf32>
    %25 = vector.shape_cast %24 : vector<1x128xf32> to vector<1x1x1x128xf32>
    %26 = vector.broadcast %25 : vector<1x1x1x128xf32> to vector<2x16x16x128xf32>
    %27 = arith.mulf %23, %26 : vector<2x16x16x128xf32>
    %28 = vector.extract_strided_slice %16 {offsets = [0, 0, 0, 0], sizes = [2, 16, 16, 128], strides = [1, 1, 1, 1]} : vector<2x18x16x128xf32> to vector<2x16x16x128xf32>
    %29 = vector.extract_strided_slice %3 {offsets = [1, 0], sizes = [1, 128], strides = [1, 1]} : vector<9x128xf32> to vector<1x128xf32>
    %30 = vector.shape_cast %29 : vector<1x128xf32> to vector<1x1x1x128xf32>
    %31 = vector.broadcast %30 : vector<1x1x1x128xf32> to vector<2x16x16x128xf32>
    %32 = arith.mulf %28, %31 : vector<2x16x16x128xf32>
    %33 = arith.addf %27, %32 : vector<2x16x16x128xf32>
    %34 = vector.extract_strided_slice %22 {offsets = [0, 0, 0, 0], sizes = [2, 16, 16, 128], strides = [1, 1, 1, 1]} : vector<2x18x16x128xf32> to vector<2x16x16x128xf32>
    %35 = vector.extract_strided_slice %3 {offsets = [2, 0], sizes = [1, 128], strides = [1, 1]} : vector<9x128xf32> to vector<1x128xf32>
    %36 = vector.shape_cast %35 : vector<1x128xf32> to vector<1x1x1x128xf32>
    %37 = vector.broadcast %36 : vector<1x1x1x128xf32> to vector<2x16x16x128xf32>
    %38 = arith.mulf %34, %37 : vector<2x16x16x128xf32>
    %39 = arith.addf %33, %38 : vector<2x16x16x128xf32>
    %40 = vector.extract_strided_slice %19 {offsets = [0, 1, 0, 0], sizes = [2, 16, 16, 128], strides = [1, 1, 1, 1]} : vector<2x18x16x128xf32> to vector<2x16x16x128xf32>
    %41 = vector.extract_strided_slice %3 {offsets = [3, 0], sizes = [1, 128], strides = [1, 1]} : vector<9x128xf32> to vector<1x128xf32>
    %42 = vector.shape_cast %41 : vector<1x128xf32> to vector<1x1x1x128xf32>
    %43 = vector.broadcast %42 : vector<1x1x1x128xf32> to vector<2x16x16x128xf32>
    %44 = arith.mulf %40, %43 : vector<2x16x16x128xf32>
    %45 = vector.extract_strided_slice %16 {offsets = [0, 1, 0, 0], sizes = [2, 16, 16, 128], strides = [1, 1, 1, 1]} : vector<2x18x16x128xf32> to vector<2x16x16x128xf32>
    %46 = vector.extract_strided_slice %3 {offsets = [4, 0], sizes = [1, 128], strides = [1, 1]} : vector<9x128xf32> to vector<1x128xf32>
    %47 = vector.shape_cast %46 : vector<1x128xf32> to vector<1x1x1x128xf32>
    %48 = vector.broadcast %47 : vector<1x1x1x128xf32> to vector<2x16x16x128xf32>
    %49 = arith.mulf %45, %48 : vector<2x16x16x128xf32>
    %50 = arith.addf %44, %49 : vector<2x16x16x128xf32>
    %51 = vector.extract_strided_slice %22 {offsets = [0, 1, 0, 0], sizes = [2, 16, 16, 128], strides = [1, 1, 1, 1]} : vector<2x18x16x128xf32> to vector<2x16x16x128xf32>
    %52 = vector.extract_strided_slice %3 {offsets = [5, 0], sizes = [1, 128], strides = [1, 1]} : vector<9x128xf32> to vector<1x128xf32>
    %53 = vector.shape_cast %52 : vector<1x128xf32> to vector<1x1x1x128xf32>
    %54 = vector.broadcast %53 : vector<1x1x1x128xf32> to vector<2x16x16x128xf32>
    %55 = arith.mulf %51, %54 : vector<2x16x16x128xf32>
    %56 = arith.addf %50, %55 : vector<2x16x16x128xf32>
    %57 = arith.addf %39, %56 : vector<2x16x16x128xf32>
    %58 = vector.extract_strided_slice %19 {offsets = [0, 2, 0, 0], sizes = [2, 16, 16, 128], strides = [1, 1, 1, 1]} : vector<2x18x16x128xf32> to vector<2x16x16x128xf32>
    %59 = vector.extract_strided_slice %3 {offsets = [6, 0], sizes = [1, 128], strides = [1, 1]} : vector<9x128xf32> to vector<1x128xf32>
    %60 = vector.shape_cast %59 : vector<1x128xf32> to vector<1x1x1x128xf32>
    %61 = vector.broadcast %60 : vector<1x1x1x128xf32> to vector<2x16x16x128xf32>
    %62 = arith.mulf %58, %61 : vector<2x16x16x128xf32>
    %63 = vector.extract_strided_slice %16 {offsets = [0, 2, 0, 0], sizes = [2, 16, 16, 128], strides = [1, 1, 1, 1]} : vector<2x18x16x128xf32> to vector<2x16x16x128xf32>
    %64 = vector.extract_strided_slice %3 {offsets = [7, 0], sizes = [1, 128], strides = [1, 1]} : vector<9x128xf32> to vector<1x128xf32>
    %65 = vector.shape_cast %64 : vector<1x128xf32> to vector<1x1x1x128xf32>
    %66 = vector.broadcast %65 : vector<1x1x1x128xf32> to vector<2x16x16x128xf32>
    %67 = arith.mulf %63, %66 : vector<2x16x16x128xf32>
    %68 = arith.addf %62, %67 : vector<2x16x16x128xf32>
    %69 = vector.extract_strided_slice %22 {offsets = [0, 2, 0, 0], sizes = [2, 16, 16, 128], strides = [1, 1, 1, 1]} : vector<2x18x16x128xf32> to vector<2x16x16x128xf32>
    %70 = vector.extract_strided_slice %3 {offsets = [8, 0], sizes = [1, 128], strides = [1, 1]} : vector<9x128xf32> to vector<1x128xf32>
    %71 = vector.shape_cast %70 : vector<1x128xf32> to vector<1x1x1x128xf32>
    %72 = vector.broadcast %71 : vector<1x1x1x128xf32> to vector<2x16x16x128xf32>
    %73 = arith.mulf %69, %72 : vector<2x16x16x128xf32>
    %74 = arith.addf %68, %73 : vector<2x16x16x128xf32>
    %75 = arith.addf %57, %74 : vector<2x16x16x128xf32>
    %76 = vector.shape_cast %75 : vector<2x16x16x128xf32> to vector<512x128xf32>
    %77 = arith.truncf %76 : vector<512x128xf32> to vector<512x128xbf16>
    %cst_29 = arith.constant dense<0.000000e+00> : vector<512x128xf32>
    %78 = tpu.matmul %77, %4, %cst_29 {dimension_numbers = #tpu.dot_dimension_numbers<[1], [0], [0], [1], [0, 0, 1, 1], [], []>} : vector<512x128xbf16>, vector<128x128xbf16>, vector<512x128xf32> -> vector<512x128xf32>
    %cst_30 = arith.constant dense<0.000000e+00> : vector<128xf32>
    %79 = vector.multi_reduction <add>, %78, %cst_30 [0] : vector<512x128xf32> to vector<128xf32>
    %80 = vector.shape_cast %79 : vector<128xf32> to vector<1x128xf32>
    %81 = arith.mulf %78, %78 : vector<512x128xf32>
    %cst_31 = arith.constant dense<0.000000e+00> : vector<128xf32>
    %82 = vector.multi_reduction <add>, %81, %cst_31 [0] : vector<512x128xf32> to vector<128xf32>
    %83 = vector.shape_cast %82 : vector<128xf32> to vector<1x128xf32>
    %cst_32 = arith.constant 0.001953125 : f32
    %84 = vector.broadcast %cst_32 : f32 to vector<1x128xf32>
    %85 = arith.mulf %80, %84 : vector<1x128xf32>
    %cst_33 = arith.constant 0.001953125 : f32
    %86 = vector.broadcast %cst_33 : f32 to vector<1x128xf32>
    %87 = arith.mulf %83, %86 : vector<1x128xf32>
    %88 = arith.mulf %85, %85 : vector<1x128xf32>
    %89 = arith.subf %87, %88 : vector<1x128xf32>
    %cst_34 = arith.constant 9.99999974E-6 : f32
    %90 = vector.broadcast %cst_34 : f32 to vector<1x128xf32>
    %91 = arith.addf %89, %90 : vector<1x128xf32>
    %92 = math.rsqrt %91 : vector<1x128xf32>
    %93 = arith.mulf %5, %92 : vector<1x128xf32>
    %94 = arith.mulf %85, %93 : vector<1x128xf32>
    %95 = arith.subf %6, %94 : vector<1x128xf32>
    %96 = vector.broadcast %93 : vector<1x128xf32> to vector<512x128xf32>
    %97 = arith.mulf %78, %96 : vector<512x128xf32>
    %98 = vector.broadcast %95 : vector<1x128xf32> to vector<512x128xf32>
    %99 = arith.addf %97, %98 : vector<512x128xf32>
    %100 = vector.shape_cast %99 : vector<512x128xf32> to vector<2x16x16x128xf32>
    %cst_35 = arith.constant 0.000000e+00 : f32
    %101 = vector.broadcast %cst_35 : f32 to vector<2x16x16x128xf32>
    %102 = arith.maximumf %100, %101 : vector<2x16x16x128xf32>
    %c0_36 = arith.constant 0 : index
    %c1_37 = arith.constant 1 : index
    %c0_38 = arith.constant 0 : index
    %c0_39 = arith.constant 0 : index
    %103 = vector.load %arg6[%c0_36, %c1_37, %c0_38, %c0_39] : memref<2x18x16x128xf32, #tpu.memory_space<vmem>>, vector<2x16x16x128xf32>
    tpu.vector_store %arg6[%c0_36, %c1_37, %c0_38, %c0_39], %102 {strides = array<i32>} : memref<2x18x16x128xf32, #tpu.memory_space<vmem>>, vector<2x16x16x128xf32>,
    %c0_40 = arith.constant 0 : index
    %c0_41 = arith.constant 0 : index
    %c0_42 = arith.constant 0 : index
    %c0_43 = arith.constant 0 : index
    %104 = vector.load %arg6[%c0_40, %c0_41, %c0_42, %c0_43] : memref<2x18x16x128xf32, #tpu.memory_space<vmem>>, vector<2x18x16x128xf32>
    %c1_i32_44 = arith.constant 1 : i32
    %105 = tpu.dynamic_rotate %104 by %c1_i32_44 dim 2 : vector<2x18x16x128xf32>, i32 -> vector<2x18x16x128xf32>
    %cst_45 = arith.constant 0.000000e+00 : f32
    %106 = vector.broadcast %cst_45 : f32 to vector<2x18x16x128xf32>
    %107 = arith.select %9, %105, %106 : vector<2x18x16x128xi1>, vector<2x18x16x128xf32>
    %c15_i32_46 = arith.constant 15 : i32
    %108 = tpu.dynamic_rotate %104 by %c15_i32_46 dim 2 : vector<2x18x16x128xf32>, i32 -> vector<2x18x16x128xf32>
    %cst_47 = arith.constant 0.000000e+00 : f32
    %109 = vector.broadcast %cst_47 : f32 to vector<2x18x16x128xf32>
    %110 = arith.select %11, %108, %109 : vector<2x18x16x128xi1>, vector<2x18x16x128xf32>
    %111 = vector.extract_strided_slice %107 {offsets = [0, 0, 0, 0], sizes = [2, 16, 16, 128], strides = [1, 1, 1, 1]} : vector<2x18x16x128xf32> to vector<2x16x16x128xf32>
    %112 = vector.extract_strided_slice %3 {offsets = [0, 0], sizes = [1, 128], strides = [1, 1]} : vector<9x128xf32> to vector<1x128xf32>
    %113 = vector.shape_cast %112 : vector<1x128xf32> to vector<1x1x1x128xf32>
    %114 = vector.broadcast %113 : vector<1x1x1x128xf32> to vector<2x16x16x128xf32>
    %115 = arith.mulf %111, %114 : vector<2x16x16x128xf32>
    %116 = vector.extract_strided_slice %104 {offsets = [0, 0, 0, 0], sizes = [2, 16, 16, 128], strides = [1, 1, 1, 1]} : vector<2x18x16x128xf32> to vector<2x16x16x128xf32>
    %117 = vector.extract_strided_slice %3 {offsets = [1, 0], sizes = [1, 128], strides = [1, 1]} : vector<9x128xf32> to vector<1x128xf32>
    %118 = vector.shape_cast %117 : vector<1x128xf32> to vector<1x1x1x128xf32>
    %119 = vector.broadcast %118 : vector<1x1x1x128xf32> to vector<2x16x16x128xf32>
    %120 = arith.mulf %116, %119 : vector<2x16x16x128xf32>
    %121 = arith.addf %115, %120 : vector<2x16x16x128xf32>
    %122 = vector.extract_strided_slice %110 {offsets = [0, 0, 0, 0], sizes = [2, 16, 16, 128], strides = [1, 1, 1, 1]} : vector<2x18x16x128xf32> to vector<2x16x16x128xf32>
    %123 = vector.extract_strided_slice %3 {offsets = [2, 0], sizes = [1, 128], strides = [1, 1]} : vector<9x128xf32> to vector<1x128xf32>
    %124 = vector.shape_cast %123 : vector<1x128xf32> to vector<1x1x1x128xf32>
    %125 = vector.broadcast %124 : vector<1x1x1x128xf32> to vector<2x16x16x128xf32>
    %126 = arith.mulf %122, %125 : vector<2x16x16x128xf32>
    %127 = arith.addf %121, %126 : vector<2x16x16x128xf32>
    %128 = vector.extract_strided_slice %107 {offsets = [0, 1, 0, 0], sizes = [2, 16, 16, 128], strides = [1, 1, 1, 1]} : vector<2x18x16x128xf32> to vector<2x16x16x128xf32>
    %129 = vector.extract_strided_slice %3 {offsets = [3, 0], sizes = [1, 128], strides = [1, 1]} : vector<9x128xf32> to vector<1x128xf32>
    %130 = vector.shape_cast %129 : vector<1x128xf32> to vector<1x1x1x128xf32>
    %131 = vector.broadcast %130 : vector<1x1x1x128xf32> to vector<2x16x16x128xf32>
    %132 = arith.mulf %128, %131 : vector<2x16x16x128xf32>
    %133 = vector.extract_strided_slice %104 {offsets = [0, 1, 0, 0], sizes = [2, 16, 16, 128], strides = [1, 1, 1, 1]} : vector<2x18x16x128xf32> to vector<2x16x16x128xf32>
    %134 = vector.extract_strided_slice %3 {offsets = [4, 0], sizes = [1, 128], strides = [1, 1]} : vector<9x128xf32> to vector<1x128xf32>
    %135 = vector.shape_cast %134 : vector<1x128xf32> to vector<1x1x1x128xf32>
    %136 = vector.broadcast %135 : vector<1x1x1x128xf32> to vector<2x16x16x128xf32>
    %137 = arith.mulf %133, %136 : vector<2x16x16x128xf32>
    %138 = arith.addf %132, %137 : vector<2x16x16x128xf32>
    %139 = vector.extract_strided_slice %110 {offsets = [0, 1, 0, 0], sizes = [2, 16, 16, 128], strides = [1, 1, 1, 1]} : vector<2x18x16x128xf32> to vector<2x16x16x128xf32>
    %140 = vector.extract_strided_slice %3 {offsets = [5, 0], sizes = [1, 128], strides = [1, 1]} : vector<9x128xf32> to vector<1x128xf32>
    %141 = vector.shape_cast %140 : vector<1x128xf32> to vector<1x1x1x128xf32>
    %142 = vector.broadcast %141 : vector<1x1x1x128xf32> to vector<2x16x16x128xf32>
    %143 = arith.mulf %139, %142 : vector<2x16x16x128xf32>
    %144 = arith.addf %138, %143 : vector<2x16x16x128xf32>
    %145 = arith.addf %127, %144 : vector<2x16x16x128xf32>
    %146 = vector.extract_strided_slice %107 {offsets = [0, 2, 0, 0], sizes = [2, 16, 16, 128], strides = [1, 1, 1, 1]} : vector<2x18x16x128xf32> to vector<2x16x16x128xf32>
    %147 = vector.extract_strided_slice %3 {offsets = [6, 0], sizes = [1, 128], strides = [1, 1]} : vector<9x128xf32> to vector<1x128xf32>
    %148 = vector.shape_cast %147 : vector<1x128xf32> to vector<1x1x1x128xf32>
    %149 = vector.broadcast %148 : vector<1x1x1x128xf32> to vector<2x16x16x128xf32>
    %150 = arith.mulf %146, %149 : vector<2x16x16x128xf32>
    %151 = vector.extract_strided_slice %104 {offsets = [0, 2, 0, 0], sizes = [2, 16, 16, 128], strides = [1, 1, 1, 1]} : vector<2x18x16x128xf32> to vector<2x16x16x128xf32>
    %152 = vector.extract_strided_slice %3 {offsets = [7, 0], sizes = [1, 128], strides = [1, 1]} : vector<9x128xf32> to vector<1x128xf32>
    %153 = vector.shape_cast %152 : vector<1x128xf32> to vector<1x1x1x128xf32>
    %154 = vector.broadcast %153 : vector<1x1x1x128xf32> to vector<2x16x16x128xf32>
    %155 = arith.mulf %151, %154 : vector<2x16x16x128xf32>
    %156 = arith.addf %150, %155 : vector<2x16x16x128xf32>
    %157 = vector.extract_strided_slice %110 {offsets = [0, 2, 0, 0], sizes = [2, 16, 16, 128], strides = [1, 1, 1, 1]} : vector<2x18x16x128xf32> to vector<2x16x16x128xf32>
    %158 = vector.extract_strided_slice %3 {offsets = [8, 0], sizes = [1, 128], strides = [1, 1]} : vector<9x128xf32> to vector<1x128xf32>
    %159 = vector.shape_cast %158 : vector<1x128xf32> to vector<1x1x1x128xf32>
    %160 = vector.broadcast %159 : vector<1x1x1x128xf32> to vector<2x16x16x128xf32>
    %161 = arith.mulf %157, %160 : vector<2x16x16x128xf32>
    %162 = arith.addf %156, %161 : vector<2x16x16x128xf32>
    %163 = arith.addf %145, %162 : vector<2x16x16x128xf32>
    %164 = vector.shape_cast %163 : vector<2x16x16x128xf32> to vector<512x128xf32>
    %165 = arith.truncf %164 : vector<512x128xf32> to vector<512x128xbf16>
    %cst_48 = arith.constant dense<0.000000e+00> : vector<512x128xf32>
    %166 = tpu.matmul %165, %4, %cst_48 {dimension_numbers = #tpu.dot_dimension_numbers<[1], [0], [0], [1], [0, 0, 1, 1], [], []>} : vector<512x128xbf16>, vector<128x128xbf16>, vector<512x128xf32> -> vector<512x128xf32>
    %cst_49 = arith.constant dense<0.000000e+00> : vector<128xf32>
    %167 = vector.multi_reduction <add>, %166, %cst_49 [0] : vector<512x128xf32> to vector<128xf32>
    %168 = vector.shape_cast %167 : vector<128xf32> to vector<1x128xf32>
    %169 = arith.mulf %166, %166 : vector<512x128xf32>
    %cst_50 = arith.constant dense<0.000000e+00> : vector<128xf32>
    %170 = vector.multi_reduction <add>, %169, %cst_50 [0] : vector<512x128xf32> to vector<128xf32>
    %171 = vector.shape_cast %170 : vector<128xf32> to vector<1x128xf32>
    %cst_51 = arith.constant 0.001953125 : f32
    %172 = vector.broadcast %cst_51 : f32 to vector<1x128xf32>
    %173 = arith.mulf %168, %172 : vector<1x128xf32>
    %cst_52 = arith.constant 0.001953125 : f32
    %174 = vector.broadcast %cst_52 : f32 to vector<1x128xf32>
    %175 = arith.mulf %171, %174 : vector<1x128xf32>
    %176 = arith.mulf %173, %173 : vector<1x128xf32>
    %177 = arith.subf %175, %176 : vector<1x128xf32>
    %cst_53 = arith.constant 9.99999974E-6 : f32
    %178 = vector.broadcast %cst_53 : f32 to vector<1x128xf32>
    %179 = arith.addf %177, %178 : vector<1x128xf32>
    %180 = math.rsqrt %179 : vector<1x128xf32>
    %181 = arith.mulf %5, %180 : vector<1x128xf32>
    %182 = arith.mulf %173, %181 : vector<1x128xf32>
    %183 = arith.subf %6, %182 : vector<1x128xf32>
    %184 = vector.broadcast %181 : vector<1x128xf32> to vector<512x128xf32>
    %185 = arith.mulf %166, %184 : vector<512x128xf32>
    %186 = vector.broadcast %183 : vector<1x128xf32> to vector<512x128xf32>
    %187 = arith.addf %185, %186 : vector<512x128xf32>
    %188 = vector.shape_cast %187 : vector<512x128xf32> to vector<2x16x16x128xf32>
    %cst_54 = arith.constant 0.000000e+00 : f32
    %189 = vector.broadcast %cst_54 : f32 to vector<2x16x16x128xf32>
    %190 = arith.maximumf %188, %189 : vector<2x16x16x128xf32>
    %c0_55 = arith.constant 0 : index
    %c1_56 = arith.constant 1 : index
    %c0_57 = arith.constant 0 : index
    %c0_58 = arith.constant 0 : index
    %191 = vector.load %arg6[%c0_55, %c1_56, %c0_57, %c0_58] : memref<2x18x16x128xf32, #tpu.memory_space<vmem>>, vector<2x16x16x128xf32>
    tpu.vector_store %arg6[%c0_55, %c1_56, %c0_57, %c0_58], %190 {strides = array<i32>} : memref<2x18x16x128xf32, #tpu.memory_space<vmem>>, vector<2x16x16x128xf32>,
    %c0_59 = arith.constant 0 : index
    %c0_60 = arith.constant 0 : index
    %c0_61 = arith.constant 0 : index
    %c0_62 = arith.constant 0 : index
    %192 = vector.load %arg6[%c0_59, %c0_60, %c0_61, %c0_62] : memref<2x18x16x128xf32, #tpu.memory_space<vmem>>, vector<2x18x16x128xf32>
    %c1_i32_63 = arith.constant 1 : i32
    %193 = tpu.dynamic_rotate %192 by %c1_i32_63 dim 2 : vector<2x18x16x128xf32>, i32 -> vector<2x18x16x128xf32>
    %cst_64 = arith.constant 0.000000e+00 : f32
    %194 = vector.broadcast %cst_64 : f32 to vector<2x18x16x128xf32>
    %195 = arith.select %9, %193, %194 : vector<2x18x16x128xi1>, vector<2x18x16x128xf32>
    %c15_i32_65 = arith.constant 15 : i32
    %196 = tpu.dynamic_rotate %192 by %c15_i32_65 dim 2 : vector<2x18x16x128xf32>, i32 -> vector<2x18x16x128xf32>
    %cst_66 = arith.constant 0.000000e+00 : f32
    %197 = vector.broadcast %cst_66 : f32 to vector<2x18x16x128xf32>
    %198 = arith.select %11, %196, %197 : vector<2x18x16x128xi1>, vector<2x18x16x128xf32>
    %199 = vector.extract_strided_slice %195 {offsets = [0, 0, 0, 0], sizes = [2, 16, 16, 128], strides = [1, 1, 1, 1]} : vector<2x18x16x128xf32> to vector<2x16x16x128xf32>
    %200 = vector.extract_strided_slice %3 {offsets = [0, 0], sizes = [1, 128], strides = [1, 1]} : vector<9x128xf32> to vector<1x128xf32>
    %201 = vector.shape_cast %200 : vector<1x128xf32> to vector<1x1x1x128xf32>
    %202 = vector.broadcast %201 : vector<1x1x1x128xf32> to vector<2x16x16x128xf32>
    %203 = arith.mulf %199, %202 : vector<2x16x16x128xf32>
    %204 = vector.extract_strided_slice %192 {offsets = [0, 0, 0, 0], sizes = [2, 16, 16, 128], strides = [1, 1, 1, 1]} : vector<2x18x16x128xf32> to vector<2x16x16x128xf32>
    %205 = vector.extract_strided_slice %3 {offsets = [1, 0], sizes = [1, 128], strides = [1, 1]} : vector<9x128xf32> to vector<1x128xf32>
    %206 = vector.shape_cast %205 : vector<1x128xf32> to vector<1x1x1x128xf32>
    %207 = vector.broadcast %206 : vector<1x1x1x128xf32> to vector<2x16x16x128xf32>
    %208 = arith.mulf %204, %207 : vector<2x16x16x128xf32>
    %209 = arith.addf %203, %208 : vector<2x16x16x128xf32>
    %210 = vector.extract_strided_slice %198 {offsets = [0, 0, 0, 0], sizes = [2, 16, 16, 128], strides = [1, 1, 1, 1]} : vector<2x18x16x128xf32> to vector<2x16x16x128xf32>
    %211 = vector.extract_strided_slice %3 {offsets = [2, 0], sizes = [1, 128], strides = [1, 1]} : vector<9x128xf32> to vector<1x128xf32>
    %212 = vector.shape_cast %211 : vector<1x128xf32> to vector<1x1x1x128xf32>
    %213 = vector.broadcast %212 : vector<1x1x1x128xf32> to vector<2x16x16x128xf32>
    %214 = arith.mulf %210, %213 : vector<2x16x16x128xf32>
    %215 = arith.addf %209, %214 : vector<2x16x16x128xf32>
    %216 = vector.extract_strided_slice %195 {offsets = [0, 1, 0, 0], sizes = [2, 16, 16, 128], strides = [1, 1, 1, 1]} : vector<2x18x16x128xf32> to vector<2x16x16x128xf32>
    %217 = vector.extract_strided_slice %3 {offsets = [3, 0], sizes = [1, 128], strides = [1, 1]} : vector<9x128xf32> to vector<1x128xf32>
    %218 = vector.shape_cast %217 : vector<1x128xf32> to vector<1x1x1x128xf32>
    %219 = vector.broadcast %218 : vector<1x1x1x128xf32> to vector<2x16x16x128xf32>
    %220 = arith.mulf %216, %219 : vector<2x16x16x128xf32>
    %221 = vector.extract_strided_slice %192 {offsets = [0, 1, 0, 0], sizes = [2, 16, 16, 128], strides = [1, 1, 1, 1]} : vector<2x18x16x128xf32> to vector<2x16x16x128xf32>
    %222 = vector.extract_strided_slice %3 {offsets = [4, 0], sizes = [1, 128], strides = [1, 1]} : vector<9x128xf32> to vector<1x128xf32>
    %223 = vector.shape_cast %222 : vector<1x128xf32> to vector<1x1x1x128xf32>
    %224 = vector.broadcast %223 : vector<1x1x1x128xf32> to vector<2x16x16x128xf32>
    %225 = arith.mulf %221, %224 : vector<2x16x16x128xf32>
    %226 = arith.addf %220, %225 : vector<2x16x16x128xf32>
    %227 = vector.extract_strided_slice %198 {offsets = [0, 1, 0, 0], sizes = [2, 16, 16, 128], strides = [1, 1, 1, 1]} : vector<2x18x16x128xf32> to vector<2x16x16x128xf32>
    %228 = vector.extract_strided_slice %3 {offsets = [5, 0], sizes = [1, 128], strides = [1, 1]} : vector<9x128xf32> to vector<1x128xf32>
    %229 = vector.shape_cast %228 : vector<1x128xf32> to vector<1x1x1x128xf32>
    %230 = vector.broadcast %229 : vector<1x1x1x128xf32> to vector<2x16x16x128xf32>
    %231 = arith.mulf %227, %230 : vector<2x16x16x128xf32>
    %232 = arith.addf %226, %231 : vector<2x16x16x128xf32>
    %233 = arith.addf %215, %232 : vector<2x16x16x128xf32>
    %234 = vector.extract_strided_slice %195 {offsets = [0, 2, 0, 0], sizes = [2, 16, 16, 128], strides = [1, 1, 1, 1]} : vector<2x18x16x128xf32> to vector<2x16x16x128xf32>
    %235 = vector.extract_strided_slice %3 {offsets = [6, 0], sizes = [1, 128], strides = [1, 1]} : vector<9x128xf32> to vector<1x128xf32>
    %236 = vector.shape_cast %235 : vector<1x128xf32> to vector<1x1x1x128xf32>
    %237 = vector.broadcast %236 : vector<1x1x1x128xf32> to vector<2x16x16x128xf32>
    %238 = arith.mulf %234, %237 : vector<2x16x16x128xf32>
    %239 = vector.extract_strided_slice %192 {offsets = [0, 2, 0, 0], sizes = [2, 16, 16, 128], strides = [1, 1, 1, 1]} : vector<2x18x16x128xf32> to vector<2x16x16x128xf32>
    %240 = vector.extract_strided_slice %3 {offsets = [7, 0], sizes = [1, 128], strides = [1, 1]} : vector<9x128xf32> to vector<1x128xf32>
    %241 = vector.shape_cast %240 : vector<1x128xf32> to vector<1x1x1x128xf32>
    %242 = vector.broadcast %241 : vector<1x1x1x128xf32> to vector<2x16x16x128xf32>
    %243 = arith.mulf %239, %242 : vector<2x16x16x128xf32>
    %244 = arith.addf %238, %243 : vector<2x16x16x128xf32>
    %245 = vector.extract_strided_slice %198 {offsets = [0, 2, 0, 0], sizes = [2, 16, 16, 128], strides = [1, 1, 1, 1]} : vector<2x18x16x128xf32> to vector<2x16x16x128xf32>
    %246 = vector.extract_strided_slice %3 {offsets = [8, 0], sizes = [1, 128], strides = [1, 1]} : vector<9x128xf32> to vector<1x128xf32>
    %247 = vector.shape_cast %246 : vector<1x128xf32> to vector<1x1x1x128xf32>
    %248 = vector.broadcast %247 : vector<1x1x1x128xf32> to vector<2x16x16x128xf32>
    %249 = arith.mulf %245, %248 : vector<2x16x16x128xf32>
    %250 = arith.addf %244, %249 : vector<2x16x16x128xf32>
    %251 = arith.addf %233, %250 : vector<2x16x16x128xf32>
    %252 = vector.shape_cast %251 : vector<2x16x16x128xf32> to vector<512x128xf32>
    %253 = arith.truncf %252 : vector<512x128xf32> to vector<512x128xbf16>
    %cst_67 = arith.constant dense<0.000000e+00> : vector<512x128xf32>
    %254 = tpu.matmul %253, %4, %cst_67 {dimension_numbers = #tpu.dot_dimension_numbers<[1], [0], [0], [1], [0, 0, 1, 1], [], []>} : vector<512x128xbf16>, vector<128x128xbf16>, vector<512x128xf32> -> vector<512x128xf32>
    %cst_68 = arith.constant dense<0.000000e+00> : vector<128xf32>
    %255 = vector.multi_reduction <add>, %254, %cst_68 [0] : vector<512x128xf32> to vector<128xf32>
    %256 = vector.shape_cast %255 : vector<128xf32> to vector<1x128xf32>
    %257 = arith.mulf %254, %254 : vector<512x128xf32>
    %cst_69 = arith.constant dense<0.000000e+00> : vector<128xf32>
    %258 = vector.multi_reduction <add>, %257, %cst_69 [0] : vector<512x128xf32> to vector<128xf32>
    %259 = vector.shape_cast %258 : vector<128xf32> to vector<1x128xf32>
    %cst_70 = arith.constant 0.001953125 : f32
    %260 = vector.broadcast %cst_70 : f32 to vector<1x128xf32>
    %261 = arith.mulf %256, %260 : vector<1x128xf32>
    %cst_71 = arith.constant 0.001953125 : f32
    %262 = vector.broadcast %cst_71 : f32 to vector<1x128xf32>
    %263 = arith.mulf %259, %262 : vector<1x128xf32>
    %264 = arith.mulf %261, %261 : vector<1x128xf32>
    %265 = arith.subf %263, %264 : vector<1x128xf32>
    %cst_72 = arith.constant 9.99999974E-6 : f32
    %266 = vector.broadcast %cst_72 : f32 to vector<1x128xf32>
    %267 = arith.addf %265, %266 : vector<1x128xf32>
    %268 = math.rsqrt %267 : vector<1x128xf32>
    %269 = arith.mulf %5, %268 : vector<1x128xf32>
    %270 = arith.mulf %261, %269 : vector<1x128xf32>
    %271 = arith.subf %6, %270 : vector<1x128xf32>
    %272 = vector.broadcast %269 : vector<1x128xf32> to vector<512x128xf32>
    %273 = arith.mulf %254, %272 : vector<512x128xf32>
    %274 = vector.broadcast %271 : vector<1x128xf32> to vector<512x128xf32>
    %275 = arith.addf %273, %274 : vector<512x128xf32>
    %276 = vector.shape_cast %275 : vector<512x128xf32> to vector<2x16x16x128xf32>
    %c0_73 = arith.constant 0 : index
    %c0_74 = arith.constant 0 : index
    %c0_75 = arith.constant 0 : index
    %c0_76 = arith.constant 0 : index
    %277 = vector.load %arg0[%c0_73, %c0_74, %c0_75, %c0_76] : memref<2x16x16x128xf32, #tpu.memory_space<vmem>>, vector<2x16x16x128xf32>
    %cst_77 = arith.constant 0.000000e+00 : f32
    %278 = vector.broadcast %cst_77 : f32 to vector<2x16x16x128xf32>
    %279 = arith.maximumf %277, %278 : vector<2x16x16x128xf32>
    %280 = arith.addf %276, %279 : vector<2x16x16x128xf32>
    %c0_78 = arith.constant 0 : index
    %c0_79 = arith.constant 0 : index
    %c0_80 = arith.constant 0 : index
    %c0_81 = arith.constant 0 : index
    %281 = vector.load %arg5[%c0_78, %c0_79, %c0_80, %c0_81] : memref<2x16x16x128xf32, #tpu.memory_space<vmem>>, vector<2x16x16x128xf32>
    tpu.vector_store %arg5[%c0_78, %c0_79, %c0_80, %c0_81], %280 {strides = array<i32>} : memref<2x16x16x128xf32, #tpu.memory_space<vmem>>, vector<2x16x16x128xf32>,
    return
  }
}

</mosaic_0001>

<llo_original>
// kernel: middleflow_pallas.1
$region0: #{middleflow_pallas.1}
  #allocation0 [shape = 'u32[]', space=smem, size = 0x4, offset = 0x4, fixed_abs, tag = 'smem constant byte address 0x4 - core index']
  #allocation1 [shape = 'u32[144,128]{1,0:T(1,128)}', space=vmem, size = 0x12000, scoped, tag = 'internal scratch']
  #allocation2 [shape = 'f32[2,18,16,128]{3,2,1,0:T(8,128)}', space=vmem, size = 0x48000, scoped, tag = 'scratch operand']
  %s0 = inlined_call_operand.vmem [shape: f32[2,16,16,128], index: 0, kind: input, shape index: {}]
  %s1 = inlined_call_operand.vmem [shape: f32[9,128], index: 1, kind: input, shape index: {}]
  %s2 = inlined_call_operand.vmem [shape: bf16[128,128], index: 2, kind: input, shape index: {}]
  %s3 = inlined_call_operand.vmem [shape: f32[1,128], index: 3, kind: input, shape index: {}]
  %s4 = inlined_call_operand.vmem [shape: f32[1,128], index: 4, kind: input, shape index: {}]
  %s5 = inlined_call_operand.vmem [shape: f32[2,16,16,128], index: 5, kind: output, shape index: {}]
  %s6 = sld [smem:[#allocation0]]
  $region30: #{middleflow_pallas.1} parent=0
    _
  %s8 = ssub.s32 1, %s6
  %s9 = scalar_select 0, %s8, %s6
  // Predicated region
  $region2: #{middleflow_pallas.1} parent=0 // pred_check
    _
  $region3: #{middleflow_pallas.1} parent=0 // pred_check_branch
    %11 = sbr.rel (0) target = $region5
  $region4: #{middleflow_pallas.1} parent=0 // pred_region
    _
  $region5: #{middleflow_pallas.1} parent=0 // pred_fallthru
    _
  // Predicated region
  $region6: #{middleflow_pallas.1} parent=0 // pred_check
    _
  $region7: #{middleflow_pallas.1} parent=0 // pred_check_branch
    %13 = sbr.rel (0) target = $region9
  $region8: #{middleflow_pallas.1} parent=0 // pred_region
    _
  $region9: #{middleflow_pallas.1} parent=0 // pred_fallthru
    _
  // Predicated region
  $region10: #{middleflow_pallas.1} parent=0 // pred_check
    _
  $region11: #{middleflow_pallas.1} parent=0 // pred_check_branch
    %15 = sbr.rel (0) target = $region13
  $region12: #{middleflow_pallas.1} parent=0 // pred_region
    _
  $region13: #{middleflow_pallas.1} parent=0 // pred_fallthru
    _
  // Predicated region
  $region14: #{middleflow_pallas.1} parent=0 // pred_check
    _
  $region15: #{middleflow_pallas.1} parent=0 // pred_check_branch
    %17 = sbr.rel (0) target = $region17
  $region16: #{middleflow_pallas.1} parent=0 // pred_region
    _
  $region17: #{middleflow_pallas.1} parent=0 // pred_fallthru
    _
  // Predicated region
  $region18: #{middleflow_pallas.1} parent=0 // pred_check
    _
  $region19: #{middleflow_pallas.1} parent=0 // pred_check_branch
    %19 = sbr.rel (0) target = $region21
  $region20: #{middleflow_pallas.1} parent=0 // pred_region
    _
  $region21: #{middleflow_pallas.1} parent=0 // pred_fallthru
    _
  %21 = vst [vmem:[#allocation2] sm:$0xff] 0.0
  %22 = vst [vmem:[#allocation2 + $0x8] sm:$0xff] 0.0
  %23 = vst [vmem:[#allocation2 + $0x120] sm:$0xff] 0.0
  %24 = vst [vmem:[#allocation2 + $0x128] sm:$0xff] 0.0
  %s25 = scalar_lea.vmem [#allocation2], 272
  %26 = vst [vmem:[%s25] sm:$0xff] 0.0
  %27 = vst [vmem:[%s25 + $0x8] sm:$0xff] 0.0
  %28 = vst [vmem:[%s25 + $0x120] sm:$0xff] 0.0
  %29 = vst [vmem:[%s25 + $0x128] sm:$0xff] 0.0
  %v30 = vld [vmem:[%s1] sm:$0xff]
  %v31 = vld [vmem:[%s1 + $0x8] sm:$0x1]
  %v32 = vld [vmem:[%s2] sm:$0xf]
  %v33 = vld [vmem:[%s2 + $0x4] sm:$0xf]
  %v34 = vld [vmem:[%s2 + $0x8] sm:$0xf]
  %v35 = vld [vmem:[%s2 + $0xc] sm:$0xf]
  %v36 = vld [vmem:[%s2 + $0x10] sm:$0xf]
  %v37 = vld [vmem:[%s2 + $0x14] sm:$0xf]
  %v38 = vld [vmem:[%s2 + $0x18] sm:$0xf]
  %v39 = vld [vmem:[%s2 + $0x1c] sm:$0xf]
  %v40 = vld [vmem:[%s2 + $0x20] sm:$0xf]
  %v41 = vld [vmem:[%s2 + $0x24] sm:$0xf]
  %v42 = vld [vmem:[%s2 + $0x28] sm:$0xf]
  %v43 = vld [vmem:[%s2 + $0x2c] sm:$0xf]
  %v44 = vld [vmem:[%s2 + $0x30] sm:$0xf]
  %v45 = vld [vmem:[%s2 + $0x34] sm:$0xf]
  %v46 = vld [vmem:[%s2 + $0x38] sm:$0xf]
  %v47 = vld [vmem:[%s2 + $0x3c] sm:$0xf]
  %v48 = vld [vmem:[%s3] sm:$0x1]
  %v49 = vld [vmem:[%s4] sm:$0x1]
  %v50 = vlaneseq
  %v51 = vshrl.u32 %v50, 7
  %v52 = vadd.s32 %v51, 8
  %vm53 = vcmp.gt.s32.totalorder %v51, 0
  %vm54 = vcmp.gt.s32.totalorder %v52, 0
  %vm55 = vcmp.lt.s32.totalorder %v51, 15
  %vm56 = vcmp.lt.s32.totalorder %v52, 15
  %v57 = vld [vmem:[%s0] sm:$0xff]
  %v58 = vld [vmem:[%s0 + $0x8] sm:$0xff]
  %v59 = vld [vmem:[%s0 + $0x10] sm:$0xff]
  %v60 = vld [vmem:[%s0 + $0x18] sm:$0xff]
  %v61 = vld [vmem:[%s0 + $0x20] sm:$0xff]
  %v62 = vld [vmem:[%s0 + $0x28] sm:$0xff]
  %v63 = vld [vmem:[%s0 + $0x30] sm:$0xff]
  %v64 = vld [vmem:[%s0 + $0x38] sm:$0xff]
  %v65 = vld [vmem:[%s0 + $0x40] sm:$0xff]
  %v66 = vld [vmem:[%s0 + $0x48] sm:$0xff]
  %v67 = vld [vmem:[%s0 + $0x50] sm:$0xff]
  %v68 = vld [vmem:[%s0 + $0x58] sm:$0xff]
  %v69 = vld [vmem:[%s0 + $0x60] sm:$0xff]
  %v70 = vld [vmem:[%s0 + $0x68] sm:$0xff]
  %v71 = vld [vmem:[%s0 + $0x70] sm:$0xff]
  %v72 = vld [vmem:[%s0 + $0x78] sm:$0xff]
  %v73 = vld [vmem:[%s0 + $0x80] sm:$0xff]
  %v74 = vld [vmem:[%s0 + $0x88] sm:$0xff]
  %v75 = vld [vmem:[%s0 + $0x90] sm:$0xff]
  %v76 = vld [vmem:[%s0 + $0x98] sm:$0xff]
  %v77 = vld [vmem:[%s0 + $0xa0] sm:$0xff]
  %v78 = vld [vmem:[%s0 + $0xa8] sm:$0xff]
  %v79 = vld [vmem:[%s0 + $0xb0] sm:$0xff]
  %v80 = vld [vmem:[%s0 + $0xb8] sm:$0xff]
  %v81 = vld [vmem:[%s0 + $0xc0] sm:$0xff]
  %v82 = vld [vmem:[%s0 + $0xc8] sm:$0xff]
  %v83 = vld [vmem:[%s0 + $0xd0] sm:$0xff]
  %v84 = vld [vmem:[%s0 + $0xd8] sm:$0xff]
  %v85 = vld [vmem:[%s0 + $0xe0] sm:$0xff]
  %v86 = vld [vmem:[%s0 + $0xe8] sm:$0xff]
  %v87 = vld [vmem:[%s0 + $0xf0] sm:$0xff]
  %v88 = vld [vmem:[%s0 + $0xf8] sm:$0xff]
  %v89 = vld [vmem:[%s0 + $0x100] sm:$0xff]
  %v90 = vld [vmem:[%s0 + $0x108] sm:$0xff]
  %v91 = vld [vmem:[%s0 + $0x110] sm:$0xff]
  %v92 = vld [vmem:[%s0 + $0x118] sm:$0xff]
  %v93 = vld [vmem:[%s0 + $0x120] sm:$0xff]
  %v94 = vld [vmem:[%s0 + $0x128] sm:$0xff]
  %v95 = vld [vmem:[%s0 + $0x130] sm:$0xff]
  %v96 = vld [vmem:[%s0 + $0x138] sm:$0xff]
  %v97 = vld [vmem:[%s0 + $0x140] sm:$0xff]
  %v98 = vld [vmem:[%s0 + $0x148] sm:$0xff]
  %v99 = vld [vmem:[%s0 + $0x150] sm:$0xff]
  %v100 = vld [vmem:[%s0 + $0x158] sm:$0xff]
  %v101 = vld [vmem:[%s0 + $0x160] sm:$0xff]
  %v102 = vld [vmem:[%s0 + $0x168] sm:$0xff]
  %v103 = vld [vmem:[%s0 + $0x170] sm:$0xff]
  %v104 = vld [vmem:[%s0 + $0x178] sm:$0xff]
  %v105 = vld [vmem:[%s0 + $0x180] sm:$0xff]
  %v106 = vld [vmem:[%s0 + $0x188] sm:$0xff]
  %v107 = vld [vmem:[%s0 + $0x190] sm:$0xff]
  %v108 = vld [vmem:[%s0 + $0x198] sm:$0xff]
  %v109 = vld [vmem:[%s0 + $0x1a0] sm:$0xff]
  %v110 = vld [vmem:[%s0 + $0x1a8] sm:$0xff]
  %v111 = vld [vmem:[%s0 + $0x1b0] sm:$0xff]
  %v112 = vld [vmem:[%s0 + $0x1b8] sm:$0xff]
  %v113 = vld [vmem:[%s0 + $0x1c0] sm:$0xff]
  %v114 = vld [vmem:[%s0 + $0x1c8] sm:$0xff]
  %v115 = vld [vmem:[%s0 + $0x1d0] sm:$0xff]
  %v116 = vld [vmem:[%s0 + $0x1d8] sm:$0xff]
  %v117 = vld [vmem:[%s0 + $0x1e0] sm:$0xff]
  %v118 = vld [vmem:[%s0 + $0x1e8] sm:$0xff]
  %v119 = vld [vmem:[%s0 + $0x1f0] sm:$0xff]
  %v120 = vld [vmem:[%s0 + $0x1f8] sm:$0xff]
  %v121 = vmax.f32 %v57, 0.0
  %v122 = vmax.f32 %v58, 0.0
  %v123 = vmax.f32 %v59, 0.0
  %v124 = vmax.f32 %v60, 0.0
  %v125 = vmax.f32 %v61, 0.0
  %v126 = vmax.f32 %v62, 0.0
  %v127 = vmax.f32 %v63, 0.0
  %v128 = vmax.f32 %v64, 0.0
  %v129 = vmax.f32 %v65, 0.0
  %v130 = vmax.f32 %v66, 0.0
  %v131 = vmax.f32 %v67, 0.0
  %v132 = vmax.f32 %v68, 0.0
  %v133 = vmax.f32 %v69, 0.0
  %v134 = vmax.f32 %v70, 0.0
  %v135 = vmax.f32 %v71, 0.0
  %v136 = vmax.f32 %v72, 0.0
  %v137 = vmax.f32 %v73, 0.0
  %v138 = vmax.f32 %v74, 0.0
  %v139 = vmax.f32 %v75, 0.0
  %v140 = vmax.f32 %v76, 0.0
  %v141 = vmax.f32 %v77, 0.0
  %v142 = vmax.f32 %v78, 0.0
  %v143 = vmax.f32 %v79, 0.0
  %v144 = vmax.f32 %v80, 0.0
  %v145 = vmax.f32 %v81, 0.0
  %v146 = vmax.f32 %v82, 0.0
  %v147 = vmax.f32 %v83, 0.0
  %v148 = vmax.f32 %v84, 0.0
  %v149 = vmax.f32 %v85, 0.0
  %v150 = vmax.f32 %v86, 0.0
  %v151 = vmax.f32 %v87, 0.0
  %v152 = vmax.f32 %v88, 0.0
  %v153 = vmax.f32 %v89, 0.0
  %v154 = vmax.f32 %v90, 0.0
  %v155 = vmax.f32 %v91, 0.0
  %v156 = vmax.f32 %v92, 0.0
  %v157 = vmax.f32 %v93, 0.0
  %v158 = vmax.f32 %v94, 0.0
  %v159 = vmax.f32 %v95, 0.0
  %v160 = vmax.f32 %v96, 0.0
  %v161 = vmax.f32 %v97, 0.0
  %v162 = vmax.f32 %v98, 0.0
  %v163 = vmax.f32 %v99, 0.0
  %v164 = vmax.f32 %v100, 0.0
  %v165 = vmax.f32 %v101, 0.0
  %v166 = vmax.f32 %v102, 0.0
  %v167 = vmax.f32 %v103, 0.0
  %v168 = vmax.f32 %v104, 0.0
  %v169 = vmax.f32 %v105, 0.0
  %v170 = vmax.f32 %v106, 0.0
  %v171 = vmax.f32 %v107, 0.0
  %v172 = vmax.f32 %v108, 0.0
  %v173 = vmax.f32 %v109, 0.0
  %v174 = vmax.f32 %v110, 0.0
  %v175 = vmax.f32 %v111, 0.0
  %v176 = vmax.f32 %v112, 0.0
  %v177 = vmax.f32 %v113, 0.0
  %v178 = vmax.f32 %v114, 0.0
  %v179 = vmax.f32 %v115, 0.0
  %v180 = vmax.f32 %v116, 0.0
  %v181 = vmax.f32 %v117, 0.0
  %v182 = vmax.f32 %v118, 0.0
  %v183 = vmax.f32 %v119, 0.0
  %v184 = vmax.f32 %v120, 0.0
  %s185 = scalar_lea.vmem [#allocation2], 16
  %186 = vst [vmem:[%s185] sm:$0xff] %v121
  %187 = vst [vmem:[%s185 + $0x8] sm:$0xff] %v122
  %188 = vst [vmem:[%s185 + $0x10] sm:$0xff] %v123
  %189 = vst [vmem:[%s185 + $0x18] sm:$0xff] %v124
  %190 = vst [vmem:[%s185 + $0x20] sm:$0xff] %v125
  %191 = vst [vmem:[%s185 + $0x28] sm:$0xff] %v126
  %192 = vst [vmem:[%s185 + $0x30] sm:$0xff] %v127
  %193 = vst [vmem:[%s185 + $0x38] sm:$0xff] %v128
  %194 = vst [vmem:[%s185 + $0x40] sm:$0xff] %v129
  %195 = vst [vmem:[%s185 + $0x48] sm:$0xff] %v130
  %196 = vst [vmem:[%s185 + $0x50] sm:$0xff] %v131
  %197 = vst [vmem:[%s185 + $0x58] sm:$0xff] %v132
  %198 = vst [vmem:[%s185 + $0x60] sm:$0xff] %v133
  %199 = vst [vmem:[%s185 + $0x68] sm:$0xff] %v134
  %200 = vst [vmem:[%s185 + $0x70] sm:$0xff] %v135
  %201 = vst [vmem:[%s185 + $0x78] sm:$0xff] %v136
  %202 = vst [vmem:[%s185 + $0x80] sm:$0xff] %v137
  %203 = vst [vmem:[%s185 + $0x88] sm:$0xff] %v138
  %204 = vst [vmem:[%s185 + $0x90] sm:$0xff] %v139
  %205 = vst [vmem:[%s185 + $0x98] sm:$0xff] %v140
  %206 = vst [vmem:[%s185 + $0xa0] sm:$0xff] %v141
  %207 = vst [vmem:[%s185 + $0xa8] sm:$0xff] %v142
  %208 = vst [vmem:[%s185 + $0xb0] sm:$0xff] %v143
  %209 = vst [vmem:[%s185 + $0xb8] sm:$0xff] %v144
  %210 = vst [vmem:[%s185 + $0xc0] sm:$0xff] %v145
  %211 = vst [vmem:[%s185 + $0xc8] sm:$0xff] %v146
  %212 = vst [vmem:[%s185 + $0xd0] sm:$0xff] %v147
  %213 = vst [vmem:[%s185 + $0xd8] sm:$0xff] %v148
  %214 = vst [vmem:[%s185 + $0xe0] sm:$0xff] %v149
  %215 = vst [vmem:[%s185 + $0xe8] sm:$0xff] %v150
  %216 = vst [vmem:[%s185 + $0xf0] sm:$0xff] %v151
  %217 = vst [vmem:[%s185 + $0xf8] sm:$0xff] %v152
  %218 = vst [vmem:[%s185 + $0x120] sm:$0xff] %v153
  %219 = vst [vmem:[%s185 + $0x128] sm:$0xff] %v154
  %220 = vst [vmem:[%s185 + $0x130] sm:$0xff] %v155
  %221 = vst [vmem:[%s185 + $0x138] sm:$0xff] %v156
  %222 = vst [vmem:[%s185 + $0x140] sm:$0xff] %v157
  %223 = vst [vmem:[%s185 + $0x148] sm:$0xff] %v158
  %224 = vst [vmem:[%s185 + $0x150] sm:$0xff] %v159
  %225 = vst [vmem:[%s185 + $0x158] sm:$0xff] %v160
  %226 = vst [vmem:[%s185 + $0x160] sm:$0xff] %v161
  %227 = vst [vmem:[%s185 + $0x168] sm:$0xff] %v162
  %228 = vst [vmem:[%s185 + $0x170] sm:$0xff] %v163
  %229 = vst [vmem:[%s185 + $0x178] sm:$0xff] %v164
  %230 = vst [vmem:[%s185 + $0x180] sm:$0xff] %v165
  %231 = vst [vmem:[%s185 + $0x188] sm:$0xff] %v166
  %232 = vst [vmem:[%s185 + $0x190] sm:$0xff] %v167
  %233 = vst [vmem:[%s185 + $0x198] sm:$0xff] %v168
  %234 = vst [vmem:[%s185 + $0x1a0] sm:$0xff] %v169
  %235 = vst [vmem:[%s185 + $0x1a8] sm:$0xff] %v170
  %236 = vst [vmem:[%s185 + $0x1b0] sm:$0xff] %v171
  %237 = vst [vmem:[%s185 + $0x1b8] sm:$0xff] %v172
  %238 = vst [vmem:[%s185 + $0x1c0] sm:$0xff] %v173
  %239 = vst [vmem:[%s185 + $0x1c8] sm:$0xff] %v174
  %240 = vst [vmem:[%s185 + $0x1d0] sm:$0xff] %v175
  %241 = vst [vmem:[%s185 + $0x1d8] sm:$0xff] %v176
  %242 = vst [vmem:[%s185 + $0x1e0] sm:$0xff] %v177
  %243 = vst [vmem:[%s185 + $0x1e8] sm:$0xff] %v178
  %244 = vst [vmem:[%s185 + $0x1f0] sm:$0xff] %v179
  %245 = vst [vmem:[%s185 + $0x1f8] sm:$0xff] %v180
  %246 = vst [vmem:[%s185 + $0x200] sm:$0xff] %v181
  %247 = vst [vmem:[%s185 + $0x208] sm:$0xff] %v182
  %248 = vst [vmem:[%s185 + $0x210] sm:$0xff] %v183
  %249 = vst [vmem:[%s185 + $0x218] sm:$0xff] %v184
  %v250 = vld [vmem:[#allocation2] sm:$0xff]
  %v251 = vld [vmem:[#allocation2 + $0x8] sm:$0xff]
  %v252 = vld [vmem:[#allocation2 + $0x10] sm:$0xff]
  %v253 = vld [vmem:[#allocation2 + $0x18] sm:$0xff]
  %v254 = vld [vmem:[#allocation2 + $0x20] sm:$0xff]
  %v255 = vld [vmem:[#allocation2 + $0x28] sm:$0xff]
  %v256 = vld [vmem:[#allocation2 + $0x30] sm:$0xff]
  %v257 = vld [vmem:[#allocation2 + $0x38] sm:$0xff]
  %v258 = vld [vmem:[#allocation2 + $0x40] sm:$0xff]
  %v259 = vld [vmem:[#allocation2 + $0x48] sm:$0xff]
  %v260 = vld [vmem:[#allocation2 + $0x50] sm:$0xff]
  %v261 = vld [vmem:[#allocation2 + $0x58] sm:$0xff]
  %v262 = vld [vmem:[#allocation2 + $0x60] sm:$0xff]
  %v263 = vld [vmem:[#allocation2 + $0x68] sm:$0xff]
  %v264 = vld [vmem:[#allocation2 + $0x70] sm:$0xff]
  %v265 = vld [vmem:[#allocation2 + $0x78] sm:$0xff]
  %v266 = vld [vmem:[#allocation2 + $0x80] sm:$0xff]
  %v267 = vld [vmem:[#allocation2 + $0x88] sm:$0xff]
  %v268 = vld [vmem:[#allocation2 + $0x90] sm:$0xff]
  %v269 = vld [vmem:[#allocation2 + $0x98] sm:$0xff]
  %v270 = vld [vmem:[#allocation2 + $0xa0] sm:$0xff]
  %v271 = vld [vmem:[#allocation2 + $0xa8] sm:$0xff]
  %v272 = vld [vmem:[#allocation2 + $0xb0] sm:$0xff]
  %v273 = vld [vmem:[#allocation2 + $0xb8] sm:$0xff]
  %v274 = vld [vmem:[#allocation2 + $0xc0] sm:$0xff]
  %v275 = vld [vmem:[#allocation2 + $0xc8] sm:$0xff]
  %v276 = vld [vmem:[#allocation2 + $0xd0] sm:$0xff]
  %v277 = vld [vmem:[#allocation2 + $0xd8] sm:$0xff]
  %v278 = vld [vmem:[#allocation2 + $0xe0] sm:$0xff]
  %v279 = vld [vmem:[#allocation2 + $0xe8] sm:$0xff]
  %v280 = vld [vmem:[#allocation2 + $0xf0] sm:$0xff]
  %v281 = vld [vmem:[#allocation2 + $0xf8] sm:$0xff]
  %v282 = vld [vmem:[#allocation2 + $0x100] sm:$0xff]
  %v283 = vld [vmem:[#allocation2 + $0x108] sm:$0xff]
  %v284 = vld [vmem:[#allocation2 + $0x110] sm:$0xff]
  %v285 = vld [vmem:[#allocation2 + $0x118] sm:$0xff]
  %v286 = vld [vmem:[#allocation2 + $0x120] sm:$0xff]
  %v287 = vld [vmem:[#allocation2 + $0x128] sm:$0xff]
  %v288 = vld [vmem:[#allocation2 + $0x130] sm:$0xff]
  %v289 = vld [vmem:[#allocation2 + $0x138] sm:$0xff]
  %v290 = vld [vmem:[#allocation2 + $0x140] sm:$0xff]
  %v291 = vld [vmem:[#allocation2 + $0x148] sm:$0xff]
  %v292 = vld [vmem:[#allocation2 + $0x150] sm:$0xff]
  %v293 = vld [vmem:[#allocation2 + $0x158] sm:$0xff]
  %v294 = vld [vmem:[#allocation2 + $0x160] sm:$0xff]
  %v295 = vld [vmem:[#allocation2 + $0x168] sm:$0xff]
  %v296 = vld [vmem:[#allocation2 + $0x170] sm:$0xff]
  %v297 = vld [vmem:[#allocation2 + $0x178] sm:$0xff]
  %v298 = vld [vmem:[#allocation2 + $0x180] sm:$0xff]
  %v299 = vld [vmem:[#allocation2 + $0x188] sm:$0xff]
  %v300 = vld [vmem:[#allocation2 + $0x190] sm:$0xff]
  %v301 = vld [vmem:[#allocation2 + $0x198] sm:$0xff]
  %v302 = vld [vmem:[#allocation2 + $0x1a0] sm:$0xff]
  %v303 = vld [vmem:[#allocation2 + $0x1a8] sm:$0xff]
  %v304 = vld [vmem:[#allocation2 + $0x1b0] sm:$0xff]
  %v305 = vld [vmem:[#allocation2 + $0x1b8] sm:$0xff]
  %v306 = vld [vmem:[#allocation2 + $0x1c0] sm:$0xff]
  %v307 = vld [vmem:[#allocation2 + $0x1c8] sm:$0xff]
  %v308 = vld [vmem:[#allocation2 + $0x1d0] sm:$0xff]
  %v309 = vld [vmem:[#allocation2 + $0x1d8] sm:$0xff]
  %v310 = vld [vmem:[#allocation2 + $0x1e0] sm:$0xff]
  %v311 = vld [vmem:[#allocation2 + $0x1e8] sm:$0xff]
  %v312 = vld [vmem:[#allocation2 + $0x1f0] sm:$0xff]
  %v313 = vld [vmem:[#allocation2 + $0x1f8] sm:$0xff]
  %v314 = vld [vmem:[#allocation2 + $0x200] sm:$0xff]
  %v315 = vld [vmem:[#allocation2 + $0x208] sm:$0xff]
  %v316 = vld [vmem:[#allocation2 + $0x210] sm:$0xff]
  %v317 = vld [vmem:[#allocation2 + $0x218] sm:$0xff]
  %v318 = vld [vmem:[#allocation2 + $0x220] sm:$0xff]
  %v319 = vld [vmem:[#allocation2 + $0x228] sm:$0xff]
  %v320 = vld [vmem:[#allocation2 + $0x230] sm:$0xff]
  %v321 = vld [vmem:[#allocation2 + $0x238] sm:$0xff]
  %v322 = vrot.slane %v250, 7
  %v323 = vrot.slane %v252, 7
  %v324 = vrot.slane %v254, 7
  %v325 = vrot.slane %v256, 7
  %v326 = vrot.slane %v258, 7
  %v327 = vrot.slane %v260, 7
  %v328 = vrot.slane %v262, 7
  %v329 = vrot.slane %v264, 7
  %v330 = vrot.slane %v266, 7
  %v331 = vrot.slane %v268, 7
  %v332 = vrot.slane %v270, 7
  %v333 = vrot.slane %v272, 7
  %v334 = vrot.slane %v274, 7
  %v335 = vrot.slane %v276, 7
  %v336 = vrot.slane %v278, 7
  %v337 = vrot.slane %v280, 7
  %v338 = vrot.slane %v282, 7
  %v339 = vrot.slane %v284, 7
  %v340 = vrot.slane %v286, 7
  %v341 = vrot.slane %v288, 7
  %v342 = vrot.slane %v290, 7
  %v343 = vrot.slane %v292, 7
  %v344 = vrot.slane %v294, 7
  %v345 = vrot.slane %v296, 7
  %v346 = vrot.slane %v298, 7
  %v347 = vrot.slane %v300, 7
  %v348 = vrot.slane %v302, 7
  %v349 = vrot.slane %v304, 7
  %v350 = vrot.slane %v306, 7
  %v351 = vrot.slane %v308, 7
  %v352 = vrot.slane %v310, 7
  %v353 = vrot.slane %v312, 7
  %v354 = vrot.slane %v314, 7
  %v355 = vrot.slane %v316, 7
  %v356 = vrot.slane %v318, 7
  %v357 = vrot.slane %v320, 7
  %v358 = vrot.slane %v251, 7
  %v359 = vrot.slane %v253, 7
  %v360 = vrot.slane %v255, 7
  %v361 = vrot.slane %v257, 7
  %v362 = vrot.slane %v259, 7
  %v363 = vrot.slane %v261, 7
  %v364 = vrot.slane %v263, 7
  %v365 = vrot.slane %v265, 7
  %v366 = vrot.slane %v267, 7
  %v367 = vrot.slane %v269, 7
  %v368 = vrot.slane %v271, 7
  %v369 = vrot.slane %v273, 7
  %v370 = vrot.slane %v275, 7
  %v371 = vrot.slane %v277, 7
  %v372 = vrot.slane %v279, 7
  %v373 = vrot.slane %v281, 7
  %v374 = vrot.slane %v283, 7
  %v375 = vrot.slane %v285, 7
  %v376 = vrot.slane %v287, 7
  %v377 = vrot.slane %v289, 7
  %v378 = vrot.slane %v291, 7
  %v379 = vrot.slane %v293, 7
  %v380 = vrot.slane %v295, 7
  %v381 = vrot.slane %v297, 7
  %v382 = vrot.slane %v299, 7
  %v383 = vrot.slane %v301, 7
  %v384 = vrot.slane %v303, 7
  %v385 = vrot.slane %v305, 7
  %v386 = vrot.slane %v307, 7
  %v387 = vrot.slane %v309, 7
  %v388 = vrot.slane %v311, 7
  %v389 = vrot.slane %v313, 7
  %v390 = vrot.slane %v315, 7
  %v391 = vrot.slane %v317, 7
  %v392 = vrot.slane %v319, 7
  %v393 = vrot.slane %v321, 7
  %vm394 = vcmp.lt.s32.totalorder %v51, 1
  %v395 = vsel %vm394, %v322, %v358
  %v396 = vsel %vm394, %v323, %v359
  %v397 = vsel %vm394, %v324, %v360
  %v398 = vsel %vm394, %v325, %v361
  %v399 = vsel %vm394, %v326, %v362
  %v400 = vsel %vm394, %v327, %v363
  %v401 = vsel %vm394, %v328, %v364
  %v402 = vsel %vm394, %v329, %v365
  %v403 = vsel %vm394, %v330, %v366
  %v404 = vsel %vm394, %v331, %v367
  %v405 = vsel %vm394, %v332, %v368
  %v406 = vsel %vm394, %v333, %v369
  %v407 = vsel %vm394, %v334, %v370
  %v408 = vsel %vm394, %v335, %v371
  %v409 = vsel %vm394, %v336, %v372
  %v410 = vsel %vm394, %v337, %v373
  %v411 = vsel %vm394, %v338, %v374
  %v412 = vsel %vm394, %v339, %v375
  %v413 = vsel %vm394, %v340, %v376
  %v414 = vsel %vm394, %v341, %v377
  %v415 = vsel %vm394, %v342, %v378
  %v416 = vsel %vm394, %v343, %v379
  %v417 = vsel %vm394, %v344, %v380
  %v418 = vsel %vm394, %v345, %v381
  %v419 = vsel %vm394, %v346, %v382
  %v420 = vsel %vm394, %v347, %v383
  %v421 = vsel %vm394, %v348, %v384
  %v422 = vsel %vm394, %v349, %v385
  %v423 = vsel %vm394, %v350, %v386
  %v424 = vsel %vm394, %v351, %v387
  %v425 = vsel %vm394, %v352, %v388
  %v426 = vsel %vm394, %v353, %v389
  %v427 = vsel %vm394, %v354, %v390
  %v428 = vsel %vm394, %v355, %v391
  %v429 = vsel %vm394, %v356, %v392
  %v430 = vsel %vm394, %v357, %v393
  %v431 = vsel %vm394, %v358, %v322
  %v432 = vsel %vm394, %v359, %v323
  %v433 = vsel %vm394, %v360, %v324
  %v434 = vsel %vm394, %v361, %v325
  %v435 = vsel %vm394, %v362, %v326
  %v436 = vsel %vm394, %v363, %v327
  %v437 = vsel %vm394, %v364, %v328
  %v438 = vsel %vm394, %v365, %v329
  %v439 = vsel %vm394, %v366, %v330
  %v440 = vsel %vm394, %v367, %v331
  %v441 = vsel %vm394, %v368, %v332
  %v442 = vsel %vm394, %v369, %v333
  %v443 = vsel %vm394, %v370, %v334
  %v444 = vsel %vm394, %v371, %v335
  %v445 = vsel %vm394, %v372, %v336
  %v446 = vsel %vm394, %v373, %v337
  %v447 = vsel %vm394, %v374, %v338
  %v448 = vsel %vm394, %v375, %v339
  %v449 = vsel %vm394, %v376, %v340
  %v450 = vsel %vm394, %v377, %v341
  %v451 = vsel %vm394, %v378, %v342
  %v452 = vsel %vm394, %v379, %v343
  %v453 = vsel %vm394, %v380, %v344
  %v454 = vsel %vm394, %v381, %v345
  %v455 = vsel %vm394, %v382, %v346
  %v456 = vsel %vm394, %v383, %v347
  %v457 = vsel %vm394, %v384, %v348
  %v458 = vsel %vm394, %v385, %v349
  %v459 = vsel %vm394, %v386, %v350
  %v460 = vsel %vm394, %v387, %v351
  %v461 = vsel %vm394, %v388, %v352
  %v462 = vsel %vm394, %v389, %v353
  %v463 = vsel %vm394, %v390, %v354
  %v464 = vsel %vm394, %v391, %v355
  %v465 = vsel %vm394, %v392, %v356
  %v466 = vsel %vm394, %v393, %v357
  %v467 = vsel %vm53, %v431, 0.0
  %v468 = vsel %vm54, %v395, 0.0
  %v469 = vsel %vm53, %v432, 0.0
  %v470 = vsel %vm54, %v396, 0.0
  %v471 = vsel %vm53, %v433, 0.0
  %v472 = vsel %vm54, %v397, 0.0
  %v473 = vsel %vm53, %v434, 0.0
  %v474 = vsel %vm54, %v398, 0.0
  %v475 = vsel %vm53, %v435, 0.0
  %v476 = vsel %vm54, %v399, 0.0
  %v477 = vsel %vm53, %v436, 0.0
  %v478 = vsel %vm54, %v400, 0.0
  %v479 = vsel %vm53, %v437, 0.0
  %v480 = vsel %vm54, %v401, 0.0
  %v481 = vsel %vm53, %v438, 0.0
  %v482 = vsel %vm54, %v402, 0.0
  %v483 = vsel %vm53, %v439, 0.0
  %v484 = vsel %vm54, %v403, 0.0
  %v485 = vsel %vm53, %v440, 0.0
  %v486 = vsel %vm54, %v404, 0.0
  %v487 = vsel %vm53, %v441, 0.0
  %v488 = vsel %vm54, %v405, 0.0
  %v489 = vsel %vm53, %v442, 0.0
  %v490 = vsel %vm54, %v406, 0.0
  %v491 = vsel %vm53, %v443, 0.0
  %v492 = vsel %vm54, %v407, 0.0
  %v493 = vsel %vm53, %v444, 0.0
  %v494 = vsel %vm54, %v408, 0.0
  %v495 = vsel %vm53, %v445, 0.0
  %v496 = vsel %vm54, %v409, 0.0
  %v497 = vsel %vm53, %v446, 0.0
  %v498 = vsel %vm54, %v410, 0.0
  %v499 = vsel %vm53, %v447, 0.0
  %v500 = vsel %vm54, %v411, 0.0
  %v501 = vsel %vm53, %v448, 0.0
  %v502 = vsel %vm54, %v412, 0.0
  %v503 = vsel %vm53, %v449, 0.0
  %v504 = vsel %vm54, %v413, 0.0
  %v505 = vsel %vm53, %v450, 0.0
  %v506 = vsel %vm54, %v414, 0.0
  %v507 = vsel %vm53, %v451, 0.0
  %v508 = vsel %vm54, %v415, 0.0
  %v509 = vsel %vm53, %v452, 0.0
  %v510 = vsel %vm54, %v416, 0.0
  %v511 = vsel %vm53, %v453, 0.0
  %v512 = vsel %vm54, %v417, 0.0
  %v513 = vsel %vm53, %v454, 0.0
  %v514 = vsel %vm54, %v418, 0.0
  %v515 = vsel %vm53, %v455, 0.0
  %v516 = vsel %vm54, %v419, 0.0
  %v517 = vsel %vm53, %v456, 0.0
  %v518 = vsel %vm54, %v420, 0.0
  %v519 = vsel %vm53, %v457, 0.0
  %v520 = vsel %vm54, %v421, 0.0
  %v521 = vsel %vm53, %v458, 0.0
  %v522 = vsel %vm54, %v422, 0.0
  %v523 = vsel %vm53, %v459, 0.0
  %v524 = vsel %vm54, %v423, 0.0
  %v525 = vsel %vm53, %v460, 0.0
  %v526 = vsel %vm54, %v424, 0.0
  %v527 = vsel %vm53, %v461, 0.0
  %v528 = vsel %vm54, %v425, 0.0
  %v529 = vsel %vm53, %v462, 0.0
  %v530 = vsel %vm54, %v426, 0.0
  %v531 = vsel %vm53, %v463, 0.0
  %v532 = vsel %vm54, %v427, 0.0
  %v533 = vsel %vm53, %v464, 0.0
  %v534 = vsel %vm54, %v428, 0.0
  %v535 = vsel %vm53, %v465, 0.0
  %v536 = vsel %vm54, %v429, 0.0
  %v537 = vsel %vm53, %v466, 0.0
  %v538 = vsel %vm54, %v430, 0.0
  %v539 = vrot.slane %v250, 1
  %v540 = vrot.slane %v252, 1
  %v541 = vrot.slane %v254, 1
  %v542 = vrot.slane %v256, 1
  %v543 = vrot.slane %v258, 1
  %v544 = vrot.slane %v260, 1
  %v545 = vrot.slane %v262, 1
  %v546 = vrot.slane %v264, 1
  %v547 = vrot.slane %v266, 1
  %v548 = vrot.slane %v268, 1
  %v549 = vrot.slane %v270, 1
  %v550 = vrot.slane %v272, 1
  %v551 = vrot.slane %v274, 1
  %v552 = vrot.slane %v276, 1
  %v553 = vrot.slane %v278, 1
  %v554 = vrot.slane %v280, 1
  %v555 = vrot.slane %v282, 1
  %v556 = vrot.slane %v284, 1
  %v557 = vrot.slane %v286, 1
  %v558 = vrot.slane %v288, 1
  %v559 = vrot.slane %v290, 1
  %v560 = vrot.slane %v292, 1
  %v561 = vrot.slane %v294, 1
  %v562 = vrot.slane %v296, 1
  %v563 = vrot.slane %v298, 1
  %v564 = vrot.slane %v300, 1
  %v565 = vrot.slane %v302, 1
  %v566 = vrot.slane %v304, 1
  %v567 = vrot.slane %v306, 1
  %v568 = vrot.slane %v308, 1
  %v569 = vrot.slane %v310, 1
  %v570 = vrot.slane %v312, 1
  %v571 = vrot.slane %v314, 1
  %v572 = vrot.slane %v316, 1
  %v573 = vrot.slane %v318, 1
  %v574 = vrot.slane %v320, 1
  %v575 = vrot.slane %v251, 1
  %v576 = vrot.slane %v253, 1
  %v577 = vrot.slane %v255, 1
  %v578 = vrot.slane %v257, 1
  %v579 = vrot.slane %v259, 1
  %v580 = vrot.slane %v261, 1
  %v581 = vrot.slane %v263, 1
  %v582 = vrot.slane %v265, 1
  %v583 = vrot.slane %v267, 1
  %v584 = vrot.slane %v269, 1
  %v585 = vrot.slane %v271, 1
  %v586 = vrot.slane %v273, 1
  %v587 = vrot.slane %v275, 1
  %v588 = vrot.slane %v277, 1
  %v589 = vrot.slane %v279, 1
  %v590 = vrot.slane %v281, 1
  %v591 = vrot.slane %v283, 1
  %v592 = vrot.slane %v285, 1
  %v593 = vrot.slane %v287, 1
  %v594 = vrot.slane %v289, 1
  %v595 = vrot.slane %v291, 1
  %v596 = vrot.slane %v293, 1
  %v597 = vrot.slane %v295, 1
  %v598 = vrot.slane %v297, 1
  %v599 = vrot.slane %v299, 1
  %v600 = vrot.slane %v301, 1
  %v601 = vrot.slane %v303, 1
  %v602 = vrot.slane %v305, 1
  %v603 = vrot.slane %v307, 1
  %v604 = vrot.slane %v309, 1
  %v605 = vrot.slane %v311, 1
  %v606 = vrot.slane %v313, 1
  %v607 = vrot.slane %v315, 1
  %v608 = vrot.slane %v317, 1
  %v609 = vrot.slane %v319, 1
  %v610 = vrot.slane %v321, 1
  %vm611 = vcmp.lt.s32.totalorder %v51, 7
  %v612 = vsel %vm611, %v539, %v575
  %v613 = vsel %vm611, %v540, %v576
  %v614 = vsel %vm611, %v541, %v577
  %v615 = vsel %vm611, %v542, %v578
  %v616 = vsel %vm611, %v543, %v579
  %v617 = vsel %vm611, %v544, %v580
  %v618 = vsel %vm611, %v545, %v581
  %v619 = vsel %vm611, %v546, %v582
  %v620 = vsel %vm611, %v547, %v583
  %v621 = vsel %vm611, %v548, %v584
  %v622 = vsel %vm611, %v549, %v585
  %v623 = vsel %vm611, %v550, %v586
  %v624 = vsel %vm611, %v551, %v587
  %v625 = vsel %vm611, %v552, %v588
  %v626 = vsel %vm611, %v553, %v589
  %v627 = vsel %vm611, %v554, %v590
  %v628 = vsel %vm611, %v555, %v591
  %v629 = vsel %vm611, %v556, %v592
  %v630 = vsel %vm611, %v557, %v593
  %v631 = vsel %vm611, %v558, %v594
  %v632 = vsel %vm611, %v559, %v595
  %v633 = vsel %vm611, %v560, %v596
  %v634 = vsel %vm611, %v561, %v597
  %v635 = vsel %vm611, %v562, %v598
  %v636 = vsel %vm611, %v563, %v599
  %v637 = vsel %vm611, %v564, %v600
  %v638 = vsel %vm611, %v565, %v601
  %v639 = vsel %vm611, %v566, %v602
  %v640 = vsel %vm611, %v567, %v603
  %v641 = vsel %vm611, %v568, %v604
  %v642 = vsel %vm611, %v569, %v605
  %v643 = vsel %vm611, %v570, %v606
  %v644 = vsel %vm611, %v571, %v607
  %v645 = vsel %vm611, %v572, %v608
  %v646 = vsel %vm611, %v573, %v609
  %v647 = vsel %vm611, %v574, %v610
  %v648 = vsel %vm611, %v575, %v539
  %v649 = vsel %vm611, %v576, %v540
  %v650 = vsel %vm611, %v577, %v541
  %v651 = vsel %vm611, %v578, %v542
  %v652 = vsel %vm611, %v579, %v543
  %v653 = vsel %vm611, %v580, %v544
  %v654 = vsel %vm611, %v581, %v545
  %v655 = vsel %vm611, %v582, %v546
  %v656 = vsel %vm611, %v583, %v547
  %v657 = vsel %vm611, %v584, %v548
  %v658 = vsel %vm611, %v585, %v549
  %v659 = vsel %vm611, %v586, %v550
  %v660 = vsel %vm611, %v587, %v551
  %v661 = vsel %vm611, %v588, %v552
  %v662 = vsel %vm611, %v589, %v553
  %v663 = vsel %vm611, %v590, %v554
  %v664 = vsel %vm611, %v591, %v555
  %v665 = vsel %vm611, %v592, %v556
  %v666 = vsel %vm611, %v593, %v557
  %v667 = vsel %vm611, %v594, %v558
  %v668 = vsel %vm611, %v595, %v559
  %v669 = vsel %vm611, %v596, %v560
  %v670 = vsel %vm611, %v597, %v561
  %v671 = vsel %vm611, %v598, %v562
  %v672 = vsel %vm611, %v599, %v563
  %v673 = vsel %vm611, %v600, %v564
  %v674 = vsel %vm611, %v601, %v565
  %v675 = vsel %vm611, %v602, %v566
  %v676 = vsel %vm611, %v603, %v567
  %v677 = vsel %vm611, %v604, %v568
  %v678 = vsel %vm611, %v605, %v569
  %v679 = vsel %vm611, %v606, %v570
  %v680 = vsel %vm611, %v607, %v571
  %v681 = vsel %vm611, %v608, %v572
  %v682 = vsel %vm611, %v609, %v573
  %v683 = vsel %vm611, %v610, %v574
  %v684 = vsel %vm55, %v612, 0.0
  %v685 = vsel %vm56, %v648, 0.0
  %v686 = vsel %vm55, %v613, 0.0
  %v687 = vsel %vm56, %v649, 0.0
  %v688 = vsel %vm55, %v614, 0.0
  %v689 = vsel %vm56, %v650, 0.0
  %v690 = vsel %vm55, %v615, 0.0
  %v691 = vsel %vm56, %v651, 0.0
  %v692 = vsel %vm55, %v616, 0.0
  %v693 = vsel %vm56, %v652, 0.0
  %v694 = vsel %vm55, %v617, 0.0
  %v695 = vsel %vm56, %v653, 0.0
  %v696 = vsel %vm55, %v618, 0.0
  %v697 = vsel %vm56, %v654, 0.0
  %v698 = vsel %vm55, %v619, 0.0
  %v699 = vsel %vm56, %v655, 0.0
  %v700 = vsel %vm55, %v620, 0.0
  %v701 = vsel %vm56, %v656, 0.0
  %v702 = vsel %vm55, %v621, 0.0
  %v703 = vsel %vm56, %v657, 0.0
  %v704 = vsel %vm55, %v622, 0.0
  %v705 = vsel %vm56, %v658, 0.0
  %v706 = vsel %vm55, %v623, 0.0
  %v707 = vsel %vm56, %v659, 0.0
  %v708 = vsel %vm55, %v624, 0.0
  %v709 = vsel %vm56, %v660, 0.0
  %v710 = vsel %vm55, %v625, 0.0
  %v711 = vsel %vm56, %v661, 0.0
  %v712 = vsel %vm55, %v626, 0.0
  %v713 = vsel %vm56, %v662, 0.0
  %v714 = vsel %vm55, %v627, 0.0
  %v715 = vsel %vm56, %v663, 0.0
  %v716 = vsel %vm55, %v628, 0.0
  %v717 = vsel %vm56, %v664, 0.0
  %v718 = vsel %vm55, %v629, 0.0
  %v719 = vsel %vm56, %v665, 0.0
  %v720 = vsel %vm55, %v630, 0.0
  %v721 = vsel %vm56, %v666, 0.0
  %v722 = vsel %vm55, %v631, 0.0
  %v723 = vsel %vm56, %v667, 0.0
  %v724 = vsel %vm55, %v632, 0.0
  %v725 = vsel %vm56, %v668, 0.0
  %v726 = vsel %vm55, %v633, 0.0
  %v727 = vsel %vm56, %v669, 0.0
  %v728 = vsel %vm55, %v634, 0.0
  %v729 = vsel %vm56, %v670, 0.0
  %v730 = vsel %vm55, %v635, 0.0
  %v731 = vsel %vm56, %v671, 0.0
  %v732 = vsel %vm55, %v636, 0.0
  %v733 = vsel %vm56, %v672, 0.0
  %v734 = vsel %vm55, %v637, 0.0
  %v735 = vsel %vm56, %v673, 0.0
  %v736 = vsel %vm55, %v638, 0.0
  %v737 = vsel %vm56, %v674, 0.0
  %v738 = vsel %vm55, %v639, 0.0
  %v739 = vsel %vm56, %v675, 0.0
  %v740 = vsel %vm55, %v640, 0.0
  %v741 = vsel %vm56, %v676, 0.0
  %v742 = vsel %vm55, %v641, 0.0
  %v743 = vsel %vm56, %v677, 0.0
  %v744 = vsel %vm55, %v642, 0.0
  %v745 = vsel %vm56, %v678, 0.0
  %v746 = vsel %vm55, %v643, 0.0
  %v747 = vsel %vm56, %v679, 0.0
  %v748 = vsel %vm55, %v644, 0.0
  %v749 = vsel %vm56, %v680, 0.0
  %v750 = vsel %vm55, %v645, 0.0
  %v751 = vsel %vm56, %v681, 0.0
  %v752 = vsel %vm55, %v646, 0.0
  %v753 = vsel %vm56, %v682, 0.0
  %v754 = vsel %vm55, %v647, 0.0
  %v755 = vsel %vm56, %v683, 0.0
  %v756 = vlaneseq
  %v757 = vshrl.u32 %v756, 7
  %v758 = vsub.s32 0, %v757
  %v759 = vrot.slane %v30, %v758
  %v760 = vmul.f32 %v467, %v759
  %v761 = vmul.f32 %v468, %v759
  %v762 = vmul.f32 %v469, %v759
  %v763 = vmul.f32 %v470, %v759
  %v764 = vmul.f32 %v471, %v759
  %v765 = vmul.f32 %v472, %v759
  %v766 = vmul.f32 %v473, %v759
  %v767 = vmul.f32 %v474, %v759
  %v768 = vmul.f32 %v475, %v759
  %v769 = vmul.f32 %v476, %v759
  %v770 = vmul.f32 %v477, %v759
  %v771 = vmul.f32 %v478, %v759
  %v772 = vmul.f32 %v479, %v759
  %v773 = vmul.f32 %v480, %v759
  %v774 = vmul.f32 %v481, %v759
  %v775 = vmul.f32 %v482, %v759
  %v776 = vmul.f32 %v483, %v759
  %v777 = vmul.f32 %v484, %v759
  %v778 = vmul.f32 %v485, %v759
  %v779 = vmul.f32 %v486, %v759
  %v780 = vmul.f32 %v487, %v759
  %v781 = vmul.f32 %v488, %v759
  %v782 = vmul.f32 %v489, %v759
  %v783 = vmul.f32 %v490, %v759
  %v784 = vmul.f32 %v491, %v759
  %v785 = vmul.f32 %v492, %v759
  %v786 = vmul.f32 %v493, %v759
  %v787 = vmul.f32 %v494, %v759
  %v788 = vmul.f32 %v495, %v759
  %v789 = vmul.f32 %v496, %v759
  %v790 = vmul.f32 %v497, %v759
  %v791 = vmul.f32 %v498, %v759
  %v792 = vmul.f32 %v503, %v759
  %v793 = vmul.f32 %v504, %v759
  %v794 = vmul.f32 %v505, %v759
  %v795 = vmul.f32 %v506, %v759
  %v796 = vmul.f32 %v507, %v759
  %v797 = vmul.f32 %v508, %v759
  %v798 = vmul.f32 %v509, %v759
  %v799 = vmul.f32 %v510, %v759
  %v800 = vmul.f32 %v511, %v759
  %v801 = vmul.f32 %v512, %v759
  %v802 = vmul.f32 %v513, %v759
  %v803 = vmul.f32 %v514, %v759
  %v804 = vmul.f32 %v515, %v759
  %v805 = vmul.f32 %v516, %v759
  %v806 = vmul.f32 %v517, %v759
  %v807 = vmul.f32 %v518, %v759
  %v808 = vmul.f32 %v519, %v759
  %v809 = vmul.f32 %v520, %v759
  %v810 = vmul.f32 %v521, %v759
  %v811 = vmul.f32 %v522, %v759
  %v812 = vmul.f32 %v523, %v759
  %v813 = vmul.f32 %v524, %v759
  %v814 = vmul.f32 %v525, %v759
  %v815 = vmul.f32 %v526, %v759
  %v816 = vmul.f32 %v527, %v759
  %v817 = vmul.f32 %v528, %v759
  %v818 = vmul.f32 %v529, %v759
  %v819 = vmul.f32 %v530, %v759
  %v820 = vmul.f32 %v531, %v759
  %v821 = vmul.f32 %v532, %v759
  %v822 = vmul.f32 %v533, %v759
  %v823 = vmul.f32 %v534, %v759
  %v824 = vlaneseq
  %v825 = vshrl.u32 %v824, 7
  %v826 = vsub.s32 1, %v825
  %v827 = vrot.slane %v30, %v826
  %v828 = vmul.f32 %v250, %v827
  %v829 = vmul.f32 %v251, %v827
  %v830 = vmul.f32 %v252, %v827
  %v831 = vmul.f32 %v253, %v827
  %v832 = vmul.f32 %v254, %v827
  %v833 = vmul.f32 %v255, %v827
  %v834 = vmul.f32 %v256, %v827
  %v835 = vmul.f32 %v257, %v827
  %v836 = vmul.f32 %v258, %v827
  %v837 = vmul.f32 %v259, %v827
  %v838 = vmul.f32 %v260, %v827
  %v839 = vmul.f32 %v261, %v827
  %v840 = vmul.f32 %v262, %v827
  %v841 = vmul.f32 %v263, %v827
  %v842 = vmul.f32 %v264, %v827
  %v843 = vmul.f32 %v265, %v827
  %v844 = vmul.f32 %v266, %v827
  %v845 = vmul.f32 %v267, %v827
  %v846 = vmul.f32 %v268, %v827
  %v847 = vmul.f32 %v269, %v827
  %v848 = vmul.f32 %v270, %v827
  %v849 = vmul.f32 %v271, %v827
  %v850 = vmul.f32 %v272, %v827
  %v851 = vmul.f32 %v273, %v827
  %v852 = vmul.f32 %v274, %v827
  %v853 = vmul.f32 %v275, %v827
  %v854 = vmul.f32 %v276, %v827
  %v855 = vmul.f32 %v277, %v827
  %v856 = vmul.f32 %v278, %v827
  %v857 = vmul.f32 %v279, %v827
  %v858 = vmul.f32 %v280, %v827
  %v859 = vmul.f32 %v281, %v827
  %v860 = vmul.f32 %v286, %v827
  %v861 = vmul.f32 %v287, %v827
  %v862 = vmul.f32 %v288, %v827
  %v863 = vmul.f32 %v289, %v827
  %v864 = vmul.f32 %v290, %v827
  %v865 = vmul.f32 %v291, %v827
  %v866 = vmul.f32 %v292, %v827
  %v867 = vmul.f32 %v293, %v827
  %v868 = vmul.f32 %v294, %v827
  %v869 = vmul.f32 %v295, %v827
  %v870 = vmul.f32 %v296, %v827
  %v871 = vmul.f32 %v297, %v827
  %v872 = vmul.f32 %v298, %v827
  %v873 = vmul.f32 %v299, %v827
  %v874 = vmul.f32 %v300, %v827
  %v875 = vmul.f32 %v301, %v827
  %v876 = vmul.f32 %v302, %v827
  %v877 = vmul.f32 %v303, %v827
  %v878 = vmul.f32 %v304, %v827
  %v879 = vmul.f32 %v305, %v827
  %v880 = vmul.f32 %v306, %v827
  %v881 = vmul.f32 %v307, %v827
  %v882 = vmul.f32 %v308, %v827
  %v883 = vmul.f32 %v309, %v827
  %v884 = vmul.f32 %v310, %v827
  %v885 = vmul.f32 %v311, %v827
  %v886 = vmul.f32 %v312, %v827
  %v887 = vmul.f32 %v313, %v827
  %v888 = vmul.f32 %v314, %v827
  %v889 = vmul.f32 %v315, %v827
  %v890 = vmul.f32 %v316, %v827
  %v891 = vmul.f32 %v317, %v827
  %v892 = vadd.f32 %v760, %v828
  %v893 = vadd.f32 %v761, %v829
  %v894 = vadd.f32 %v762, %v830
  %v895 = vadd.f32 %v763, %v831
  %v896 = vadd.f32 %v764, %v832
  %v897 = vadd.f32 %v765, %v833
  %v898 = vadd.f32 %v766, %v834
  %v899 = vadd.f32 %v767, %v835
  %v900 = vadd.f32 %v768, %v836
  %v901 = vadd.f32 %v769, %v837
  %v902 = vadd.f32 %v770, %v838
  %v903 = vadd.f32 %v771, %v839
  %v904 = vadd.f32 %v772, %v840
  %v905 = vadd.f32 %v773, %v841
  %v906 = vadd.f32 %v774, %v842
  %v907 = vadd.f32 %v775, %v843
  %v908 = vadd.f32 %v776, %v844
  %v909 = vadd.f32 %v777, %v845
  %v910 = vadd.f32 %v778, %v846
  %v911 = vadd.f32 %v779, %v847
  %v912 = vadd.f32 %v780, %v848
  %v913 = vadd.f32 %v781, %v849
  %v914 = vadd.f32 %v782, %v850
  %v915 = vadd.f32 %v783, %v851
  %v916 = vadd.f32 %v784, %v852
  %v917 = vadd.f32 %v785, %v853
  %v918 = vadd.f32 %v786, %v854
  %v919 = vadd.f32 %v787, %v855
  %v920 = vadd.f32 %v788, %v856
  %v921 = vadd.f32 %v789, %v857
  %v922 = vadd.f32 %v790, %v858
  %v923 = vadd.f32 %v791, %v859
  %v924 = vadd.f32 %v792, %v860
  %v925 = vadd.f32 %v793, %v861
  %v926 = vadd.f32 %v794, %v862
  %v927 = vadd.f32 %v795, %v863
  %v928 = vadd.f32 %v796, %v864
  %v929 = vadd.f32 %v797, %v865
  %v930 = vadd.f32 %v798, %v866
  %v931 = vadd.f32 %v799, %v867
  %v932 = vadd.f32 %v800, %v868
  %v933 = vadd.f32 %v801, %v869
  %v934 = vadd.f32 %v802, %v870
  %v935 = vadd.f32 %v803, %v871
  %v936 = vadd.f32 %v804, %v872
  %v937 = vadd.f32 %v805, %v873
  %v938 = vadd.f32 %v806, %v874
  %v939 = vadd.f32 %v807, %v875
  %v940 = vadd.f32 %v808, %v876
  %v941 = vadd.f32 %v809, %v877
  %v942 = vadd.f32 %v810, %v878
  %v943 = vadd.f32 %v811, %v879
  %v944 = vadd.f32 %v812, %v880
  %v945 = vadd.f32 %v813, %v881
  %v946 = vadd.f32 %v814, %v882
  %v947 = vadd.f32 %v815, %v883
  %v948 = vadd.f32 %v816, %v884
  %v949 = vadd.f32 %v817, %v885
  %v950 = vadd.f32 %v818, %v886
  %v951 = vadd.f32 %v819, %v887
  %v952 = vadd.f32 %v820, %v888
  %v953 = vadd.f32 %v821, %v889
  %v954 = vadd.f32 %v822, %v890
  %v955 = vadd.f32 %v823, %v891
  %v956 = vlaneseq
  %v957 = vshrl.u32 %v956, 7
  %v958 = vsub.s32 2, %v957
  %v959 = vrot.slane %v30, %v958
  %v960 = vmul.f32 %v684, %v959
  %v961 = vmul.f32 %v685, %v959
  %v962 = vmul.f32 %v686, %v959
  %v963 = vmul.f32 %v687, %v959
  %v964 = vmul.f32 %v688, %v959
  %v965 = vmul.f32 %v689, %v959
  %v966 = vmul.f32 %v690, %v959
  %v967 = vmul.f32 %v691, %v959
  %v968 = vmul.f32 %v692, %v959
  %v969 = vmul.f32 %v693, %v959
  %v970 = vmul.f32 %v694, %v959
  %v971 = vmul.f32 %v695, %v959
  %v972 = vmul.f32 %v696, %v959
  %v973 = vmul.f32 %v697, %v959
  %v974 = vmul.f32 %v698, %v959
  %v975 = vmul.f32 %v699, %v959
  %v976 = vmul.f32 %v700, %v959
  %v977 = vmul.f32 %v701, %v959
  %v978 = vmul.f32 %v702, %v959
  %v979 = vmul.f32 %v703, %v959
  %v980 = vmul.f32 %v704, %v959
  %v981 = vmul.f32 %v705, %v959
  %v982 = vmul.f32 %v706, %v959
  %v983 = vmul.f32 %v707, %v959
  %v984 = vmul.f32 %v708, %v959
  %v985 = vmul.f32 %v709, %v959
  %v986 = vmul.f32 %v710, %v959
  %v987 = vmul.f32 %v711, %v959
  %v988 = vmul.f32 %v712, %v959
  %v989 = vmul.f32 %v713, %v959
  %v990 = vmul.f32 %v714, %v959
  %v991 = vmul.f32 %v715, %v959
  %v992 = vmul.f32 %v720, %v959
  %v993 = vmul.f32 %v721, %v959
  %v994 = vmul.f32 %v722, %v959
  %v995 = vmul.f32 %v723, %v959
  %v996 = vmul.f32 %v724, %v959
  %v997 = vmul.f32 %v725, %v959
  %v998 = vmul.f32 %v726, %v959
  %v999 = vmul.f32 %v727, %v959
  %v1000 = vmul.f32 %v728, %v959
  %v1001 = vmul.f32 %v729, %v959
  %v1002 = vmul.f32 %v730, %v959
  %v1003 = vmul.f32 %v731, %v959
  %v1004 = vmul.f32 %v732, %v959
  %v1005 = vmul.f32 %v733, %v959
  %v1006 = vmul.f32 %v734, %v959
  %v1007 = vmul.f32 %v735, %v959
  %v1008 = vmul.f32 %v736, %v959
  %v1009 = vmul.f32 %v737, %v959
  %v1010 = vmul.f32 %v738, %v959
  %v1011 = vmul.f32 %v739, %v959
  %v1012 = vmul.f32 %v740, %v959
  %v1013 = vmul.f32 %v741, %v959
  %v1014 = vmul.f32 %v742, %v959
  %v1015 = vmul.f32 %v743, %v959
  %v1016 = vmul.f32 %v744, %v959
  %v1017 = vmul.f32 %v745, %v959
  %v1018 = vmul.f32 %v746, %v959
  %v1019 = vmul.f32 %v747, %v959
  %v1020 = vmul.f32 %v748, %v959
  %v1021 = vmul.f32 %v749, %v959
  %v1022 = vmul.f32 %v750, %v959
  %v1023 = vmul.f32 %v751, %v959
  %v1024 = vadd.f32 %v892, %v960
  %v1025 = vadd.f32 %v893, %v961
  %v1026 = vadd.f32 %v894, %v962
  %v1027 = vadd.f32 %v895, %v963
  %v1028 = vadd.f32 %v896, %v964
  %v1029 = vadd.f32 %v897, %v965
  %v1030 = vadd.f32 %v898, %v966
  %v1031 = vadd.f32 %v899, %v967
  %v1032 = vadd.f32 %v900, %v968
  %v1033 = vadd.f32 %v901, %v969
  %v1034 = vadd.f32 %v902, %v970
  %v1035 = vadd.f32 %v903, %v971
  %v1036 = vadd.f32 %v904, %v972
  %v1037 = vadd.f32 %v905, %v973
  %v1038 = vadd.f32 %v906, %v974
  %v1039 = vadd.f32 %v907, %v975
  %v1040 = vadd.f32 %v908, %v976
  %v1041 = vadd.f32 %v909, %v977
  %v1042 = vadd.f32 %v910, %v978
  %v1043 = vadd.f32 %v911, %v979
  %v1044 = vadd.f32 %v912, %v980
  %v1045 = vadd.f32 %v913, %v981
  %v1046 = vadd.f32 %v914, %v982
  %v1047 = vadd.f32 %v915, %v983
  %v1048 = vadd.f32 %v916, %v984
  %v1049 = vadd.f32 %v917, %v985
  %v1050 = vadd.f32 %v918, %v986
  %v1051 = vadd.f32 %v919, %v987
  %v1052 = vadd.f32 %v920, %v988
  %v1053 = vadd.f32 %v921, %v989
  %v1054 = vadd.f32 %v922, %v990
  %v1055 = vadd.f32 %v923, %v991
  %v1056 = vadd.f32 %v924, %v992
  %v1057 = vadd.f32 %v925, %v993
  %v1058 = vadd.f32 %v926, %v994
  %v1059 = vadd.f32 %v927, %v995
  %v1060 = vadd.f32 %v928, %v996
  %v1061 = vadd.f32 %v929, %v997
  %v1062 = vadd.f32 %v930, %v998
  %v1063 = vadd.f32 %v931, %v999
  %v1064 = vadd.f32 %v932, %v1000
  %v1065 = vadd.f32 %v933, %v1001
  %v1066 = vadd.f32 %v934, %v1002
  %v1067 = vadd.f32 %v935, %v1003
  %v1068 = vadd.f32 %v936, %v1004
  %v1069 = vadd.f32 %v937, %v1005
  %v1070 = vadd.f32 %v938, %v1006
  %v1071 = vadd.f32 %v939, %v1007
  %v1072 = vadd.f32 %v940, %v1008
  %v1073 = vadd.f32 %v941, %v1009
  %v1074 = vadd.f32 %v942, %v1010
  %v1075 = vadd.f32 %v943, %v1011
  %v1076 = vadd.f32 %v944, %v1012
  %v1077 = vadd.f32 %v945, %v1013
  %v1078 = vadd.f32 %v946, %v1014
  %v1079 = vadd.f32 %v947, %v1015
  %v1080 = vadd.f32 %v948, %v1016
  %v1081 = vadd.f32 %v949, %v1017
  %v1082 = vadd.f32 %v950, %v1018
  %v1083 = vadd.f32 %v951, %v1019
  %v1084 = vadd.f32 %v952, %v1020
  %v1085 = vadd.f32 %v953, %v1021
  %v1086 = vadd.f32 %v954, %v1022
  %v1087 = vadd.f32 %v955, %v1023
  %v1088 = vlaneseq
  %v1089 = vshrl.u32 %v1088, 7
  %v1090 = vsub.s32 3, %v1089
  %v1091 = vrot.slane %v30, %v1090
  %v1092 = vmul.f32 %v469, %v1091
  %v1093 = vmul.f32 %v470, %v1091
  %v1094 = vmul.f32 %v471, %v1091
  %v1095 = vmul.f32 %v472, %v1091
  %v1096 = vmul.f32 %v473, %v1091
  %v1097 = vmul.f32 %v474, %v1091
  %v1098 = vmul.f32 %v475, %v1091
  %v1099 = vmul.f32 %v476, %v1091
  %v1100 = vmul.f32 %v477, %v1091
  %v1101 = vmul.f32 %v478, %v1091
  %v1102 = vmul.f32 %v479, %v1091
  %v1103 = vmul.f32 %v480, %v1091
  %v1104 = vmul.f32 %v481, %v1091
  %v1105 = vmul.f32 %v482, %v1091
  %v1106 = vmul.f32 %v483, %v1091
  %v1107 = vmul.f32 %v484, %v1091
  %v1108 = vmul.f32 %v485, %v1091
  %v1109 = vmul.f32 %v486, %v1091
  %v1110 = vmul.f32 %v487, %v1091
  %v1111 = vmul.f32 %v488, %v1091
  %v1112 = vmul.f32 %v489, %v1091
  %v1113 = vmul.f32 %v490, %v1091
  %v1114 = vmul.f32 %v491, %v1091
  %v1115 = vmul.f32 %v492, %v1091
  %v1116 = vmul.f32 %v493, %v1091
  %v1117 = vmul.f32 %v494, %v1091
  %v1118 = vmul.f32 %v495, %v1091
  %v1119 = vmul.f32 %v496, %v1091
  %v1120 = vmul.f32 %v497, %v1091
  %v1121 = vmul.f32 %v498, %v1091
  %v1122 = vmul.f32 %v499, %v1091
  %v1123 = vmul.f32 %v500, %v1091
  %v1124 = vmul.f32 %v505, %v1091
  %v1125 = vmul.f32 %v506, %v1091
  %v1126 = vmul.f32 %v507, %v1091
  %v1127 = vmul.f32 %v508, %v1091
  %v1128 = vmul.f32 %v509, %v1091
  %v1129 = vmul.f32 %v510, %v1091
  %v1130 = vmul.f32 %v511, %v1091
  %v1131 = vmul.f32 %v512, %v1091
  %v1132 = vmul.f32 %v513, %v1091
  %v1133 = vmul.f32 %v514, %v1091
  %v1134 = vmul.f32 %v515, %v1091
  %v1135 = vmul.f32 %v516, %v1091
  %v1136 = vmul.f32 %v517, %v1091
  %v1137 = vmul.f32 %v518, %v1091
  %v1138 = vmul.f32 %v519, %v1091
  %v1139 = vmul.f32 %v520, %v1091
  %v1140 = vmul.f32 %v521, %v1091
  %v1141 = vmul.f32 %v522, %v1091
  %v1142 = vmul.f32 %v523, %v1091
  %v1143 = vmul.f32 %v524, %v1091
  %v1144 = vmul.f32 %v525, %v1091
  %v1145 = vmul.f32 %v526, %v1091
  %v1146 = vmul.f32 %v527, %v1091
  %v1147 = vmul.f32 %v528, %v1091
  %v1148 = vmul.f32 %v529, %v1091
  %v1149 = vmul.f32 %v530, %v1091
  %v1150 = vmul.f32 %v531, %v1091
  %v1151 = vmul.f32 %v532, %v1091
  %v1152 = vmul.f32 %v533, %v1091
  %v1153 = vmul.f32 %v534, %v1091
  %v1154 = vmul.f32 %v535, %v1091
  %v1155 = vmul.f32 %v536, %v1091
  %v1156 = vlaneseq
  %v1157 = vshrl.u32 %v1156, 7
  %v1158 = vsub.s32 4, %v1157
  %v1159 = vrot.slane %v30, %v1158
  %v1160 = vmul.f32 %v252, %v1159
  %v1161 = vmul.f32 %v253, %v1159
  %v1162 = vmul.f32 %v254, %v1159
  %v1163 = vmul.f32 %v255, %v1159
  %v1164 = vmul.f32 %v256, %v1159
  %v1165 = vmul.f32 %v257, %v1159
  %v1166 = vmul.f32 %v258, %v1159
  %v1167 = vmul.f32 %v259, %v1159
  %v1168 = vmul.f32 %v260, %v1159
  %v1169 = vmul.f32 %v261, %v1159
  %v1170 = vmul.f32 %v262, %v1159
  %v1171 = vmul.f32 %v263, %v1159
  %v1172 = vmul.f32 %v264, %v1159
  %v1173 = vmul.f32 %v265, %v1159
  %v1174 = vmul.f32 %v266, %v1159
  %v1175 = vmul.f32 %v267, %v1159
  %v1176 = vmul.f32 %v268, %v1159
  %v1177 = vmul.f32 %v269, %v1159
  %v1178 = vmul.f32 %v270, %v1159
  %v1179 = vmul.f32 %v271, %v1159
  %v1180 = vmul.f32 %v272, %v1159
  %v1181 = vmul.f32 %v273, %v1159
  %v1182 = vmul.f32 %v274, %v1159
  %v1183 = vmul.f32 %v275, %v1159
  %v1184 = vmul.f32 %v276, %v1159
  %v1185 = vmul.f32 %v277, %v1159
  %v1186 = vmul.f32 %v278, %v1159
  %v1187 = vmul.f32 %v279, %v1159
  %v1188 = vmul.f32 %v280, %v1159
  %v1189 = vmul.f32 %v281, %v1159
  %v1190 = vmul.f32 %v282, %v1159
  %v1191 = vmul.f32 %v283, %v1159
  %v1192 = vmul.f32 %v288, %v1159
  %v1193 = vmul.f32 %v289, %v1159
  %v1194 = vmul.f32 %v290, %v1159
  %v1195 = vmul.f32 %v291, %v1159
  %v1196 = vmul.f32 %v292, %v1159
  %v1197 = vmul.f32 %v293, %v1159
  %v1198 = vmul.f32 %v294, %v1159
  %v1199 = vmul.f32 %v295, %v1159
  %v1200 = vmul.f32 %v296, %v1159
  %v1201 = vmul.f32 %v297, %v1159
  %v1202 = vmul.f32 %v298, %v1159
  %v1203 = vmul.f32 %v299, %v1159
  %v1204 = vmul.f32 %v300, %v1159
  %v1205 = vmul.f32 %v301, %v1159
  %v1206 = vmul.f32 %v302, %v1159
  %v1207 = vmul.f32 %v303, %v1159
  %v1208 = vmul.f32 %v304, %v1159
  %v1209 = vmul.f32 %v305, %v1159
  %v1210 = vmul.f32 %v306, %v1159
  %v1211 = vmul.f32 %v307, %v1159
  %v1212 = vmul.f32 %v308, %v1159
  %v1213 = vmul.f32 %v309, %v1159
  %v1214 = vmul.f32 %v310, %v1159
  %v1215 = vmul.f32 %v311, %v1159
  %v1216 = vmul.f32 %v312, %v1159
  %v1217 = vmul.f32 %v313, %v1159
  %v1218 = vmul.f32 %v314, %v1159
  %v1219 = vmul.f32 %v315, %v1159
  %v1220 = vmul.f32 %v316, %v1159
  %v1221 = vmul.f32 %v317, %v1159
  %v1222 = vmul.f32 %v318, %v1159
  %v1223 = vmul.f32 %v319, %v1159
  %v1224 = vadd.f32 %v1092, %v1160
  %v1225 = vadd.f32 %v1093, %v1161
  %v1226 = vadd.f32 %v1094, %v1162
  %v1227 = vadd.f32 %v1095, %v1163
  %v1228 = vadd.f32 %v1096, %v1164
  %v1229 = vadd.f32 %v1097, %v1165
  %v1230 = vadd.f32 %v1098, %v1166
  %v1231 = vadd.f32 %v1099, %v1167
  %v1232 = vadd.f32 %v1100, %v1168
  %v1233 = vadd.f32 %v1101, %v1169
  %v1234 = vadd.f32 %v1102, %v1170
  %v1235 = vadd.f32 %v1103, %v1171
  %v1236 = vadd.f32 %v1104, %v1172
  %v1237 = vadd.f32 %v1105, %v1173
  %v1238 = vadd.f32 %v1106, %v1174
  %v1239 = vadd.f32 %v1107, %v1175
  %v1240 = vadd.f32 %v1108, %v1176
  %v1241 = vadd.f32 %v1109, %v1177
  %v1242 = vadd.f32 %v1110, %v1178
  %v1243 = vadd.f32 %v1111, %v1179
  %v1244 = vadd.f32 %v1112, %v1180
  %v1245 = vadd.f32 %v1113, %v1181
  %v1246 = vadd.f32 %v1114, %v1182
  %v1247 = vadd.f32 %v1115, %v1183
  %v1248 = vadd.f32 %v1116, %v1184
  %v1249 = vadd.f32 %v1117, %v1185
  %v1250 = vadd.f32 %v1118, %v1186
  %v1251 = vadd.f32 %v1119, %v1187
  %v1252 = vadd.f32 %v1120, %v1188
  %v1253 = vadd.f32 %v1121, %v1189
  %v1254 = vadd.f32 %v1122, %v1190
  %v1255 = vadd.f32 %v1123, %v1191
  %v1256 = vadd.f32 %v1124, %v1192
  %v1257 = vadd.f32 %v1125, %v1193
  %v1258 = vadd.f32 %v1126, %v1194
  %v1259 = vadd.f32 %v1127, %v1195
  %v1260 = vadd.f32 %v1128, %v1196
  %v1261 = vadd.f32 %v1129, %v1197
  %v1262 = vadd.f32 %v1130, %v1198
  %v1263 = vadd.f32 %v1131, %v1199
  %v1264 = vadd.f32 %v1132, %v1200
  %v1265 = vadd.f32 %v1133, %v1201
  %v1266 = vadd.f32 %v1134, %v1202
  %v1267 = vadd.f32 %v1135, %v1203
  %v1268 = vadd.f32 %v1136, %v1204
  %v1269 = vadd.f32 %v1137, %v1205
  %v1270 = vadd.f32 %v1138, %v1206
  %v1271 = vadd.f32 %v1139, %v1207
  %v1272 = vadd.f32 %v1140, %v1208
  %v1273 = vadd.f32 %v1141, %v1209
  %v1274 = vadd.f32 %v1142, %v1210
  %v1275 = vadd.f32 %v1143, %v1211
  %v1276 = vadd.f32 %v1144, %v1212
  %v1277 = vadd.f32 %v1145, %v1213
  %v1278 = vadd.f32 %v1146, %v1214
  %v1279 = vadd.f32 %v1147, %v1215
  %v1280 = vadd.f32 %v1148, %v1216
  %v1281 = vadd.f32 %v1149, %v1217
  %v1282 = vadd.f32 %v1150, %v1218
  %v1283 = vadd.f32 %v1151, %v1219
  %v1284 = vadd.f32 %v1152, %v1220
  %v1285 = vadd.f32 %v1153, %v1221
  %v1286 = vadd.f32 %v1154, %v1222
  %v1287 = vadd.f32 %v1155, %v1223
  %v1288 = vlaneseq
  %v1289 = vshrl.u32 %v1288, 7
  %v1290 = vsub.s32 5, %v1289
  %v1291 = vrot.slane %v30, %v1290
  %v1292 = vmul.f32 %v686, %v1291
  %v1293 = vmul.f32 %v687, %v1291
  %v1294 = vmul.f32 %v688, %v1291
  %v1295 = vmul.f32 %v689, %v1291
  %v1296 = vmul.f32 %v690, %v1291
  %v1297 = vmul.f32 %v691, %v1291
  %v1298 = vmul.f32 %v692, %v1291
  %v1299 = vmul.f32 %v693, %v1291
  %v1300 = vmul.f32 %v694, %v1291
  %v1301 = vmul.f32 %v695, %v1291
  %v1302 = vmul.f32 %v696, %v1291
  %v1303 = vmul.f32 %v697, %v1291
  %v1304 = vmul.f32 %v698, %v1291
  %v1305 = vmul.f32 %v699, %v1291
  %v1306 = vmul.f32 %v700, %v1291
  %v1307 = vmul.f32 %v701, %v1291
  %v1308 = vmul.f32 %v702, %v1291
  %v1309 = vmul.f32 %v703, %v1291
  %v1310 = vmul.f32 %v704, %v1291
  %v1311 = vmul.f32 %v705, %v1291
  %v1312 = vmul.f32 %v706, %v1291
  %v1313 = vmul.f32 %v707, %v1291
  %v1314 = vmul.f32 %v708, %v1291
  %v1315 = vmul.f32 %v709, %v1291
  %v1316 = vmul.f32 %v710, %v1291
  %v1317 = vmul.f32 %v711, %v1291
  %v1318 = vmul.f32 %v712, %v1291
  %v1319 = vmul.f32 %v713, %v1291
  %v1320 = vmul.f32 %v714, %v1291
  %v1321 = vmul.f32 %v715, %v1291
  %v1322 = vmul.f32 %v716, %v1291
  %v1323 = vmul.f32 %v717, %v1291
  %v1324 = vmul.f32 %v722, %v1291
  %v1325 = vmul.f32 %v723, %v1291
  %v1326 = vmul.f32 %v724, %v1291
  %v1327 = vmul.f32 %v725, %v1291
  %v1328 = vmul.f32 %v726, %v1291
  %v1329 = vmul.f32 %v727, %v1291
  %v1330 = vmul.f32 %v728, %v1291
  %v1331 = vmul.f32 %v729, %v1291
  %v1332 = vmul.f32 %v730, %v1291
  %v1333 = vmul.f32 %v731, %v1291
  %v1334 = vmul.f32 %v732, %v1291
  %v1335 = vmul.f32 %v733, %v1291
  %v1336 = vmul.f32 %v734, %v1291
  %v1337 = vmul.f32 %v735, %v1291
  %v1338 = vmul.f32 %v736, %v1291
  %v1339 = vmul.f32 %v737, %v1291
  %v1340 = vmul.f32 %v738, %v1291
  %v1341 = vmul.f32 %v739, %v1291
  %v1342 = vmul.f32 %v740, %v1291
  %v1343 = vmul.f32 %v741, %v1291
  %v1344 = vmul.f32 %v742, %v1291
  %v1345 = vmul.f32 %v743, %v1291
  %v1346 = vmul.f32 %v744, %v1291
  %v1347 = vmul.f32 %v745, %v1291
  %v1348 = vmul.f32 %v746, %v1291
  %v1349 = vmul.f32 %v747, %v1291
  %v1350 = vmul.f32 %v748, %v1291
  %v1351 = vmul.f32 %v749, %v1291
  %v1352 = vmul.f32 %v750, %v1291
  %v1353 = vmul.f32 %v751, %v1291
  %v1354 = vmul.f32 %v752, %v1291
  %v1355 = vmul.f32 %v753, %v1291
  %v1356 = vadd.f32 %v1224, %v1292
  %v1357 = vadd.f32 %v1225, %v1293
  %v1358 = vadd.f32 %v1226, %v1294
  %v1359 = vadd.f32 %v1227, %v1295
  %v1360 = vadd.f32 %v1228, %v1296
  %v1361 = vadd.f32 %v1229, %v1297
  %v1362 = vadd.f32 %v1230, %v1298
  %v1363 = vadd.f32 %v1231, %v1299
  %v1364 = vadd.f32 %v1232, %v1300
  %v1365 = vadd.f32 %v1233, %v1301
  %v1366 = vadd.f32 %v1234, %v1302
  %v1367 = vadd.f32 %v1235, %v1303
  %v1368 = vadd.f32 %v1236, %v1304
  %v1369 = vadd.f32 %v1237, %v1305
  %v1370 = vadd.f32 %v1238, %v1306
  %v1371 = vadd.f32 %v1239, %v1307
  %v1372 = vadd.f32 %v1240, %v1308
  %v1373 = vadd.f32 %v1241, %v1309
  %v1374 = vadd.f32 %v1242, %v1310
  %v1375 = vadd.f32 %v1243, %v1311
  %v1376 = vadd.f32 %v1244, %v1312
  %v1377 = vadd.f32 %v1245, %v1313
  %v1378 = vadd.f32 %v1246, %v1314
  %v1379 = vadd.f32 %v1247, %v1315
  %v1380 = vadd.f32 %v1248, %v1316
  %v1381 = vadd.f32 %v1249, %v1317
  %v1382 = vadd.f32 %v1250, %v1318
  %v1383 = vadd.f32 %v1251, %v1319
  %v1384 = vadd.f32 %v1252, %v1320
  %v1385 = vadd.f32 %v1253, %v1321
  %v1386 = vadd.f32 %v1254, %v1322
  %v1387 = vadd.f32 %v1255, %v1323
  %v1388 = vadd.f32 %v1256, %v1324
  %v1389 = vadd.f32 %v1257, %v1325
  %v1390 = vadd.f32 %v1258, %v1326
  %v1391 = vadd.f32 %v1259, %v1327
  %v1392 = vadd.f32 %v1260, %v1328
  %v1393 = vadd.f32 %v1261, %v1329
  %v1394 = vadd.f32 %v1262, %v1330
  %v1395 = vadd.f32 %v1263, %v1331
  %v1396 = vadd.f32 %v1264, %v1332
  %v1397 = vadd.f32 %v1265, %v1333
  %v1398 = vadd.f32 %v1266, %v1334
  %v1399 = vadd.f32 %v1267, %v1335
  %v1400 = vadd.f32 %v1268, %v1336
  %v1401 = vadd.f32 %v1269, %v1337
  %v1402 = vadd.f32 %v1270, %v1338
  %v1403 = vadd.f32 %v1271, %v1339
  %v1404 = vadd.f32 %v1272, %v1340
  %v1405 = vadd.f32 %v1273, %v1341
  %v1406 = vadd.f32 %v1274, %v1342
  %v1407 = vadd.f32 %v1275, %v1343
  %v1408 = vadd.f32 %v1276, %v1344
  %v1409 = vadd.f32 %v1277, %v1345
  %v1410 = vadd.f32 %v1278, %v1346
  %v1411 = vadd.f32 %v1279, %v1347
  %v1412 = vadd.f32 %v1280, %v1348
  %v1413 = vadd.f32 %v1281, %v1349
  %v1414 = vadd.f32 %v1282, %v1350
  %v1415 = vadd.f32 %v1283, %v1351
  %v1416 = vadd.f32 %v1284, %v1352
  %v1417 = vadd.f32 %v1285, %v1353
  %v1418 = vadd.f32 %v1286, %v1354
  %v1419 = vadd.f32 %v1287, %v1355
  %v1420 = vadd.f32 %v1024, %v1356
  %v1421 = vadd.f32 %v1025, %v1357
  %v1422 = vadd.f32 %v1026, %v1358
  %v1423 = vadd.f32 %v1027, %v1359
  %v1424 = vadd.f32 %v1028, %v1360
  %v1425 = vadd.f32 %v1029, %v1361
  %v1426 = vadd.f32 %v1030, %v1362
  %v1427 = vadd.f32 %v1031, %v1363
  %v1428 = vadd.f32 %v1032, %v1364
  %v1429 = vadd.f32 %v1033, %v1365
  %v1430 = vadd.f32 %v1034, %v1366
  %v1431 = vadd.f32 %v1035, %v1367
  %v1432 = vadd.f32 %v1036, %v1368
  %v1433 = vadd.f32 %v1037, %v1369
  %v1434 = vadd.f32 %v1038, %v1370
  %v1435 = vadd.f32 %v1039, %v1371
  %v1436 = vadd.f32 %v1040, %v1372
  %v1437 = vadd.f32 %v1041, %v1373
  %v1438 = vadd.f32 %v1042, %v1374
  %v1439 = vadd.f32 %v1043, %v1375
  %v1440 = vadd.f32 %v1044, %v1376
  %v1441 = vadd.f32 %v1045, %v1377
  %v1442 = vadd.f32 %v1046, %v1378
  %v1443 = vadd.f32 %v1047, %v1379
  %v1444 = vadd.f32 %v1048, %v1380
  %v1445 = vadd.f32 %v1049, %v1381
  %v1446 = vadd.f32 %v1050, %v1382
  %v1447 = vadd.f32 %v1051, %v1383
  %v1448 = vadd.f32 %v1052, %v1384
  %v1449 = vadd.f32 %v1053, %v1385
  %v1450 = vadd.f32 %v1054, %v1386
  %v1451 = vadd.f32 %v1055, %v1387
  %v1452 = vadd.f32 %v1056, %v1388
  %v1453 = vadd.f32 %v1057, %v1389
  %v1454 = vadd.f32 %v1058, %v1390
  %v1455 = vadd.f32 %v1059, %v1391
  %v1456 = vadd.f32 %v1060, %v1392
  %v1457 = vadd.f32 %v1061, %v1393
  %v1458 = vadd.f32 %v1062, %v1394
  %v1459 = vadd.f32 %v1063, %v1395
  %v1460 = vadd.f32 %v1064, %v1396
  %v1461 = vadd.f32 %v1065, %v1397
  %v1462 = vadd.f32 %v1066, %v1398
  %v1463 = vadd.f32 %v1067, %v1399
  %v1464 = vadd.f32 %v1068, %v1400
  %v1465 = vadd.f32 %v1069, %v1401
  %v1466 = vadd.f32 %v1070, %v1402
  %v1467 = vadd.f32 %v1071, %v1403
  %v1468 = vadd.f32 %v1072, %v1404
  %v1469 = vadd.f32 %v1073, %v1405
  %v1470 = vadd.f32 %v1074, %v1406
  %v1471 = vadd.f32 %v1075, %v1407
  %v1472 = vadd.f32 %v1076, %v1408
  %v1473 = vadd.f32 %v1077, %v1409
  %v1474 = vadd.f32 %v1078, %v1410
  %v1475 = vadd.f32 %v1079, %v1411
  %v1476 = vadd.f32 %v1080, %v1412
  %v1477 = vadd.f32 %v1081, %v1413
  %v1478 = vadd.f32 %v1082, %v1414
  %v1479 = vadd.f32 %v1083, %v1415
  %v1480 = vadd.f32 %v1084, %v1416
  %v1481 = vadd.f32 %v1085, %v1417
  %v1482 = vadd.f32 %v1086, %v1418
  %v1483 = vadd.f32 %v1087, %v1419
  %v1484 = vlaneseq
  %v1485 = vshrl.u32 %v1484, 7
  %v1486 = vsub.s32 6, %v1485
  %v1487 = vrot.slane %v30, %v1486
  %v1488 = vmul.f32 %v471, %v1487
  %v1489 = vmul.f32 %v472, %v1487
  %v1490 = vmul.f32 %v473, %v1487
  %v1491 = vmul.f32 %v474, %v1487
  %v1492 = vmul.f32 %v475, %v1487
  %v1493 = vmul.f32 %v476, %v1487
  %v1494 = vmul.f32 %v477, %v1487
  %v1495 = vmul.f32 %v478, %v1487
  %v1496 = vmul.f32 %v479, %v1487
  %v1497 = vmul.f32 %v480, %v1487
  %v1498 = vmul.f32 %v481, %v1487
  %v1499 = vmul.f32 %v482, %v1487
  %v1500 = vmul.f32 %v483, %v1487
  %v1501 = vmul.f32 %v484, %v1487
  %v1502 = vmul.f32 %v485, %v1487
  %v1503 = vmul.f32 %v486, %v1487
  %v1504 = vmul.f32 %v487, %v1487
  %v1505 = vmul.f32 %v488, %v1487
  %v1506 = vmul.f32 %v489, %v1487
  %v1507 = vmul.f32 %v490, %v1487
  %v1508 = vmul.f32 %v491, %v1487
  %v1509 = vmul.f32 %v492, %v1487
  %v1510 = vmul.f32 %v493, %v1487
  %v1511 = vmul.f32 %v494, %v1487
  %v1512 = vmul.f32 %v495, %v1487
  %v1513 = vmul.f32 %v496, %v1487
  %v1514 = vmul.f32 %v497, %v1487
  %v1515 = vmul.f32 %v498, %v1487
  %v1516 = vmul.f32 %v499, %v1487
  %v1517 = vmul.f32 %v500, %v1487
  %v1518 = vmul.f32 %v501, %v1487
  %v1519 = vmul.f32 %v502, %v1487
  %v1520 = vmul.f32 %v507, %v1487
  %v1521 = vmul.f32 %v508, %v1487
  %v1522 = vmul.f32 %v509, %v1487
  %v1523 = vmul.f32 %v510, %v1487
  %v1524 = vmul.f32 %v511, %v1487
  %v1525 = vmul.f32 %v512, %v1487
  %v1526 = vmul.f32 %v513, %v1487
  %v1527 = vmul.f32 %v514, %v1487
  %v1528 = vmul.f32 %v515, %v1487
  %v1529 = vmul.f32 %v516, %v1487
  %v1530 = vmul.f32 %v517, %v1487
  %v1531 = vmul.f32 %v518, %v1487
  %v1532 = vmul.f32 %v519, %v1487
  %v1533 = vmul.f32 %v520, %v1487
  %v1534 = vmul.f32 %v521, %v1487
  %v1535 = vmul.f32 %v522, %v1487
  %v1536 = vmul.f32 %v523, %v1487
  %v1537 = vmul.f32 %v524, %v1487
  %v1538 = vmul.f32 %v525, %v1487
  %v1539 = vmul.f32 %v526, %v1487
  %v1540 = vmul.f32 %v527, %v1487
  %v1541 = vmul.f32 %v528, %v1487
  %v1542 = vmul.f32 %v529, %v1487
  %v1543 = vmul.f32 %v530, %v1487
  %v1544 = vmul.f32 %v531, %v1487
  %v1545 = vmul.f32 %v532, %v1487
  %v1546 = vmul.f32 %v533, %v1487
  %v1547 = vmul.f32 %v534, %v1487
  %v1548 = vmul.f32 %v535, %v1487
  %v1549 = vmul.f32 %v536, %v1487
  %v1550 = vmul.f32 %v537, %v1487
  %v1551 = vmul.f32 %v538, %v1487
  %v1552 = vlaneseq
  %v1553 = vshrl.u32 %v1552, 7
  %v1554 = vsub.s32 7, %v1553
  %v1555 = vrot.slane %v30, %v1554
  %v1556 = vmul.f32 %v254, %v1555
  %v1557 = vmul.f32 %v255, %v1555
  %v1558 = vmul.f32 %v256, %v1555
  %v1559 = vmul.f32 %v257, %v1555
  %v1560 = vmul.f32 %v258, %v1555
  %v1561 = vmul.f32 %v259, %v1555
  %v1562 = vmul.f32 %v260, %v1555
  %v1563 = vmul.f32 %v261, %v1555
  %v1564 = vmul.f32 %v262, %v1555
  %v1565 = vmul.f32 %v263, %v1555
  %v1566 = vmul.f32 %v264, %v1555
  %v1567 = vmul.f32 %v265, %v1555
  %v1568 = vmul.f32 %v266, %v1555
  %v1569 = vmul.f32 %v267, %v1555
  %v1570 = vmul.f32 %v268, %v1555
  %v1571 = vmul.f32 %v269, %v1555
  %v1572 = vmul.f32 %v270, %v1555
  %v1573 = vmul.f32 %v271, %v1555
  %v1574 = vmul.f32 %v272, %v1555
  %v1575 = vmul.f32 %v273, %v1555
  %v1576 = vmul.f32 %v274, %v1555
  %v1577 = vmul.f32 %v275, %v1555
  %v1578 = vmul.f32 %v276, %v1555
  %v1579 = vmul.f32 %v277, %v1555
  %v1580 = vmul.f32 %v278, %v1555
  %v1581 = vmul.f32 %v279, %v1555
  %v1582 = vmul.f32 %v280, %v1555
  %v1583 = vmul.f32 %v281, %v1555
  %v1584 = vmul.f32 %v282, %v1555
  %v1585 = vmul.f32 %v283, %v1555
  %v1586 = vmul.f32 %v284, %v1555
  %v1587 = vmul.f32 %v285, %v1555
  %v1588 = vmul.f32 %v290, %v1555
  %v1589 = vmul.f32 %v291, %v1555
  %v1590 = vmul.f32 %v292, %v1555
  %v1591 = vmul.f32 %v293, %v1555
  %v1592 = vmul.f32 %v294, %v1555
  %v1593 = vmul.f32 %v295, %v1555
  %v1594 = vmul.f32 %v296, %v1555
  %v1595 = vmul.f32 %v297, %v1555
  %v1596 = vmul.f32 %v298, %v1555
  %v1597 = vmul.f32 %v299, %v1555
  %v1598 = vmul.f32 %v300, %v1555
  %v1599 = vmul.f32 %v301, %v1555
  %v1600 = vmul.f32 %v302, %v1555
  %v1601 = vmul.f32 %v303, %v1555
  %v1602 = vmul.f32 %v304, %v1555
  %v1603 = vmul.f32 %v305, %v1555
  %v1604 = vmul.f32 %v306, %v1555
  %v1605 = vmul.f32 %v307, %v1555
  %v1606 = vmul.f32 %v308, %v1555
  %v1607 = vmul.f32 %v309, %v1555
  %v1608 = vmul.f32 %v310, %v1555
  %v1609 = vmul.f32 %v311, %v1555
  %v1610 = vmul.f32 %v312, %v1555
  %v1611 = vmul.f32 %v313, %v1555
  %v1612 = vmul.f32 %v314, %v1555
  %v1613 = vmul.f32 %v315, %v1555
  %v1614 = vmul.f32 %v316, %v1555
  %v1615 = vmul.f32 %v317, %v1555
  %v1616 = vmul.f32 %v318, %v1555
  %v1617 = vmul.f32 %v319, %v1555
  %v1618 = vmul.f32 %v320, %v1555
  %v1619 = vmul.f32 %v321, %v1555
  %v1620 = vadd.f32 %v1488, %v1556
  %v1621 = vadd.f32 %v1489, %v1557
  %v1622 = vadd.f32 %v1490, %v1558
  %v1623 = vadd.f32 %v1491, %v1559
  %v1624 = vadd.f32 %v1492, %v1560
  %v1625 = vadd.f32 %v1493, %v1561
  %v1626 = vadd.f32 %v1494, %v1562
  %v1627 = vadd.f32 %v1495, %v1563
  %v1628 = vadd.f32 %v1496, %v1564
  %v1629 = vadd.f32 %v1497, %v1565
  %v1630 = vadd.f32 %v1498, %v1566
  %v1631 = vadd.f32 %v1499, %v1567
  %v1632 = vadd.f32 %v1500, %v1568
  %v1633 = vadd.f32 %v1501, %v1569
  %v1634 = vadd.f32 %v1502, %v1570
  %v1635 = vadd.f32 %v1503, %v1571
  %v1636 = vadd.f32 %v1504, %v1572
  %v1637 = vadd.f32 %v1505, %v1573
  %v1638 = vadd.f32 %v1506, %v1574
  %v1639 = vadd.f32 %v1507, %v1575
  %v1640 = vadd.f32 %v1508, %v1576
  %v1641 = vadd.f32 %v1509, %v1577
  %v1642 = vadd.f32 %v1510, %v1578
  %v1643 = vadd.f32 %v1511, %v1579
  %v1644 = vadd.f32 %v1512, %v1580
  %v1645 = vadd.f32 %v1513, %v1581
  %v1646 = vadd.f32 %v1514, %v1582
  %v1647 = vadd.f32 %v1515, %v1583
  %v1648 = vadd.f32 %v1516, %v1584
  %v1649 = vadd.f32 %v1517, %v1585
  %v1650 = vadd.f32 %v1518, %v1586
  %v1651 = vadd.f32 %v1519, %v1587
  %v1652 = vadd.f32 %v1520, %v1588
  %v1653 = vadd.f32 %v1521, %v1589
  %v1654 = vadd.f32 %v1522, %v1590
  %v1655 = vadd.f32 %v1523, %v1591
  %v1656 = vadd.f32 %v1524, %v1592
  %v1657 = vadd.f32 %v1525, %v1593
  %v1658 = vadd.f32 %v1526, %v1594
  %v1659 = vadd.f32 %v1527, %v1595
  %v1660 = vadd.f32 %v1528, %v1596
  %v1661 = vadd.f32 %v1529, %v1597
  %v1662 = vadd.f32 %v1530, %v1598
  %v1663 = vadd.f32 %v1531, %v1599
  %v1664 = vadd.f32 %v1532, %v1600
  %v1665 = vadd.f32 %v1533, %v1601
  %v1666 = vadd.f32 %v1534, %v1602
  %v1667 = vadd.f32 %v1535, %v1603
  %v1668 = vadd.f32 %v1536, %v1604
  %v1669 = vadd.f32 %v1537, %v1605
  %v1670 = vadd.f32 %v1538, %v1606
  %v1671 = vadd.f32 %v1539, %v1607
  %v1672 = vadd.f32 %v1540, %v1608
  %v1673 = vadd.f32 %v1541, %v1609
  %v1674 = vadd.f32 %v1542, %v1610
  %v1675 = vadd.f32 %v1543, %v1611
  %v1676 = vadd.f32 %v1544, %v1612
  %v1677 = vadd.f32 %v1545, %v1613
  %v1678 = vadd.f32 %v1546, %v1614
  %v1679 = vadd.f32 %v1547, %v1615
  %v1680 = vadd.f32 %v1548, %v1616
  %v1681 = vadd.f32 %v1549, %v1617
  %v1682 = vadd.f32 %v1550, %v1618
  %v1683 = vadd.f32 %v1551, %v1619
  %v1684 = vlaneseq
  %v1685 = vshrl.u32 %v1684, 7
  %v1686 = vsub.s32 0, %v1685
  %v1687 = vrot.slane %v31, %v1686
  %v1688 = vmul.f32 %v688, %v1687
  %v1689 = vmul.f32 %v689, %v1687
  %v1690 = vmul.f32 %v690, %v1687
  %v1691 = vmul.f32 %v691, %v1687
  %v1692 = vmul.f32 %v692, %v1687
  %v1693 = vmul.f32 %v693, %v1687
  %v1694 = vmul.f32 %v694, %v1687
  %v1695 = vmul.f32 %v695, %v1687
  %v1696 = vmul.f32 %v696, %v1687
  %v1697 = vmul.f32 %v697, %v1687
  %v1698 = vmul.f32 %v698, %v1687
  %v1699 = vmul.f32 %v699, %v1687
  %v1700 = vmul.f32 %v700, %v1687
  %v1701 = vmul.f32 %v701, %v1687
  %v1702 = vmul.f32 %v702, %v1687
  %v1703 = vmul.f32 %v703, %v1687
  %v1704 = vmul.f32 %v704, %v1687
  %v1705 = vmul.f32 %v705, %v1687
  %v1706 = vmul.f32 %v706, %v1687
  %v1707 = vmul.f32 %v707, %v1687
  %v1708 = vmul.f32 %v708, %v1687
  %v1709 = vmul.f32 %v709, %v1687
  %v1710 = vmul.f32 %v710, %v1687
  %v1711 = vmul.f32 %v711, %v1687
  %v1712 = vmul.f32 %v712, %v1687
  %v1713 = vmul.f32 %v713, %v1687
  %v1714 = vmul.f32 %v714, %v1687
  %v1715 = vmul.f32 %v715, %v1687
  %v1716 = vmul.f32 %v716, %v1687
  %v1717 = vmul.f32 %v717, %v1687
  %v1718 = vmul.f32 %v718, %v1687
  %v1719 = vmul.f32 %v719, %v1687
  %v1720 = vmul.f32 %v724, %v1687
  %v1721 = vmul.f32 %v725, %v1687
  %v1722 = vmul.f32 %v726, %v1687
  %v1723 = vmul.f32 %v727, %v1687
  %v1724 = vmul.f32 %v728, %v1687
  %v1725 = vmul.f32 %v729, %v1687
  %v1726 = vmul.f32 %v730, %v1687
  %v1727 = vmul.f32 %v731, %v1687
  %v1728 = vmul.f32 %v732, %v1687
  %v1729 = vmul.f32 %v733, %v1687
  %v1730 = vmul.f32 %v734, %v1687
  %v1731 = vmul.f32 %v735, %v1687
  %v1732 = vmul.f32 %v736, %v1687
  %v1733 = vmul.f32 %v737, %v1687
  %v1734 = vmul.f32 %v738, %v1687
  %v1735 = vmul.f32 %v739, %v1687
  %v1736 = vmul.f32 %v740, %v1687
  %v1737 = vmul.f32 %v741, %v1687
  %v1738 = vmul.f32 %v742, %v1687
  %v1739 = vmul.f32 %v743, %v1687
  %v1740 = vmul.f32 %v744, %v1687
  %v1741 = vmul.f32 %v745, %v1687
  %v1742 = vmul.f32 %v746, %v1687
  %v1743 = vmul.f32 %v747, %v1687
  %v1744 = vmul.f32 %v748, %v1687
  %v1745 = vmul.f32 %v749, %v1687
  %v1746 = vmul.f32 %v750, %v1687
  %v1747 = vmul.f32 %v751, %v1687
  %v1748 = vmul.f32 %v752, %v1687
  %v1749 = vmul.f32 %v753, %v1687
  %v1750 = vmul.f32 %v754, %v1687
  %v1751 = vmul.f32 %v755, %v1687
  %v1752 = vadd.f32 %v1620, %v1688
  %v1753 = vadd.f32 %v1621, %v1689
  %v1754 = vadd.f32 %v1622, %v1690
  %v1755 = vadd.f32 %v1623, %v1691
  %v1756 = vadd.f32 %v1624, %v1692
  %v1757 = vadd.f32 %v1625, %v1693
  %v1758 = vadd.f32 %v1626, %v1694
  %v1759 = vadd.f32 %v1627, %v1695
  %v1760 = vadd.f32 %v1628, %v1696
  %v1761 = vadd.f32 %v1629, %v1697
  %v1762 = vadd.f32 %v1630, %v1698
  %v1763 = vadd.f32 %v1631, %v1699
  %v1764 = vadd.f32 %v1632, %v1700
  %v1765 = vadd.f32 %v1633, %v1701
  %v1766 = vadd.f32 %v1634, %v1702
  %v1767 = vadd.f32 %v1635, %v1703
  %v1768 = vadd.f32 %v1636, %v1704
  %v1769 = vadd.f32 %v1637, %v1705
  %v1770 = vadd.f32 %v1638, %v1706
  %v1771 = vadd.f32 %v1639, %v1707
  %v1772 = vadd.f32 %v1640, %v1708
  %v1773 = vadd.f32 %v1641, %v1709
  %v1774 = vadd.f32 %v1642, %v1710
  %v1775 = vadd.f32 %v1643, %v1711
  %v1776 = vadd.f32 %v1644, %v1712
  %v1777 = vadd.f32 %v1645, %v1713
  %v1778 = vadd.f32 %v1646, %v1714
  %v1779 = vadd.f32 %v1647, %v1715
  %v1780 = vadd.f32 %v1648, %v1716
  %v1781 = vadd.f32 %v1649, %v1717
  %v1782 = vadd.f32 %v1650, %v1718
  %v1783 = vadd.f32 %v1651, %v1719
  %v1784 = vadd.f32 %v1652, %v1720
  %v1785 = vadd.f32 %v1653, %v1721
  %v1786 = vadd.f32 %v1654, %v1722
  %v1787 = vadd.f32 %v1655, %v1723
  %v1788 = vadd.f32 %v1656, %v1724
  %v1789 = vadd.f32 %v1657, %v1725
  %v1790 = vadd.f32 %v1658, %v1726
  %v1791 = vadd.f32 %v1659, %v1727
  %v1792 = vadd.f32 %v1660, %v1728
  %v1793 = vadd.f32 %v1661, %v1729
  %v1794 = vadd.f32 %v1662, %v1730
  %v1795 = vadd.f32 %v1663, %v1731
  %v1796 = vadd.f32 %v1664, %v1732
  %v1797 = vadd.f32 %v1665, %v1733
  %v1798 = vadd.f32 %v1666, %v1734
  %v1799 = vadd.f32 %v1667, %v1735
  %v1800 = vadd.f32 %v1668, %v1736
  %v1801 = vadd.f32 %v1669, %v1737
  %v1802 = vadd.f32 %v1670, %v1738
  %v1803 = vadd.f32 %v1671, %v1739
  %v1804 = vadd.f32 %v1672, %v1740
  %v1805 = vadd.f32 %v1673, %v1741
  %v1806 = vadd.f32 %v1674, %v1742
  %v1807 = vadd.f32 %v1675, %v1743
  %v1808 = vadd.f32 %v1676, %v1744
  %v1809 = vadd.f32 %v1677, %v1745
  %v1810 = vadd.f32 %v1678, %v1746
  %v1811 = vadd.f32 %v1679, %v1747
  %v1812 = vadd.f32 %v1680, %v1748
  %v1813 = vadd.f32 %v1681, %v1749
  %v1814 = vadd.f32 %v1682, %v1750
  %v1815 = vadd.f32 %v1683, %v1751
  %v1816 = vadd.f32 %v1420, %v1752
  %v1817 = vadd.f32 %v1421, %v1753
  %v1818 = vadd.f32 %v1422, %v1754
  %v1819 = vadd.f32 %v1423, %v1755
  %v1820 = vadd.f32 %v1424, %v1756
  %v1821 = vadd.f32 %v1425, %v1757
  %v1822 = vadd.f32 %v1426, %v1758
  %v1823 = vadd.f32 %v1427, %v1759
  %v1824 = vadd.f32 %v1428, %v1760
  %v1825 = vadd.f32 %v1429, %v1761
  %v1826 = vadd.f32 %v1430, %v1762
  %v1827 = vadd.f32 %v1431, %v1763
  %v1828 = vadd.f32 %v1432, %v1764
  %v1829 = vadd.f32 %v1433, %v1765
  %v1830 = vadd.f32 %v1434, %v1766
  %v1831 = vadd.f32 %v1435, %v1767
  %v1832 = vadd.f32 %v1436, %v1768
  %v1833 = vadd.f32 %v1437, %v1769
  %v1834 = vadd.f32 %v1438, %v1770
  %v1835 = vadd.f32 %v1439, %v1771
  %v1836 = vadd.f32 %v1440, %v1772
  %v1837 = vadd.f32 %v1441, %v1773
  %v1838 = vadd.f32 %v1442, %v1774
  %v1839 = vadd.f32 %v1443, %v1775
  %v1840 = vadd.f32 %v1444, %v1776
  %v1841 = vadd.f32 %v1445, %v1777
  %v1842 = vadd.f32 %v1446, %v1778
  %v1843 = vadd.f32 %v1447, %v1779
  %v1844 = vadd.f32 %v1448, %v1780
  %v1845 = vadd.f32 %v1449, %v1781
  %v1846 = vadd.f32 %v1450, %v1782
  %v1847 = vadd.f32 %v1451, %v1783
  %v1848 = vadd.f32 %v1452, %v1784
  %v1849 = vadd.f32 %v1453, %v1785
  %v1850 = vadd.f32 %v1454, %v1786
  %v1851 = vadd.f32 %v1455, %v1787
  %v1852 = vadd.f32 %v1456, %v1788
  %v1853 = vadd.f32 %v1457, %v1789
  %v1854 = vadd.f32 %v1458, %v1790
  %v1855 = vadd.f32 %v1459, %v1791
  %v1856 = vadd.f32 %v1460, %v1792
  %v1857 = vadd.f32 %v1461, %v1793
  %v1858 = vadd.f32 %v1462, %v1794
  %v1859 = vadd.f32 %v1463, %v1795
  %v1860 = vadd.f32 %v1464, %v1796
  %v1861 = vadd.f32 %v1465, %v1797
  %v1862 = vadd.f32 %v1466, %v1798
  %v1863 = vadd.f32 %v1467, %v1799
  %v1864 = vadd.f32 %v1468, %v1800
  %v1865 = vadd.f32 %v1469, %v1801
  %v1866 = vadd.f32 %v1470, %v1802
  %v1867 = vadd.f32 %v1471, %v1803
  %v1868 = vadd.f32 %v1472, %v1804
  %v1869 = vadd.f32 %v1473, %v1805
  %v1870 = vadd.f32 %v1474, %v1806
  %v1871 = vadd.f32 %v1475, %v1807
  %v1872 = vadd.f32 %v1476, %v1808
  %v1873 = vadd.f32 %v1477, %v1809
  %v1874 = vadd.f32 %v1478, %v1810
  %v1875 = vadd.f32 %v1479, %v1811
  %v1876 = vadd.f32 %v1480, %v1812
  %v1877 = vadd.f32 %v1481, %v1813
  %v1878 = vadd.f32 %v1482, %v1814
  %v1879 = vadd.f32 %v1483, %v1815
  %v1880 = vpack.c.bf16 %v1817, %v1816
  %v1881 = vpack.c.bf16 %v1819, %v1818
  %v1882 = vpack.c.bf16 %v1821, %v1820
  %v1883 = vpack.c.bf16 %v1823, %v1822
  %v1884 = vpack.c.bf16 %v1825, %v1824
  %v1885 = vpack.c.bf16 %v1827, %v1826
  %v1886 = vpack.c.bf16 %v1829, %v1828
  %v1887 = vpack.c.bf16 %v1831, %v1830
  %v1888 = vpack.c.bf16 %v1833, %v1832
  %v1889 = vpack.c.bf16 %v1835, %v1834
  %v1890 = vpack.c.bf16 %v1837, %v1836
  %v1891 = vpack.c.bf16 %v1839, %v1838
  %v1892 = vpack.c.bf16 %v1841, %v1840
  %v1893 = vpack.c.bf16 %v1843, %v1842
  %v1894 = vpack.c.bf16 %v1845, %v1844
  %v1895 = vpack.c.bf16 %v1847, %v1846
  %v1896 = vpack.c.bf16 %v1849, %v1848
  %v1897 = vpack.c.bf16 %v1851, %v1850
  %v1898 = vpack.c.bf16 %v1853, %v1852
  %v1899 = vpack.c.bf16 %v1855, %v1854
  %v1900 = vpack.c.bf16 %v1857, %v1856
  %v1901 = vpack.c.bf16 %v1859, %v1858
  %v1902 = vpack.c.bf16 %v1861, %v1860
  %v1903 = vpack.c.bf16 %v1863, %v1862
  %v1904 = vpack.c.bf16 %v1865, %v1864
  %v1905 = vpack.c.bf16 %v1867, %v1866
  %v1906 = vpack.c.bf16 %v1869, %v1868
  %v1907 = vpack.c.bf16 %v1871, %v1870
  %v1908 = vpack.c.bf16 %v1873, %v1872
  %v1909 = vpack.c.bf16 %v1875, %v1874
  %v1910 = vpack.c.bf16 %v1877, %v1876
  %v1911 = vpack.c.bf16 %v1879, %v1878
  %v1928 = vunpack.c.l.b16 %v32
  %v1929 = vunpack.c.l.b16 %v33
  %v1930 = vunpack.c.l.b16 %v34
  %v1931 = vunpack.c.l.b16 %v35
  %v1932 = vunpack.c.l.b16 %v36
  %v1933 = vunpack.c.l.b16 %v37
  %v1934 = vunpack.c.l.b16 %v38
  %v1935 = vunpack.c.l.b16 %v39
  %v1936 = vunpack.c.l.b16 %v40
  %v1937 = vunpack.c.l.b16 %v41
  %v1938 = vunpack.c.l.b16 %v42
  %v1939 = vunpack.c.l.b16 %v43
  %v1940 = vunpack.c.l.b16 %v44
  %v1941 = vunpack.c.l.b16 %v45
  %v1942 = vunpack.c.l.b16 %v46
  %v1943 = vunpack.c.l.b16 %v47
  %v1944 = vpack.c.b16 %v1929, %v1928
  %v1945 = vpack.c.b16 %v1931, %v1930
  %v1946 = vpack.c.b16 %v1933, %v1932
  %v1947 = vpack.c.b16 %v1935, %v1934
  %v1948 = vpack.c.b16 %v1937, %v1936
  %v1949 = vpack.c.b16 %v1939, %v1938
  %v1950 = vpack.c.b16 %v1941, %v1940
  %v1951 = vpack.c.b16 %v1943, %v1942
  %1960 = vmatprep.subr.bf16.mxu0 0
  %1961 = vmatpush1.bf16.msra.mxu0 %v1944
  %1962 = vmatprep.subr.bf16.mxu0 0
  %1963 = vmatpush1.bf16.msra.mxu0 %v1945
  %1964 = vmatprep.subr.bf16.mxu0 0
  %1965 = vmatpush1.bf16.msra.mxu0 %v1946
  %1966 = vmatprep.subr.bf16.mxu0 0
  %1967 = vmatpush1.bf16.msra.mxu0 %v1947
  %1968 = vmatprep.subr.bf16.mxu0 0
  %1969 = vmatpush1.bf16.msra.mxu0 %v1948
  %1970 = vmatprep.subr.bf16.mxu0 0
  %1971 = vmatpush1.bf16.msra.mxu0 %v1949
  %1972 = vmatprep.subr.bf16.mxu0 0
  %1973 = vmatpush1.bf16.msra.mxu0 %v1950
  %1974 = vmatprep.subr.bf16.mxu0 0
  %1975 = vmatpush1.bf16.msra.mxu0 %v1951
  %1976 = vmatprep.subr.bf16.mxu0 0
  %1977 = vmatpush1.bf16.msra.mxu0 0
  %1978 = vmatprep.subr.bf16.mxu0 0
  %1979 = vmatpush1.bf16.msra.mxu0 0
  %1980 = vmatprep.subr.bf16.mxu0 0
  %1981 = vmatpush1.bf16.msra.mxu0 0
  %1982 = vmatprep.subr.bf16.mxu0 0
  %1983 = vmatpush1.bf16.msra.mxu0 0
  %1984 = vmatprep.subr.bf16.mxu0 0
  %1985 = vmatpush1.bf16.msra.mxu0 0
  %1986 = vmatprep.subr.bf16.mxu0 0
  %1987 = vmatpush1.bf16.msra.mxu0 0
  %1988 = vmatprep.subr.bf16.mxu0 0
  %1989 = vmatpush1.bf16.msra.mxu0 0
  %1990 = vmatprep.subr.bf16.mxu0 0
  %1991 = vmatpush1.bf16.msra.mxu0 0
  %1992 = vmatprep.mubr.bf16.mxu0 0
  %1993 = vmatmul.mubr.bf16.gmra.mrb[0].mxu0 %v1880
  %v1994 = vpop.f32.mrb[0].mxu0
  %v1995 = vadd.f32 0.0, %v1994
  %v1996 = vpop.f32.mrb[0].mxu0
  %v1997 = vpop.f32.mrb[0].mxu0
  %v1998 = vadd.f32 0.0, %v1997
  %v1999 = vpop.f32.mrb[0].mxu0
  %2000 = vmatprep.mubr.bf16.mxu0 0
  %2001 = vmatmul.mubr.bf16.gmra.mrb[0].mxu0 %v1881
  %v2002 = vpop.f32.mrb[0].mxu0
  %v2003 = vadd.f32 0.0, %v2002
  %v2004 = vpop.f32.mrb[0].mxu0
  %v2005 = vpop.f32.mrb[0].mxu0
  %v2006 = vadd.f32 0.0, %v2005
  %v2007 = vpop.f32.mrb[0].mxu0
  %2008 = vmatprep.mubr.bf16.mxu0 0
  %2009 = vmatmul.mubr.bf16.gmra.mrb[0].mxu0 %v1882
  %v2010 = vpop.f32.mrb[0].mxu0
  %v2011 = vadd.f32 0.0, %v2010
  %v2012 = vpop.f32.mrb[0].mxu0
  %v2013 = vpop.f32.mrb[0].mxu0
  %v2014 = vadd.f32 0.0, %v2013
  %v2015 = vpop.f32.mrb[0].mxu0
  %2016 = vmatprep.mubr.bf16.mxu0 0
  %2017 = vmatmul.mubr.bf16.gmra.mrb[0].mxu0 %v1883
  %v2018 = vpop.f32.mrb[0].mxu0
  %v2019 = vadd.f32 0.0, %v2018
  %v2020 = vpop.f32.mrb[0].mxu0
  %v2021 = vpop.f32.mrb[0].mxu0
  %v2022 = vadd.f32 0.0, %v2021
  %v2023 = vpop.f32.mrb[0].mxu0
  %2024 = vmatprep.mubr.bf16.mxu0 0
  %2025 = vmatmul.mubr.bf16.gmra.mrb[0].mxu0 %v1884
  %v2026 = vpop.f32.mrb[0].mxu0
  %v2027 = vadd.f32 0.0, %v2026
  %v2028 = vpop.f32.mrb[0].mxu0
  %v2029 = vpop.f32.mrb[0].mxu0
  %v2030 = vadd.f32 0.0, %v2029
  %v2031 = vpop.f32.mrb[0].mxu0
  %2032 = vmatprep.mubr.bf16.mxu0 0
  %2033 = vmatmul.mubr.bf16.gmra.mrb[0].mxu0 %v1885
  %v2034 = vpop.f32.mrb[0].mxu0
  %v2035 = vadd.f32 0.0, %v2034
  %v2036 = vpop.f32.mrb[0].mxu0
  %v2037 = vpop.f32.mrb[0].mxu0
  %v2038 = vadd.f32 0.0, %v2037
  %v2039 = vpop.f32.mrb[0].mxu0
  %2040 = vmatprep.mubr.bf16.mxu0 0
  %2041 = vmatmul.mubr.bf16.gmra.mrb[0].mxu0 %v1886
  %v2042 = vpop.f32.mrb[0].mxu0
  %v2043 = vadd.f32 0.0, %v2042
  %v2044 = vpop.f32.mrb[0].mxu0
  %v2045 = vpop.f32.mrb[0].mxu0
  %v2046 = vadd.f32 0.0, %v2045
  %v2047 = vpop.f32.mrb[0].mxu0
  %2048 = vmatprep.mubr.bf16.mxu0 0
  %2049 = vmatmul.mubr.bf16.gmra.mrb[0].mxu0 %v1887
  %v2050 = vpop.f32.mrb[0].mxu0
  %v2051 = vadd.f32 0.0, %v2050
  %v2052 = vpop.f32.mrb[0].mxu0
  %v2053 = vpop.f32.mrb[0].mxu0
  %v2054 = vadd.f32 0.0, %v2053
  %v2055 = vpop.f32.mrb[0].mxu0
  %2056 = vmatprep.mubr.bf16.mxu0 0
  %2057 = vmatmul.mubr.bf16.gmra.mrb[0].mxu0 %v1888
  %v2058 = vpop.f32.mrb[0].mxu0
  %v2059 = vadd.f32 0.0, %v2058
  %v2060 = vpop.f32.mrb[0].mxu0
  %v2061 = vpop.f32.mrb[0].mxu0
  %v2062 = vadd.f32 0.0, %v2061
  %v2063 = vpop.f32.mrb[0].mxu0
  %2064 = vmatprep.mubr.bf16.mxu0 0
  %2065 = vmatmul.mubr.bf16.gmra.mrb[0].mxu0 %v1889
  %v2066 = vpop.f32.mrb[0].mxu0
  %v2067 = vadd.f32 0.0, %v2066
  %v2068 = vpop.f32.mrb[0].mxu0
  %v2069 = vpop.f32.mrb[0].mxu0
  %v2070 = vadd.f32 0.0, %v2069
  %v2071 = vpop.f32.mrb[0].mxu0
  %2072 = vmatprep.mubr.bf16.mxu0 0
  %2073 = vmatmul.mubr.bf16.gmra.mrb[0].mxu0 %v1890
  %v2074 = vpop.f32.mrb[0].mxu0
  %v2075 = vadd.f32 0.0, %v2074
  %v2076 = vpop.f32.mrb[0].mxu0
  %v2077 = vpop.f32.mrb[0].mxu0
  %v2078 = vadd.f32 0.0, %v2077
  %v2079 = vpop.f32.mrb[0].mxu0
  %2080 = vmatprep.mubr.bf16.mxu0 0
  %2081 = vmatmul.mubr.bf16.gmra.mrb[0].mxu0 %v1891
  %v2082 = vpop.f32.mrb[0].mxu0
  %v2083 = vadd.f32 0.0, %v2082
  %v2084 = vpop.f32.mrb[0].mxu0
  %v2085 = vpop.f32.mrb[0].mxu0
  %v2086 = vadd.f32 0.0, %v2085
  %v2087 = vpop.f32.mrb[0].mxu0
  %2088 = vmatprep.mubr.bf16.mxu0 0
  %2089 = vmatmul.mubr.bf16.gmra.mrb[0].mxu0 %v1892
  %v2090 = vpop.f32.mrb[0].mxu0
  %v2091 = vadd.f32 0.0, %v2090
  %v2092 = vpop.f32.mrb[0].mxu0
  %v2093 = vpop.f32.mrb[0].mxu0
  %v2094 = vadd.f32 0.0, %v2093
  %v2095 = vpop.f32.mrb[0].mxu0
  %2096 = vmatprep.mubr.bf16.mxu0 0
  %2097 = vmatmul.mubr.bf16.gmra.mrb[0].mxu0 %v1893
  %v2098 = vpop.f32.mrb[0].mxu0
  %v2099 = vadd.f32 0.0, %v2098
  %v2100 = vpop.f32.mrb[0].mxu0
  %v2101 = vpop.f32.mrb[0].mxu0
  %v2102 = vadd.f32 0.0, %v2101
  %v2103 = vpop.f32.mrb[0].mxu0
  %2104 = vmatprep.mubr.bf16.mxu0 0
  %2105 = vmatmul.mubr.bf16.gmra.mrb[0].mxu0 %v1894
  %v2106 = vpop.f32.mrb[0].mxu0
  %v2107 = vadd.f32 0.0, %v2106
  %v2108 = vpop.f32.mrb[0].mxu0
  %v2109 = vpop.f32.mrb[0].mxu0
  %v2110 = vadd.f32 0.0, %v2109
  %v2111 = vpop.f32.mrb[0].mxu0
  %2112 = vmatprep.mubr.bf16.mxu0 0
  %2113 = vmatmul.mubr.bf16.gmra.mrb[0].mxu0 %v1895
  %v2114 = vpop.f32.mrb[0].mxu0
  %v2115 = vadd.f32 0.0, %v2114
  %v2116 = vpop.f32.mrb[0].mxu0
  %v2117 = vpop.f32.mrb[0].mxu0
  %v2118 = vadd.f32 0.0, %v2117
  %v2119 = vpop.f32.mrb[0].mxu0
  %2120 = vmatprep.mubr.bf16.mxu0 0
  %2121 = vmatmul.mubr.bf16.gmra.mrb[0].mxu0 %v1896
  %v2122 = vpop.f32.mrb[0].mxu0
  %v2123 = vadd.f32 0.0, %v2122
  %v2124 = vpop.f32.mrb[0].mxu0
  %v2125 = vpop.f32.mrb[0].mxu0
  %v2126 = vadd.f32 0.0, %v2125
  %v2127 = vpop.f32.mrb[0].mxu0
  %2128 = vmatprep.mubr.bf16.mxu0 0
  %2129 = vmatmul.mubr.bf16.gmra.mrb[0].mxu0 %v1897
  %v2130 = vpop.f32.mrb[0].mxu0
  %v2131 = vadd.f32 0.0, %v2130
  %v2132 = vpop.f32.mrb[0].mxu0
  %v2133 = vpop.f32.mrb[0].mxu0
  %v2134 = vadd.f32 0.0, %v2133
  %v2135 = vpop.f32.mrb[0].mxu0
  %2136 = vmatprep.mubr.bf16.mxu0 0
  %2137 = vmatmul.mubr.bf16.gmra.mrb[0].mxu0 %v1898
  %v2138 = vpop.f32.mrb[0].mxu0
  %v2139 = vadd.f32 0.0, %v2138
  %v2140 = vpop.f32.mrb[0].mxu0
  %v2141 = vpop.f32.mrb[0].mxu0
  %v2142 = vadd.f32 0.0, %v2141
  %v2143 = vpop.f32.mrb[0].mxu0
  %2144 = vmatprep.mubr.bf16.mxu0 0
  %2145 = vmatmul.mubr.bf16.gmra.mrb[0].mxu0 %v1899
  %v2146 = vpop.f32.mrb[0].mxu0
  %v2147 = vadd.f32 0.0, %v2146
  %v2148 = vpop.f32.mrb[0].mxu0
  %v2149 = vpop.f32.mrb[0].mxu0
  %v2150 = vadd.f32 0.0, %v2149
  %v2151 = vpop.f32.mrb[0].mxu0
  %2152 = vmatprep.mubr.bf16.mxu0 0
  %2153 = vmatmul.mubr.bf16.gmra.mrb[0].mxu0 %v1900
  %v2154 = vpop.f32.mrb[0].mxu0
  %v2155 = vadd.f32 0.0, %v2154
  %v2156 = vpop.f32.mrb[0].mxu0
  %v2157 = vpop.f32.mrb[0].mxu0
  %v2158 = vadd.f32 0.0, %v2157
  %v2159 = vpop.f32.mrb[0].mxu0
  %2160 = vmatprep.mubr.bf16.mxu0 0
  %2161 = vmatmul.mubr.bf16.gmra.mrb[0].mxu0 %v1901
  %v2162 = vpop.f32.mrb[0].mxu0
  %v2163 = vadd.f32 0.0, %v2162
  %v2164 = vpop.f32.mrb[0].mxu0
  %v2165 = vpop.f32.mrb[0].mxu0
  %v2166 = vadd.f32 0.0, %v2165
  %v2167 = vpop.f32.mrb[0].mxu0
  %2168 = vmatprep.mubr.bf16.mxu0 0
  %2169 = vmatmul.mubr.bf16.gmra.mrb[0].mxu0 %v1902
  %v2170 = vpop.f32.mrb[0].mxu0
  %v2171 = vadd.f32 0.0, %v2170
  %v2172 = vpop.f32.mrb[0].mxu0
  %v2173 = vpop.f32.mrb[0].mxu0
  %v2174 = vadd.f32 0.0, %v2173
  %v2175 = vpop.f32.mrb[0].mxu0
  %2176 = vmatprep.mubr.bf16.mxu0 0
  %2177 = vmatmul.mubr.bf16.gmra.mrb[0].mxu0 %v1903
  %v2178 = vpop.f32.mrb[0].mxu0
  %v2179 = vadd.f32 0.0, %v2178
  %v2180 = vpop.f32.mrb[0].mxu0
  %v2181 = vpop.f32.mrb[0].mxu0
  %v2182 = vadd.f32 0.0, %v2181
  %v2183 = vpop.f32.mrb[0].mxu0
  %2184 = vmatprep.mubr.bf16.mxu0 0
  %2185 = vmatmul.mubr.bf16.gmra.mrb[0].mxu0 %v1904
  %v2186 = vpop.f32.mrb[0].mxu0
  %v2187 = vadd.f32 0.0, %v2186
  %v2188 = vpop.f32.mrb[0].mxu0
  %v2189 = vpop.f32.mrb[0].mxu0
  %v2190 = vadd.f32 0.0, %v2189
  %v2191 = vpop.f32.mrb[0].mxu0
  %2192 = vmatprep.mubr.bf16.mxu0 0
  %2193 = vmatmul.mubr.bf16.gmra.mrb[0].mxu0 %v1905
  %v2194 = vpop.f32.mrb[0].mxu0
  %v2195 = vadd.f32 0.0, %v2194
  %v2196 = vpop.f32.mrb[0].mxu0
  %v2197 = vpop.f32.mrb[0].mxu0
  %v2198 = vadd.f32 0.0, %v2197
  %v2199 = vpop.f32.mrb[0].mxu0
  %2200 = vmatprep.mubr.bf16.mxu0 0
  %2201 = vmatmul.mubr.bf16.gmra.mrb[0].mxu0 %v1906
  %v2202 = vpop.f32.mrb[0].mxu0
  %v2203 = vadd.f32 0.0, %v2202
  %v2204 = vpop.f32.mrb[0].mxu0
  %v2205 = vpop.f32.mrb[0].mxu0
  %v2206 = vadd.f32 0.0, %v2205
  %v2207 = vpop.f32.mrb[0].mxu0
  %2208 = vmatprep.mubr.bf16.mxu0 0
  %2209 = vmatmul.mubr.bf16.gmra.mrb[0].mxu0 %v1907
  %v2210 = vpop.f32.mrb[0].mxu0
  %v2211 = vadd.f32 0.0, %v2210
  %v2212 = vpop.f32.mrb[0].mxu0
  %v2213 = vpop.f32.mrb[0].mxu0
  %v2214 = vadd.f32 0.0, %v2213
  %v2215 = vpop.f32.mrb[0].mxu0
  %2216 = vmatprep.mubr.bf16.mxu0 0
  %2217 = vmatmul.mubr.bf16.gmra.mrb[0].mxu0 %v1908
  %v2218 = vpop.f32.mrb[0].mxu0
  %v2219 = vadd.f32 0.0, %v2218
  %v2220 = vpop.f32.mrb[0].mxu0
  %v2221 = vpop.f32.mrb[0].mxu0
  %v2222 = vadd.f32 0.0, %v2221
  %v2223 = vpop.f32.mrb[0].mxu0
  %2224 = vmatprep.mubr.bf16.mxu0 0
  %2225 = vmatmul.mubr.bf16.gmra.mrb[0].mxu0 %v1909
  %v2226 = vpop.f32.mrb[0].mxu0
  %v2227 = vadd.f32 0.0, %v2226
  %v2228 = vpop.f32.mrb[0].mxu0
  %v2229 = vpop.f32.mrb[0].mxu0
  %v2230 = vadd.f32 0.0, %v2229
  %v2231 = vpop.f32.mrb[0].mxu0
  %2232 = vmatprep.mubr.bf16.mxu0 0
  %2233 = vmatmul.mubr.bf16.gmra.mrb[0].mxu0 %v1910
  %v2234 = vpop.f32.mrb[0].mxu0
  %v2235 = vadd.f32 0.0, %v2234
  %v2236 = vpop.f32.mrb[0].mxu0
  %v2237 = vpop.f32.mrb[0].mxu0
  %v2238 = vadd.f32 0.0, %v2237
  %v2239 = vpop.f32.mrb[0].mxu0
  %2240 = vmatprep.mubr.bf16.mxu0 0
  %2241 = vmatmul.mubr.bf16.gmra.mrb[0].mxu0 %v1911
  %v2242 = vpop.f32.mrb[0].mxu0
  %v2243 = vadd.f32 0.0, %v2242
  %v2244 = vpop.f32.mrb[0].mxu0
  %v2245 = vpop.f32.mrb[0].mxu0
  %v2246 = vadd.f32 0.0, %v2245
  %v2247 = vpop.f32.mrb[0].mxu0
  %2248 = vdwg.mxu0
  %v2249 = vadd.f32 %v1995, %v1998
  %v2250 = vadd.f32 %v2249, %v2003
  %v2251 = vadd.f32 %v2250, %v2006
  %v2252 = vadd.f32 %v2251, %v2011
  %v2253 = vadd.f32 %v2252, %v2014
  %v2254 = vadd.f32 %v2253, %v2019
  %v2255 = vadd.f32 %v2254, %v2022
  %v2256 = vadd.f32 %v2255, %v2027
  %v2257 = vadd.f32 %v2256, %v2030
  %v2258 = vadd.f32 %v2257, %v2035
  %v2259 = vadd.f32 %v2258, %v2038
  %v2260 = vadd.f32 %v2259, %v2043
  %v2261 = vadd.f32 %v2260, %v2046
  %v2262 = vadd.f32 %v2261, %v2051
  %v2263 = vadd.f32 %v2262, %v2054
  %v2264 = vadd.f32 %v2263, %v2059
  %v2265 = vadd.f32 %v2264, %v2062
  %v2266 = vadd.f32 %v2265, %v2067
  %v2267 = vadd.f32 %v2266, %v2070
  %v2268 = vadd.f32 %v2267, %v2075
  %v2269 = vadd.f32 %v2268, %v2078
  %v2270 = vadd.f32 %v2269, %v2083
  %v2271 = vadd.f32 %v2270, %v2086
  %v2272 = vadd.f32 %v2271, %v2091
  %v2273 = vadd.f32 %v2272, %v2094
  %v2274 = vadd.f32 %v2273, %v2099
  %v2275 = vadd.f32 %v2274, %v2102
  %v2276 = vadd.f32 %v2275, %v2107
  %v2277 = vadd.f32 %v2276, %v2110
  %v2278 = vadd.f32 %v2277, %v2115
  %v2279 = vadd.f32 %v2278, %v2118
  %v2280 = vadd.f32 %v2279, %v2123
  %v2281 = vadd.f32 %v2280, %v2126
  %v2282 = vadd.f32 %v2281, %v2131
  %v2283 = vadd.f32 %v2282, %v2134
  %v2284 = vadd.f32 %v2283, %v2139
  %v2285 = vadd.f32 %v2284, %v2142
  %v2286 = vadd.f32 %v2285, %v2147
  %v2287 = vadd.f32 %v2286, %v2150
  %v2288 = vadd.f32 %v2287, %v2155
  %v2289 = vadd.f32 %v2288, %v2158
  %v2290 = vadd.f32 %v2289, %v2163
  %v2291 = vadd.f32 %v2290, %v2166
  %v2292 = vadd.f32 %v2291, %v2171
  %v2293 = vadd.f32 %v2292, %v2174
  %v2294 = vadd.f32 %v2293, %v2179
  %v2295 = vadd.f32 %v2294, %v2182
  %v2296 = vadd.f32 %v2295, %v2187
  %v2297 = vadd.f32 %v2296, %v2190
  %v2298 = vadd.f32 %v2297, %v2195
  %v2299 = vadd.f32 %v2298, %v2198
  %v2300 = vadd.f32 %v2299, %v2203
  %v2301 = vadd.f32 %v2300, %v2206
  %v2302 = vadd.f32 %v2301, %v2211
  %v2303 = vadd.f32 %v2302, %v2214
  %v2304 = vadd.f32 %v2303, %v2219
  %v2305 = vadd.f32 %v2304, %v2222
  %v2306 = vadd.f32 %v2305, %v2227
  %v2307 = vadd.f32 %v2306, %v2230
  %v2308 = vadd.f32 %v2307, %v2235
  %v2309 = vadd.f32 %v2308, %v2238
  %v2310 = vadd.f32 %v2309, %v2243
  %v2311 = vadd.f32 %v2310, %v2246
  %v2312 = vrot.slane %v2311, 4
  %v2313 = vadd.f32 %v2311, %v2312
  %v2314 = vrot.slane %v2313, 2
  %v2315 = vadd.f32 %v2313, %v2314
  %v2316 = vrot.slane %v2315, 1
  %v2317 = vadd.f32 %v2315, %v2316
  %v2318 = vmul.f32 %v1995, %v1995
  %v2319 = vmul.f32 %v1998, %v1998
  %v2320 = vmul.f32 %v2003, %v2003
  %v2321 = vmul.f32 %v2006, %v2006
  %v2322 = vmul.f32 %v2011, %v2011
  %v2323 = vmul.f32 %v2014, %v2014
  %v2324 = vmul.f32 %v2019, %v2019
  %v2325 = vmul.f32 %v2022, %v2022
  %v2326 = vmul.f32 %v2027, %v2027
  %v2327 = vmul.f32 %v2030, %v2030
  %v2328 = vmul.f32 %v2035, %v2035
  %v2329 = vmul.f32 %v2038, %v2038
  %v2330 = vmul.f32 %v2043, %v2043
  %v2331 = vmul.f32 %v2046, %v2046
  %v2332 = vmul.f32 %v2051, %v2051
  %v2333 = vmul.f32 %v2054, %v2054
  %v2334 = vmul.f32 %v2059, %v2059
  %v2335 = vmul.f32 %v2062, %v2062
  %v2336 = vmul.f32 %v2067, %v2067
  %v2337 = vmul.f32 %v2070, %v2070
  %v2338 = vmul.f32 %v2075, %v2075
  %v2339 = vmul.f32 %v2078, %v2078
  %v2340 = vmul.f32 %v2083, %v2083
  %v2341 = vmul.f32 %v2086, %v2086
  %v2342 = vmul.f32 %v2091, %v2091
  %v2343 = vmul.f32 %v2094, %v2094
  %v2344 = vmul.f32 %v2099, %v2099
  %v2345 = vmul.f32 %v2102, %v2102
  %v2346 = vmul.f32 %v2107, %v2107
  %v2347 = vmul.f32 %v2110, %v2110
  %v2348 = vmul.f32 %v2115, %v2115
  %v2349 = vmul.f32 %v2118, %v2118
  %v2350 = vmul.f32 %v2123, %v2123
  %v2351 = vmul.f32 %v2126, %v2126
  %v2352 = vmul.f32 %v2131, %v2131
  %v2353 = vmul.f32 %v2134, %v2134
  %v2354 = vmul.f32 %v2139, %v2139
  %v2355 = vmul.f32 %v2142, %v2142
  %v2356 = vmul.f32 %v2147, %v2147
  %v2357 = vmul.f32 %v2150, %v2150
  %v2358 = vmul.f32 %v2155, %v2155
  %v2359 = vmul.f32 %v2158, %v2158
  %v2360 = vmul.f32 %v2163, %v2163
  %v2361 = vmul.f32 %v2166, %v2166
  %v2362 = vmul.f32 %v2171, %v2171
  %v2363 = vmul.f32 %v2174, %v2174
  %v2364 = vmul.f32 %v2179, %v2179
  %v2365 = vmul.f32 %v2182, %v2182
  %v2366 = vmul.f32 %v2187, %v2187
  %v2367 = vmul.f32 %v2190, %v2190
  %v2368 = vmul.f32 %v2195, %v2195
  %v2369 = vmul.f32 %v2198, %v2198
  %v2370 = vmul.f32 %v2203, %v2203
  %v2371 = vmul.f32 %v2206, %v2206
  %v2372 = vmul.f32 %v2211, %v2211
  %v2373 = vmul.f32 %v2214, %v2214
  %v2374 = vmul.f32 %v2219, %v2219
  %v2375 = vmul.f32 %v2222, %v2222
  %v2376 = vmul.f32 %v2227, %v2227
  %v2377 = vmul.f32 %v2230, %v2230
  %v2378 = vmul.f32 %v2235, %v2235
  %v2379 = vmul.f32 %v2238, %v2238
  %v2380 = vmul.f32 %v2243, %v2243
  %v2381 = vmul.f32 %v2246, %v2246
  %v2382 = vadd.f32 %v2318, %v2319
  %v2383 = vadd.f32 %v2382, %v2320
  %v2384 = vadd.f32 %v2383, %v2321
  %v2385 = vadd.f32 %v2384, %v2322
  %v2386 = vadd.f32 %v2385, %v2323
  %v2387 = vadd.f32 %v2386, %v2324
  %v2388 = vadd.f32 %v2387, %v2325
  %v2389 = vadd.f32 %v2388, %v2326
  %v2390 = vadd.f32 %v2389, %v2327
  %v2391 = vadd.f32 %v2390, %v2328
  %v2392 = vadd.f32 %v2391, %v2329
  %v2393 = vadd.f32 %v2392, %v2330
  %v2394 = vadd.f32 %v2393, %v2331
  %v2395 = vadd.f32 %v2394, %v2332
  %v2396 = vadd.f32 %v2395, %v2333
  %v2397 = vadd.f32 %v2396, %v2334
  %v2398 = vadd.f32 %v2397, %v2335
  %v2399 = vadd.f32 %v2398, %v2336
  %v2400 = vadd.f32 %v2399, %v2337
  %v2401 = vadd.f32 %v2400, %v2338
  %v2402 = vadd.f32 %v2401, %v2339
  %v2403 = vadd.f32 %v2402, %v2340
  %v2404 = vadd.f32 %v2403, %v2341
  %v2405 = vadd.f32 %v2404, %v2342
  %v2406 = vadd.f32 %v2405, %v2343
  %v2407 = vadd.f32 %v2406, %v2344
  %v2408 = vadd.f32 %v2407, %v2345
  %v2409 = vadd.f32 %v2408, %v2346
  %v2410 = vadd.f32 %v2409, %v2347
  %v2411 = vadd.f32 %v2410, %v2348
  %v2412 = vadd.f32 %v2411, %v2349
  %v2413 = vadd.f32 %v2412, %v2350
  %v2414 = vadd.f32 %v2413, %v2351
  %v2415 = vadd.f32 %v2414, %v2352
  %v2416 = vadd.f32 %v2415, %v2353
  %v2417 = vadd.f32 %v2416, %v2354
  %v2418 = vadd.f32 %v2417, %v2355
  %v2419 = vadd.f32 %v2418, %v2356
  %v2420 = vadd.f32 %v2419, %v2357
  %v2421 = vadd.f32 %v2420, %v2358
  %v2422 = vadd.f32 %v2421, %v2359
  %v2423 = vadd.f32 %v2422, %v2360
  %v2424 = vadd.f32 %v2423, %v2361
  %v2425 = vadd.f32 %v2424, %v2362
  %v2426 = vadd.f32 %v2425, %v2363
  %v2427 = vadd.f32 %v2426, %v2364
  %v2428 = vadd.f32 %v2427, %v2365
  %v2429 = vadd.f32 %v2428, %v2366
  %v2430 = vadd.f32 %v2429, %v2367
  %v2431 = vadd.f32 %v2430, %v2368
  %v2432 = vadd.f32 %v2431, %v2369
  %v2433 = vadd.f32 %v2432, %v2370
  %v2434 = vadd.f32 %v2433, %v2371
  %v2435 = vadd.f32 %v2434, %v2372
  %v2436 = vadd.f32 %v2435, %v2373
  %v2437 = vadd.f32 %v2436, %v2374
  %v2438 = vadd.f32 %v2437, %v2375
  %v2439 = vadd.f32 %v2438, %v2376
  %v2440 = vadd.f32 %v2439, %v2377
  %v2441 = vadd.f32 %v2440, %v2378
  %v2442 = vadd.f32 %v2441, %v2379
  %v2443 = vadd.f32 %v2442, %v2380
  %v2444 = vadd.f32 %v2443, %v2381
  %v2445 = vrot.slane %v2444, 4
  %v2446 = vadd.f32 %v2444, %v2445
  %v2447 = vrot.slane %v2446, 2
  %v2448 = vadd.f32 %v2446, %v2447
  %v2449 = vrot.slane %v2448, 1
  %v2450 = vadd.f32 %v2448, %v2449
  %v2451 = vmul.f32 %v2317, 0.001953125
  %v2452 = vmul.f32 %v2450, 0.001953125
  %v2453 = vmul.f32 %v2451, %v2451
  %v2454 = vsub.f32 %v2452, %v2453
  %v2455 = vadd.f32 %v2454, 1e-05
  %v2456 = vrsqrt.pop %v2455
  %v2457 = vmul.f32 %v48, %v2456
  %v2458 = vmul.f32 %v2451, %v2457
  %v2459 = vsub.f32 %v49, %v2458
  %v2461 = vlaneseq
  %v2462 = vshrl.u32 %v2461, 7
  %v2463 = vsub.s32 0, %v2462
  %v2464 = vrot.slane %v2457, %v2463
  %v2466 = vmul.f32 %v1995, %v2464
  %v2467 = vmul.f32 %v1998, %v2464
  %v2468 = vmul.f32 %v2003, %v2464
  %v2469 = vmul.f32 %v2006, %v2464
  %v2470 = vmul.f32 %v2011, %v2464
  %v2471 = vmul.f32 %v2014, %v2464
  %v2472 = vmul.f32 %v2019, %v2464
  %v2473 = vmul.f32 %v2022, %v2464
  %v2474 = vmul.f32 %v2027, %v2464
  %v2475 = vmul.f32 %v2030, %v2464
  %v2476 = vmul.f32 %v2035, %v2464
  %v2477 = vmul.f32 %v2038, %v2464
  %v2478 = vmul.f32 %v2043, %v2464
  %v2479 = vmul.f32 %v2046, %v2464
  %v2480 = vmul.f32 %v2051, %v2464
  %v2481 = vmul.f32 %v2054, %v2464
  %v2482 = vmul.f32 %v2059, %v2464
  %v2483 = vmul.f32 %v2062, %v2464
  %v2484 = vmul.f32 %v2067, %v2464
  %v2485 = vmul.f32 %v2070, %v2464
  %v2486 = vmul.f32 %v2075, %v2464
  %v2487 = vmul.f32 %v2078, %v2464
  %v2488 = vmul.f32 %v2083, %v2464
  %v2489 = vmul.f32 %v2086, %v2464
  %v2490 = vmul.f32 %v2091, %v2464
  %v2491 = vmul.f32 %v2094, %v2464
  %v2492 = vmul.f32 %v2099, %v2464
  %v2493 = vmul.f32 %v2102, %v2464
  %v2494 = vmul.f32 %v2107, %v2464
  %v2495 = vmul.f32 %v2110, %v2464
  %v2496 = vmul.f32 %v2115, %v2464
  %v2497 = vmul.f32 %v2118, %v2464
  %v2498 = vmul.f32 %v2123, %v2464
  %v2499 = vmul.f32 %v2126, %v2464
  %v2500 = vmul.f32 %v2131, %v2464
  %v2501 = vmul.f32 %v2134, %v2464
  %v2502 = vmul.f32 %v2139, %v2464
  %v2503 = vmul.f32 %v2142, %v2464
  %v2504 = vmul.f32 %v2147, %v2464
  %v2505 = vmul.f32 %v2150, %v2464
  %v2506 = vmul.f32 %v2155, %v2464
  %v2507 = vmul.f32 %v2158, %v2464
  %v2508 = vmul.f32 %v2163, %v2464
  %v2509 = vmul.f32 %v2166, %v2464
  %v2510 = vmul.f32 %v2171, %v2464
  %v2511 = vmul.f32 %v2174, %v2464
  %v2512 = vmul.f32 %v2179, %v2464
  %v2513 = vmul.f32 %v2182, %v2464
  %v2514 = vmul.f32 %v2187, %v2464
  %v2515 = vmul.f32 %v2190, %v2464
  %v2516 = vmul.f32 %v2195, %v2464
  %v2517 = vmul.f32 %v2198, %v2464
  %v2518 = vmul.f32 %v2203, %v2464
  %v2519 = vmul.f32 %v2206, %v2464
  %v2520 = vmul.f32 %v2211, %v2464
  %v2521 = vmul.f32 %v2214, %v2464
  %v2522 = vmul.f32 %v2219, %v2464
  %v2523 = vmul.f32 %v2222, %v2464
  %v2524 = vmul.f32 %v2227, %v2464
  %v2525 = vmul.f32 %v2230, %v2464
  %v2526 = vmul.f32 %v2235, %v2464
  %v2527 = vmul.f32 %v2238, %v2464
  %v2528 = vmul.f32 %v2243, %v2464
  %v2529 = vmul.f32 %v2246, %v2464
  %v2531 = vlaneseq
  %v2532 = vshrl.u32 %v2531, 7
  %v2533 = vsub.s32 0, %v2532
  %v2534 = vrot.slane %v2459, %v2533
  %v2536 = vadd.f32 %v2466, %v2534
  %v2537 = vadd.f32 %v2467, %v2534
  %v2538 = vadd.f32 %v2468, %v2534
  %v2539 = vadd.f32 %v2469, %v2534
  %v2540 = vadd.f32 %v2470, %v2534
  %v2541 = vadd.f32 %v2471, %v2534
  %v2542 = vadd.f32 %v2472, %v2534
  %v2543 = vadd.f32 %v2473, %v2534
  %v2544 = vadd.f32 %v2474, %v2534
  %v2545 = vadd.f32 %v2475, %v2534
  %v2546 = vadd.f32 %v2476, %v2534
  %v2547 = vadd.f32 %v2477, %v2534
  %v2548 = vadd.f32 %v2478, %v2534
  %v2549 = vadd.f32 %v2479, %v2534
  %v2550 = vadd.f32 %v2480, %v2534
  %v2551 = vadd.f32 %v2481, %v2534
  %v2552 = vadd.f32 %v2482, %v2534
  %v2553 = vadd.f32 %v2483, %v2534
  %v2554 = vadd.f32 %v2484, %v2534
  %v2555 = vadd.f32 %v2485, %v2534
  %v2556 = vadd.f32 %v2486, %v2534
  %v2557 = vadd.f32 %v2487, %v2534
  %v2558 = vadd.f32 %v2488, %v2534
  %v2559 = vadd.f32 %v2489, %v2534
  %v2560 = vadd.f32 %v2490, %v2534
  %v2561 = vadd.f32 %v2491, %v2534
  %v2562 = vadd.f32 %v2492, %v2534
  %v2563 = vadd.f32 %v2493, %v2534
  %v2564 = vadd.f32 %v2494, %v2534
  %v2565 = vadd.f32 %v2495, %v2534
  %v2566 = vadd.f32 %v2496, %v2534
  %v2567 = vadd.f32 %v2497, %v2534
  %v2568 = vadd.f32 %v2498, %v2534
  %v2569 = vadd.f32 %v2499, %v2534
  %v2570 = vadd.f32 %v2500, %v2534
  %v2571 = vadd.f32 %v2501, %v2534
  %v2572 = vadd.f32 %v2502, %v2534
  %v2573 = vadd.f32 %v2503, %v2534
  %v2574 = vadd.f32 %v2504, %v2534
  %v2575 = vadd.f32 %v2505, %v2534
  %v2576 = vadd.f32 %v2506, %v2534
  %v2577 = vadd.f32 %v2507, %v2534
  %v2578 = vadd.f32 %v2508, %v2534
  %v2579 = vadd.f32 %v2509, %v2534
  %v2580 = vadd.f32 %v2510, %v2534
  %v2581 = vadd.f32 %v2511, %v2534
  %v2582 = vadd.f32 %v2512, %v2534
  %v2583 = vadd.f32 %v2513, %v2534
  %v2584 = vadd.f32 %v2514, %v2534
  %v2585 = vadd.f32 %v2515, %v2534
  %v2586 = vadd.f32 %v2516, %v2534
  %v2587 = vadd.f32 %v2517, %v2534
  %v2588 = vadd.f32 %v2518, %v2534
  %v2589 = vadd.f32 %v2519, %v2534
  %v2590 = vadd.f32 %v2520, %v2534
  %v2591 = vadd.f32 %v2521, %v2534
  %v2592 = vadd.f32 %v2522, %v2534
  %v2593 = vadd.f32 %v2523, %v2534
  %v2594 = vadd.f32 %v2524, %v2534
  %v2595 = vadd.f32 %v2525, %v2534
  %v2596 = vadd.f32 %v2526, %v2534
  %v2597 = vadd.f32 %v2527, %v2534
  %v2598 = vadd.f32 %v2528, %v2534
  %v2599 = vadd.f32 %v2529, %v2534
  %v2600 = vmax.f32 %v2536, 0.0
  %v2601 = vmax.f32 %v2537, 0.0
  %v2602 = vmax.f32 %v2538, 0.0
  %v2603 = vmax.f32 %v2539, 0.0
  %v2604 = vmax.f32 %v2540, 0.0
  %v2605 = vmax.f32 %v2541, 0.0
  %v2606 = vmax.f32 %v2542, 0.0
  %v2607 = vmax.f32 %v2543, 0.0
  %v2608 = vmax.f32 %v2544, 0.0
  %v2609 = vmax.f32 %v2545, 0.0
  %v2610 = vmax.f32 %v2546, 0.0
  %v2611 = vmax.f32 %v2547, 0.0
  %v2612 = vmax.f32 %v2548, 0.0
  %v2613 = vmax.f32 %v2549, 0.0
  %v2614 = vmax.f32 %v2550, 0.0
  %v2615 = vmax.f32 %v2551, 0.0
  %v2616 = vmax.f32 %v2552, 0.0
  %v2617 = vmax.f32 %v2553, 0.0
  %v2618 = vmax.f32 %v2554, 0.0
  %v2619 = vmax.f32 %v2555, 0.0
  %v2620 = vmax.f32 %v2556, 0.0
  %v2621 = vmax.f32 %v2557, 0.0
  %v2622 = vmax.f32 %v2558, 0.0
  %v2623 = vmax.f32 %v2559, 0.0
  %v2624 = vmax.f32 %v2560, 0.0
  %v2625 = vmax.f32 %v2561, 0.0
  %v2626 = vmax.f32 %v2562, 0.0
  %v2627 = vmax.f32 %v2563, 0.0
  %v2628 = vmax.f32 %v2564, 0.0
  %v2629 = vmax.f32 %v2565, 0.0
  %v2630 = vmax.f32 %v2566, 0.0
  %v2631 = vmax.f32 %v2567, 0.0
  %v2632 = vmax.f32 %v2568, 0.0
  %v2633 = vmax.f32 %v2569, 0.0
  %v2634 = vmax.f32 %v2570, 0.0
  %v2635 = vmax.f32 %v2571, 0.0
  %v2636 = vmax.f32 %v2572, 0.0
  %v2637 = vmax.f32 %v2573, 0.0
  %v2638 = vmax.f32 %v2574, 0.0
  %v2639 = vmax.f32 %v2575, 0.0
  %v2640 = vmax.f32 %v2576, 0.0
  %v2641 = vmax.f32 %v2577, 0.0
  %v2642 = vmax.f32 %v2578, 0.0
  %v2643 = vmax.f32 %v2579, 0.0
  %v2644 = vmax.f32 %v2580, 0.0
  %v2645 = vmax.f32 %v2581, 0.0
  %v2646 = vmax.f32 %v2582, 0.0
  %v2647 = vmax.f32 %v2583, 0.0
  %v2648 = vmax.f32 %v2584, 0.0
  %v2649 = vmax.f32 %v2585, 0.0
  %v2650 = vmax.f32 %v2586, 0.0
  %v2651 = vmax.f32 %v2587, 0.0
  %v2652 = vmax.f32 %v2588, 0.0
  %v2653 = vmax.f32 %v2589, 0.0
  %v2654 = vmax.f32 %v2590, 0.0
  %v2655 = vmax.f32 %v2591, 0.0
  %v2656 = vmax.f32 %v2592, 0.0
  %v2657 = vmax.f32 %v2593, 0.0
  %v2658 = vmax.f32 %v2594, 0.0
  %v2659 = vmax.f32 %v2595, 0.0
  %v2660 = vmax.f32 %v2596, 0.0
  %v2661 = vmax.f32 %v2597, 0.0
  %v2662 = vmax.f32 %v2598, 0.0
  %v2663 = vmax.f32 %v2599, 0.0
  %2664 = vst [vmem:[%s185] sm:$0xff] %v2600
  %2665 = vst [vmem:[%s185 + $0x8] sm:$0xff] %v2601
  %2666 = vst [vmem:[%s185 + $0x10] sm:$0xff] %v2602
  %2667 = vst [vmem:[%s185 + $0x18] sm:$0xff] %v2603
  %2668 = vst [vmem:[%s185 + $0x20] sm:$0xff] %v2604
  %2669 = vst [vmem:[%s185 + $0x28] sm:$0xff] %v2605
  %2670 = vst [vmem:[%s185 + $0x30] sm:$0xff] %v2606
  %2671 = vst [vmem:[%s185 + $0x38] sm:$0xff] %v2607
  %2672 = vst [vmem:[%s185 + $0x40] sm:$0xff] %v2608
  %2673 = vst [vmem:[%s185 + $0x48] sm:$0xff] %v2609
  %2674 = vst [vmem:[%s185 + $0x50] sm:$0xff] %v2610
  %2675 = vst [vmem:[%s185 + $0x58] sm:$0xff] %v2611
  %2676 = vst [vmem:[%s185 + $0x60] sm:$0xff] %v2612
  %2677 = vst [vmem:[%s185 + $0x68] sm:$0xff] %v2613
  %2678 = vst [vmem:[%s185 + $0x70] sm:$0xff] %v2614
  %2679 = vst [vmem:[%s185 + $0x78] sm:$0xff] %v2615
  %2680 = vst [vmem:[%s185 + $0x80] sm:$0xff] %v2616
  %2681 = vst [vmem:[%s185 + $0x88] sm:$0xff] %v2617
  %2682 = vst [vmem:[%s185 + $0x90] sm:$0xff] %v2618
  %2683 = vst [vmem:[%s185 + $0x98] sm:$0xff] %v2619
  %2684 = vst [vmem:[%s185 + $0xa0] sm:$0xff] %v2620
  %2685 = vst [vmem:[%s185 + $0xa8] sm:$0xff] %v2621
  %2686 = vst [vmem:[%s185 + $0xb0] sm:$0xff] %v2622
  %2687 = vst [vmem:[%s185 + $0xb8] sm:$0xff] %v2623
  %2688 = vst [vmem:[%s185 + $0xc0] sm:$0xff] %v2624
  %2689 = vst [vmem:[%s185 + $0xc8] sm:$0xff] %v2625
  %2690 = vst [vmem:[%s185 + $0xd0] sm:$0xff] %v2626
  %2691 = vst [vmem:[%s185 + $0xd8] sm:$0xff] %v2627
  %2692 = vst [vmem:[%s185 + $0xe0] sm:$0xff] %v2628
  %2693 = vst [vmem:[%s185 + $0xe8] sm:$0xff] %v2629
  %2694 = vst [vmem:[%s185 + $0xf0] sm:$0xff] %v2630
  %2695 = vst [vmem:[%s185 + $0xf8] sm:$0xff] %v2631
  %2696 = vst [vmem:[%s185 + $0x120] sm:$0xff] %v2632
  %2697 = vst [vmem:[%s185 + $0x128] sm:$0xff] %v2633
  %2698 = vst [vmem:[%s185 + $0x130] sm:$0xff] %v2634
  %2699 = vst [vmem:[%s185 + $0x138] sm:$0xff] %v2635
  %2700 = vst [vmem:[%s185 + $0x140] sm:$0xff] %v2636
  %2701 = vst [vmem:[%s185 + $0x148] sm:$0xff] %v2637
  %2702 = vst [vmem:[%s185 + $0x150] sm:$0xff] %v2638
  %2703 = vst [vmem:[%s185 + $0x158] sm:$0xff] %v2639
  %2704 = vst [vmem:[%s185 + $0x160] sm:$0xff] %v2640
  %2705 = vst [vmem:[%s185 + $0x168] sm:$0xff] %v2641
  %2706 = vst [vmem:[%s185 + $0x170] sm:$0xff] %v2642
  %2707 = vst [vmem:[%s185 + $0x178] sm:$0xff] %v2643
  %2708 = vst [vmem:[%s185 + $0x180] sm:$0xff] %v2644
  %2709 = vst [vmem:[%s185 + $0x188] sm:$0xff] %v2645
  %2710 = vst [vmem:[%s185 + $0x190] sm:$0xff] %v2646
  %2711 = vst [vmem:[%s185 + $0x198] sm:$0xff] %v2647
  %2712 = vst [vmem:[%s185 + $0x1a0] sm:$0xff] %v2648
  %2713 = vst [vmem:[%s185 + $0x1a8] sm:$0xff] %v2649
  %2714 = vst [vmem:[%s185 + $0x1b0] sm:$0xff] %v2650
  %2715 = vst [vmem:[%s185 + $0x1b8] sm:$0xff] %v2651
  %2716 = vst [vmem:[%s185 + $0x1c0] sm:$0xff] %v2652
  %2717 = vst [vmem:[%s185 + $0x1c8] sm:$0xff] %v2653
  %2718 = vst [vmem:[%s185 + $0x1d0] sm:$0xff] %v2654
  %2719 = vst [vmem:[%s185 + $0x1d8] sm:$0xff] %v2655
  %2720 = vst [vmem:[%s185 + $0x1e0] sm:$0xff] %v2656
  %2721 = vst [vmem:[%s185 + $0x1e8] sm:$0xff] %v2657
  %2722 = vst [vmem:[%s185 + $0x1f0] sm:$0xff] %v2658
  %2723 = vst [vmem:[%s185 + $0x1f8] sm:$0xff] %v2659
  %2724 = vst [vmem:[%s185 + $0x200] sm:$0xff] %v2660
  %2725 = vst [vmem:[%s185 + $0x208] sm:$0xff] %v2661
  %2726 = vst [vmem:[%s185 + $0x210] sm:$0xff] %v2662
  %2727 = vst [vmem:[%s185 + $0x218] sm:$0xff] %v2663
  %v2728 = vld [vmem:[#allocation2] sm:$0xff]
  %v2729 = vld [vmem:[#allocation2 + $0x8] sm:$0xff]
  %v2730 = vld [vmem:[#allocation2 + $0x10] sm:$0xff]
  %v2731 = vld [vmem:[#allocation2 + $0x18] sm:$0xff]
  %v2732 = vld [vmem:[#allocation2 + $0x20] sm:$0xff]
  %v2733 = vld [vmem:[#allocation2 + $0x28] sm:$0xff]
  %v2734 = vld [vmem:[#allocation2 + $0x30] sm:$0xff]
  %v2735 = vld [vmem:[#allocation2 + $0x38] sm:$0xff]
  %v2736 = vld [vmem:[#allocation2 + $0x40] sm:$0xff]
  %v2737 = vld [vmem:[#allocation2 + $0x48] sm:$0xff]
  %v2738 = vld [vmem:[#allocation2 + $0x50] sm:$0xff]
  %v2739 = vld [vmem:[#allocation2 + $0x58] sm:$0xff]
  %v2740 = vld [vmem:[#allocation2 + $0x60] sm:$0xff]
  %v2741 = vld [vmem:[#allocation2 + $0x68] sm:$0xff]
  %v2742 = vld [vmem:[#allocation2 + $0x70] sm:$0xff]
  %v2743 = vld [vmem:[#allocation2 + $0x78] sm:$0xff]
  %v2744 = vld [vmem:[#allocation2 + $0x80] sm:$0xff]
  %v2745 = vld [vmem:[#allocation2 + $0x88] sm:$0xff]
  %v2746 = vld [vmem:[#allocation2 + $0x90] sm:$0xff]
  %v2747 = vld [vmem:[#allocation2 + $0x98] sm:$0xff]
  %v2748 = vld [vmem:[#allocation2 + $0xa0] sm:$0xff]
  %v2749 = vld [vmem:[#allocation2 + $0xa8] sm:$0xff]
  %v2750 = vld [vmem:[#allocation2 + $0xb0] sm:$0xff]
  %v2751 = vld [vmem:[#allocation2 + $0xb8] sm:$0xff]
  %v2752 = vld [vmem:[#allocation2 + $0xc0] sm:$0xff]
  %v2753 = vld [vmem:[#allocation2 + $0xc8] sm:$0xff]
  %v2754 = vld [vmem:[#allocation2 + $0xd0] sm:$0xff]
  %v2755 = vld [vmem:[#allocation2 + $0xd8] sm:$0xff]
  %v2756 = vld [vmem:[#allocation2 + $0xe0] sm:$0xff]
  %v2757 = vld [vmem:[#allocation2 + $0xe8] sm:$0xff]
  %v2758 = vld [vmem:[#allocation2 + $0xf0] sm:$0xff]
  %v2759 = vld [vmem:[#allocation2 + $0xf8] sm:$0xff]
  %v2760 = vld [vmem:[#allocation2 + $0x100] sm:$0xff]
  %v2761 = vld [vmem:[#allocation2 + $0x108] sm:$0xff]
  %v2762 = vld [vmem:[#allocation2 + $0x110] sm:$0xff]
  %v2763 = vld [vmem:[#allocation2 + $0x118] sm:$0xff]
  %v2764 = vld [vmem:[#allocation2 + $0x120] sm:$0xff]
  %v2765 = vld [vmem:[#allocation2 + $0x128] sm:$0xff]
  %v2766 = vld [vmem:[#allocation2 + $0x130] sm:$0xff]
  %v2767 = vld [vmem:[#allocation2 + $0x138] sm:$0xff]
  %v2768 = vld [vmem:[#allocation2 + $0x140] sm:$0xff]
  %v2769 = vld [vmem:[#allocation2 + $0x148] sm:$0xff]
  %v2770 = vld [vmem:[#allocation2 + $0x150] sm:$0xff]
  %v2771 = vld [vmem:[#allocation2 + $0x158] sm:$0xff]
  %v2772 = vld [vmem:[#allocation2 + $0x160] sm:$0xff]
  %v2773 = vld [vmem:[#allocation2 + $0x168] sm:$0xff]
  %v2774 = vld [vmem:[#allocation2 + $0x170] sm:$0xff]
  %v2775 = vld [vmem:[#allocation2 + $0x178] sm:$0xff]
  %v2776 = vld [vmem:[#allocation2 + $0x180] sm:$0xff]
  %v2777 = vld [vmem:[#allocation2 + $0x188] sm:$0xff]
  %v2778 = vld [vmem:[#allocation2 + $0x190] sm:$0xff]
  %v2779 = vld [vmem:[#allocation2 + $0x198] sm:$0xff]
  %v2780 = vld [vmem:[#allocation2 + $0x1a0] sm:$0xff]
  %v2781 = vld [vmem:[#allocation2 + $0x1a8] sm:$0xff]
  %v2782 = vld [vmem:[#allocation2 + $0x1b0] sm:$0xff]
  %v2783 = vld [vmem:[#allocation2 + $0x1b8] sm:$0xff]
  %v2784 = vld [vmem:[#allocation2 + $0x1c0] sm:$0xff]
  %v2785 = vld [vmem:[#allocation2 + $0x1c8] sm:$0xff]
  %v2786 = vld [vmem:[#allocation2 + $0x1d0] sm:$0xff]
  %v2787 = vld [vmem:[#allocation2 + $0x1d8] sm:$0xff]
  %v2788 = vld [vmem:[#allocation2 + $0x1e0] sm:$0xff]
  %v2789 = vld [vmem:[#allocation2 + $0x1e8] sm:$0xff]
  %v2790 = vld [vmem:[#allocation2 + $0x1f0] sm:$0xff]
  %v2791 = vld [vmem:[#allocation2 + $0x1f8] sm:$0xff]
  %v2792 = vld [vmem:[#allocation2 + $0x200] sm:$0xff]
  %v2793 = vld [vmem:[#allocation2 + $0x208] sm:$0xff]
  %v2794 = vld [vmem:[#allocation2 + $0x210] sm:$0xff]
  %v2795 = vld [vmem:[#allocation2 + $0x218] sm:$0xff]
  %v2796 = vld [vmem:[#allocation2 + $0x220] sm:$0xff]
  %v2797 = vld [vmem:[#allocation2 + $0x228] sm:$0xff]
  %v2798 = vld [vmem:[#allocation2 + $0x230] sm:$0xff]
  %v2799 = vld [vmem:[#allocation2 + $0x238] sm:$0xff]
  %v2800 = vrot.slane %v2728, 7
  %v2801 = vrot.slane %v2730, 7
  %v2802 = vrot.slane %v2732, 7
  %v2803 = vrot.slane %v2734, 7
  %v2804 = vrot.slane %v2736, 7
  %v2805 = vrot.slane %v2738, 7
  %v2806 = vrot.slane %v2740, 7
  %v2807 = vrot.slane %v2742, 7
  %v2808 = vrot.slane %v2744, 7
  %v2809 = vrot.slane %v2746, 7
  %v2810 = vrot.slane %v2748, 7
  %v2811 = vrot.slane %v2750, 7
  %v2812 = vrot.slane %v2752, 7
  %v2813 = vrot.slane %v2754, 7
  %v2814 = vrot.slane %v2756, 7
  %v2815 = vrot.slane %v2758, 7
  %v2816 = vrot.slane %v2760, 7
  %v2817 = vrot.slane %v2762, 7
  %v2818 = vrot.slane %v2764, 7
  %v2819 = vrot.slane %v2766, 7
  %v2820 = vrot.slane %v2768, 7
  %v2821 = vrot.slane %v2770, 7
  %v2822 = vrot.slane %v2772, 7
  %v2823 = vrot.slane %v2774, 7
  %v2824 = vrot.slane %v2776, 7
  %v2825 = vrot.slane %v2778, 7
  %v2826 = vrot.slane %v2780, 7
  %v2827 = vrot.slane %v2782, 7
  %v2828 = vrot.slane %v2784, 7
  %v2829 = vrot.slane %v2786, 7
  %v2830 = vrot.slane %v2788, 7
  %v2831 = vrot.slane %v2790, 7
  %v2832 = vrot.slane %v2792, 7
  %v2833 = vrot.slane %v2794, 7
  %v2834 = vrot.slane %v2796, 7
  %v2835 = vrot.slane %v2798, 7
  %v2836 = vrot.slane %v2729, 7
  %v2837 = vrot.slane %v2731, 7
  %v2838 = vrot.slane %v2733, 7
  %v2839 = vrot.slane %v2735, 7
  %v2840 = vrot.slane %v2737, 7
  %v2841 = vrot.slane %v2739, 7
  %v2842 = vrot.slane %v2741, 7
  %v2843 = vrot.slane %v2743, 7
  %v2844 = vrot.slane %v2745, 7
  %v2845 = vrot.slane %v2747, 7
  %v2846 = vrot.slane %v2749, 7
  %v2847 = vrot.slane %v2751, 7
  %v2848 = vrot.slane %v2753, 7
  %v2849 = vrot.slane %v2755, 7
  %v2850 = vrot.slane %v2757, 7
  %v2851 = vrot.slane %v2759, 7
  %v2852 = vrot.slane %v2761, 7
  %v2853 = vrot.slane %v2763, 7
  %v2854 = vrot.slane %v2765, 7
  %v2855 = vrot.slane %v2767, 7
  %v2856 = vrot.slane %v2769, 7
  %v2857 = vrot.slane %v2771, 7
  %v2858 = vrot.slane %v2773, 7
  %v2859 = vrot.slane %v2775, 7
  %v2860 = vrot.slane %v2777, 7
  %v2861 = vrot.slane %v2779, 7
  %v2862 = vrot.slane %v2781, 7
  %v2863 = vrot.slane %v2783, 7
  %v2864 = vrot.slane %v2785, 7
  %v2865 = vrot.slane %v2787, 7
  %v2866 = vrot.slane %v2789, 7
  %v2867 = vrot.slane %v2791, 7
  %v2868 = vrot.slane %v2793, 7
  %v2869 = vrot.slane %v2795, 7
  %v2870 = vrot.slane %v2797, 7
  %v2871 = vrot.slane %v2799, 7
  %v2872 = vsel %vm394, %v2800, %v2836
  %v2873 = vsel %vm394, %v2801, %v2837
  %v2874 = vsel %vm394, %v2802, %v2838
  %v2875 = vsel %vm394, %v2803, %v2839
  %v2876 = vsel %vm394, %v2804, %v2840
  %v2877 = vsel %vm394, %v2805, %v2841
  %v2878 = vsel %vm394, %v2806, %v2842
  %v2879 = vsel %vm394, %v2807, %v2843
  %v2880 = vsel %vm394, %v2808, %v2844
  %v2881 = vsel %vm394, %v2809, %v2845
  %v2882 = vsel %vm394, %v2810, %v2846
  %v2883 = vsel %vm394, %v2811, %v2847
  %v2884 = vsel %vm394, %v2812, %v2848
  %v2885 = vsel %vm394, %v2813, %v2849
  %v2886 = vsel %vm394, %v2814, %v2850
  %v2887 = vsel %vm394, %v2815, %v2851
  %v2888 = vsel %vm394, %v2816, %v2852
  %v2889 = vsel %vm394, %v2817, %v2853
  %v2890 = vsel %vm394, %v2818, %v2854
  %v2891 = vsel %vm394, %v2819, %v2855
  %v2892 = vsel %vm394, %v2820, %v2856
  %v2893 = vsel %vm394, %v2821, %v2857
  %v2894 = vsel %vm394, %v2822, %v2858
  %v2895 = vsel %vm394, %v2823, %v2859
  %v2896 = vsel %vm394, %v2824, %v2860
  %v2897 = vsel %vm394, %v2825, %v2861
  %v2898 = vsel %vm394, %v2826, %v2862
  %v2899 = vsel %vm394, %v2827, %v2863
  %v2900 = vsel %vm394, %v2828, %v2864
  %v2901 = vsel %vm394, %v2829, %v2865
  %v2902 = vsel %vm394, %v2830, %v2866
  %v2903 = vsel %vm394, %v2831, %v2867
  %v2904 = vsel %vm394, %v2832, %v2868
  %v2905 = vsel %vm394, %v2833, %v2869
  %v2906 = vsel %vm394, %v2834, %v2870
  %v2907 = vsel %vm394, %v2835, %v2871
  %v2908 = vsel %vm394, %v2836, %v2800
  %v2909 = vsel %vm394, %v2837, %v2801
  %v2910 = vsel %vm394, %v2838, %v2802
  %v2911 = vsel %vm394, %v2839, %v2803
  %v2912 = vsel %vm394, %v2840, %v2804
  %v2913 = vsel %vm394, %v2841, %v2805
  %v2914 = vsel %vm394, %v2842, %v2806
  %v2915 = vsel %vm394, %v2843, %v2807
  %v2916 = vsel %vm394, %v2844, %v2808
  %v2917 = vsel %vm394, %v2845, %v2809
  %v2918 = vsel %vm394, %v2846, %v2810
  %v2919 = vsel %vm394, %v2847, %v2811
  %v2920 = vsel %vm394, %v2848, %v2812
  %v2921 = vsel %vm394, %v2849, %v2813
  %v2922 = vsel %vm394, %v2850, %v2814
  %v2923 = vsel %vm394, %v2851, %v2815
  %v2924 = vsel %vm394, %v2852, %v2816
  %v2925 = vsel %vm394, %v2853, %v2817
  %v2926 = vsel %vm394, %v2854, %v2818
  %v2927 = vsel %vm394, %v2855, %v2819
  %v2928 = vsel %vm394, %v2856, %v2820
  %v2929 = vsel %vm394, %v2857, %v2821
  %v2930 = vsel %vm394, %v2858, %v2822
  %v2931 = vsel %vm394, %v2859, %v2823
  %v2932 = vsel %vm394, %v2860, %v2824
  %v2933 = vsel %vm394, %v2861, %v2825
  %v2934 = vsel %vm394, %v2862, %v2826
  %v2935 = vsel %vm394, %v2863, %v2827
  %v2936 = vsel %vm394, %v2864, %v2828
  %v2937 = vsel %vm394, %v2865, %v2829
  %v2938 = vsel %vm394, %v2866, %v2830
  %v2939 = vsel %vm394, %v2867, %v2831
  %v2940 = vsel %vm394, %v2868, %v2832
  %v2941 = vsel %vm394, %v2869, %v2833
  %v2942 = vsel %vm394, %v2870, %v2834
  %v2943 = vsel %vm394, %v2871, %v2835
  %v2944 = vsel %vm53, %v2908, 0.0
  %v2945 = vsel %vm54, %v2872, 0.0
  %v2946 = vsel %vm53, %v2909, 0.0
  %v2947 = vsel %vm54, %v2873, 0.0
  %v2948 = vsel %vm53, %v2910, 0.0
  %v2949 = vsel %vm54, %v2874, 0.0
  %v2950 = vsel %vm53, %v2911, 0.0
  %v2951 = vsel %vm54, %v2875, 0.0
  %v2952 = vsel %vm53, %v2912, 0.0
  %v2953 = vsel %vm54, %v2876, 0.0
  %v2954 = vsel %vm53, %v2913, 0.0
  %v2955 = vsel %vm54, %v2877, 0.0
  %v2956 = vsel %vm53, %v2914, 0.0
  %v2957 = vsel %vm54, %v2878, 0.0
  %v2958 = vsel %vm53, %v2915, 0.0
  %v2959 = vsel %vm54, %v2879, 0.0
  %v2960 = vsel %vm53, %v2916, 0.0
  %v2961 = vsel %vm54, %v2880, 0.0
  %v2962 = vsel %vm53, %v2917, 0.0
  %v2963 = vsel %vm54, %v2881, 0.0
  %v2964 = vsel %vm53, %v2918, 0.0
  %v2965 = vsel %vm54, %v2882, 0.0
  %v2966 = vsel %vm53, %v2919, 0.0
  %v2967 = vsel %vm54, %v2883, 0.0
  %v2968 = vsel %vm53, %v2920, 0.0
  %v2969 = vsel %vm54, %v2884, 0.0
  %v2970 = vsel %vm53, %v2921, 0.0
  %v2971 = vsel %vm54, %v2885, 0.0
  %v2972 = vsel %vm53, %v2922, 0.0
  %v2973 = vsel %vm54, %v2886, 0.0
  %v2974 = vsel %vm53, %v2923, 0.0
  %v2975 = vsel %vm54, %v2887, 0.0
  %v2976 = vsel %vm53, %v2924, 0.0
  %v2977 = vsel %vm54, %v2888, 0.0
  %v2978 = vsel %vm53, %v2925, 0.0
  %v2979 = vsel %vm54, %v2889, 0.0
  %v2980 = vsel %vm53, %v2926, 0.0
  %v2981 = vsel %vm54, %v2890, 0.0
  %v2982 = vsel %vm53, %v2927, 0.0
  %v2983 = vsel %vm54, %v2891, 0.0
  %v2984 = vsel %vm53, %v2928, 0.0
  %v2985 = vsel %vm54, %v2892, 0.0
  %v2986 = vsel %vm53, %v2929, 0.0
  %v2987 = vsel %vm54, %v2893, 0.0
  %v2988 = vsel %vm53, %v2930, 0.0
  %v2989 = vsel %vm54, %v2894, 0.0
  %v2990 = vsel %vm53, %v2931, 0.0
  %v2991 = vsel %vm54, %v2895, 0.0
  %v2992 = vsel %vm53, %v2932, 0.0
  %v2993 = vsel %vm54, %v2896, 0.0
  %v2994 = vsel %vm53, %v2933, 0.0
  %v2995 = vsel %vm54, %v2897, 0.0
  %v2996 = vsel %vm53, %v2934, 0.0
  %v2997 = vsel %vm54, %v2898, 0.0
  %v2998 = vsel %vm53, %v2935, 0.0
  %v2999 = vsel %vm54, %v2899, 0.0
  %v3000 = vsel %vm53, %v2936, 0.0
  %v3001 = vsel %vm54, %v2900, 0.0
  %v3002 = vsel %vm53, %v2937, 0.0
  %v3003 = vsel %vm54, %v2901, 0.0
  %v3004 = vsel %vm53, %v2938, 0.0
  %v3005 = vsel %vm54, %v2902, 0.0
  %v3006 = vsel %vm53, %v2939, 0.0
  %v3007 = vsel %vm54, %v2903, 0.0
  %v3008 = vsel %vm53, %v2940, 0.0
  %v3009 = vsel %vm54, %v2904, 0.0
  %v3010 = vsel %vm53, %v2941, 0.0
  %v3011 = vsel %vm54, %v2905, 0.0
  %v3012 = vsel %vm53, %v2942, 0.0
  %v3013 = vsel %vm54, %v2906, 0.0
  %v3014 = vsel %vm53, %v2943, 0.0
  %v3015 = vsel %vm54, %v2907, 0.0
  %v3016 = vrot.slane %v2728, 1
  %v3017 = vrot.slane %v2730, 1
  %v3018 = vrot.slane %v2732, 1
  %v3019 = vrot.slane %v2734, 1
  %v3020 = vrot.slane %v2736, 1
  %v3021 = vrot.slane %v2738, 1
  %v3022 = vrot.slane %v2740, 1
  %v3023 = vrot.slane %v2742, 1
  %v3024 = vrot.slane %v2744, 1
  %v3025 = vrot.slane %v2746, 1
  %v3026 = vrot.slane %v2748, 1
  %v3027 = vrot.slane %v2750, 1
  %v3028 = vrot.slane %v2752, 1
  %v3029 = vrot.slane %v2754, 1
  %v3030 = vrot.slane %v2756, 1
  %v3031 = vrot.slane %v2758, 1
  %v3032 = vrot.slane %v2760, 1
  %v3033 = vrot.slane %v2762, 1
  %v3034 = vrot.slane %v2764, 1
  %v3035 = vrot.slane %v2766, 1
  %v3036 = vrot.slane %v2768, 1
  %v3037 = vrot.slane %v2770, 1
  %v3038 = vrot.slane %v2772, 1
  %v3039 = vrot.slane %v2774, 1
  %v3040 = vrot.slane %v2776, 1
  %v3041 = vrot.slane %v2778, 1
  %v3042 = vrot.slane %v2780, 1
  %v3043 = vrot.slane %v2782, 1
  %v3044 = vrot.slane %v2784, 1
  %v3045 = vrot.slane %v2786, 1
  %v3046 = vrot.slane %v2788, 1
  %v3047 = vrot.slane %v2790, 1
  %v3048 = vrot.slane %v2792, 1
  %v3049 = vrot.slane %v2794, 1
  %v3050 = vrot.slane %v2796, 1
  %v3051 = vrot.slane %v2798, 1
  %v3052 = vrot.slane %v2729, 1
  %v3053 = vrot.slane %v2731, 1
  %v3054 = vrot.slane %v2733, 1
  %v3055 = vrot.slane %v2735, 1
  %v3056 = vrot.slane %v2737, 1
  %v3057 = vrot.slane %v2739, 1
  %v3058 = vrot.slane %v2741, 1
  %v3059 = vrot.slane %v2743, 1
  %v3060 = vrot.slane %v2745, 1
  %v3061 = vrot.slane %v2747, 1
  %v3062 = vrot.slane %v2749, 1
  %v3063 = vrot.slane %v2751, 1
  %v3064 = vrot.slane %v2753, 1
  %v3065 = vrot.slane %v2755, 1
  %v3066 = vrot.slane %v2757, 1
  %v3067 = vrot.slane %v2759, 1
  %v3068 = vrot.slane %v2761, 1
  %v3069 = vrot.slane %v2763, 1
  %v3070 = vrot.slane %v2765, 1
  %v3071 = vrot.slane %v2767, 1
  %v3072 = vrot.slane %v2769, 1
  %v3073 = vrot.slane %v2771, 1
  %v3074 = vrot.slane %v2773, 1
  %v3075 = vrot.slane %v2775, 1
  %v3076 = vrot.slane %v2777, 1
  %v3077 = vrot.slane %v2779, 1
  %v3078 = vrot.slane %v2781, 1
  %v3079 = vrot.slane %v2783, 1
  %v3080 = vrot.slane %v2785, 1
  %v3081 = vrot.slane %v2787, 1
  %v3082 = vrot.slane %v2789, 1
  %v3083 = vrot.slane %v2791, 1
  %v3084 = vrot.slane %v2793, 1
  %v3085 = vrot.slane %v2795, 1
  %v3086 = vrot.slane %v2797, 1
  %v3087 = vrot.slane %v2799, 1
  %v3088 = vsel %vm611, %v3016, %v3052
  %v3089 = vsel %vm611, %v3017, %v3053
  %v3090 = vsel %vm611, %v3018, %v3054
  %v3091 = vsel %vm611, %v3019, %v3055
  %v3092 = vsel %vm611, %v3020, %v3056
  %v3093 = vsel %vm611, %v3021, %v3057
  %v3094 = vsel %vm611, %v3022, %v3058
  %v3095 = vsel %vm611, %v3023, %v3059
  %v3096 = vsel %vm611, %v3024, %v3060
  %v3097 = vsel %vm611, %v3025, %v3061
  %v3098 = vsel %vm611, %v3026, %v3062
  %v3099 = vsel %vm611, %v3027, %v3063
  %v3100 = vsel %vm611, %v3028, %v3064
  %v3101 = vsel %vm611, %v3029, %v3065
  %v3102 = vsel %vm611, %v3030, %v3066
  %v3103 = vsel %vm611, %v3031, %v3067
  %v3104 = vsel %vm611, %v3032, %v3068
  %v3105 = vsel %vm611, %v3033, %v3069
  %v3106 = vsel %vm611, %v3034, %v3070
  %v3107 = vsel %vm611, %v3035, %v3071
  %v3108 = vsel %vm611, %v3036, %v3072
  %v3109 = vsel %vm611, %v3037, %v3073
  %v3110 = vsel %vm611, %v3038, %v3074
  %v3111 = vsel %vm611, %v3039, %v3075
  %v3112 = vsel %vm611, %v3040, %v3076
  %v3113 = vsel %vm611, %v3041, %v3077
  %v3114 = vsel %vm611, %v3042, %v3078
  %v3115 = vsel %vm611, %v3043, %v3079
  %v3116 = vsel %vm611, %v3044, %v3080
  %v3117 = vsel %vm611, %v3045, %v3081
  %v3118 = vsel %vm611, %v3046, %v3082
  %v3119 = vsel %vm611, %v3047, %v3083
  %v3120 = vsel %vm611, %v3048, %v3084
  %v3121 = vsel %vm611, %v3049, %v3085
  %v3122 = vsel %vm611, %v3050, %v3086
  %v3123 = vsel %vm611, %v3051, %v3087
  %v3124 = vsel %vm611, %v3052, %v3016
  %v3125 = vsel %vm611, %v3053, %v3017
  %v3126 = vsel %vm611, %v3054, %v3018
  %v3127 = vsel %vm611, %v3055, %v3019
  %v3128 = vsel %vm611, %v3056, %v3020
  %v3129 = vsel %vm611, %v3057, %v3021
  %v3130 = vsel %vm611, %v3058, %v3022
  %v3131 = vsel %vm611, %v3059, %v3023
  %v3132 = vsel %vm611, %v3060, %v3024
  %v3133 = vsel %vm611, %v3061, %v3025
  %v3134 = vsel %vm611, %v3062, %v3026
  %v3135 = vsel %vm611, %v3063, %v3027
  %v3136 = vsel %vm611, %v3064, %v3028
  %v3137 = vsel %vm611, %v3065, %v3029
  %v3138 = vsel %vm611, %v3066, %v3030
  %v3139 = vsel %vm611, %v3067, %v3031
  %v3140 = vsel %vm611, %v3068, %v3032
  %v3141 = vsel %vm611, %v3069, %v3033
  %v3142 = vsel %vm611, %v3070, %v3034
  %v3143 = vsel %vm611, %v3071, %v3035
  %v3144 = vsel %vm611, %v3072, %v3036
  %v3145 = vsel %vm611, %v3073, %v3037
  %v3146 = vsel %vm611, %v3074, %v3038
  %v3147 = vsel %vm611, %v3075, %v3039
  %v3148 = vsel %vm611, %v3076, %v3040
  %v3149 = vsel %vm611, %v3077, %v3041
  %v3150 = vsel %vm611, %v3078, %v3042
  %v3151 = vsel %vm611, %v3079, %v3043
  %v3152 = vsel %vm611, %v3080, %v3044
  %v3153 = vsel %vm611, %v3081, %v3045
  %v3154 = vsel %vm611, %v3082, %v3046
  %v3155 = vsel %vm611, %v3083, %v3047
  %v3156 = vsel %vm611, %v3084, %v3048
  %v3157 = vsel %vm611, %v3085, %v3049
  %v3158 = vsel %vm611, %v3086, %v3050
  %v3159 = vsel %vm611, %v3087, %v3051
  %v3160 = vsel %vm55, %v3088, 0.0
  %v3161 = vsel %vm56, %v3124, 0.0
  %v3162 = vsel %vm55, %v3089, 0.0
  %v3163 = vsel %vm56, %v3125, 0.0
  %v3164 = vsel %vm55, %v3090, 0.0
  %v3165 = vsel %vm56, %v3126, 0.0
  %v3166 = vsel %vm55, %v3091, 0.0
  %v3167 = vsel %vm56, %v3127, 0.0
  %v3168 = vsel %vm55, %v3092, 0.0
  %v3169 = vsel %vm56, %v3128, 0.0
  %v3170 = vsel %vm55, %v3093, 0.0
  %v3171 = vsel %vm56, %v3129, 0.0
  %v3172 = vsel %vm55, %v3094, 0.0
  %v3173 = vsel %vm56, %v3130, 0.0
  %v3174 = vsel %vm55, %v3095, 0.0
  %v3175 = vsel %vm56, %v3131, 0.0
  %v3176 = vsel %vm55, %v3096, 0.0
  %v3177 = vsel %vm56, %v3132, 0.0
  %v3178 = vsel %vm55, %v3097, 0.0
  %v3179 = vsel %vm56, %v3133, 0.0
  %v3180 = vsel %vm55, %v3098, 0.0
  %v3181 = vsel %vm56, %v3134, 0.0
  %v3182 = vsel %vm55, %v3099, 0.0
  %v3183 = vsel %vm56, %v3135, 0.0
  %v3184 = vsel %vm55, %v3100, 0.0
  %v3185 = vsel %vm56, %v3136, 0.0
  %v3186 = vsel %vm55, %v3101, 0.0
  %v3187 = vsel %vm56, %v3137, 0.0
  %v3188 = vsel %vm55, %v3102, 0.0
  %v3189 = vsel %vm56, %v3138, 0.0
  %v3190 = vsel %vm55, %v3103, 0.0
  %v3191 = vsel %vm56, %v3139, 0.0
  %v3192 = vsel %vm55, %v3104, 0.0
  %v3193 = vsel %vm56, %v3140, 0.0
  %v3194 = vsel %vm55, %v3105, 0.0
  %v3195 = vsel %vm56, %v3141, 0.0
  %v3196 = vsel %vm55, %v3106, 0.0
  %v3197 = vsel %vm56, %v3142, 0.0
  %v3198 = vsel %vm55, %v3107, 0.0
  %v3199 = vsel %vm56, %v3143, 0.0
  %v3200 = vsel %vm55, %v3108, 0.0
  %v3201 = vsel %vm56, %v3144, 0.0
  %v3202 = vsel %vm55, %v3109, 0.0
  %v3203 = vsel %vm56, %v3145, 0.0
  %v3204 = vsel %vm55, %v3110, 0.0
  %v3205 = vsel %vm56, %v3146, 0.0
  %v3206 = vsel %vm55, %v3111, 0.0
  %v3207 = vsel %vm56, %v3147, 0.0
  %v3208 = vsel %vm55, %v3112, 0.0
  %v3209 = vsel %vm56, %v3148, 0.0
  %v3210 = vsel %vm55, %v3113, 0.0
  %v3211 = vsel %vm56, %v3149, 0.0
  %v3212 = vsel %vm55, %v3114, 0.0
  %v3213 = vsel %vm56, %v3150, 0.0
  %v3214 = vsel %vm55, %v3115, 0.0
  %v3215 = vsel %vm56, %v3151, 0.0
  %v3216 = vsel %vm55, %v3116, 0.0
  %v3217 = vsel %vm56, %v3152, 0.0
  %v3218 = vsel %vm55, %v3117, 0.0
  %v3219 = vsel %vm56, %v3153, 0.0
  %v3220 = vsel %vm55, %v3118, 0.0
  %v3221 = vsel %vm56, %v3154, 0.0
  %v3222 = vsel %vm55, %v3119, 0.0
  %v3223 = vsel %vm56, %v3155, 0.0
  %v3224 = vsel %vm55, %v3120, 0.0
  %v3225 = vsel %vm56, %v3156, 0.0
  %v3226 = vsel %vm55, %v3121, 0.0
  %v3227 = vsel %vm56, %v3157, 0.0
  %v3228 = vsel %vm55, %v3122, 0.0
  %v3229 = vsel %vm56, %v3158, 0.0
  %v3230 = vsel %vm55, %v3123, 0.0
  %v3231 = vsel %vm56, %v3159, 0.0
  %v3232 = vmul.f32 %v2944, %v759
  %v3233 = vmul.f32 %v2945, %v759
  %v3234 = vmul.f32 %v2946, %v759
  %v3235 = vmul.f32 %v2947, %v759
  %v3236 = vmul.f32 %v2948, %v759
  %v3237 = vmul.f32 %v2949, %v759
  %v3238 = vmul.f32 %v2950, %v759
  %v3239 = vmul.f32 %v2951, %v759
  %v3240 = vmul.f32 %v2952, %v759
  %v3241 = vmul.f32 %v2953, %v759
  %v3242 = vmul.f32 %v2954, %v759
  %v3243 = vmul.f32 %v2955, %v759
  %v3244 = vmul.f32 %v2956, %v759
  %v3245 = vmul.f32 %v2957, %v759
  %v3246 = vmul.f32 %v2958, %v759
  %v3247 = vmul.f32 %v2959, %v759
  %v3248 = vmul.f32 %v2960, %v759
  %v3249 = vmul.f32 %v2961, %v759
  %v3250 = vmul.f32 %v2962, %v759
  %v3251 = vmul.f32 %v2963, %v759
  %v3252 = vmul.f32 %v2964, %v759
  %v3253 = vmul.f32 %v2965, %v759
  %v3254 = vmul.f32 %v2966, %v759
  %v3255 = vmul.f32 %v2967, %v759
  %v3256 = vmul.f32 %v2968, %v759
  %v3257 = vmul.f32 %v2969, %v759
  %v3258 = vmul.f32 %v2970, %v759
  %v3259 = vmul.f32 %v2971, %v759
  %v3260 = vmul.f32 %v2972, %v759
  %v3261 = vmul.f32 %v2973, %v759
  %v3262 = vmul.f32 %v2974, %v759
  %v3263 = vmul.f32 %v2975, %v759
  %v3264 = vmul.f32 %v2980, %v759
  %v3265 = vmul.f32 %v2981, %v759
  %v3266 = vmul.f32 %v2982, %v759
  %v3267 = vmul.f32 %v2983, %v759
  %v3268 = vmul.f32 %v2984, %v759
  %v3269 = vmul.f32 %v2985, %v759
  %v3270 = vmul.f32 %v2986, %v759
  %v3271 = vmul.f32 %v2987, %v759
  %v3272 = vmul.f32 %v2988, %v759
  %v3273 = vmul.f32 %v2989, %v759
  %v3274 = vmul.f32 %v2990, %v759
  %v3275 = vmul.f32 %v2991, %v759
  %v3276 = vmul.f32 %v2992, %v759
  %v3277 = vmul.f32 %v2993, %v759
  %v3278 = vmul.f32 %v2994, %v759
  %v3279 = vmul.f32 %v2995, %v759
  %v3280 = vmul.f32 %v2996, %v759
  %v3281 = vmul.f32 %v2997, %v759
  %v3282 = vmul.f32 %v2998, %v759
  %v3283 = vmul.f32 %v2999, %v759
  %v3284 = vmul.f32 %v3000, %v759
  %v3285 = vmul.f32 %v3001, %v759
  %v3286 = vmul.f32 %v3002, %v759
  %v3287 = vmul.f32 %v3003, %v759
  %v3288 = vmul.f32 %v3004, %v759
  %v3289 = vmul.f32 %v3005, %v759
  %v3290 = vmul.f32 %v3006, %v759
  %v3291 = vmul.f32 %v3007, %v759
  %v3292 = vmul.f32 %v3008, %v759
  %v3293 = vmul.f32 %v3009, %v759
  %v3294 = vmul.f32 %v3010, %v759
  %v3295 = vmul.f32 %v3011, %v759
  %v3296 = vmul.f32 %v2728, %v827
  %v3297 = vmul.f32 %v2729, %v827
  %v3298 = vmul.f32 %v2730, %v827
  %v3299 = vmul.f32 %v2731, %v827
  %v3300 = vmul.f32 %v2732, %v827
  %v3301 = vmul.f32 %v2733, %v827
  %v3302 = vmul.f32 %v2734, %v827
  %v3303 = vmul.f32 %v2735, %v827
  %v3304 = vmul.f32 %v2736, %v827
  %v3305 = vmul.f32 %v2737, %v827
  %v3306 = vmul.f32 %v2738, %v827
  %v3307 = vmul.f32 %v2739, %v827
  %v3308 = vmul.f32 %v2740, %v827
  %v3309 = vmul.f32 %v2741, %v827
  %v3310 = vmul.f32 %v2742, %v827
  %v3311 = vmul.f32 %v2743, %v827
  %v3312 = vmul.f32 %v2744, %v827
  %v3313 = vmul.f32 %v2745, %v827
  %v3314 = vmul.f32 %v2746, %v827
  %v3315 = vmul.f32 %v2747, %v827
  %v3316 = vmul.f32 %v2748, %v827
  %v3317 = vmul.f32 %v2749, %v827
  %v3318 = vmul.f32 %v2750, %v827
  %v3319 = vmul.f32 %v2751, %v827
  %v3320 = vmul.f32 %v2752, %v827
  %v3321 = vmul.f32 %v2753, %v827
  %v3322 = vmul.f32 %v2754, %v827
  %v3323 = vmul.f32 %v2755, %v827
  %v3324 = vmul.f32 %v2756, %v827
  %v3325 = vmul.f32 %v2757, %v827
  %v3326 = vmul.f32 %v2758, %v827
  %v3327 = vmul.f32 %v2759, %v827
  %v3328 = vmul.f32 %v2764, %v827
  %v3329 = vmul.f32 %v2765, %v827
  %v3330 = vmul.f32 %v2766, %v827
  %v3331 = vmul.f32 %v2767, %v827
  %v3332 = vmul.f32 %v2768, %v827
  %v3333 = vmul.f32 %v2769, %v827
  %v3334 = vmul.f32 %v2770, %v827
  %v3335 = vmul.f32 %v2771, %v827
  %v3336 = vmul.f32 %v2772, %v827
  %v3337 = vmul.f32 %v2773, %v827
  %v3338 = vmul.f32 %v2774, %v827
  %v3339 = vmul.f32 %v2775, %v827
  %v3340 = vmul.f32 %v2776, %v827
  %v3341 = vmul.f32 %v2777, %v827
  %v3342 = vmul.f32 %v2778, %v827
  %v3343 = vmul.f32 %v2779, %v827
  %v3344 = vmul.f32 %v2780, %v827
  %v3345 = vmul.f32 %v2781, %v827
  %v3346 = vmul.f32 %v2782, %v827
  %v3347 = vmul.f32 %v2783, %v827
  %v3348 = vmul.f32 %v2784, %v827
  %v3349 = vmul.f32 %v2785, %v827
  %v3350 = vmul.f32 %v2786, %v827
  %v3351 = vmul.f32 %v2787, %v827
  %v3352 = vmul.f32 %v2788, %v827
  %v3353 = vmul.f32 %v2789, %v827
  %v3354 = vmul.f32 %v2790, %v827
  %v3355 = vmul.f32 %v2791, %v827
  %v3356 = vmul.f32 %v2792, %v827
  %v3357 = vmul.f32 %v2793, %v827
  %v3358 = vmul.f32 %v2794, %v827
  %v3359 = vmul.f32 %v2795, %v827
  %v3360 = vadd.f32 %v3232, %v3296
  %v3361 = vadd.f32 %v3233, %v3297
  %v3362 = vadd.f32 %v3234, %v3298
  %v3363 = vadd.f32 %v3235, %v3299
  %v3364 = vadd.f32 %v3236, %v3300
  %v3365 = vadd.f32 %v3237, %v3301
  %v3366 = vadd.f32 %v3238, %v3302
  %v3367 = vadd.f32 %v3239, %v3303
  %v3368 = vadd.f32 %v3240, %v3304
  %v3369 = vadd.f32 %v3241, %v3305
  %v3370 = vadd.f32 %v3242, %v3306
  %v3371 = vadd.f32 %v3243, %v3307
  %v3372 = vadd.f32 %v3244, %v3308
  %v3373 = vadd.f32 %v3245, %v3309
  %v3374 = vadd.f32 %v3246, %v3310
  %v3375 = vadd.f32 %v3247, %v3311
  %v3376 = vadd.f32 %v3248, %v3312
  %v3377 = vadd.f32 %v3249, %v3313
  %v3378 = vadd.f32 %v3250, %v3314
  %v3379 = vadd.f32 %v3251, %v3315
  %v3380 = vadd.f32 %v3252, %v3316
  %v3381 = vadd.f32 %v3253, %v3317
  %v3382 = vadd.f32 %v3254, %v3318
  %v3383 = vadd.f32 %v3255, %v3319
  %v3384 = vadd.f32 %v3256, %v3320
  %v3385 = vadd.f32 %v3257, %v3321
  %v3386 = vadd.f32 %v3258, %v3322
  %v3387 = vadd.f32 %v3259, %v3323
  %v3388 = vadd.f32 %v3260, %v3324
  %v3389 = vadd.f32 %v3261, %v3325
  %v3390 = vadd.f32 %v3262, %v3326
  %v3391 = vadd.f32 %v3263, %v3327
  %v3392 = vadd.f32 %v3264, %v3328
  %v3393 = vadd.f32 %v3265, %v3329
  %v3394 = vadd.f32 %v3266, %v3330
  %v3395 = vadd.f32 %v3267, %v3331
  %v3396 = vadd.f32 %v3268, %v3332
  %v3397 = vadd.f32 %v3269, %v3333
  %v3398 = vadd.f32 %v3270, %v3334
  %v3399 = vadd.f32 %v3271, %v3335
  %v3400 = vadd.f32 %v3272, %v3336
  %v3401 = vadd.f32 %v3273, %v3337
  %v3402 = vadd.f32 %v3274, %v3338
  %v3403 = vadd.f32 %v3275, %v3339
  %v3404 = vadd.f32 %v3276, %v3340
  %v3405 = vadd.f32 %v3277, %v3341
  %v3406 = vadd.f32 %v3278, %v3342
  %v3407 = vadd.f32 %v3279, %v3343
  %v3408 = vadd.f32 %v3280, %v3344
  %v3409 = vadd.f32 %v3281, %v3345
  %v3410 = vadd.f32 %v3282, %v3346
  %v3411 = vadd.f32 %v3283, %v3347
  %v3412 = vadd.f32 %v3284, %v3348
  %v3413 = vadd.f32 %v3285, %v3349
  %v3414 = vadd.f32 %v3286, %v3350
  %v3415 = vadd.f32 %v3287, %v3351
  %v3416 = vadd.f32 %v3288, %v3352
  %v3417 = vadd.f32 %v3289, %v3353
  %v3418 = vadd.f32 %v3290, %v3354
  %v3419 = vadd.f32 %v3291, %v3355
  %v3420 = vadd.f32 %v3292, %v3356
  %v3421 = vadd.f32 %v3293, %v3357
  %v3422 = vadd.f32 %v3294, %v3358
  %v3423 = vadd.f32 %v3295, %v3359
  %v3424 = vmul.f32 %v3160, %v959
  %v3425 = vmul.f32 %v3161, %v959
  %v3426 = vmul.f32 %v3162, %v959
  %v3427 = vmul.f32 %v3163, %v959
  %v3428 = vmul.f32 %v3164, %v959
  %v3429 = vmul.f32 %v3165, %v959
  %v3430 = vmul.f32 %v3166, %v959
  %v3431 = vmul.f32 %v3167, %v959
  %v3432 = vmul.f32 %v3168, %v959
  %v3433 = vmul.f32 %v3169, %v959
  %v3434 = vmul.f32 %v3170, %v959
  %v3435 = vmul.f32 %v3171, %v959
  %v3436 = vmul.f32 %v3172, %v959
  %v3437 = vmul.f32 %v3173, %v959
  %v3438 = vmul.f32 %v3174, %v959
  %v3439 = vmul.f32 %v3175, %v959
  %v3440 = vmul.f32 %v3176, %v959
  %v3441 = vmul.f32 %v3177, %v959
  %v3442 = vmul.f32 %v3178, %v959
  %v3443 = vmul.f32 %v3179, %v959
  %v3444 = vmul.f32 %v3180, %v959
  %v3445 = vmul.f32 %v3181, %v959
  %v3446 = vmul.f32 %v3182, %v959
  %v3447 = vmul.f32 %v3183, %v959
  %v3448 = vmul.f32 %v3184, %v959
  %v3449 = vmul.f32 %v3185, %v959
  %v3450 = vmul.f32 %v3186, %v959
  %v3451 = vmul.f32 %v3187, %v959
  %v3452 = vmul.f32 %v3188, %v959
  %v3453 = vmul.f32 %v3189, %v959
  %v3454 = vmul.f32 %v3190, %v959
  %v3455 = vmul.f32 %v3191, %v959
  %v3456 = vmul.f32 %v3196, %v959
  %v3457 = vmul.f32 %v3197, %v959
  %v3458 = vmul.f32 %v3198, %v959
  %v3459 = vmul.f32 %v3199, %v959
  %v3460 = vmul.f32 %v3200, %v959
  %v3461 = vmul.f32 %v3201, %v959
  %v3462 = vmul.f32 %v3202, %v959
  %v3463 = vmul.f32 %v3203, %v959
  %v3464 = vmul.f32 %v3204, %v959
  %v3465 = vmul.f32 %v3205, %v959
  %v3466 = vmul.f32 %v3206, %v959
  %v3467 = vmul.f32 %v3207, %v959
  %v3468 = vmul.f32 %v3208, %v959
  %v3469 = vmul.f32 %v3209, %v959
  %v3470 = vmul.f32 %v3210, %v959
  %v3471 = vmul.f32 %v3211, %v959
  %v3472 = vmul.f32 %v3212, %v959
  %v3473 = vmul.f32 %v3213, %v959
  %v3474 = vmul.f32 %v3214, %v959
  %v3475 = vmul.f32 %v3215, %v959
  %v3476 = vmul.f32 %v3216, %v959
  %v3477 = vmul.f32 %v3217, %v959
  %v3478 = vmul.f32 %v3218, %v959
  %v3479 = vmul.f32 %v3219, %v959
  %v3480 = vmul.f32 %v3220, %v959
  %v3481 = vmul.f32 %v3221, %v959
  %v3482 = vmul.f32 %v3222, %v959
  %v3483 = vmul.f32 %v3223, %v959
  %v3484 = vmul.f32 %v3224, %v959
  %v3485 = vmul.f32 %v3225, %v959
  %v3486 = vmul.f32 %v3226, %v959
  %v3487 = vmul.f32 %v3227, %v959
  %v3488 = vadd.f32 %v3360, %v3424
  %v3489 = vadd.f32 %v3361, %v3425
  %v3490 = vadd.f32 %v3362, %v3426
  %v3491 = vadd.f32 %v3363, %v3427
  %v3492 = vadd.f32 %v3364, %v3428
  %v3493 = vadd.f32 %v3365, %v3429
  %v3494 = vadd.f32 %v3366, %v3430
  %v3495 = vadd.f32 %v3367, %v3431
  %v3496 = vadd.f32 %v3368, %v3432
  %v3497 = vadd.f32 %v3369, %v3433
  %v3498 = vadd.f32 %v3370, %v3434
  %v3499 = vadd.f32 %v3371, %v3435
  %v3500 = vadd.f32 %v3372, %v3436
  %v3501 = vadd.f32 %v3373, %v3437
  %v3502 = vadd.f32 %v3374, %v3438
  %v3503 = vadd.f32 %v3375, %v3439
  %v3504 = vadd.f32 %v3376, %v3440
  %v3505 = vadd.f32 %v3377, %v3441
  %v3506 = vadd.f32 %v3378, %v3442
  %v3507 = vadd.f32 %v3379, %v3443
  %v3508 = vadd.f32 %v3380, %v3444
  %v3509 = vadd.f32 %v3381, %v3445
  %v3510 = vadd.f32 %v3382, %v3446
  %v3511 = vadd.f32 %v3383, %v3447
  %v3512 = vadd.f32 %v3384, %v3448
  %v3513 = vadd.f32 %v3385, %v3449
  %v3514 = vadd.f32 %v3386, %v3450
  %v3515 = vadd.f32 %v3387, %v3451
  %v3516 = vadd.f32 %v3388, %v3452
  %v3517 = vadd.f32 %v3389, %v3453
  %v3518 = vadd.f32 %v3390, %v3454
  %v3519 = vadd.f32 %v3391, %v3455
  %v3520 = vadd.f32 %v3392, %v3456
  %v3521 = vadd.f32 %v3393, %v3457
  %v3522 = vadd.f32 %v3394, %v3458
  %v3523 = vadd.f32 %v3395, %v3459
  %v3524 = vadd.f32 %v3396, %v3460
  %v3525 = vadd.f32 %v3397, %v3461
  %v3526 = vadd.f32 %v3398, %v3462
  %v3527 = vadd.f32 %v3399, %v3463
  %v3528 = vadd.f32 %v3400, %v3464
  %v3529 = vadd.f32 %v3401, %v3465
  %v3530 = vadd.f32 %v3402, %v3466
  %v3531 = vadd.f32 %v3403, %v3467
  %v3532 = vadd.f32 %v3404, %v3468
  %v3533 = vadd.f32 %v3405, %v3469
  %v3534 = vadd.f32 %v3406, %v3470
  %v3535 = vadd.f32 %v3407, %v3471
  %v3536 = vadd.f32 %v3408, %v3472
  %v3537 = vadd.f32 %v3409, %v3473
  %v3538 = vadd.f32 %v3410, %v3474
  %v3539 = vadd.f32 %v3411, %v3475
  %v3540 = vadd.f32 %v3412, %v3476
  %v3541 = vadd.f32 %v3413, %v3477
  %v3542 = vadd.f32 %v3414, %v3478
  %v3543 = vadd.f32 %v3415, %v3479
  %v3544 = vadd.f32 %v3416, %v3480
  %v3545 = vadd.f32 %v3417, %v3481
  %v3546 = vadd.f32 %v3418, %v3482
  %v3547 = vadd.f32 %v3419, %v3483
  %v3548 = vadd.f32 %v3420, %v3484
  %v3549 = vadd.f32 %v3421, %v3485
  %v3550 = vadd.f32 %v3422, %v3486
  %v3551 = vadd.f32 %v3423, %v3487
  %v3552 = vmul.f32 %v2946, %v1091
  %v3553 = vmul.f32 %v2947, %v1091
  %v3554 = vmul.f32 %v2948, %v1091
  %v3555 = vmul.f32 %v2949, %v1091
  %v3556 = vmul.f32 %v2950, %v1091
  %v3557 = vmul.f32 %v2951, %v1091
  %v3558 = vmul.f32 %v2952, %v1091
  %v3559 = vmul.f32 %v2953, %v1091
  %v3560 = vmul.f32 %v2954, %v1091
  %v3561 = vmul.f32 %v2955, %v1091
  %v3562 = vmul.f32 %v2956, %v1091
  %v3563 = vmul.f32 %v2957, %v1091
  %v3564 = vmul.f32 %v2958, %v1091
  %v3565 = vmul.f32 %v2959, %v1091
  %v3566 = vmul.f32 %v2960, %v1091
  %v3567 = vmul.f32 %v2961, %v1091
  %v3568 = vmul.f32 %v2962, %v1091
  %v3569 = vmul.f32 %v2963, %v1091
  %v3570 = vmul.f32 %v2964, %v1091
  %v3571 = vmul.f32 %v2965, %v1091
  %v3572 = vmul.f32 %v2966, %v1091
  %v3573 = vmul.f32 %v2967, %v1091
  %v3574 = vmul.f32 %v2968, %v1091
  %v3575 = vmul.f32 %v2969, %v1091
  %v3576 = vmul.f32 %v2970, %v1091
  %v3577 = vmul.f32 %v2971, %v1091
  %v3578 = vmul.f32 %v2972, %v1091
  %v3579 = vmul.f32 %v2973, %v1091
  %v3580 = vmul.f32 %v2974, %v1091
  %v3581 = vmul.f32 %v2975, %v1091
  %v3582 = vmul.f32 %v2976, %v1091
  %v3583 = vmul.f32 %v2977, %v1091
  %v3584 = vmul.f32 %v2982, %v1091
  %v3585 = vmul.f32 %v2983, %v1091
  %v3586 = vmul.f32 %v2984, %v1091
  %v3587 = vmul.f32 %v2985, %v1091
  %v3588 = vmul.f32 %v2986, %v1091
  %v3589 = vmul.f32 %v2987, %v1091
  %v3590 = vmul.f32 %v2988, %v1091
  %v3591 = vmul.f32 %v2989, %v1091
  %v3592 = vmul.f32 %v2990, %v1091
  %v3593 = vmul.f32 %v2991, %v1091
  %v3594 = vmul.f32 %v2992, %v1091
  %v3595 = vmul.f32 %v2993, %v1091
  %v3596 = vmul.f32 %v2994, %v1091
  %v3597 = vmul.f32 %v2995, %v1091
  %v3598 = vmul.f32 %v2996, %v1091
  %v3599 = vmul.f32 %v2997, %v1091
  %v3600 = vmul.f32 %v2998, %v1091
  %v3601 = vmul.f32 %v2999, %v1091
  %v3602 = vmul.f32 %v3000, %v1091
  %v3603 = vmul.f32 %v3001, %v1091
  %v3604 = vmul.f32 %v3002, %v1091
  %v3605 = vmul.f32 %v3003, %v1091
  %v3606 = vmul.f32 %v3004, %v1091
  %v3607 = vmul.f32 %v3005, %v1091
  %v3608 = vmul.f32 %v3006, %v1091
  %v3609 = vmul.f32 %v3007, %v1091
  %v3610 = vmul.f32 %v3008, %v1091
  %v3611 = vmul.f32 %v3009, %v1091
  %v3612 = vmul.f32 %v3010, %v1091
  %v3613 = vmul.f32 %v3011, %v1091
  %v3614 = vmul.f32 %v3012, %v1091
  %v3615 = vmul.f32 %v3013, %v1091
  %v3616 = vmul.f32 %v2730, %v1159
  %v3617 = vmul.f32 %v2731, %v1159
  %v3618 = vmul.f32 %v2732, %v1159
  %v3619 = vmul.f32 %v2733, %v1159
  %v3620 = vmul.f32 %v2734, %v1159
  %v3621 = vmul.f32 %v2735, %v1159
  %v3622 = vmul.f32 %v2736, %v1159
  %v3623 = vmul.f32 %v2737, %v1159
  %v3624 = vmul.f32 %v2738, %v1159
  %v3625 = vmul.f32 %v2739, %v1159
  %v3626 = vmul.f32 %v2740, %v1159
  %v3627 = vmul.f32 %v2741, %v1159
  %v3628 = vmul.f32 %v2742, %v1159
  %v3629 = vmul.f32 %v2743, %v1159
  %v3630 = vmul.f32 %v2744, %v1159
  %v3631 = vmul.f32 %v2745, %v1159
  %v3632 = vmul.f32 %v2746, %v1159
  %v3633 = vmul.f32 %v2747, %v1159
  %v3634 = vmul.f32 %v2748, %v1159
  %v3635 = vmul.f32 %v2749, %v1159
  %v3636 = vmul.f32 %v2750, %v1159
  %v3637 = vmul.f32 %v2751, %v1159
  %v3638 = vmul.f32 %v2752, %v1159
  %v3639 = vmul.f32 %v2753, %v1159
  %v3640 = vmul.f32 %v2754, %v1159
  %v3641 = vmul.f32 %v2755, %v1159
  %v3642 = vmul.f32 %v2756, %v1159
  %v3643 = vmul.f32 %v2757, %v1159
  %v3644 = vmul.f32 %v2758, %v1159
  %v3645 = vmul.f32 %v2759, %v1159
  %v3646 = vmul.f32 %v2760, %v1159
  %v3647 = vmul.f32 %v2761, %v1159
  %v3648 = vmul.f32 %v2766, %v1159
  %v3649 = vmul.f32 %v2767, %v1159
  %v3650 = vmul.f32 %v2768, %v1159
  %v3651 = vmul.f32 %v2769, %v1159
  %v3652 = vmul.f32 %v2770, %v1159
  %v3653 = vmul.f32 %v2771, %v1159
  %v3654 = vmul.f32 %v2772, %v1159
  %v3655 = vmul.f32 %v2773, %v1159
  %v3656 = vmul.f32 %v2774, %v1159
  %v3657 = vmul.f32 %v2775, %v1159
  %v3658 = vmul.f32 %v2776, %v1159
  %v3659 = vmul.f32 %v2777, %v1159
  %v3660 = vmul.f32 %v2778, %v1159
  %v3661 = vmul.f32 %v2779, %v1159
  %v3662 = vmul.f32 %v2780, %v1159
  %v3663 = vmul.f32 %v2781, %v1159
  %v3664 = vmul.f32 %v2782, %v1159
  %v3665 = vmul.f32 %v2783, %v1159
  %v3666 = vmul.f32 %v2784, %v1159
  %v3667 = vmul.f32 %v2785, %v1159
  %v3668 = vmul.f32 %v2786, %v1159
  %v3669 = vmul.f32 %v2787, %v1159
  %v3670 = vmul.f32 %v2788, %v1159
  %v3671 = vmul.f32 %v2789, %v1159
  %v3672 = vmul.f32 %v2790, %v1159
  %v3673 = vmul.f32 %v2791, %v1159
  %v3674 = vmul.f32 %v2792, %v1159
  %v3675 = vmul.f32 %v2793, %v1159
  %v3676 = vmul.f32 %v2794, %v1159
  %v3677 = vmul.f32 %v2795, %v1159
  %v3678 = vmul.f32 %v2796, %v1159
  %v3679 = vmul.f32 %v2797, %v1159
  %v3680 = vadd.f32 %v3552, %v3616
  %v3681 = vadd.f32 %v3553, %v3617
  %v3682 = vadd.f32 %v3554, %v3618
  %v3683 = vadd.f32 %v3555, %v3619
  %v3684 = vadd.f32 %v3556, %v3620
  %v3685 = vadd.f32 %v3557, %v3621
  %v3686 = vadd.f32 %v3558, %v3622
  %v3687 = vadd.f32 %v3559, %v3623
  %v3688 = vadd.f32 %v3560, %v3624
  %v3689 = vadd.f32 %v3561, %v3625
  %v3690 = vadd.f32 %v3562, %v3626
  %v3691 = vadd.f32 %v3563, %v3627
  %v3692 = vadd.f32 %v3564, %v3628
  %v3693 = vadd.f32 %v3565, %v3629
  %v3694 = vadd.f32 %v3566, %v3630
  %v3695 = vadd.f32 %v3567, %v3631
  %v3696 = vadd.f32 %v3568, %v3632
  %v3697 = vadd.f32 %v3569, %v3633
  %v3698 = vadd.f32 %v3570, %v3634
  %v3699 = vadd.f32 %v3571, %v3635
  %v3700 = vadd.f32 %v3572, %v3636
  %v3701 = vadd.f32 %v3573, %v3637
  %v3702 = vadd.f32 %v3574, %v3638
  %v3703 = vadd.f32 %v3575, %v3639
  %v3704 = vadd.f32 %v3576, %v3640
  %v3705 = vadd.f32 %v3577, %v3641
  %v3706 = vadd.f32 %v3578, %v3642
  %v3707 = vadd.f32 %v3579, %v3643
  %v3708 = vadd.f32 %v3580, %v3644
  %v3709 = vadd.f32 %v3581, %v3645
  %v3710 = vadd.f32 %v3582, %v3646
  %v3711 = vadd.f32 %v3583, %v3647
  %v3712 = vadd.f32 %v3584, %v3648
  %v3713 = vadd.f32 %v3585, %v3649
  %v3714 = vadd.f32 %v3586, %v3650
  %v3715 = vadd.f32 %v3587, %v3651
  %v3716 = vadd.f32 %v3588, %v3652
  %v3717 = vadd.f32 %v3589, %v3653
  %v3718 = vadd.f32 %v3590, %v3654
  %v3719 = vadd.f32 %v3591, %v3655
  %v3720 = vadd.f32 %v3592, %v3656
  %v3721 = vadd.f32 %v3593, %v3657
  %v3722 = vadd.f32 %v3594, %v3658
  %v3723 = vadd.f32 %v3595, %v3659
  %v3724 = vadd.f32 %v3596, %v3660
  %v3725 = vadd.f32 %v3597, %v3661
  %v3726 = vadd.f32 %v3598, %v3662
  %v3727 = vadd.f32 %v3599, %v3663
  %v3728 = vadd.f32 %v3600, %v3664
  %v3729 = vadd.f32 %v3601, %v3665
  %v3730 = vadd.f32 %v3602, %v3666
  %v3731 = vadd.f32 %v3603, %v3667
  %v3732 = vadd.f32 %v3604, %v3668
  %v3733 = vadd.f32 %v3605, %v3669
  %v3734 = vadd.f32 %v3606, %v3670
  %v3735 = vadd.f32 %v3607, %v3671
  %v3736 = vadd.f32 %v3608, %v3672
  %v3737 = vadd.f32 %v3609, %v3673
  %v3738 = vadd.f32 %v3610, %v3674
  %v3739 = vadd.f32 %v3611, %v3675
  %v3740 = vadd.f32 %v3612, %v3676
  %v3741 = vadd.f32 %v3613, %v3677
  %v3742 = vadd.f32 %v3614, %v3678
  %v3743 = vadd.f32 %v3615, %v3679
  %v3744 = vmul.f32 %v3162, %v1291
  %v3745 = vmul.f32 %v3163, %v1291
  %v3746 = vmul.f32 %v3164, %v1291
  %v3747 = vmul.f32 %v3165, %v1291
  %v3748 = vmul.f32 %v3166, %v1291
  %v3749 = vmul.f32 %v3167, %v1291
  %v3750 = vmul.f32 %v3168, %v1291
  %v3751 = vmul.f32 %v3169, %v1291
  %v3752 = vmul.f32 %v3170, %v1291
  %v3753 = vmul.f32 %v3171, %v1291
  %v3754 = vmul.f32 %v3172, %v1291
  %v3755 = vmul.f32 %v3173, %v1291
  %v3756 = vmul.f32 %v3174, %v1291
  %v3757 = vmul.f32 %v3175, %v1291
  %v3758 = vmul.f32 %v3176, %v1291
  %v3759 = vmul.f32 %v3177, %v1291
  %v3760 = vmul.f32 %v3178, %v1291
  %v3761 = vmul.f32 %v3179, %v1291
  %v3762 = vmul.f32 %v3180, %v1291
  %v3763 = vmul.f32 %v3181, %v1291
  %v3764 = vmul.f32 %v3182, %v1291
  %v3765 = vmul.f32 %v3183, %v1291
  %v3766 = vmul.f32 %v3184, %v1291
  %v3767 = vmul.f32 %v3185, %v1291
  %v3768 = vmul.f32 %v3186, %v1291
  %v3769 = vmul.f32 %v3187, %v1291
  %v3770 = vmul.f32 %v3188, %v1291
  %v3771 = vmul.f32 %v3189, %v1291
  %v3772 = vmul.f32 %v3190, %v1291
  %v3773 = vmul.f32 %v3191, %v1291
  %v3774 = vmul.f32 %v3192, %v1291
  %v3775 = vmul.f32 %v3193, %v1291
  %v3776 = vmul.f32 %v3198, %v1291
  %v3777 = vmul.f32 %v3199, %v1291
  %v3778 = vmul.f32 %v3200, %v1291
  %v3779 = vmul.f32 %v3201, %v1291
  %v3780 = vmul.f32 %v3202, %v1291
  %v3781 = vmul.f32 %v3203, %v1291
  %v3782 = vmul.f32 %v3204, %v1291
  %v3783 = vmul.f32 %v3205, %v1291
  %v3784 = vmul.f32 %v3206, %v1291
  %v3785 = vmul.f32 %v3207, %v1291
  %v3786 = vmul.f32 %v3208, %v1291
  %v3787 = vmul.f32 %v3209, %v1291
  %v3788 = vmul.f32 %v3210, %v1291
  %v3789 = vmul.f32 %v3211, %v1291
  %v3790 = vmul.f32 %v3212, %v1291
  %v3791 = vmul.f32 %v3213, %v1291
  %v3792 = vmul.f32 %v3214, %v1291
  %v3793 = vmul.f32 %v3215, %v1291
  %v3794 = vmul.f32 %v3216, %v1291
  %v3795 = vmul.f32 %v3217, %v1291
  %v3796 = vmul.f32 %v3218, %v1291
  %v3797 = vmul.f32 %v3219, %v1291
  %v3798 = vmul.f32 %v3220, %v1291
  %v3799 = vmul.f32 %v3221, %v1291
  %v3800 = vmul.f32 %v3222, %v1291
  %v3801 = vmul.f32 %v3223, %v1291
  %v3802 = vmul.f32 %v3224, %v1291
  %v3803 = vmul.f32 %v3225, %v1291
  %v3804 = vmul.f32 %v3226, %v1291
  %v3805 = vmul.f32 %v3227, %v1291
  %v3806 = vmul.f32 %v3228, %v1291
  %v3807 = vmul.f32 %v3229, %v1291
  %v3808 = vadd.f32 %v3680, %v3744
  %v3809 = vadd.f32 %v3681, %v3745
  %v3810 = vadd.f32 %v3682, %v3746
  %v3811 = vadd.f32 %v3683, %v3747
  %v3812 = vadd.f32 %v3684, %v3748
  %v3813 = vadd.f32 %v3685, %v3749
  %v3814 = vadd.f32 %v3686, %v3750
  %v3815 = vadd.f32 %v3687, %v3751
  %v3816 = vadd.f32 %v3688, %v3752
  %v3817 = vadd.f32 %v3689, %v3753
  %v3818 = vadd.f32 %v3690, %v3754
  %v3819 = vadd.f32 %v3691, %v3755
  %v3820 = vadd.f32 %v3692, %v3756
  %v3821 = vadd.f32 %v3693, %v3757
  %v3822 = vadd.f32 %v3694, %v3758
  %v3823 = vadd.f32 %v3695, %v3759
  %v3824 = vadd.f32 %v3696, %v3760
  %v3825 = vadd.f32 %v3697, %v3761
  %v3826 = vadd.f32 %v3698, %v3762
  %v3827 = vadd.f32 %v3699, %v3763
  %v3828 = vadd.f32 %v3700, %v3764
  %v3829 = vadd.f32 %v3701, %v3765
  %v3830 = vadd.f32 %v3702, %v3766
  %v3831 = vadd.f32 %v3703, %v3767
  %v3832 = vadd.f32 %v3704, %v3768
  %v3833 = vadd.f32 %v3705, %v3769
  %v3834 = vadd.f32 %v3706, %v3770
  %v3835 = vadd.f32 %v3707, %v3771
  %v3836 = vadd.f32 %v3708, %v3772
  %v3837 = vadd.f32 %v3709, %v3773
  %v3838 = vadd.f32 %v3710, %v3774
  %v3839 = vadd.f32 %v3711, %v3775
  %v3840 = vadd.f32 %v3712, %v3776
  %v3841 = vadd.f32 %v3713, %v3777
  %v3842 = vadd.f32 %v3714, %v3778
  %v3843 = vadd.f32 %v3715, %v3779
  %v3844 = vadd.f32 %v3716, %v3780
  %v3845 = vadd.f32 %v3717, %v3781
  %v3846 = vadd.f32 %v3718, %v3782
  %v3847 = vadd.f32 %v3719, %v3783
  %v3848 = vadd.f32 %v3720, %v3784
  %v3849 = vadd.f32 %v3721, %v3785
  %v3850 = vadd.f32 %v3722, %v3786
  %v3851 = vadd.f32 %v3723, %v3787
  %v3852 = vadd.f32 %v3724, %v3788
  %v3853 = vadd.f32 %v3725, %v3789
  %v3854 = vadd.f32 %v3726, %v3790
  %v3855 = vadd.f32 %v3727, %v3791
  %v3856 = vadd.f32 %v3728, %v3792
  %v3857 = vadd.f32 %v3729, %v3793
  %v3858 = vadd.f32 %v3730, %v3794
  %v3859 = vadd.f32 %v3731, %v3795
  %v3860 = vadd.f32 %v3732, %v3796
  %v3861 = vadd.f32 %v3733, %v3797
  %v3862 = vadd.f32 %v3734, %v3798
  %v3863 = vadd.f32 %v3735, %v3799
  %v3864 = vadd.f32 %v3736, %v3800
  %v3865 = vadd.f32 %v3737, %v3801
  %v3866 = vadd.f32 %v3738, %v3802
  %v3867 = vadd.f32 %v3739, %v3803
  %v3868 = vadd.f32 %v3740, %v3804
  %v3869 = vadd.f32 %v3741, %v3805
  %v3870 = vadd.f32 %v3742, %v3806
  %v3871 = vadd.f32 %v3743, %v3807
  %v3872 = vadd.f32 %v3488, %v3808
  %v3873 = vadd.f32 %v3489, %v3809
  %v3874 = vadd.f32 %v3490, %v3810
  %v3875 = vadd.f32 %v3491, %v3811
  %v3876 = vadd.f32 %v3492, %v3812
  %v3877 = vadd.f32 %v3493, %v3813
  %v3878 = vadd.f32 %v3494, %v3814
  %v3879 = vadd.f32 %v3495, %v3815
  %v3880 = vadd.f32 %v3496, %v3816
  %v3881 = vadd.f32 %v3497, %v3817
  %v3882 = vadd.f32 %v3498, %v3818
  %v3883 = vadd.f32 %v3499, %v3819
  %v3884 = vadd.f32 %v3500, %v3820
  %v3885 = vadd.f32 %v3501, %v3821
  %v3886 = vadd.f32 %v3502, %v3822
  %v3887 = vadd.f32 %v3503, %v3823
  %v3888 = vadd.f32 %v3504, %v3824
  %v3889 = vadd.f32 %v3505, %v3825
  %v3890 = vadd.f32 %v3506, %v3826
  %v3891 = vadd.f32 %v3507, %v3827
  %v3892 = vadd.f32 %v3508, %v3828
  %v3893 = vadd.f32 %v3509, %v3829
  %v3894 = vadd.f32 %v3510, %v3830
  %v3895 = vadd.f32 %v3511, %v3831
  %v3896 = vadd.f32 %v3512, %v3832
  %v3897 = vadd.f32 %v3513, %v3833
  %v3898 = vadd.f32 %v3514, %v3834
  %v3899 = vadd.f32 %v3515, %v3835
  %v3900 = vadd.f32 %v3516, %v3836
  %v3901 = vadd.f32 %v3517, %v3837
  %v3902 = vadd.f32 %v3518, %v3838
  %v3903 = vadd.f32 %v3519, %v3839
  %v3904 = vadd.f32 %v3520, %v3840
  %v3905 = vadd.f32 %v3521, %v3841
  %v3906 = vadd.f32 %v3522, %v3842
  %v3907 = vadd.f32 %v3523, %v3843
  %v3908 = vadd.f32 %v3524, %v3844
  %v3909 = vadd.f32 %v3525, %v3845
  %v3910 = vadd.f32 %v3526, %v3846
  %v3911 = vadd.f32 %v3527, %v3847
  %v3912 = vadd.f32 %v3528, %v3848
  %v3913 = vadd.f32 %v3529, %v3849
  %v3914 = vadd.f32 %v3530, %v3850
  %v3915 = vadd.f32 %v3531, %v3851
  %v3916 = vadd.f32 %v3532, %v3852
  %v3917 = vadd.f32 %v3533, %v3853
  %v3918 = vadd.f32 %v3534, %v3854
  %v3919 = vadd.f32 %v3535, %v3855
  %v3920 = vadd.f32 %v3536, %v3856
  %v3921 = vadd.f32 %v3537, %v3857
  %v3922 = vadd.f32 %v3538, %v3858
  %v3923 = vadd.f32 %v3539, %v3859
  %v3924 = vadd.f32 %v3540, %v3860
  %v3925 = vadd.f32 %v3541, %v3861
  %v3926 = vadd.f32 %v3542, %v3862
  %v3927 = vadd.f32 %v3543, %v3863
  %v3928 = vadd.f32 %v3544, %v3864
  %v3929 = vadd.f32 %v3545, %v3865
  %v3930 = vadd.f32 %v3546, %v3866
  %v3931 = vadd.f32 %v3547, %v3867
  %v3932 = vadd.f32 %v3548, %v3868
  %v3933 = vadd.f32 %v3549, %v3869
  %v3934 = vadd.f32 %v3550, %v3870
  %v3935 = vadd.f32 %v3551, %v3871
  %v3936 = vmul.f32 %v2948, %v1487
  %v3937 = vmul.f32 %v2949, %v1487
  %v3938 = vmul.f32 %v2950, %v1487
  %v3939 = vmul.f32 %v2951, %v1487
  %v3940 = vmul.f32 %v2952, %v1487
  %v3941 = vmul.f32 %v2953, %v1487
  %v3942 = vmul.f32 %v2954, %v1487
  %v3943 = vmul.f32 %v2955, %v1487
  %v3944 = vmul.f32 %v2956, %v1487
  %v3945 = vmul.f32 %v2957, %v1487
  %v3946 = vmul.f32 %v2958, %v1487
  %v3947 = vmul.f32 %v2959, %v1487
  %v3948 = vmul.f32 %v2960, %v1487
  %v3949 = vmul.f32 %v2961, %v1487
  %v3950 = vmul.f32 %v2962, %v1487
  %v3951 = vmul.f32 %v2963, %v1487
  %v3952 = vmul.f32 %v2964, %v1487
  %v3953 = vmul.f32 %v2965, %v1487
  %v3954 = vmul.f32 %v2966, %v1487
  %v3955 = vmul.f32 %v2967, %v1487
  %v3956 = vmul.f32 %v2968, %v1487
  %v3957 = vmul.f32 %v2969, %v1487
  %v3958 = vmul.f32 %v2970, %v1487
  %v3959 = vmul.f32 %v2971, %v1487
  %v3960 = vmul.f32 %v2972, %v1487
  %v3961 = vmul.f32 %v2973, %v1487
  %v3962 = vmul.f32 %v2974, %v1487
  %v3963 = vmul.f32 %v2975, %v1487
  %v3964 = vmul.f32 %v2976, %v1487
  %v3965 = vmul.f32 %v2977, %v1487
  %v3966 = vmul.f32 %v2978, %v1487
  %v3967 = vmul.f32 %v2979, %v1487
  %v3968 = vmul.f32 %v2984, %v1487
  %v3969 = vmul.f32 %v2985, %v1487
  %v3970 = vmul.f32 %v2986, %v1487
  %v3971 = vmul.f32 %v2987, %v1487
  %v3972 = vmul.f32 %v2988, %v1487
  %v3973 = vmul.f32 %v2989, %v1487
  %v3974 = vmul.f32 %v2990, %v1487
  %v3975 = vmul.f32 %v2991, %v1487
  %v3976 = vmul.f32 %v2992, %v1487
  %v3977 = vmul.f32 %v2993, %v1487
  %v3978 = vmul.f32 %v2994, %v1487
  %v3979 = vmul.f32 %v2995, %v1487
  %v3980 = vmul.f32 %v2996, %v1487
  %v3981 = vmul.f32 %v2997, %v1487
  %v3982 = vmul.f32 %v2998, %v1487
  %v3983 = vmul.f32 %v2999, %v1487
  %v3984 = vmul.f32 %v3000, %v1487
  %v3985 = vmul.f32 %v3001, %v1487
  %v3986 = vmul.f32 %v3002, %v1487
  %v3987 = vmul.f32 %v3003, %v1487
  %v3988 = vmul.f32 %v3004, %v1487
  %v3989 = vmul.f32 %v3005, %v1487
  %v3990 = vmul.f32 %v3006, %v1487
  %v3991 = vmul.f32 %v3007, %v1487
  %v3992 = vmul.f32 %v3008, %v1487
  %v3993 = vmul.f32 %v3009, %v1487
  %v3994 = vmul.f32 %v3010, %v1487
  %v3995 = vmul.f32 %v3011, %v1487
  %v3996 = vmul.f32 %v3012, %v1487
  %v3997 = vmul.f32 %v3013, %v1487
  %v3998 = vmul.f32 %v3014, %v1487
  %v3999 = vmul.f32 %v3015, %v1487
  %v4000 = vmul.f32 %v2732, %v1555
  %v4001 = vmul.f32 %v2733, %v1555
  %v4002 = vmul.f32 %v2734, %v1555
  %v4003 = vmul.f32 %v2735, %v1555
  %v4004 = vmul.f32 %v2736, %v1555
  %v4005 = vmul.f32 %v2737, %v1555
  %v4006 = vmul.f32 %v2738, %v1555
  %v4007 = vmul.f32 %v2739, %v1555
  %v4008 = vmul.f32 %v2740, %v1555
  %v4009 = vmul.f32 %v2741, %v1555
  %v4010 = vmul.f32 %v2742, %v1555
  %v4011 = vmul.f32 %v2743, %v1555
  %v4012 = vmul.f32 %v2744, %v1555
  %v4013 = vmul.f32 %v2745, %v1555
  %v4014 = vmul.f32 %v2746, %v1555
  %v4015 = vmul.f32 %v2747, %v1555
  %v4016 = vmul.f32 %v2748, %v1555
  %v4017 = vmul.f32 %v2749, %v1555
  %v4018 = vmul.f32 %v2750, %v1555
  %v4019 = vmul.f32 %v2751, %v1555
  %v4020 = vmul.f32 %v2752, %v1555
  %v4021 = vmul.f32 %v2753, %v1555
  %v4022 = vmul.f32 %v2754, %v1555
  %v4023 = vmul.f32 %v2755, %v1555
  %v4024 = vmul.f32 %v2756, %v1555
  %v4025 = vmul.f32 %v2757, %v1555
  %v4026 = vmul.f32 %v2758, %v1555
  %v4027 = vmul.f32 %v2759, %v1555
  %v4028 = vmul.f32 %v2760, %v1555
  %v4029 = vmul.f32 %v2761, %v1555
  %v4030 = vmul.f32 %v2762, %v1555
  %v4031 = vmul.f32 %v2763, %v1555
  %v4032 = vmul.f32 %v2768, %v1555
  %v4033 = vmul.f32 %v2769, %v1555
  %v4034 = vmul.f32 %v2770, %v1555
  %v4035 = vmul.f32 %v2771, %v1555
  %v4036 = vmul.f32 %v2772, %v1555
  %v4037 = vmul.f32 %v2773, %v1555
  %v4038 = vmul.f32 %v2774, %v1555
  %v4039 = vmul.f32 %v2775, %v1555
  %v4040 = vmul.f32 %v2776, %v1555
  %v4041 = vmul.f32 %v2777, %v1555
  %v4042 = vmul.f32 %v2778, %v1555
  %v4043 = vmul.f32 %v2779, %v1555
  %v4044 = vmul.f32 %v2780, %v1555
  %v4045 = vmul.f32 %v2781, %v1555
  %v4046 = vmul.f32 %v2782, %v1555
  %v4047 = vmul.f32 %v2783, %v1555
  %v4048 = vmul.f32 %v2784, %v1555
  %v4049 = vmul.f32 %v2785, %v1555
  %v4050 = vmul.f32 %v2786, %v1555
  %v4051 = vmul.f32 %v2787, %v1555
  %v4052 = vmul.f32 %v2788, %v1555
  %v4053 = vmul.f32 %v2789, %v1555
  %v4054 = vmul.f32 %v2790, %v1555
  %v4055 = vmul.f32 %v2791, %v1555
  %v4056 = vmul.f32 %v2792, %v1555
  %v4057 = vmul.f32 %v2793, %v1555
  %v4058 = vmul.f32 %v2794, %v1555
  %v4059 = vmul.f32 %v2795, %v1555
  %v4060 = vmul.f32 %v2796, %v1555
  %v4061 = vmul.f32 %v2797, %v1555
  %v4062 = vmul.f32 %v2798, %v1555
  %v4063 = vmul.f32 %v2799, %v1555
  %v4064 = vadd.f32 %v3936, %v4000
  %v4065 = vadd.f32 %v3937, %v4001
  %v4066 = vadd.f32 %v3938, %v4002
  %v4067 = vadd.f32 %v3939, %v4003
  %v4068 = vadd.f32 %v3940, %v4004
  %v4069 = vadd.f32 %v3941, %v4005
  %v4070 = vadd.f32 %v3942, %v4006
  %v4071 = vadd.f32 %v3943, %v4007
  %v4072 = vadd.f32 %v3944, %v4008
  %v4073 = vadd.f32 %v3945, %v4009
  %v4074 = vadd.f32 %v3946, %v4010
  %v4075 = vadd.f32 %v3947, %v4011
  %v4076 = vadd.f32 %v3948, %v4012
  %v4077 = vadd.f32 %v3949, %v4013
  %v4078 = vadd.f32 %v3950, %v4014
  %v4079 = vadd.f32 %v3951, %v4015
  %v4080 = vadd.f32 %v3952, %v4016
  %v4081 = vadd.f32 %v3953, %v4017
  %v4082 = vadd.f32 %v3954, %v4018
  %v4083 = vadd.f32 %v3955, %v4019
  %v4084 = vadd.f32 %v3956, %v4020
  %v4085 = vadd.f32 %v3957, %v4021
  %v4086 = vadd.f32 %v3958, %v4022
  %v4087 = vadd.f32 %v3959, %v4023
  %v4088 = vadd.f32 %v3960, %v4024
  %v4089 = vadd.f32 %v3961, %v4025
  %v4090 = vadd.f32 %v3962, %v4026
  %v4091 = vadd.f32 %v3963, %v4027
  %v4092 = vadd.f32 %v3964, %v4028
  %v4093 = vadd.f32 %v3965, %v4029
  %v4094 = vadd.f32 %v3966, %v4030
  %v4095 = vadd.f32 %v3967, %v4031
  %v4096 = vadd.f32 %v3968, %v4032
  %v4097 = vadd.f32 %v3969, %v4033
  %v4098 = vadd.f32 %v3970, %v4034
  %v4099 = vadd.f32 %v3971, %v4035
  %v4100 = vadd.f32 %v3972, %v4036
  %v4101 = vadd.f32 %v3973, %v4037
  %v4102 = vadd.f32 %v3974, %v4038
  %v4103 = vadd.f32 %v3975, %v4039
  %v4104 = vadd.f32 %v3976, %v4040
  %v4105 = vadd.f32 %v3977, %v4041
  %v4106 = vadd.f32 %v3978, %v4042
  %v4107 = vadd.f32 %v3979, %v4043
  %v4108 = vadd.f32 %v3980, %v4044
  %v4109 = vadd.f32 %v3981, %v4045
  %v4110 = vadd.f32 %v3982, %v4046
  %v4111 = vadd.f32 %v3983, %v4047
  %v4112 = vadd.f32 %v3984, %v4048
  %v4113 = vadd.f32 %v3985, %v4049
  %v4114 = vadd.f32 %v3986, %v4050
  %v4115 = vadd.f32 %v3987, %v4051
  %v4116 = vadd.f32 %v3988, %v4052
  %v4117 = vadd.f32 %v3989, %v4053
  %v4118 = vadd.f32 %v3990, %v4054
  %v4119 = vadd.f32 %v3991, %v4055
  %v4120 = vadd.f32 %v3992, %v4056
  %v4121 = vadd.f32 %v3993, %v4057
  %v4122 = vadd.f32 %v3994, %v4058
  %v4123 = vadd.f32 %v3995, %v4059
  %v4124 = vadd.f32 %v3996, %v4060
  %v4125 = vadd.f32 %v3997, %v4061
  %v4126 = vadd.f32 %v3998, %v4062
  %v4127 = vadd.f32 %v3999, %v4063
  %v4128 = vmul.f32 %v3164, %v1687
  %v4129 = vmul.f32 %v3165, %v1687
  %v4130 = vmul.f32 %v3166, %v1687
  %v4131 = vmul.f32 %v3167, %v1687
  %v4132 = vmul.f32 %v3168, %v1687
  %v4133 = vmul.f32 %v3169, %v1687
  %v4134 = vmul.f32 %v3170, %v1687
  %v4135 = vmul.f32 %v3171, %v1687
  %v4136 = vmul.f32 %v3172, %v1687
  %v4137 = vmul.f32 %v3173, %v1687
  %v4138 = vmul.f32 %v3174, %v1687
  %v4139 = vmul.f32 %v3175, %v1687
  %v4140 = vmul.f32 %v3176, %v1687
  %v4141 = vmul.f32 %v3177, %v1687
  %v4142 = vmul.f32 %v3178, %v1687
  %v4143 = vmul.f32 %v3179, %v1687
  %v4144 = vmul.f32 %v3180, %v1687
  %v4145 = vmul.f32 %v3181, %v1687
  %v4146 = vmul.f32 %v3182, %v1687
  %v4147 = vmul.f32 %v3183, %v1687
  %v4148 = vmul.f32 %v3184, %v1687
  %v4149 = vmul.f32 %v3185, %v1687
  %v4150 = vmul.f32 %v3186, %v1687
  %v4151 = vmul.f32 %v3187, %v1687
  %v4152 = vmul.f32 %v3188, %v1687
  %v4153 = vmul.f32 %v3189, %v1687
  %v4154 = vmul.f32 %v3190, %v1687
  %v4155 = vmul.f32 %v3191, %v1687
  %v4156 = vmul.f32 %v3192, %v1687
  %v4157 = vmul.f32 %v3193, %v1687
  %v4158 = vmul.f32 %v3194, %v1687
  %v4159 = vmul.f32 %v3195, %v1687
  %v4160 = vmul.f32 %v3200, %v1687
  %v4161 = vmul.f32 %v3201, %v1687
  %v4162 = vmul.f32 %v3202, %v1687
  %v4163 = vmul.f32 %v3203, %v1687
  %v4164 = vmul.f32 %v3204, %v1687
  %v4165 = vmul.f32 %v3205, %v1687
  %v4166 = vmul.f32 %v3206, %v1687
  %v4167 = vmul.f32 %v3207, %v1687
  %v4168 = vmul.f32 %v3208, %v1687
  %v4169 = vmul.f32 %v3209, %v1687
  %v4170 = vmul.f32 %v3210, %v1687
  %v4171 = vmul.f32 %v3211, %v1687
  %v4172 = vmul.f32 %v3212, %v1687
  %v4173 = vmul.f32 %v3213, %v1687
  %v4174 = vmul.f32 %v3214, %v1687
  %v4175 = vmul.f32 %v3215, %v1687
  %v4176 = vmul.f32 %v3216, %v1687
  %v4177 = vmul.f32 %v3217, %v1687
  %v4178 = vmul.f32 %v3218, %v1687
  %v4179 = vmul.f32 %v3219, %v1687
  %v4180 = vmul.f32 %v3220, %v1687
  %v4181 = vmul.f32 %v3221, %v1687
  %v4182 = vmul.f32 %v3222, %v1687
  %v4183 = vmul.f32 %v3223, %v1687
  %v4184 = vmul.f32 %v3224, %v1687
  %v4185 = vmul.f32 %v3225, %v1687
  %v4186 = vmul.f32 %v3226, %v1687
  %v4187 = vmul.f32 %v3227, %v1687
  %v4188 = vmul.f32 %v3228, %v1687
  %v4189 = vmul.f32 %v3229, %v1687
  %v4190 = vmul.f32 %v3230, %v1687
  %v4191 = vmul.f32 %v3231, %v1687
  %v4192 = vadd.f32 %v4064, %v4128
  %v4193 = vadd.f32 %v4065, %v4129
  %v4194 = vadd.f32 %v4066, %v4130
  %v4195 = vadd.f32 %v4067, %v4131
  %v4196 = vadd.f32 %v4068, %v4132
  %v4197 = vadd.f32 %v4069, %v4133
  %v4198 = vadd.f32 %v4070, %v4134
  %v4199 = vadd.f32 %v4071, %v4135
  %v4200 = vadd.f32 %v4072, %v4136
  %v4201 = vadd.f32 %v4073, %v4137
  %v4202 = vadd.f32 %v4074, %v4138
  %v4203 = vadd.f32 %v4075, %v4139
  %v4204 = vadd.f32 %v4076, %v4140
  %v4205 = vadd.f32 %v4077, %v4141
  %v4206 = vadd.f32 %v4078, %v4142
  %v4207 = vadd.f32 %v4079, %v4143
  %v4208 = vadd.f32 %v4080, %v4144
  %v4209 = vadd.f32 %v4081, %v4145
  %v4210 = vadd.f32 %v4082, %v4146
  %v4211 = vadd.f32 %v4083, %v4147
  %v4212 = vadd.f32 %v4084, %v4148
  %v4213 = vadd.f32 %v4085, %v4149
  %v4214 = vadd.f32 %v4086, %v4150
  %v4215 = vadd.f32 %v4087, %v4151
  %v4216 = vadd.f32 %v4088, %v4152
  %v4217 = vadd.f32 %v4089, %v4153
  %v4218 = vadd.f32 %v4090, %v4154
  %v4219 = vadd.f32 %v4091, %v4155
  %v4220 = vadd.f32 %v4092, %v4156
  %v4221 = vadd.f32 %v4093, %v4157
  %v4222 = vadd.f32 %v4094, %v4158
  %v4223 = vadd.f32 %v4095, %v4159
  %v4224 = vadd.f32 %v4096, %v4160
  %v4225 = vadd.f32 %v4097, %v4161
  %v4226 = vadd.f32 %v4098, %v4162
  %v4227 = vadd.f32 %v4099, %v4163
  %v4228 = vadd.f32 %v4100, %v4164
  %v4229 = vadd.f32 %v4101, %v4165
  %v4230 = vadd.f32 %v4102, %v4166
  %v4231 = vadd.f32 %v4103, %v4167
  %v4232 = vadd.f32 %v4104, %v4168
  %v4233 = vadd.f32 %v4105, %v4169
  %v4234 = vadd.f32 %v4106, %v4170
  %v4235 = vadd.f32 %v4107, %v4171
  %v4236 = vadd.f32 %v4108, %v4172
  %v4237 = vadd.f32 %v4109, %v4173
  %v4238 = vadd.f32 %v4110, %v4174
  %v4239 = vadd.f32 %v4111, %v4175
  %v4240 = vadd.f32 %v4112, %v4176
  %v4241 = vadd.f32 %v4113, %v4177
  %v4242 = vadd.f32 %v4114, %v4178
  %v4243 = vadd.f32 %v4115, %v4179
  %v4244 = vadd.f32 %v4116, %v4180
  %v4245 = vadd.f32 %v4117, %v4181
  %v4246 = vadd.f32 %v4118, %v4182
  %v4247 = vadd.f32 %v4119, %v4183
  %v4248 = vadd.f32 %v4120, %v4184
  %v4249 = vadd.f32 %v4121, %v4185
  %v4250 = vadd.f32 %v4122, %v4186
  %v4251 = vadd.f32 %v4123, %v4187
  %v4252 = vadd.f32 %v4124, %v4188
  %v4253 = vadd.f32 %v4125, %v4189
  %v4254 = vadd.f32 %v4126, %v4190
  %v4255 = vadd.f32 %v4127, %v4191
  %v4256 = vadd.f32 %v3872, %v4192
  %v4257 = vadd.f32 %v3873, %v4193
  %v4258 = vadd.f32 %v3874, %v4194
  %v4259 = vadd.f32 %v3875, %v4195
  %v4260 = vadd.f32 %v3876, %v4196
  %v4261 = vadd.f32 %v3877, %v4197
  %v4262 = vadd.f32 %v3878, %v4198
  %v4263 = vadd.f32 %v3879, %v4199
  %v4264 = vadd.f32 %v3880, %v4200
  %v4265 = vadd.f32 %v3881, %v4201
  %v4266 = vadd.f32 %v3882, %v4202
  %v4267 = vadd.f32 %v3883, %v4203
  %v4268 = vadd.f32 %v3884, %v4204
  %v4269 = vadd.f32 %v3885, %v4205
  %v4270 = vadd.f32 %v3886, %v4206
  %v4271 = vadd.f32 %v3887, %v4207
  %v4272 = vadd.f32 %v3888, %v4208
  %v4273 = vadd.f32 %v3889, %v4209
  %v4274 = vadd.f32 %v3890, %v4210
  %v4275 = vadd.f32 %v3891, %v4211
  %v4276 = vadd.f32 %v3892, %v4212
  %v4277 = vadd.f32 %v3893, %v4213
  %v4278 = vadd.f32 %v3894, %v4214
  %v4279 = vadd.f32 %v3895, %v4215
  %v4280 = vadd.f32 %v3896, %v4216
  %v4281 = vadd.f32 %v3897, %v4217
  %v4282 = vadd.f32 %v3898, %v4218
  %v4283 = vadd.f32 %v3899, %v4219
  %v4284 = vadd.f32 %v3900, %v4220
  %v4285 = vadd.f32 %v3901, %v4221
  %v4286 = vadd.f32 %v3902, %v4222
  %v4287 = vadd.f32 %v3903, %v4223
  %v4288 = vadd.f32 %v3904, %v4224
  %v4289 = vadd.f32 %v3905, %v4225
  %v4290 = vadd.f32 %v3906, %v4226
  %v4291 = vadd.f32 %v3907, %v4227
  %v4292 = vadd.f32 %v3908, %v4228
  %v4293 = vadd.f32 %v3909, %v4229
  %v4294 = vadd.f32 %v3910, %v4230
  %v4295 = vadd.f32 %v3911, %v4231
  %v4296 = vadd.f32 %v3912, %v4232
  %v4297 = vadd.f32 %v3913, %v4233
  %v4298 = vadd.f32 %v3914, %v4234
  %v4299 = vadd.f32 %v3915, %v4235
  %v4300 = vadd.f32 %v3916, %v4236
  %v4301 = vadd.f32 %v3917, %v4237
  %v4302 = vadd.f32 %v3918, %v4238
  %v4303 = vadd.f32 %v3919, %v4239
  %v4304 = vadd.f32 %v3920, %v4240
  %v4305 = vadd.f32 %v3921, %v4241
  %v4306 = vadd.f32 %v3922, %v4242
  %v4307 = vadd.f32 %v3923, %v4243
  %v4308 = vadd.f32 %v3924, %v4244
  %v4309 = vadd.f32 %v3925, %v4245
  %v4310 = vadd.f32 %v3926, %v4246
  %v4311 = vadd.f32 %v3927, %v4247
  %v4312 = vadd.f32 %v3928, %v4248
  %v4313 = vadd.f32 %v3929, %v4249
  %v4314 = vadd.f32 %v3930, %v4250
  %v4315 = vadd.f32 %v3931, %v4251
  %v4316 = vadd.f32 %v3932, %v4252
  %v4317 = vadd.f32 %v3933, %v4253
  %v4318 = vadd.f32 %v3934, %v4254
  %v4319 = vadd.f32 %v3935, %v4255
  %v4320 = vpack.c.bf16 %v4257, %v4256
  %v4321 = vpack.c.bf16 %v4259, %v4258
  %v4322 = vpack.c.bf16 %v4261, %v4260
  %v4323 = vpack.c.bf16 %v4263, %v4262
  %v4324 = vpack.c.bf16 %v4265, %v4264
  %v4325 = vpack.c.bf16 %v4267, %v4266
  %v4326 = vpack.c.bf16 %v4269, %v4268
  %v4327 = vpack.c.bf16 %v4271, %v4270
  %v4328 = vpack.c.bf16 %v4273, %v4272
  %v4329 = vpack.c.bf16 %v4275, %v4274
  %v4330 = vpack.c.bf16 %v4277, %v4276
  %v4331 = vpack.c.bf16 %v4279, %v4278
  %v4332 = vpack.c.bf16 %v4281, %v4280
  %v4333 = vpack.c.bf16 %v4283, %v4282
  %v4334 = vpack.c.bf16 %v4285, %v4284
  %v4335 = vpack.c.bf16 %v4287, %v4286
  %v4336 = vpack.c.bf16 %v4289, %v4288
  %v4337 = vpack.c.bf16 %v4291, %v4290
  %v4338 = vpack.c.bf16 %v4293, %v4292
  %v4339 = vpack.c.bf16 %v4295, %v4294
  %v4340 = vpack.c.bf16 %v4297, %v4296
  %v4341 = vpack.c.bf16 %v4299, %v4298
  %v4342 = vpack.c.bf16 %v4301, %v4300
  %v4343 = vpack.c.bf16 %v4303, %v4302
  %v4344 = vpack.c.bf16 %v4305, %v4304
  %v4345 = vpack.c.bf16 %v4307, %v4306
  %v4346 = vpack.c.bf16 %v4309, %v4308
  %v4347 = vpack.c.bf16 %v4311, %v4310
  %v4348 = vpack.c.bf16 %v4313, %v4312
  %v4349 = vpack.c.bf16 %v4315, %v4314
  %v4350 = vpack.c.bf16 %v4317, %v4316
  %v4351 = vpack.c.bf16 %v4319, %v4318
  %4352 = vmatprep.subr.bf16.mxu0 0
  %4353 = vmatpush1.bf16.msra.mxu0 %v1944
  %4354 = vmatprep.subr.bf16.mxu0 0
  %4355 = vmatpush1.bf16.msra.mxu0 %v1945
  %4356 = vmatprep.subr.bf16.mxu0 0
  %4357 = vmatpush1.bf16.msra.mxu0 %v1946
  %4358 = vmatprep.subr.bf16.mxu0 0
  %4359 = vmatpush1.bf16.msra.mxu0 %v1947
  %4360 = vmatprep.subr.bf16.mxu0 0
  %4361 = vmatpush1.bf16.msra.mxu0 %v1948
  %4362 = vmatprep.subr.bf16.mxu0 0
  %4363 = vmatpush1.bf16.msra.mxu0 %v1949
  %4364 = vmatprep.subr.bf16.mxu0 0
  %4365 = vmatpush1.bf16.msra.mxu0 %v1950
  %4366 = vmatprep.subr.bf16.mxu0 0
  %4367 = vmatpush1.bf16.msra.mxu0 %v1951
  %4368 = vmatprep.subr.bf16.mxu0 0
  %4369 = vmatpush1.bf16.msra.mxu0 0
  %4370 = vmatprep.subr.bf16.mxu0 0
  %4371 = vmatpush1.bf16.msra.mxu0 0
  %4372 = vmatprep.subr.bf16.mxu0 0
  %4373 = vmatpush1.bf16.msra.mxu0 0
  %4374 = vmatprep.subr.bf16.mxu0 0
  %4375 = vmatpush1.bf16.msra.mxu0 0
  %4376 = vmatprep.subr.bf16.mxu0 0
  %4377 = vmatpush1.bf16.msra.mxu0 0
  %4378 = vmatprep.subr.bf16.mxu0 0
  %4379 = vmatpush1.bf16.msra.mxu0 0
  %4380 = vmatprep.subr.bf16.mxu0 0
  %4381 = vmatpush1.bf16.msra.mxu0 0
  %4382 = vmatprep.subr.bf16.mxu0 0
  %4383 = vmatpush1.bf16.msra.mxu0 0
  %4384 = vmatprep.mubr.bf16.mxu0 0
  %4385 = vmatmul.mubr.bf16.gmra.mrb[0].mxu0 %v4320
  %v4386 = vpop.f32.mrb[0].mxu0
  %v4387 = vadd.f32 0.0, %v4386
  %v4388 = vpop.f32.mrb[0].mxu0
  %v4389 = vpop.f32.mrb[0].mxu0
  %v4390 = vadd.f32 0.0, %v4389
  %v4391 = vpop.f32.mrb[0].mxu0
  %4392 = vmatprep.mubr.bf16.mxu0 0
  %4393 = vmatmul.mubr.bf16.gmra.mrb[0].mxu0 %v4321
  %v4394 = vpop.f32.mrb[0].mxu0
  %v4395 = vadd.f32 0.0, %v4394
  %v4396 = vpop.f32.mrb[0].mxu0
  %v4397 = vpop.f32.mrb[0].mxu0
  %v4398 = vadd.f32 0.0, %v4397
  %v4399 = vpop.f32.mrb[0].mxu0
  %4400 = vmatprep.mubr.bf16.mxu0 0
  %4401 = vmatmul.mubr.bf16.gmra.mrb[0].mxu0 %v4322
  %v4402 = vpop.f32.mrb[0].mxu0
  %v4403 = vadd.f32 0.0, %v4402
  %v4404 = vpop.f32.mrb[0].mxu0
  %v4405 = vpop.f32.mrb[0].mxu0
  %v4406 = vadd.f32 0.0, %v4405
  %v4407 = vpop.f32.mrb[0].mxu0
  %4408 = vmatprep.mubr.bf16.mxu0 0
  %4409 = vmatmul.mubr.bf16.gmra.mrb[0].mxu0 %v4323
  %v4410 = vpop.f32.mrb[0].mxu0
  %v4411 = vadd.f32 0.0, %v4410
  %v4412 = vpop.f32.mrb[0].mxu0
  %v4413 = vpop.f32.mrb[0].mxu0
  %v4414 = vadd.f32 0.0, %v4413
  %v4415 = vpop.f32.mrb[0].mxu0
  %4416 = vmatprep.mubr.bf16.mxu0 0
  %4417 = vmatmul.mubr.bf16.gmra.mrb[0].mxu0 %v4324
  %v4418 = vpop.f32.mrb[0].mxu0
  %v4419 = vadd.f32 0.0, %v4418
  %v4420 = vpop.f32.mrb[0].mxu0
  %v4421 = vpop.f32.mrb[0].mxu0
  %v4422 = vadd.f32 0.0, %v4421
  %v4423 = vpop.f32.mrb[0].mxu0
  %4424 = vmatprep.mubr.bf16.mxu0 0
  %4425 = vmatmul.mubr.bf16.gmra.mrb[0].mxu0 %v4325
  %v4426 = vpop.f32.mrb[0].mxu0
  %v4427 = vadd.f32 0.0, %v4426
  %v4428 = vpop.f32.mrb[0].mxu0
  %v4429 = vpop.f32.mrb[0].mxu0
  %v4430 = vadd.f32 0.0, %v4429
  %v4431 = vpop.f32.mrb[0].mxu0
  %4432 = vmatprep.mubr.bf16.mxu0 0
  %4433 = vmatmul.mubr.bf16.gmra.mrb[0].mxu0 %v4326
  %v4434 = vpop.f32.mrb[0].mxu0
  %v4435 = vadd.f32 0.0, %v4434
  %v4436 = vpop.f32.mrb[0].mxu0
  %v4437 = vpop.f32.mrb[0].mxu0
  %v4438 = vadd.f32 0.0, %v4437
  %v4439 = vpop.f32.mrb[0].mxu0
  %4440 = vmatprep.mubr.bf16.mxu0 0
  %4441 = vmatmul.mubr.bf16.gmra.mrb[0].mxu0 %v4327
  %v4442 = vpop.f32.mrb[0].mxu0
  %v4443 = vadd.f32 0.0, %v4442
  %v4444 = vpop.f32.mrb[0].mxu0
  %v4445 = vpop.f32.mrb[0].mxu0
  %v4446 = vadd.f32 0.0, %v4445
  %v4447 = vpop.f32.mrb[0].mxu0
  %4448 = vmatprep.mubr.bf16.mxu0 0
  %4449 = vmatmul.mubr.bf16.gmra.mrb[0].mxu0 %v4328
  %v4450 = vpop.f32.mrb[0].mxu0
  %v4451 = vadd.f32 0.0, %v4450
  %v4452 = vpop.f32.mrb[0].mxu0
  %v4453 = vpop.f32.mrb[0].mxu0
  %v4454 = vadd.f32 0.0, %v4453
  %v4455 = vpop.f32.mrb[0].mxu0
  %4456 = vmatprep.mubr.bf16.mxu0 0
  %4457 = vmatmul.mubr.bf16.gmra.mrb[0].mxu0 %v4329
  %v4458 = vpop.f32.mrb[0].mxu0
  %v4459 = vadd.f32 0.0, %v4458
  %v4460 = vpop.f32.mrb[0].mxu0
  %v4461 = vpop.f32.mrb[0].mxu0
  %v4462 = vadd.f32 0.0, %v4461
  %v4463 = vpop.f32.mrb[0].mxu0
  %4464 = vmatprep.mubr.bf16.mxu0 0
  %4465 = vmatmul.mubr.bf16.gmra.mrb[0].mxu0 %v4330
  %v4466 = vpop.f32.mrb[0].mxu0
  %v4467 = vadd.f32 0.0, %v4466
  %v4468 = vpop.f32.mrb[0].mxu0
  %v4469 = vpop.f32.mrb[0].mxu0
  %v4470 = vadd.f32 0.0, %v4469
  %v4471 = vpop.f32.mrb[0].mxu0
  %4472 = vmatprep.mubr.bf16.mxu0 0
  %4473 = vmatmul.mubr.bf16.gmra.mrb[0].mxu0 %v4331
  %v4474 = vpop.f32.mrb[0].mxu0
  %v4475 = vadd.f32 0.0, %v4474
  %v4476 = vpop.f32.mrb[0].mxu0
  %v4477 = vpop.f32.mrb[0].mxu0
  %v4478 = vadd.f32 0.0, %v4477
  %v4479 = vpop.f32.mrb[0].mxu0
  %4480 = vmatprep.mubr.bf16.mxu0 0
  %4481 = vmatmul.mubr.bf16.gmra.mrb[0].mxu0 %v4332
  %v4482 = vpop.f32.mrb[0].mxu0
  %v4483 = vadd.f32 0.0, %v4482
  %v4484 = vpop.f32.mrb[0].mxu0
  %v4485 = vpop.f32.mrb[0].mxu0
  %v4486 = vadd.f32 0.0, %v4485
  %v4487 = vpop.f32.mrb[0].mxu0
  %4488 = vmatprep.mubr.bf16.mxu0 0
  %4489 = vmatmul.mubr.bf16.gmra.mrb[0].mxu0 %v4333
  %v4490 = vpop.f32.mrb[0].mxu0
  %v4491 = vadd.f32 0.0, %v4490
  %v4492 = vpop.f32.mrb[0].mxu0
  %v4493 = vpop.f32.mrb[0].mxu0
  %v4494 = vadd.f32 0.0, %v4493
  %v4495 = vpop.f32.mrb[0].mxu0
  %4496 = vmatprep.mubr.bf16.mxu0 0
  %4497 = vmatmul.mubr.bf16.gmra.mrb[0].mxu0 %v4334
  %v4498 = vpop.f32.mrb[0].mxu0
  %v4499 = vadd.f32 0.0, %v4498
  %v4500 = vpop.f32.mrb[0].mxu0
  %v4501 = vpop.f32.mrb[0].mxu0
  %v4502 = vadd.f32 0.0, %v4501
  %v4503 = vpop.f32.mrb[0].mxu0
  %4504 = vmatprep.mubr.bf16.mxu0 0
  %4505 = vmatmul.mubr.bf16.gmra.mrb[0].mxu0 %v4335
  %v4506 = vpop.f32.mrb[0].mxu0
  %v4507 = vadd.f32 0.0, %v4506
  %v4508 = vpop.f32.mrb[0].mxu0
  %v4509 = vpop.f32.mrb[0].mxu0
  %v4510 = vadd.f32 0.0, %v4509
  %v4511 = vpop.f32.mrb[0].mxu0
  %4512 = vmatprep.mubr.bf16.mxu0 0
  %4513 = vmatmul.mubr.bf16.gmra.mrb[0].mxu0 %v4336
  %v4514 = vpop.f32.mrb[0].mxu0
  %v4515 = vadd.f32 0.0, %v4514
  %v4516 = vpop.f32.mrb[0].mxu0
  %v4517 = vpop.f32.mrb[0].mxu0
  %v4518 = vadd.f32 0.0, %v4517
  %v4519 = vpop.f32.mrb[0].mxu0
  %4520 = vmatprep.mubr.bf16.mxu0 0
  %4521 = vmatmul.mubr.bf16.gmra.mrb[0].mxu0 %v4337
  %v4522 = vpop.f32.mrb[0].mxu0
  %v4523 = vadd.f32 0.0, %v4522
  %v4524 = vpop.f32.mrb[0].mxu0
  %v4525 = vpop.f32.mrb[0].mxu0
  %v4526 = vadd.f32 0.0, %v4525
  %v4527 = vpop.f32.mrb[0].mxu0
  %4528 = vmatprep.mubr.bf16.mxu0 0
  %4529 = vmatmul.mubr.bf16.gmra.mrb[0].mxu0 %v4338
  %v4530 = vpop.f32.mrb[0].mxu0
  %v4531 = vadd.f32 0.0, %v4530
  %v4532 = vpop.f32.mrb[0].mxu0
  %v4533 = vpop.f32.mrb[0].mxu0
  %v4534 = vadd.f32 0.0, %v4533
  %v4535 = vpop.f32.mrb[0].mxu0
  %4536 = vmatprep.mubr.bf16.mxu0 0
  %4537 = vmatmul.mubr.bf16.gmra.mrb[0].mxu0 %v4339
  %v4538 = vpop.f32.mrb[0].mxu0
  %v4539 = vadd.f32 0.0, %v4538
  %v4540 = vpop.f32.mrb[0].mxu0
  %v4541 = vpop.f32.mrb[0].mxu0
  %v4542 = vadd.f32 0.0, %v4541
  %v4543 = vpop.f32.mrb[0].mxu0
  %4544 = vmatprep.mubr.bf16.mxu0 0
  %4545 = vmatmul.mubr.bf16.gmra.mrb[0].mxu0 %v4340
  %v4546 = vpop.f32.mrb[0].mxu0
  %v4547 = vadd.f32 0.0, %v4546
  %v4548 = vpop.f32.mrb[0].mxu0
  %v4549 = vpop.f32.mrb[0].mxu0
  %v4550 = vadd.f32 0.0, %v4549
  %v4551 = vpop.f32.mrb[0].mxu0
  %4552 = vmatprep.mubr.bf16.mxu0 0
  %4553 = vmatmul.mubr.bf16.gmra.mrb[0].mxu0 %v4341
  %v4554 = vpop.f32.mrb[0].mxu0
  %v4555 = vadd.f32 0.0, %v4554
  %v4556 = vpop.f32.mrb[0].mxu0
  %v4557 = vpop.f32.mrb[0].mxu0
  %v4558 = vadd.f32 0.0, %v4557
  %v4559 = vpop.f32.mrb[0].mxu0
  %4560 = vmatprep.mubr.bf16.mxu0 0
  %4561 = vmatmul.mubr.bf16.gmra.mrb[0].mxu0 %v4342
  %v4562 = vpop.f32.mrb[0].mxu0
  %v4563 = vadd.f32 0.0, %v4562
  %v4564 = vpop.f32.mrb[0].mxu0
  %v4565 = vpop.f32.mrb[0].mxu0
  %v4566 = vadd.f32 0.0, %v4565
  %v4567 = vpop.f32.mrb[0].mxu0
  %4568 = vmatprep.mubr.bf16.mxu0 0
  %4569 = vmatmul.mubr.bf16.gmra.mrb[0].mxu0 %v4343
  %v4570 = vpop.f32.mrb[0].mxu0
  %v4571 = vadd.f32 0.0, %v4570
  %v4572 = vpop.f32.mrb[0].mxu0
  %v4573 = vpop.f32.mrb[0].mxu0
  %v4574 = vadd.f32 0.0, %v4573
  %v4575 = vpop.f32.mrb[0].mxu0
  %4576 = vmatprep.mubr.bf16.mxu0 0
  %4577 = vmatmul.mubr.bf16.gmra.mrb[0].mxu0 %v4344
  %v4578 = vpop.f32.mrb[0].mxu0
  %v4579 = vadd.f32 0.0, %v4578
  %v4580 = vpop.f32.mrb[0].mxu0
  %v4581 = vpop.f32.mrb[0].mxu0
  %v4582 = vadd.f32 0.0, %v4581
  %v4583 = vpop.f32.mrb[0].mxu0
  %4584 = vmatprep.mubr.bf16.mxu0 0
  %4585 = vmatmul.mubr.bf16.gmra.mrb[0].mxu0 %v4345
  %v4586 = vpop.f32.mrb[0].mxu0
  %v4587 = vadd.f32 0.0, %v4586
  %v4588 = vpop.f32.mrb[0].mxu0
  %v4589 = vpop.f32.mrb[0].mxu0
  %v4590 = vadd.f32 0.0, %v4589
  %v4591 = vpop.f32.mrb[0].mxu0
  %4592 = vmatprep.mubr.bf16.mxu0 0
  %4593 = vmatmul.mubr.bf16.gmra.mrb[0].mxu0 %v4346
  %v4594 = vpop.f32.mrb[0].mxu0
  %v4595 = vadd.f32 0.0, %v4594
  %v4596 = vpop.f32.mrb[0].mxu0
  %v4597 = vpop.f32.mrb[0].mxu0
  %v4598 = vadd.f32 0.0, %v4597
  %v4599 = vpop.f32.mrb[0].mxu0
  %4600 = vmatprep.mubr.bf16.mxu0 0
  %4601 = vmatmul.mubr.bf16.gmra.mrb[0].mxu0 %v4347
  %v4602 = vpop.f32.mrb[0].mxu0
  %v4603 = vadd.f32 0.0, %v4602
  %v4604 = vpop.f32.mrb[0].mxu0
  %v4605 = vpop.f32.mrb[0].mxu0
  %v4606 = vadd.f32 0.0, %v4605
  %v4607 = vpop.f32.mrb[0].mxu0
  %4608 = vmatprep.mubr.bf16.mxu0 0
  %4609 = vmatmul.mubr.bf16.gmra.mrb[0].mxu0 %v4348
  %v4610 = vpop.f32.mrb[0].mxu0
  %v4611 = vadd.f32 0.0, %v4610
  %v4612 = vpop.f32.mrb[0].mxu0
  %v4613 = vpop.f32.mrb[0].mxu0
  %v4614 = vadd.f32 0.0, %v4613
  %v4615 = vpop.f32.mrb[0].mxu0
  %4616 = vmatprep.mubr.bf16.mxu0 0
  %4617 = vmatmul.mubr.bf16.gmra.mrb[0].mxu0 %v4349
  %v4618 = vpop.f32.mrb[0].mxu0
  %v4619 = vadd.f32 0.0, %v4618
  %v4620 = vpop.f32.mrb[0].mxu0
  %v4621 = vpop.f32.mrb[0].mxu0
  %v4622 = vadd.f32 0.0, %v4621
  %v4623 = vpop.f32.mrb[0].mxu0
  %4624 = vmatprep.mubr.bf16.mxu0 0
  %4625 = vmatmul.mubr.bf16.gmra.mrb[0].mxu0 %v4350
  %v4626 = vpop.f32.mrb[0].mxu0
  %v4627 = vadd.f32 0.0, %v4626
  %v4628 = vpop.f32.mrb[0].mxu0
  %v4629 = vpop.f32.mrb[0].mxu0
  %v4630 = vadd.f32 0.0, %v4629
  %v4631 = vpop.f32.mrb[0].mxu0
  %4632 = vmatprep.mubr.bf16.mxu0 0
  %4633 = vmatmul.mubr.bf16.gmra.mrb[0].mxu0 %v4351
  %v4634 = vpop.f32.mrb[0].mxu0
  %v4635 = vadd.f32 0.0, %v4634
  %v4636 = vpop.f32.mrb[0].mxu0
  %v4637 = vpop.f32.mrb[0].mxu0
  %v4638 = vadd.f32 0.0, %v4637
  %v4639 = vpop.f32.mrb[0].mxu0
  %4640 = vdwg.mxu0
  %v4641 = vadd.f32 %v4387, %v4390
  %v4642 = vadd.f32 %v4641, %v4395
  %v4643 = vadd.f32 %v4642, %v4398
  %v4644 = vadd.f32 %v4643, %v4403
  %v4645 = vadd.f32 %v4644, %v4406
  %v4646 = vadd.f32 %v4645, %v4411
  %v4647 = vadd.f32 %v4646, %v4414
  %v4648 = vadd.f32 %v4647, %v4419
  %v4649 = vadd.f32 %v4648, %v4422
  %v4650 = vadd.f32 %v4649, %v4427
  %v4651 = vadd.f32 %v4650, %v4430
  %v4652 = vadd.f32 %v4651, %v4435
  %v4653 = vadd.f32 %v4652, %v4438
  %v4654 = vadd.f32 %v4653, %v4443
  %v4655 = vadd.f32 %v4654, %v4446
  %v4656 = vadd.f32 %v4655, %v4451
  %v4657 = vadd.f32 %v4656, %v4454
  %v4658 = vadd.f32 %v4657, %v4459
  %v4659 = vadd.f32 %v4658, %v4462
  %v4660 = vadd.f32 %v4659, %v4467
  %v4661 = vadd.f32 %v4660, %v4470
  %v4662 = vadd.f32 %v4661, %v4475
  %v4663 = vadd.f32 %v4662, %v4478
  %v4664 = vadd.f32 %v4663, %v4483
  %v4665 = vadd.f32 %v4664, %v4486
  %v4666 = vadd.f32 %v4665, %v4491
  %v4667 = vadd.f32 %v4666, %v4494
  %v4668 = vadd.f32 %v4667, %v4499
  %v4669 = vadd.f32 %v4668, %v4502
  %v4670 = vadd.f32 %v4669, %v4507
  %v4671 = vadd.f32 %v4670, %v4510
  %v4672 = vadd.f32 %v4671, %v4515
  %v4673 = vadd.f32 %v4672, %v4518
  %v4674 = vadd.f32 %v4673, %v4523
  %v4675 = vadd.f32 %v4674, %v4526
  %v4676 = vadd.f32 %v4675, %v4531
  %v4677 = vadd.f32 %v4676, %v4534
  %v4678 = vadd.f32 %v4677, %v4539
  %v4679 = vadd.f32 %v4678, %v4542
  %v4680 = vadd.f32 %v4679, %v4547
  %v4681 = vadd.f32 %v4680, %v4550
  %v4682 = vadd.f32 %v4681, %v4555
  %v4683 = vadd.f32 %v4682, %v4558
  %v4684 = vadd.f32 %v4683, %v4563
  %v4685 = vadd.f32 %v4684, %v4566
  %v4686 = vadd.f32 %v4685, %v4571
  %v4687 = vadd.f32 %v4686, %v4574
  %v4688 = vadd.f32 %v4687, %v4579
  %v4689 = vadd.f32 %v4688, %v4582
  %v4690 = vadd.f32 %v4689, %v4587
  %v4691 = vadd.f32 %v4690, %v4590
  %v4692 = vadd.f32 %v4691, %v4595
  %v4693 = vadd.f32 %v4692, %v4598
  %v4694 = vadd.f32 %v4693, %v4603
  %v4695 = vadd.f32 %v4694, %v4606
  %v4696 = vadd.f32 %v4695, %v4611
  %v4697 = vadd.f32 %v4696, %v4614
  %v4698 = vadd.f32 %v4697, %v4619
  %v4699 = vadd.f32 %v4698, %v4622
  %v4700 = vadd.f32 %v4699, %v4627
  %v4701 = vadd.f32 %v4700, %v4630
  %v4702 = vadd.f32 %v4701, %v4635
  %v4703 = vadd.f32 %v4702, %v4638
  %v4704 = vrot.slane %v4703, 4
  %v4705 = vadd.f32 %v4703, %v4704
  %v4706 = vrot.slane %v4705, 2
  %v4707 = vadd.f32 %v4705, %v4706
  %v4708 = vrot.slane %v4707, 1
  %v4709 = vadd.f32 %v4707, %v4708
  %v4710 = vmul.f32 %v4387, %v4387
  %v4711 = vmul.f32 %v4390, %v4390
  %v4712 = vmul.f32 %v4395, %v4395
  %v4713 = vmul.f32 %v4398, %v4398
  %v4714 = vmul.f32 %v4403, %v4403
  %v4715 = vmul.f32 %v4406, %v4406
  %v4716 = vmul.f32 %v4411, %v4411
  %v4717 = vmul.f32 %v4414, %v4414
  %v4718 = vmul.f32 %v4419, %v4419
  %v4719 = vmul.f32 %v4422, %v4422
  %v4720 = vmul.f32 %v4427, %v4427
  %v4721 = vmul.f32 %v4430, %v4430
  %v4722 = vmul.f32 %v4435, %v4435
  %v4723 = vmul.f32 %v4438, %v4438
  %v4724 = vmul.f32 %v4443, %v4443
  %v4725 = vmul.f32 %v4446, %v4446
  %v4726 = vmul.f32 %v4451, %v4451
  %v4727 = vmul.f32 %v4454, %v4454
  %v4728 = vmul.f32 %v4459, %v4459
  %v4729 = vmul.f32 %v4462, %v4462
  %v4730 = vmul.f32 %v4467, %v4467
  %v4731 = vmul.f32 %v4470, %v4470
  %v4732 = vmul.f32 %v4475, %v4475
  %v4733 = vmul.f32 %v4478, %v4478
  %v4734 = vmul.f32 %v4483, %v4483
  %v4735 = vmul.f32 %v4486, %v4486
  %v4736 = vmul.f32 %v4491, %v4491
  %v4737 = vmul.f32 %v4494, %v4494
  %v4738 = vmul.f32 %v4499, %v4499
  %v4739 = vmul.f32 %v4502, %v4502
  %v4740 = vmul.f32 %v4507, %v4507
  %v4741 = vmul.f32 %v4510, %v4510
  %v4742 = vmul.f32 %v4515, %v4515
  %v4743 = vmul.f32 %v4518, %v4518
  %v4744 = vmul.f32 %v4523, %v4523
  %v4745 = vmul.f32 %v4526, %v4526
  %v4746 = vmul.f32 %v4531, %v4531
  %v4747 = vmul.f32 %v4534, %v4534
  %v4748 = vmul.f32 %v4539, %v4539
  %v4749 = vmul.f32 %v4542, %v4542
  %v4750 = vmul.f32 %v4547, %v4547
  %v4751 = vmul.f32 %v4550, %v4550
  %v4752 = vmul.f32 %v4555, %v4555
  %v4753 = vmul.f32 %v4558, %v4558
  %v4754 = vmul.f32 %v4563, %v4563
  %v4755 = vmul.f32 %v4566, %v4566
  %v4756 = vmul.f32 %v4571, %v4571
  %v4757 = vmul.f32 %v4574, %v4574
  %v4758 = vmul.f32 %v4579, %v4579
  %v4759 = vmul.f32 %v4582, %v4582
  %v4760 = vmul.f32 %v4587, %v4587
  %v4761 = vmul.f32 %v4590, %v4590
  %v4762 = vmul.f32 %v4595, %v4595
  %v4763 = vmul.f32 %v4598, %v4598
  %v4764 = vmul.f32 %v4603, %v4603
  %v4765 = vmul.f32 %v4606, %v4606
  %v4766 = vmul.f32 %v4611, %v4611
  %v4767 = vmul.f32 %v4614, %v4614
  %v4768 = vmul.f32 %v4619, %v4619
  %v4769 = vmul.f32 %v4622, %v4622
  %v4770 = vmul.f32 %v4627, %v4627
  %v4771 = vmul.f32 %v4630, %v4630
  %v4772 = vmul.f32 %v4635, %v4635
  %v4773 = vmul.f32 %v4638, %v4638
  %v4774 = vadd.f32 %v4710, %v4711
  %v4775 = vadd.f32 %v4774, %v4712
  %v4776 = vadd.f32 %v4775, %v4713
  %v4777 = vadd.f32 %v4776, %v4714
  %v4778 = vadd.f32 %v4777, %v4715
  %v4779 = vadd.f32 %v4778, %v4716
  %v4780 = vadd.f32 %v4779, %v4717
  %v4781 = vadd.f32 %v4780, %v4718
  %v4782 = vadd.f32 %v4781, %v4719
  %v4783 = vadd.f32 %v4782, %v4720
  %v4784 = vadd.f32 %v4783, %v4721
  %v4785 = vadd.f32 %v4784, %v4722
  %v4786 = vadd.f32 %v4785, %v4723
  %v4787 = vadd.f32 %v4786, %v4724
  %v4788 = vadd.f32 %v4787, %v4725
  %v4789 = vadd.f32 %v4788, %v4726
  %v4790 = vadd.f32 %v4789, %v4727
  %v4791 = vadd.f32 %v4790, %v4728
  %v4792 = vadd.f32 %v4791, %v4729
  %v4793 = vadd.f32 %v4792, %v4730
  %v4794 = vadd.f32 %v4793, %v4731
  %v4795 = vadd.f32 %v4794, %v4732
  %v4796 = vadd.f32 %v4795, %v4733
  %v4797 = vadd.f32 %v4796, %v4734
  %v4798 = vadd.f32 %v4797, %v4735
  %v4799 = vadd.f32 %v4798, %v4736
  %v4800 = vadd.f32 %v4799, %v4737
  %v4801 = vadd.f32 %v4800, %v4738
  %v4802 = vadd.f32 %v4801, %v4739
  %v4803 = vadd.f32 %v4802, %v4740
  %v4804 = vadd.f32 %v4803, %v4741
  %v4805 = vadd.f32 %v4804, %v4742
  %v4806 = vadd.f32 %v4805, %v4743
  %v4807 = vadd.f32 %v4806, %v4744
  %v4808 = vadd.f32 %v4807, %v4745
  %v4809 = vadd.f32 %v4808, %v4746
  %v4810 = vadd.f32 %v4809, %v4747
  %v4811 = vadd.f32 %v4810, %v4748
  %v4812 = vadd.f32 %v4811, %v4749
  %v4813 = vadd.f32 %v4812, %v4750
  %v4814 = vadd.f32 %v4813, %v4751
  %v4815 = vadd.f32 %v4814, %v4752
  %v4816 = vadd.f32 %v4815, %v4753
  %v4817 = vadd.f32 %v4816, %v4754
  %v4818 = vadd.f32 %v4817, %v4755
  %v4819 = vadd.f32 %v4818, %v4756
  %v4820 = vadd.f32 %v4819, %v4757
  %v4821 = vadd.f32 %v4820, %v4758
  %v4822 = vadd.f32 %v4821, %v4759
  %v4823 = vadd.f32 %v4822, %v4760
  %v4824 = vadd.f32 %v4823, %v4761
  %v4825 = vadd.f32 %v4824, %v4762
  %v4826 = vadd.f32 %v4825, %v4763
  %v4827 = vadd.f32 %v4826, %v4764
  %v4828 = vadd.f32 %v4827, %v4765
  %v4829 = vadd.f32 %v4828, %v4766
  %v4830 = vadd.f32 %v4829, %v4767
  %v4831 = vadd.f32 %v4830, %v4768
  %v4832 = vadd.f32 %v4831, %v4769
  %v4833 = vadd.f32 %v4832, %v4770
  %v4834 = vadd.f32 %v4833, %v4771
  %v4835 = vadd.f32 %v4834, %v4772
  %v4836 = vadd.f32 %v4835, %v4773
  %v4837 = vrot.slane %v4836, 4
  %v4838 = vadd.f32 %v4836, %v4837
  %v4839 = vrot.slane %v4838, 2
  %v4840 = vadd.f32 %v4838, %v4839
  %v4841 = vrot.slane %v4840, 1
  %v4842 = vadd.f32 %v4840, %v4841
  %v4843 = vmul.f32 %v4709, 0.001953125
  %v4844 = vmul.f32 %v4842, 0.001953125
  %v4845 = vmul.f32 %v4843, %v4843
  %v4846 = vsub.f32 %v4844, %v4845
  %v4847 = vadd.f32 %v4846, 1e-05
  %v4848 = vrsqrt.pop %v4847
  %v4849 = vmul.f32 %v48, %v4848
  %v4850 = vmul.f32 %v4843, %v4849
  %v4851 = vsub.f32 %v49, %v4850
  %v4853 = vlaneseq
  %v4854 = vshrl.u32 %v4853, 7
  %v4855 = vsub.s32 0, %v4854
  %v4856 = vrot.slane %v4849, %v4855
  %v4858 = vmul.f32 %v4387, %v4856
  %v4859 = vmul.f32 %v4390, %v4856
  %v4860 = vmul.f32 %v4395, %v4856
  %v4861 = vmul.f32 %v4398, %v4856
  %v4862 = vmul.f32 %v4403, %v4856
  %v4863 = vmul.f32 %v4406, %v4856
  %v4864 = vmul.f32 %v4411, %v4856
  %v4865 = vmul.f32 %v4414, %v4856
  %v4866 = vmul.f32 %v4419, %v4856
  %v4867 = vmul.f32 %v4422, %v4856
  %v4868 = vmul.f32 %v4427, %v4856
  %v4869 = vmul.f32 %v4430, %v4856
  %v4870 = vmul.f32 %v4435, %v4856
  %v4871 = vmul.f32 %v4438, %v4856
  %v4872 = vmul.f32 %v4443, %v4856
  %v4873 = vmul.f32 %v4446, %v4856
  %v4874 = vmul.f32 %v4451, %v4856
  %v4875 = vmul.f32 %v4454, %v4856
  %v4876 = vmul.f32 %v4459, %v4856
  %v4877 = vmul.f32 %v4462, %v4856
  %v4878 = vmul.f32 %v4467, %v4856
  %v4879 = vmul.f32 %v4470, %v4856
  %v4880 = vmul.f32 %v4475, %v4856
  %v4881 = vmul.f32 %v4478, %v4856
  %v4882 = vmul.f32 %v4483, %v4856
  %v4883 = vmul.f32 %v4486, %v4856
  %v4884 = vmul.f32 %v4491, %v4856
  %v4885 = vmul.f32 %v4494, %v4856
  %v4886 = vmul.f32 %v4499, %v4856
  %v4887 = vmul.f32 %v4502, %v4856
  %v4888 = vmul.f32 %v4507, %v4856
  %v4889 = vmul.f32 %v4510, %v4856
  %v4890 = vmul.f32 %v4515, %v4856
  %v4891 = vmul.f32 %v4518, %v4856
  %v4892 = vmul.f32 %v4523, %v4856
  %v4893 = vmul.f32 %v4526, %v4856
  %v4894 = vmul.f32 %v4531, %v4856
  %v4895 = vmul.f32 %v4534, %v4856
  %v4896 = vmul.f32 %v4539, %v4856
  %v4897 = vmul.f32 %v4542, %v4856
  %v4898 = vmul.f32 %v4547, %v4856
  %v4899 = vmul.f32 %v4550, %v4856
  %v4900 = vmul.f32 %v4555, %v4856
  %v4901 = vmul.f32 %v4558, %v4856
  %v4902 = vmul.f32 %v4563, %v4856
  %v4903 = vmul.f32 %v4566, %v4856
  %v4904 = vmul.f32 %v4571, %v4856
  %v4905 = vmul.f32 %v4574, %v4856
  %v4906 = vmul.f32 %v4579, %v4856
  %v4907 = vmul.f32 %v4582, %v4856
  %v4908 = vmul.f32 %v4587, %v4856
  %v4909 = vmul.f32 %v4590, %v4856
  %v4910 = vmul.f32 %v4595, %v4856
  %v4911 = vmul.f32 %v4598, %v4856
  %v4912 = vmul.f32 %v4603, %v4856
  %v4913 = vmul.f32 %v4606, %v4856
  %v4914 = vmul.f32 %v4611, %v4856
  %v4915 = vmul.f32 %v4614, %v4856
  %v4916 = vmul.f32 %v4619, %v4856
  %v4917 = vmul.f32 %v4622, %v4856
  %v4918 = vmul.f32 %v4627, %v4856
  %v4919 = vmul.f32 %v4630, %v4856
  %v4920 = vmul.f32 %v4635, %v4856
  %v4921 = vmul.f32 %v4638, %v4856
  %v4923 = vlaneseq
  %v4924 = vshrl.u32 %v4923, 7
  %v4925 = vsub.s32 0, %v4924
  %v4926 = vrot.slane %v4851, %v4925
  %v4928 = vadd.f32 %v4858, %v4926
  %v4929 = vadd.f32 %v4859, %v4926
  %v4930 = vadd.f32 %v4860, %v4926
  %v4931 = vadd.f32 %v4861, %v4926
  %v4932 = vadd.f32 %v4862, %v4926
  %v4933 = vadd.f32 %v4863, %v4926
  %v4934 = vadd.f32 %v4864, %v4926
  %v4935 = vadd.f32 %v4865, %v4926
  %v4936 = vadd.f32 %v4866, %v4926
  %v4937 = vadd.f32 %v4867, %v4926
  %v4938 = vadd.f32 %v4868, %v4926
  %v4939 = vadd.f32 %v4869, %v4926
  %v4940 = vadd.f32 %v4870, %v4926
  %v4941 = vadd.f32 %v4871, %v4926
  %v4942 = vadd.f32 %v4872, %v4926
  %v4943 = vadd.f32 %v4873, %v4926
  %v4944 = vadd.f32 %v4874, %v4926
  %v4945 = vadd.f32 %v4875, %v4926
  %v4946 = vadd.f32 %v4876, %v4926
  %v4947 = vadd.f32 %v4877, %v4926
  %v4948 = vadd.f32 %v4878, %v4926
  %v4949 = vadd.f32 %v4879, %v4926
  %v4950 = vadd.f32 %v4880, %v4926
  %v4951 = vadd.f32 %v4881, %v4926
  %v4952 = vadd.f32 %v4882, %v4926
  %v4953 = vadd.f32 %v4883, %v4926
  %v4954 = vadd.f32 %v4884, %v4926
  %v4955 = vadd.f32 %v4885, %v4926
  %v4956 = vadd.f32 %v4886, %v4926
  %v4957 = vadd.f32 %v4887, %v4926
  %v4958 = vadd.f32 %v4888, %v4926
  %v4959 = vadd.f32 %v4889, %v4926
  %v4960 = vadd.f32 %v4890, %v4926
  %v4961 = vadd.f32 %v4891, %v4926
  %v4962 = vadd.f32 %v4892, %v4926
  %v4963 = vadd.f32 %v4893, %v4926
  %v4964 = vadd.f32 %v4894, %v4926
  %v4965 = vadd.f32 %v4895, %v4926
  %v4966 = vadd.f32 %v4896, %v4926
  %v4967 = vadd.f32 %v4897, %v4926
  %v4968 = vadd.f32 %v4898, %v4926
  %v4969 = vadd.f32 %v4899, %v4926
  %v4970 = vadd.f32 %v4900, %v4926
  %v4971 = vadd.f32 %v4901, %v4926
  %v4972 = vadd.f32 %v4902, %v4926
  %v4973 = vadd.f32 %v4903, %v4926
  %v4974 = vadd.f32 %v4904, %v4926
  %v4975 = vadd.f32 %v4905, %v4926
  %v4976 = vadd.f32 %v4906, %v4926
  %v4977 = vadd.f32 %v4907, %v4926
  %v4978 = vadd.f32 %v4908, %v4926
  %v4979 = vadd.f32 %v4909, %v4926
  %v4980 = vadd.f32 %v4910, %v4926
  %v4981 = vadd.f32 %v4911, %v4926
  %v4982 = vadd.f32 %v4912, %v4926
  %v4983 = vadd.f32 %v4913, %v4926
  %v4984 = vadd.f32 %v4914, %v4926
  %v4985 = vadd.f32 %v4915, %v4926
  %v4986 = vadd.f32 %v4916, %v4926
  %v4987 = vadd.f32 %v4917, %v4926
  %v4988 = vadd.f32 %v4918, %v4926
  %v4989 = vadd.f32 %v4919, %v4926
  %v4990 = vadd.f32 %v4920, %v4926
  %v4991 = vadd.f32 %v4921, %v4926
  %v4992 = vmax.f32 %v4928, 0.0
  %v4993 = vmax.f32 %v4929, 0.0
  %v4994 = vmax.f32 %v4930, 0.0
  %v4995 = vmax.f32 %v4931, 0.0
  %v4996 = vmax.f32 %v4932, 0.0
  %v4997 = vmax.f32 %v4933, 0.0
  %v4998 = vmax.f32 %v4934, 0.0
  %v4999 = vmax.f32 %v4935, 0.0
  %v5000 = vmax.f32 %v4936, 0.0
  %v5001 = vmax.f32 %v4937, 0.0
  %v5002 = vmax.f32 %v4938, 0.0
  %v5003 = vmax.f32 %v4939, 0.0
  %v5004 = vmax.f32 %v4940, 0.0
  %v5005 = vmax.f32 %v4941, 0.0
  %v5006 = vmax.f32 %v4942, 0.0
  %v5007 = vmax.f32 %v4943, 0.0
  %v5008 = vmax.f32 %v4944, 0.0
  %v5009 = vmax.f32 %v4945, 0.0
  %v5010 = vmax.f32 %v4946, 0.0
  %v5011 = vmax.f32 %v4947, 0.0
  %v5012 = vmax.f32 %v4948, 0.0
  %v5013 = vmax.f32 %v4949, 0.0
  %v5014 = vmax.f32 %v4950, 0.0
  %v5015 = vmax.f32 %v4951, 0.0
  %v5016 = vmax.f32 %v4952, 0.0
  %v5017 = vmax.f32 %v4953, 0.0
  %v5018 = vmax.f32 %v4954, 0.0
  %v5019 = vmax.f32 %v4955, 0.0
  %v5020 = vmax.f32 %v4956, 0.0
  %v5021 = vmax.f32 %v4957, 0.0
  %v5022 = vmax.f32 %v4958, 0.0
  %v5023 = vmax.f32 %v4959, 0.0
  %v5024 = vmax.f32 %v4960, 0.0
  %v5025 = vmax.f32 %v4961, 0.0
  %v5026 = vmax.f32 %v4962, 0.0
  %v5027 = vmax.f32 %v4963, 0.0
  %v5028 = vmax.f32 %v4964, 0.0
  %v5029 = vmax.f32 %v4965, 0.0
  %v5030 = vmax.f32 %v4966, 0.0
  %v5031 = vmax.f32 %v4967, 0.0
  %v5032 = vmax.f32 %v4968, 0.0
  %v5033 = vmax.f32 %v4969, 0.0
  %v5034 = vmax.f32 %v4970, 0.0
  %v5035 = vmax.f32 %v4971, 0.0
  %v5036 = vmax.f32 %v4972, 0.0
  %v5037 = vmax.f32 %v4973, 0.0
  %v5038 = vmax.f32 %v4974, 0.0
  %v5039 = vmax.f32 %v4975, 0.0
  %v5040 = vmax.f32 %v4976, 0.0
  %v5041 = vmax.f32 %v4977, 0.0
  %v5042 = vmax.f32 %v4978, 0.0
  %v5043 = vmax.f32 %v4979, 0.0
  %v5044 = vmax.f32 %v4980, 0.0
  %v5045 = vmax.f32 %v4981, 0.0
  %v5046 = vmax.f32 %v4982, 0.0
  %v5047 = vmax.f32 %v4983, 0.0
  %v5048 = vmax.f32 %v4984, 0.0
  %v5049 = vmax.f32 %v4985, 0.0
  %v5050 = vmax.f32 %v4986, 0.0
  %v5051 = vmax.f32 %v4987, 0.0
  %v5052 = vmax.f32 %v4988, 0.0
  %v5053 = vmax.f32 %v4989, 0.0
  %v5054 = vmax.f32 %v4990, 0.0
  %v5055 = vmax.f32 %v4991, 0.0
  %5056 = vst [vmem:[%s185] sm:$0xff] %v4992
  %5057 = vst [vmem:[%s185 + $0x8] sm:$0xff] %v4993
  %5058 = vst [vmem:[%s185 + $0x10] sm:$0xff] %v4994
  %5059 = vst [vmem:[%s185 + $0x18] sm:$0xff] %v4995
  %5060 = vst [vmem:[%s185 + $0x20] sm:$0xff] %v4996
  %5061 = vst [vmem:[%s185 + $0x28] sm:$0xff] %v4997
  %5062 = vst [vmem:[%s185 + $0x30] sm:$0xff] %v4998
  %5063 = vst [vmem:[%s185 + $0x38] sm:$0xff] %v4999
  %5064 = vst [vmem:[%s185 + $0x40] sm:$0xff] %v5000
  %5065 = vst [vmem:[%s185 + $0x48] sm:$0xff] %v5001
  %5066 = vst [vmem:[%s185 + $0x50] sm:$0xff] %v5002
  %5067 = vst [vmem:[%s185 + $0x58] sm:$0xff] %v5003
  %5068 = vst [vmem:[%s185 + $0x60] sm:$0xff] %v5004
  %5069 = vst [vmem:[%s185 + $0x68] sm:$0xff] %v5005
  %5070 = vst [vmem:[%s185 + $0x70] sm:$0xff] %v5006
  %5071 = vst [vmem:[%s185 + $0x78] sm:$0xff] %v5007
  %5072 = vst [vmem:[%s185 + $0x80] sm:$0xff] %v5008
  %5073 = vst [vmem:[%s185 + $0x88] sm:$0xff] %v5009
  %5074 = vst [vmem:[%s185 + $0x90] sm:$0xff] %v5010
  %5075 = vst [vmem:[%s185 + $0x98] sm:$0xff] %v5011
  %5076 = vst [vmem:[%s185 + $0xa0] sm:$0xff] %v5012
  %5077 = vst [vmem:[%s185 + $0xa8] sm:$0xff] %v5013
  %5078 = vst [vmem:[%s185 + $0xb0] sm:$0xff] %v5014
  %5079 = vst [vmem:[%s185 + $0xb8] sm:$0xff] %v5015
  %5080 = vst [vmem:[%s185 + $0xc0] sm:$0xff] %v5016
  %5081 = vst [vmem:[%s185 + $0xc8] sm:$0xff] %v5017
  %5082 = vst [vmem:[%s185 + $0xd0] sm:$0xff] %v5018
  %5083 = vst [vmem:[%s185 + $0xd8] sm:$0xff] %v5019
  %5084 = vst [vmem:[%s185 + $0xe0] sm:$0xff] %v5020
  %5085 = vst [vmem:[%s185 + $0xe8] sm:$0xff] %v5021
  %5086 = vst [vmem:[%s185 + $0xf0] sm:$0xff] %v5022
  %5087 = vst [vmem:[%s185 + $0xf8] sm:$0xff] %v5023
  %5088 = vst [vmem:[%s185 + $0x120] sm:$0xff] %v5024
  %5089 = vst [vmem:[%s185 + $0x128] sm:$0xff] %v5025
  %5090 = vst [vmem:[%s185 + $0x130] sm:$0xff] %v5026
  %5091 = vst [vmem:[%s185 + $0x138] sm:$0xff] %v5027
  %5092 = vst [vmem:[%s185 + $0x140] sm:$0xff] %v5028
  %5093 = vst [vmem:[%s185 + $0x148] sm:$0xff] %v5029
  %5094 = vst [vmem:[%s185 + $0x150] sm:$0xff] %v5030
  %5095 = vst [vmem:[%s185 + $0x158] sm:$0xff] %v5031
  %5096 = vst [vmem:[%s185 + $0x160] sm:$0xff] %v5032
  %5097 = vst [vmem:[%s185 + $0x168] sm:$0xff] %v5033
  %5098 = vst [vmem:[%s185 + $0x170] sm:$0xff] %v5034
  %5099 = vst [vmem:[%s185 + $0x178] sm:$0xff] %v5035
  %5100 = vst [vmem:[%s185 + $0x180] sm:$0xff] %v5036
  %5101 = vst [vmem:[%s185 + $0x188] sm:$0xff] %v5037
  %5102 = vst [vmem:[%s185 + $0x190] sm:$0xff] %v5038
  %5103 = vst [vmem:[%s185 + $0x198] sm:$0xff] %v5039
  %5104 = vst [vmem:[%s185 + $0x1a0] sm:$0xff] %v5040
  %5105 = vst [vmem:[%s185 + $0x1a8] sm:$0xff] %v5041
  %5106 = vst [vmem:[%s185 + $0x1b0] sm:$0xff] %v5042
  %5107 = vst [vmem:[%s185 + $0x1b8] sm:$0xff] %v5043
  %5108 = vst [vmem:[%s185 + $0x1c0] sm:$0xff] %v5044
  %5109 = vst [vmem:[%s185 + $0x1c8] sm:$0xff] %v5045
  %5110 = vst [vmem:[%s185 + $0x1d0] sm:$0xff] %v5046
  %5111 = vst [vmem:[%s185 + $0x1d8] sm:$0xff] %v5047
  %5112 = vst [vmem:[%s185 + $0x1e0] sm:$0xff] %v5048
  %5113 = vst [vmem:[%s185 + $0x1e8] sm:$0xff] %v5049
  %5114 = vst [vmem:[%s185 + $0x1f0] sm:$0xff] %v5050
  %5115 = vst [vmem:[%s185 + $0x1f8] sm:$0xff] %v5051
  %5116 = vst [vmem:[%s185 + $0x200] sm:$0xff] %v5052
  %5117 = vst [vmem:[%s185 + $0x208] sm:$0xff] %v5053
  %5118 = vst [vmem:[%s185 + $0x210] sm:$0xff] %v5054
  %5119 = vst [vmem:[%s185 + $0x218] sm:$0xff] %v5055
  %v5120 = vld [vmem:[#allocation2] sm:$0xff]
  %v5121 = vld [vmem:[#allocation2 + $0x8] sm:$0xff]
  %v5122 = vld [vmem:[#allocation2 + $0x10] sm:$0xff]
  %v5123 = vld [vmem:[#allocation2 + $0x18] sm:$0xff]
  %v5124 = vld [vmem:[#allocation2 + $0x20] sm:$0xff]
  %v5125 = vld [vmem:[#allocation2 + $0x28] sm:$0xff]
  %v5126 = vld [vmem:[#allocation2 + $0x30] sm:$0xff]
  %v5127 = vld [vmem:[#allocation2 + $0x38] sm:$0xff]
  %v5128 = vld [vmem:[#allocation2 + $0x40] sm:$0xff]
  %v5129 = vld [vmem:[#allocation2 + $0x48] sm:$0xff]
  %v5130 = vld [vmem:[#allocation2 + $0x50] sm:$0xff]
  %v5131 = vld [vmem:[#allocation2 + $0x58] sm:$0xff]
  %v5132 = vld [vmem:[#allocation2 + $0x60] sm:$0xff]
  %v5133 = vld [vmem:[#allocation2 + $0x68] sm:$0xff]
  %v5134 = vld [vmem:[#allocation2 + $0x70] sm:$0xff]
  %v5135 = vld [vmem:[#allocation2 + $0x78] sm:$0xff]
  %v5136 = vld [vmem:[#allocation2 + $0x80] sm:$0xff]
  %v5137 = vld [vmem:[#allocation2 + $0x88] sm:$0xff]
  %v5138 = vld [vmem:[#allocation2 + $0x90] sm:$0xff]
  %v5139 = vld [vmem:[#allocation2 + $0x98] sm:$0xff]
  %v5140 = vld [vmem:[#allocation2 + $0xa0] sm:$0xff]
  %v5141 = vld [vmem:[#allocation2 + $0xa8] sm:$0xff]
  %v5142 = vld [vmem:[#allocation2 + $0xb0] sm:$0xff]
  %v5143 = vld [vmem:[#allocation2 + $0xb8] sm:$0xff]
  %v5144 = vld [vmem:[#allocation2 + $0xc0] sm:$0xff]
  %v5145 = vld [vmem:[#allocation2 + $0xc8] sm:$0xff]
  %v5146 = vld [vmem:[#allocation2 + $0xd0] sm:$0xff]
  %v5147 = vld [vmem:[#allocation2 + $0xd8] sm:$0xff]
  %v5148 = vld [vmem:[#allocation2 + $0xe0] sm:$0xff]
  %v5149 = vld [vmem:[#allocation2 + $0xe8] sm:$0xff]
  %v5150 = vld [vmem:[#allocation2 + $0xf0] sm:$0xff]
  %v5151 = vld [vmem:[#allocation2 + $0xf8] sm:$0xff]
  %v5152 = vld [vmem:[#allocation2 + $0x100] sm:$0xff]
  %v5153 = vld [vmem:[#allocation2 + $0x108] sm:$0xff]
  %v5154 = vld [vmem:[#allocation2 + $0x110] sm:$0xff]
  %v5155 = vld [vmem:[#allocation2 + $0x118] sm:$0xff]
  %v5156 = vld [vmem:[#allocation2 + $0x120] sm:$0xff]
  %v5157 = vld [vmem:[#allocation2 + $0x128] sm:$0xff]
  %v5158 = vld [vmem:[#allocation2 + $0x130] sm:$0xff]
  %v5159 = vld [vmem:[#allocation2 + $0x138] sm:$0xff]
  %v5160 = vld [vmem:[#allocation2 + $0x140] sm:$0xff]
  %v5161 = vld [vmem:[#allocation2 + $0x148] sm:$0xff]
  %v5162 = vld [vmem:[#allocation2 + $0x150] sm:$0xff]
  %v5163 = vld [vmem:[#allocation2 + $0x158] sm:$0xff]
  %v5164 = vld [vmem:[#allocation2 + $0x160] sm:$0xff]
  %v5165 = vld [vmem:[#allocation2 + $0x168] sm:$0xff]
  %v5166 = vld [vmem:[#allocation2 + $0x170] sm:$0xff]
  %v5167 = vld [vmem:[#allocation2 + $0x178] sm:$0xff]
  %v5168 = vld [vmem:[#allocation2 + $0x180] sm:$0xff]
  %v5169 = vld [vmem:[#allocation2 + $0x188] sm:$0xff]
  %v5170 = vld [vmem:[#allocation2 + $0x190] sm:$0xff]
  %v5171 = vld [vmem:[#allocation2 + $0x198] sm:$0xff]
  %v5172 = vld [vmem:[#allocation2 + $0x1a0] sm:$0xff]
  %v5173 = vld [vmem:[#allocation2 + $0x1a8] sm:$0xff]
  %v5174 = vld [vmem:[#allocation2 + $0x1b0] sm:$0xff]
  %v5175 = vld [vmem:[#allocation2 + $0x1b8] sm:$0xff]
  %v5176 = vld [vmem:[#allocation2 + $0x1c0] sm:$0xff]
  %v5177 = vld [vmem:[#allocation2 + $0x1c8] sm:$0xff]
  %v5178 = vld [vmem:[#allocation2 + $0x1d0] sm:$0xff]
  %v5179 = vld [vmem:[#allocation2 + $0x1d8] sm:$0xff]
  %v5180 = vld [vmem:[#allocation2 + $0x1e0] sm:$0xff]
  %v5181 = vld [vmem:[#allocation2 + $0x1e8] sm:$0xff]
  %v5182 = vld [vmem:[#allocation2 + $0x1f0] sm:$0xff]
  %v5183 = vld [vmem:[#allocation2 + $0x1f8] sm:$0xff]
  %v5184 = vld [vmem:[#allocation2 + $0x200] sm:$0xff]
  %v5185 = vld [vmem:[#allocation2 + $0x208] sm:$0xff]
  %v5186 = vld [vmem:[#allocation2 + $0x210] sm:$0xff]
  %v5187 = vld [vmem:[#allocation2 + $0x218] sm:$0xff]
  %v5188 = vld [vmem:[#allocation2 + $0x220] sm:$0xff]
  %v5189 = vld [vmem:[#allocation2 + $0x228] sm:$0xff]
  %v5190 = vld [vmem:[#allocation2 + $0x230] sm:$0xff]
  %v5191 = vld [vmem:[#allocation2 + $0x238] sm:$0xff]
  %v5192 = vrot.slane %v5120, 7
  %v5193 = vrot.slane %v5122, 7
  %v5194 = vrot.slane %v5124, 7
  %v5195 = vrot.slane %v5126, 7
  %v5196 = vrot.slane %v5128, 7
  %v5197 = vrot.slane %v5130, 7
  %v5198 = vrot.slane %v5132, 7
  %v5199 = vrot.slane %v5134, 7
  %v5200 = vrot.slane %v5136, 7
  %v5201 = vrot.slane %v5138, 7
  %v5202 = vrot.slane %v5140, 7
  %v5203 = vrot.slane %v5142, 7
  %v5204 = vrot.slane %v5144, 7
  %v5205 = vrot.slane %v5146, 7
  %v5206 = vrot.slane %v5148, 7
  %v5207 = vrot.slane %v5150, 7
  %v5208 = vrot.slane %v5152, 7
  %v5209 = vrot.slane %v5154, 7
  %v5210 = vrot.slane %v5156, 7
  %v5211 = vrot.slane %v5158, 7
  %v5212 = vrot.slane %v5160, 7
  %v5213 = vrot.slane %v5162, 7
  %v5214 = vrot.slane %v5164, 7
  %v5215 = vrot.slane %v5166, 7
  %v5216 = vrot.slane %v5168, 7
  %v5217 = vrot.slane %v5170, 7
  %v5218 = vrot.slane %v5172, 7
  %v5219 = vrot.slane %v5174, 7
  %v5220 = vrot.slane %v5176, 7
  %v5221 = vrot.slane %v5178, 7
  %v5222 = vrot.slane %v5180, 7
  %v5223 = vrot.slane %v5182, 7
  %v5224 = vrot.slane %v5184, 7
  %v5225 = vrot.slane %v5186, 7
  %v5226 = vrot.slane %v5188, 7
  %v5227 = vrot.slane %v5190, 7
  %v5228 = vrot.slane %v5121, 7
  %v5229 = vrot.slane %v5123, 7
  %v5230 = vrot.slane %v5125, 7
  %v5231 = vrot.slane %v5127, 7
  %v5232 = vrot.slane %v5129, 7
  %v5233 = vrot.slane %v5131, 7
  %v5234 = vrot.slane %v5133, 7
  %v5235 = vrot.slane %v5135, 7
  %v5236 = vrot.slane %v5137, 7
  %v5237 = vrot.slane %v5139, 7
  %v5238 = vrot.slane %v5141, 7
  %v5239 = vrot.slane %v5143, 7
  %v5240 = vrot.slane %v5145, 7
  %v5241 = vrot.slane %v5147, 7
  %v5242 = vrot.slane %v5149, 7
  %v5243 = vrot.slane %v5151, 7
  %v5244 = vrot.slane %v5153, 7
  %v5245 = vrot.slane %v5155, 7
  %v5246 = vrot.slane %v5157, 7
  %v5247 = vrot.slane %v5159, 7
  %v5248 = vrot.slane %v5161, 7
  %v5249 = vrot.slane %v5163, 7
  %v5250 = vrot.slane %v5165, 7
  %v5251 = vrot.slane %v5167, 7
  %v5252 = vrot.slane %v5169, 7
  %v5253 = vrot.slane %v5171, 7
  %v5254 = vrot.slane %v5173, 7
  %v5255 = vrot.slane %v5175, 7
  %v5256 = vrot.slane %v5177, 7
  %v5257 = vrot.slane %v5179, 7
  %v5258 = vrot.slane %v5181, 7
  %v5259 = vrot.slane %v5183, 7
  %v5260 = vrot.slane %v5185, 7
  %v5261 = vrot.slane %v5187, 7
  %v5262 = vrot.slane %v5189, 7
  %v5263 = vrot.slane %v5191, 7
  %v5264 = vsel %vm394, %v5192, %v5228
  %v5265 = vsel %vm394, %v5193, %v5229
  %v5266 = vsel %vm394, %v5194, %v5230
  %v5267 = vsel %vm394, %v5195, %v5231
  %v5268 = vsel %vm394, %v5196, %v5232
  %v5269 = vsel %vm394, %v5197, %v5233
  %v5270 = vsel %vm394, %v5198, %v5234
  %v5271 = vsel %vm394, %v5199, %v5235
  %v5272 = vsel %vm394, %v5200, %v5236
  %v5273 = vsel %vm394, %v5201, %v5237
  %v5274 = vsel %vm394, %v5202, %v5238
  %v5275 = vsel %vm394, %v5203, %v5239
  %v5276 = vsel %vm394, %v5204, %v5240
  %v5277 = vsel %vm394, %v5205, %v5241
  %v5278 = vsel %vm394, %v5206, %v5242
  %v5279 = vsel %vm394, %v5207, %v5243
  %v5280 = vsel %vm394, %v5208, %v5244
  %v5281 = vsel %vm394, %v5209, %v5245
  %v5282 = vsel %vm394, %v5210, %v5246
  %v5283 = vsel %vm394, %v5211, %v5247
  %v5284 = vsel %vm394, %v5212, %v5248
  %v5285 = vsel %vm394, %v5213, %v5249
  %v5286 = vsel %vm394, %v5214, %v5250
  %v5287 = vsel %vm394, %v5215, %v5251
  %v5288 = vsel %vm394, %v5216, %v5252
  %v5289 = vsel %vm394, %v5217, %v5253
  %v5290 = vsel %vm394, %v5218, %v5254
  %v5291 = vsel %vm394, %v5219, %v5255
  %v5292 = vsel %vm394, %v5220, %v5256
  %v5293 = vsel %vm394, %v5221, %v5257
  %v5294 = vsel %vm394, %v5222, %v5258
  %v5295 = vsel %vm394, %v5223, %v5259
  %v5296 = vsel %vm394, %v5224, %v5260
  %v5297 = vsel %vm394, %v5225, %v5261
  %v5298 = vsel %vm394, %v5226, %v5262
  %v5299 = vsel %vm394, %v5227, %v5263
  %v5300 = vsel %vm394, %v5228, %v5192
  %v5301 = vsel %vm394, %v5229, %v5193
  %v5302 = vsel %vm394, %v5230, %v5194
  %v5303 = vsel %vm394, %v5231, %v5195
  %v5304 = vsel %vm394, %v5232, %v5196
  %v5305 = vsel %vm394, %v5233, %v5197
  %v5306 = vsel %vm394, %v5234, %v5198
  %v5307 = vsel %vm394, %v5235, %v5199
  %v5308 = vsel %vm394, %v5236, %v5200
  %v5309 = vsel %vm394, %v5237, %v5201
  %v5310 = vsel %vm394, %v5238, %v5202
  %v5311 = vsel %vm394, %v5239, %v5203
  %v5312 = vsel %vm394, %v5240, %v5204
  %v5313 = vsel %vm394, %v5241, %v5205
  %v5314 = vsel %vm394, %v5242, %v5206
  %v5315 = vsel %vm394, %v5243, %v5207
  %v5316 = vsel %vm394, %v5244, %v5208
  %v5317 = vsel %vm394, %v5245, %v5209
  %v5318 = vsel %vm394, %v5246, %v5210
  %v5319 = vsel %vm394, %v5247, %v5211
  %v5320 = vsel %vm394, %v5248, %v5212
  %v5321 = vsel %vm394, %v5249, %v5213
  %v5322 = vsel %vm394, %v5250, %v5214
  %v5323 = vsel %vm394, %v5251, %v5215
  %v5324 = vsel %vm394, %v5252, %v5216
  %v5325 = vsel %vm394, %v5253, %v5217
  %v5326 = vsel %vm394, %v5254, %v5218
  %v5327 = vsel %vm394, %v5255, %v5219
  %v5328 = vsel %vm394, %v5256, %v5220
  %v5329 = vsel %vm394, %v5257, %v5221
  %v5330 = vsel %vm394, %v5258, %v5222
  %v5331 = vsel %vm394, %v5259, %v5223
  %v5332 = vsel %vm394, %v5260, %v5224
  %v5333 = vsel %vm394, %v5261, %v5225
  %v5334 = vsel %vm394, %v5262, %v5226
  %v5335 = vsel %vm394, %v5263, %v5227
  %v5336 = vsel %vm53, %v5300, 0.0
  %v5337 = vsel %vm54, %v5264, 0.0
  %v5338 = vsel %vm53, %v5301, 0.0
  %v5339 = vsel %vm54, %v5265, 0.0
  %v5340 = vsel %vm53, %v5302, 0.0
  %v5341 = vsel %vm54, %v5266, 0.0
  %v5342 = vsel %vm53, %v5303, 0.0
  %v5343 = vsel %vm54, %v5267, 0.0
  %v5344 = vsel %vm53, %v5304, 0.0
  %v5345 = vsel %vm54, %v5268, 0.0
  %v5346 = vsel %vm53, %v5305, 0.0
  %v5347 = vsel %vm54, %v5269, 0.0
  %v5348 = vsel %vm53, %v5306, 0.0
  %v5349 = vsel %vm54, %v5270, 0.0
  %v5350 = vsel %vm53, %v5307, 0.0
  %v5351 = vsel %vm54, %v5271, 0.0
  %v5352 = vsel %vm53, %v5308, 0.0
  %v5353 = vsel %vm54, %v5272, 0.0
  %v5354 = vsel %vm53, %v5309, 0.0
  %v5355 = vsel %vm54, %v5273, 0.0
  %v5356 = vsel %vm53, %v5310, 0.0
  %v5357 = vsel %vm54, %v5274, 0.0
  %v5358 = vsel %vm53, %v5311, 0.0
  %v5359 = vsel %vm54, %v5275, 0.0
  %v5360 = vsel %vm53, %v5312, 0.0
  %v5361 = vsel %vm54, %v5276, 0.0
  %v5362 = vsel %vm53, %v5313, 0.0
  %v5363 = vsel %vm54, %v5277, 0.0
  %v5364 = vsel %vm53, %v5314, 0.0
  %v5365 = vsel %vm54, %v5278, 0.0
  %v5366 = vsel %vm53, %v5315, 0.0
  %v5367 = vsel %vm54, %v5279, 0.0
  %v5368 = vsel %vm53, %v5316, 0.0
  %v5369 = vsel %vm54, %v5280, 0.0
  %v5370 = vsel %vm53, %v5317, 0.0
  %v5371 = vsel %vm54, %v5281, 0.0
  %v5372 = vsel %vm53, %v5318, 0.0
  %v5373 = vsel %vm54, %v5282, 0.0
  %v5374 = vsel %vm53, %v5319, 0.0
  %v5375 = vsel %vm54, %v5283, 0.0
  %v5376 = vsel %vm53, %v5320, 0.0
  %v5377 = vsel %vm54, %v5284, 0.0
  %v5378 = vsel %vm53, %v5321, 0.0
  %v5379 = vsel %vm54, %v5285, 0.0
  %v5380 = vsel %vm53, %v5322, 0.0
  %v5381 = vsel %vm54, %v5286, 0.0
  %v5382 = vsel %vm53, %v5323, 0.0
  %v5383 = vsel %vm54, %v5287, 0.0
  %v5384 = vsel %vm53, %v5324, 0.0
  %v5385 = vsel %vm54, %v5288, 0.0
  %v5386 = vsel %vm53, %v5325, 0.0
  %v5387 = vsel %vm54, %v5289, 0.0
  %v5388 = vsel %vm53, %v5326, 0.0
  %v5389 = vsel %vm54, %v5290, 0.0
  %v5390 = vsel %vm53, %v5327, 0.0
  %v5391 = vsel %vm54, %v5291, 0.0
  %v5392 = vsel %vm53, %v5328, 0.0
  %v5393 = vsel %vm54, %v5292, 0.0
  %v5394 = vsel %vm53, %v5329, 0.0
  %v5395 = vsel %vm54, %v5293, 0.0
  %v5396 = vsel %vm53, %v5330, 0.0
  %v5397 = vsel %vm54, %v5294, 0.0
  %v5398 = vsel %vm53, %v5331, 0.0
  %v5399 = vsel %vm54, %v5295, 0.0
  %v5400 = vsel %vm53, %v5332, 0.0
  %v5401 = vsel %vm54, %v5296, 0.0
  %v5402 = vsel %vm53, %v5333, 0.0
  %v5403 = vsel %vm54, %v5297, 0.0
  %v5404 = vsel %vm53, %v5334, 0.0
  %v5405 = vsel %vm54, %v5298, 0.0
  %v5406 = vsel %vm53, %v5335, 0.0
  %v5407 = vsel %vm54, %v5299, 0.0
  %v5408 = vrot.slane %v5120, 1
  %v5409 = vrot.slane %v5122, 1
  %v5410 = vrot.slane %v5124, 1
  %v5411 = vrot.slane %v5126, 1
  %v5412 = vrot.slane %v5128, 1
  %v5413 = vrot.slane %v5130, 1
  %v5414 = vrot.slane %v5132, 1
  %v5415 = vrot.slane %v5134, 1
  %v5416 = vrot.slane %v5136, 1
  %v5417 = vrot.slane %v5138, 1
  %v5418 = vrot.slane %v5140, 1
  %v5419 = vrot.slane %v5142, 1
  %v5420 = vrot.slane %v5144, 1
  %v5421 = vrot.slane %v5146, 1
  %v5422 = vrot.slane %v5148, 1
  %v5423 = vrot.slane %v5150, 1
  %v5424 = vrot.slane %v5152, 1
  %v5425 = vrot.slane %v5154, 1
  %v5426 = vrot.slane %v5156, 1
  %v5427 = vrot.slane %v5158, 1
  %v5428 = vrot.slane %v5160, 1
  %v5429 = vrot.slane %v5162, 1
  %v5430 = vrot.slane %v5164, 1
  %v5431 = vrot.slane %v5166, 1
  %v5432 = vrot.slane %v5168, 1
  %v5433 = vrot.slane %v5170, 1
  %v5434 = vrot.slane %v5172, 1
  %v5435 = vrot.slane %v5174, 1
  %v5436 = vrot.slane %v5176, 1
  %v5437 = vrot.slane %v5178, 1
  %v5438 = vrot.slane %v5180, 1
  %v5439 = vrot.slane %v5182, 1
  %v5440 = vrot.slane %v5184, 1
  %v5441 = vrot.slane %v5186, 1
  %v5442 = vrot.slane %v5188, 1
  %v5443 = vrot.slane %v5190, 1
  %v5444 = vrot.slane %v5121, 1
  %v5445 = vrot.slane %v5123, 1
  %v5446 = vrot.slane %v5125, 1
  %v5447 = vrot.slane %v5127, 1
  %v5448 = vrot.slane %v5129, 1
  %v5449 = vrot.slane %v5131, 1
  %v5450 = vrot.slane %v5133, 1
  %v5451 = vrot.slane %v5135, 1
  %v5452 = vrot.slane %v5137, 1
  %v5453 = vrot.slane %v5139, 1
  %v5454 = vrot.slane %v5141, 1
  %v5455 = vrot.slane %v5143, 1
  %v5456 = vrot.slane %v5145, 1
  %v5457 = vrot.slane %v5147, 1
  %v5458 = vrot.slane %v5149, 1
  %v5459 = vrot.slane %v5151, 1
  %v5460 = vrot.slane %v5153, 1
  %v5461 = vrot.slane %v5155, 1
  %v5462 = vrot.slane %v5157, 1
  %v5463 = vrot.slane %v5159, 1
  %v5464 = vrot.slane %v5161, 1
  %v5465 = vrot.slane %v5163, 1
  %v5466 = vrot.slane %v5165, 1
  %v5467 = vrot.slane %v5167, 1
  %v5468 = vrot.slane %v5169, 1
  %v5469 = vrot.slane %v5171, 1
  %v5470 = vrot.slane %v5173, 1
  %v5471 = vrot.slane %v5175, 1
  %v5472 = vrot.slane %v5177, 1
  %v5473 = vrot.slane %v5179, 1
  %v5474 = vrot.slane %v5181, 1
  %v5475 = vrot.slane %v5183, 1
  %v5476 = vrot.slane %v5185, 1
  %v5477 = vrot.slane %v5187, 1
  %v5478 = vrot.slane %v5189, 1
  %v5479 = vrot.slane %v5191, 1
  %v5480 = vsel %vm611, %v5408, %v5444
  %v5481 = vsel %vm611, %v5409, %v5445
  %v5482 = vsel %vm611, %v5410, %v5446
  %v5483 = vsel %vm611, %v5411, %v5447
  %v5484 = vsel %vm611, %v5412, %v5448
  %v5485 = vsel %vm611, %v5413, %v5449
  %v5486 = vsel %vm611, %v5414, %v5450
  %v5487 = vsel %vm611, %v5415, %v5451
  %v5488 = vsel %vm611, %v5416, %v5452
  %v5489 = vsel %vm611, %v5417, %v5453
  %v5490 = vsel %vm611, %v5418, %v5454
  %v5491 = vsel %vm611, %v5419, %v5455
  %v5492 = vsel %vm611, %v5420, %v5456
  %v5493 = vsel %vm611, %v5421, %v5457
  %v5494 = vsel %vm611, %v5422, %v5458
  %v5495 = vsel %vm611, %v5423, %v5459
  %v5496 = vsel %vm611, %v5424, %v5460
  %v5497 = vsel %vm611, %v5425, %v5461
  %v5498 = vsel %vm611, %v5426, %v5462
  %v5499 = vsel %vm611, %v5427, %v5463
  %v5500 = vsel %vm611, %v5428, %v5464
  %v5501 = vsel %vm611, %v5429, %v5465
  %v5502 = vsel %vm611, %v5430, %v5466
  %v5503 = vsel %vm611, %v5431, %v5467
  %v5504 = vsel %vm611, %v5432, %v5468
  %v5505 = vsel %vm611, %v5433, %v5469
  %v5506 = vsel %vm611, %v5434, %v5470
  %v5507 = vsel %vm611, %v5435, %v5471
  %v5508 = vsel %vm611, %v5436, %v5472
  %v5509 = vsel %vm611, %v5437, %v5473
  %v5510 = vsel %vm611, %v5438, %v5474
  %v5511 = vsel %vm611, %v5439, %v5475
  %v5512 = vsel %vm611, %v5440, %v5476
  %v5513 = vsel %vm611, %v5441, %v5477
  %v5514 = vsel %vm611, %v5442, %v5478
  %v5515 = vsel %vm611, %v5443, %v5479
  %v5516 = vsel %vm611, %v5444, %v5408
  %v5517 = vsel %vm611, %v5445, %v5409
  %v5518 = vsel %vm611, %v5446, %v5410
  %v5519 = vsel %vm611, %v5447, %v5411
  %v5520 = vsel %vm611, %v5448, %v5412
  %v5521 = vsel %vm611, %v5449, %v5413
  %v5522 = vsel %vm611, %v5450, %v5414
  %v5523 = vsel %vm611, %v5451, %v5415
  %v5524 = vsel %vm611, %v5452, %v5416
  %v5525 = vsel %vm611, %v5453, %v5417
  %v5526 = vsel %vm611, %v5454, %v5418
  %v5527 = vsel %vm611, %v5455, %v5419
  %v5528 = vsel %vm611, %v5456, %v5420
  %v5529 = vsel %vm611, %v5457, %v5421
  %v5530 = vsel %vm611, %v5458, %v5422
  %v5531 = vsel %vm611, %v5459, %v5423
  %v5532 = vsel %vm611, %v5460, %v5424
  %v5533 = vsel %vm611, %v5461, %v5425
  %v5534 = vsel %vm611, %v5462, %v5426
  %v5535 = vsel %vm611, %v5463, %v5427
  %v5536 = vsel %vm611, %v5464, %v5428
  %v5537 = vsel %vm611, %v5465, %v5429
  %v5538 = vsel %vm611, %v5466, %v5430
  %v5539 = vsel %vm611, %v5467, %v5431
  %v5540 = vsel %vm611, %v5468, %v5432
  %v5541 = vsel %vm611, %v5469, %v5433
  %v5542 = vsel %vm611, %v5470, %v5434
  %v5543 = vsel %vm611, %v5471, %v5435
  %v5544 = vsel %vm611, %v5472, %v5436
  %v5545 = vsel %vm611, %v5473, %v5437
  %v5546 = vsel %vm611, %v5474, %v5438
  %v5547 = vsel %vm611, %v5475, %v5439
  %v5548 = vsel %vm611, %v5476, %v5440
  %v5549 = vsel %vm611, %v5477, %v5441
  %v5550 = vsel %vm611, %v5478, %v5442
  %v5551 = vsel %vm611, %v5479, %v5443
  %v5552 = vsel %vm55, %v5480, 0.0
  %v5553 = vsel %vm56, %v5516, 0.0
  %v5554 = vsel %vm55, %v5481, 0.0
  %v5555 = vsel %vm56, %v5517, 0.0
  %v5556 = vsel %vm55, %v5482, 0.0
  %v5557 = vsel %vm56, %v5518, 0.0
  %v5558 = vsel %vm55, %v5483, 0.0
  %v5559 = vsel %vm56, %v5519, 0.0
  %v5560 = vsel %vm55, %v5484, 0.0
  %v5561 = vsel %vm56, %v5520, 0.0
  %v5562 = vsel %vm55, %v5485, 0.0
  %v5563 = vsel %vm56, %v5521, 0.0
  %v5564 = vsel %vm55, %v5486, 0.0
  %v5565 = vsel %vm56, %v5522, 0.0
  %v5566 = vsel %vm55, %v5487, 0.0
  %v5567 = vsel %vm56, %v5523, 0.0
  %v5568 = vsel %vm55, %v5488, 0.0
  %v5569 = vsel %vm56, %v5524, 0.0
  %v5570 = vsel %vm55, %v5489, 0.0
  %v5571 = vsel %vm56, %v5525, 0.0
  %v5572 = vsel %vm55, %v5490, 0.0
  %v5573 = vsel %vm56, %v5526, 0.0
  %v5574 = vsel %vm55, %v5491, 0.0
  %v5575 = vsel %vm56, %v5527, 0.0
  %v5576 = vsel %vm55, %v5492, 0.0
  %v5577 = vsel %vm56, %v5528, 0.0
  %v5578 = vsel %vm55, %v5493, 0.0
  %v5579 = vsel %vm56, %v5529, 0.0
  %v5580 = vsel %vm55, %v5494, 0.0
  %v5581 = vsel %vm56, %v5530, 0.0
  %v5582 = vsel %vm55, %v5495, 0.0
  %v5583 = vsel %vm56, %v5531, 0.0
  %v5584 = vsel %vm55, %v5496, 0.0
  %v5585 = vsel %vm56, %v5532, 0.0
  %v5586 = vsel %vm55, %v5497, 0.0
  %v5587 = vsel %vm56, %v5533, 0.0
  %v5588 = vsel %vm55, %v5498, 0.0
  %v5589 = vsel %vm56, %v5534, 0.0
  %v5590 = vsel %vm55, %v5499, 0.0
  %v5591 = vsel %vm56, %v5535, 0.0
  %v5592 = vsel %vm55, %v5500, 0.0
  %v5593 = vsel %vm56, %v5536, 0.0
  %v5594 = vsel %vm55, %v5501, 0.0
  %v5595 = vsel %vm56, %v5537, 0.0
  %v5596 = vsel %vm55, %v5502, 0.0
  %v5597 = vsel %vm56, %v5538, 0.0
  %v5598 = vsel %vm55, %v5503, 0.0
  %v5599 = vsel %vm56, %v5539, 0.0
  %v5600 = vsel %vm55, %v5504, 0.0
  %v5601 = vsel %vm56, %v5540, 0.0
  %v5602 = vsel %vm55, %v5505, 0.0
  %v5603 = vsel %vm56, %v5541, 0.0
  %v5604 = vsel %vm55, %v5506, 0.0
  %v5605 = vsel %vm56, %v5542, 0.0
  %v5606 = vsel %vm55, %v5507, 0.0
  %v5607 = vsel %vm56, %v5543, 0.0
  %v5608 = vsel %vm55, %v5508, 0.0
  %v5609 = vsel %vm56, %v5544, 0.0
  %v5610 = vsel %vm55, %v5509, 0.0
  %v5611 = vsel %vm56, %v5545, 0.0
  %v5612 = vsel %vm55, %v5510, 0.0
  %v5613 = vsel %vm56, %v5546, 0.0
  %v5614 = vsel %vm55, %v5511, 0.0
  %v5615 = vsel %vm56, %v5547, 0.0
  %v5616 = vsel %vm55, %v5512, 0.0
  %v5617 = vsel %vm56, %v5548, 0.0
  %v5618 = vsel %vm55, %v5513, 0.0
  %v5619 = vsel %vm56, %v5549, 0.0
  %v5620 = vsel %vm55, %v5514, 0.0
  %v5621 = vsel %vm56, %v5550, 0.0
  %v5622 = vsel %vm55, %v5515, 0.0
  %v5623 = vsel %vm56, %v5551, 0.0
  %v5624 = vmul.f32 %v5336, %v759
  %v5625 = vmul.f32 %v5337, %v759
  %v5626 = vmul.f32 %v5338, %v759
  %v5627 = vmul.f32 %v5339, %v759
  %v5628 = vmul.f32 %v5340, %v759
  %v5629 = vmul.f32 %v5341, %v759
  %v5630 = vmul.f32 %v5342, %v759
  %v5631 = vmul.f32 %v5343, %v759
  %v5632 = vmul.f32 %v5344, %v759
  %v5633 = vmul.f32 %v5345, %v759
  %v5634 = vmul.f32 %v5346, %v759
  %v5635 = vmul.f32 %v5347, %v759
  %v5636 = vmul.f32 %v5348, %v759
  %v5637 = vmul.f32 %v5349, %v759
  %v5638 = vmul.f32 %v5350, %v759
  %v5639 = vmul.f32 %v5351, %v759
  %v5640 = vmul.f32 %v5352, %v759
  %v5641 = vmul.f32 %v5353, %v759
  %v5642 = vmul.f32 %v5354, %v759
  %v5643 = vmul.f32 %v5355, %v759
  %v5644 = vmul.f32 %v5356, %v759
  %v5645 = vmul.f32 %v5357, %v759
  %v5646 = vmul.f32 %v5358, %v759
  %v5647 = vmul.f32 %v5359, %v759
  %v5648 = vmul.f32 %v5360, %v759
  %v5649 = vmul.f32 %v5361, %v759
  %v5650 = vmul.f32 %v5362, %v759
  %v5651 = vmul.f32 %v5363, %v759
  %v5652 = vmul.f32 %v5364, %v759
  %v5653 = vmul.f32 %v5365, %v759
  %v5654 = vmul.f32 %v5366, %v759
  %v5655 = vmul.f32 %v5367, %v759
  %v5656 = vmul.f32 %v5372, %v759
  %v5657 = vmul.f32 %v5373, %v759
  %v5658 = vmul.f32 %v5374, %v759
  %v5659 = vmul.f32 %v5375, %v759
  %v5660 = vmul.f32 %v5376, %v759
  %v5661 = vmul.f32 %v5377, %v759
  %v5662 = vmul.f32 %v5378, %v759
  %v5663 = vmul.f32 %v5379, %v759
  %v5664 = vmul.f32 %v5380, %v759
  %v5665 = vmul.f32 %v5381, %v759
  %v5666 = vmul.f32 %v5382, %v759
  %v5667 = vmul.f32 %v5383, %v759
  %v5668 = vmul.f32 %v5384, %v759
  %v5669 = vmul.f32 %v5385, %v759
  %v5670 = vmul.f32 %v5386, %v759
  %v5671 = vmul.f32 %v5387, %v759
  %v5672 = vmul.f32 %v5388, %v759
  %v5673 = vmul.f32 %v5389, %v759
  %v5674 = vmul.f32 %v5390, %v759
  %v5675 = vmul.f32 %v5391, %v759
  %v5676 = vmul.f32 %v5392, %v759
  %v5677 = vmul.f32 %v5393, %v759
  %v5678 = vmul.f32 %v5394, %v759
  %v5679 = vmul.f32 %v5395, %v759
  %v5680 = vmul.f32 %v5396, %v759
  %v5681 = vmul.f32 %v5397, %v759
  %v5682 = vmul.f32 %v5398, %v759
  %v5683 = vmul.f32 %v5399, %v759
  %v5684 = vmul.f32 %v5400, %v759
  %v5685 = vmul.f32 %v5401, %v759
  %v5686 = vmul.f32 %v5402, %v759
  %v5687 = vmul.f32 %v5403, %v759
  %v5688 = vmul.f32 %v5120, %v827
  %v5689 = vmul.f32 %v5121, %v827
  %v5690 = vmul.f32 %v5122, %v827
  %v5691 = vmul.f32 %v5123, %v827
  %v5692 = vmul.f32 %v5124, %v827
  %v5693 = vmul.f32 %v5125, %v827
  %v5694 = vmul.f32 %v5126, %v827
  %v5695 = vmul.f32 %v5127, %v827
  %v5696 = vmul.f32 %v5128, %v827
  %v5697 = vmul.f32 %v5129, %v827
  %v5698 = vmul.f32 %v5130, %v827
  %v5699 = vmul.f32 %v5131, %v827
  %v5700 = vmul.f32 %v5132, %v827
  %v5701 = vmul.f32 %v5133, %v827
  %v5702 = vmul.f32 %v5134, %v827
  %v5703 = vmul.f32 %v5135, %v827
  %v5704 = vmul.f32 %v5136, %v827
  %v5705 = vmul.f32 %v5137, %v827
  %v5706 = vmul.f32 %v5138, %v827
  %v5707 = vmul.f32 %v5139, %v827
  %v5708 = vmul.f32 %v5140, %v827
  %v5709 = vmul.f32 %v5141, %v827
  %v5710 = vmul.f32 %v5142, %v827
  %v5711 = vmul.f32 %v5143, %v827
  %v5712 = vmul.f32 %v5144, %v827
  %v5713 = vmul.f32 %v5145, %v827
  %v5714 = vmul.f32 %v5146, %v827
  %v5715 = vmul.f32 %v5147, %v827
  %v5716 = vmul.f32 %v5148, %v827
  %v5717 = vmul.f32 %v5149, %v827
  %v5718 = vmul.f32 %v5150, %v827
  %v5719 = vmul.f32 %v5151, %v827
  %v5720 = vmul.f32 %v5156, %v827
  %v5721 = vmul.f32 %v5157, %v827
  %v5722 = vmul.f32 %v5158, %v827
  %v5723 = vmul.f32 %v5159, %v827
  %v5724 = vmul.f32 %v5160, %v827
  %v5725 = vmul.f32 %v5161, %v827
  %v5726 = vmul.f32 %v5162, %v827
  %v5727 = vmul.f32 %v5163, %v827
  %v5728 = vmul.f32 %v5164, %v827
  %v5729 = vmul.f32 %v5165, %v827
  %v5730 = vmul.f32 %v5166, %v827
  %v5731 = vmul.f32 %v5167, %v827
  %v5732 = vmul.f32 %v5168, %v827
  %v5733 = vmul.f32 %v5169, %v827
  %v5734 = vmul.f32 %v5170, %v827
  %v5735 = vmul.f32 %v5171, %v827
  %v5736 = vmul.f32 %v5172, %v827
  %v5737 = vmul.f32 %v5173, %v827
  %v5738 = vmul.f32 %v5174, %v827
  %v5739 = vmul.f32 %v5175, %v827
  %v5740 = vmul.f32 %v5176, %v827
  %v5741 = vmul.f32 %v5177, %v827
  %v5742 = vmul.f32 %v5178, %v827
  %v5743 = vmul.f32 %v5179, %v827
  %v5744 = vmul.f32 %v5180, %v827
  %v5745 = vmul.f32 %v5181, %v827
  %v5746 = vmul.f32 %v5182, %v827
  %v5747 = vmul.f32 %v5183, %v827
  %v5748 = vmul.f32 %v5184, %v827
  %v5749 = vmul.f32 %v5185, %v827
  %v5750 = vmul.f32 %v5186, %v827
  %v5751 = vmul.f32 %v5187, %v827
  %v5752 = vadd.f32 %v5624, %v5688
  %v5753 = vadd.f32 %v5625, %v5689
  %v5754 = vadd.f32 %v5626, %v5690
  %v5755 = vadd.f32 %v5627, %v5691
  %v5756 = vadd.f32 %v5628, %v5692
  %v5757 = vadd.f32 %v5629, %v5693
  %v5758 = vadd.f32 %v5630, %v5694
  %v5759 = vadd.f32 %v5631, %v5695
  %v5760 = vadd.f32 %v5632, %v5696
  %v5761 = vadd.f32 %v5633, %v5697
  %v5762 = vadd.f32 %v5634, %v5698
  %v5763 = vadd.f32 %v5635, %v5699
  %v5764 = vadd.f32 %v5636, %v5700
  %v5765 = vadd.f32 %v5637, %v5701
  %v5766 = vadd.f32 %v5638, %v5702
  %v5767 = vadd.f32 %v5639, %v5703
  %v5768 = vadd.f32 %v5640, %v5704
  %v5769 = vadd.f32 %v5641, %v5705
  %v5770 = vadd.f32 %v5642, %v5706
  %v5771 = vadd.f32 %v5643, %v5707
  %v5772 = vadd.f32 %v5644, %v5708
  %v5773 = vadd.f32 %v5645, %v5709
  %v5774 = vadd.f32 %v5646, %v5710
  %v5775 = vadd.f32 %v5647, %v5711
  %v5776 = vadd.f32 %v5648, %v5712
  %v5777 = vadd.f32 %v5649, %v5713
  %v5778 = vadd.f32 %v5650, %v5714
  %v5779 = vadd.f32 %v5651, %v5715
  %v5780 = vadd.f32 %v5652, %v5716
  %v5781 = vadd.f32 %v5653, %v5717
  %v5782 = vadd.f32 %v5654, %v5718
  %v5783 = vadd.f32 %v5655, %v5719
  %v5784 = vadd.f32 %v5656, %v5720
  %v5785 = vadd.f32 %v5657, %v5721
  %v5786 = vadd.f32 %v5658, %v5722
  %v5787 = vadd.f32 %v5659, %v5723
  %v5788 = vadd.f32 %v5660, %v5724
  %v5789 = vadd.f32 %v5661, %v5725
  %v5790 = vadd.f32 %v5662, %v5726
  %v5791 = vadd.f32 %v5663, %v5727
  %v5792 = vadd.f32 %v5664, %v5728
  %v5793 = vadd.f32 %v5665, %v5729
  %v5794 = vadd.f32 %v5666, %v5730
  %v5795 = vadd.f32 %v5667, %v5731
  %v5796 = vadd.f32 %v5668, %v5732
  %v5797 = vadd.f32 %v5669, %v5733
  %v5798 = vadd.f32 %v5670, %v5734
  %v5799 = vadd.f32 %v5671, %v5735
  %v5800 = vadd.f32 %v5672, %v5736
  %v5801 = vadd.f32 %v5673, %v5737
  %v5802 = vadd.f32 %v5674, %v5738
  %v5803 = vadd.f32 %v5675, %v5739
  %v5804 = vadd.f32 %v5676, %v5740
  %v5805 = vadd.f32 %v5677, %v5741
  %v5806 = vadd.f32 %v5678, %v5742
  %v5807 = vadd.f32 %v5679, %v5743
  %v5808 = vadd.f32 %v5680, %v5744
  %v5809 = vadd.f32 %v5681, %v5745
  %v5810 = vadd.f32 %v5682, %v5746
  %v5811 = vadd.f32 %v5683, %v5747
  %v5812 = vadd.f32 %v5684, %v5748
  %v5813 = vadd.f32 %v5685, %v5749
  %v5814 = vadd.f32 %v5686, %v5750
  %v5815 = vadd.f32 %v5687, %v5751
  %v5816 = vmul.f32 %v5552, %v959
  %v5817 = vmul.f32 %v5553, %v959
  %v5818 = vmul.f32 %v5554, %v959
  %v5819 = vmul.f32 %v5555, %v959
  %v5820 = vmul.f32 %v5556, %v959
  %v5821 = vmul.f32 %v5557, %v959
  %v5822 = vmul.f32 %v5558, %v959
  %v5823 = vmul.f32 %v5559, %v959
  %v5824 = vmul.f32 %v5560, %v959
  %v5825 = vmul.f32 %v5561, %v959
  %v5826 = vmul.f32 %v5562, %v959
  %v5827 = vmul.f32 %v5563, %v959
  %v5828 = vmul.f32 %v5564, %v959
  %v5829 = vmul.f32 %v5565, %v959
  %v5830 = vmul.f32 %v5566, %v959
  %v5831 = vmul.f32 %v5567, %v959
  %v5832 = vmul.f32 %v5568, %v959
  %v5833 = vmul.f32 %v5569, %v959
  %v5834 = vmul.f32 %v5570, %v959
  %v5835 = vmul.f32 %v5571, %v959
  %v5836 = vmul.f32 %v5572, %v959
  %v5837 = vmul.f32 %v5573, %v959
  %v5838 = vmul.f32 %v5574, %v959
  %v5839 = vmul.f32 %v5575, %v959
  %v5840 = vmul.f32 %v5576, %v959
  %v5841 = vmul.f32 %v5577, %v959
  %v5842 = vmul.f32 %v5578, %v959
  %v5843 = vmul.f32 %v5579, %v959
  %v5844 = vmul.f32 %v5580, %v959
  %v5845 = vmul.f32 %v5581, %v959
  %v5846 = vmul.f32 %v5582, %v959
  %v5847 = vmul.f32 %v5583, %v959
  %v5848 = vmul.f32 %v5588, %v959
  %v5849 = vmul.f32 %v5589, %v959
  %v5850 = vmul.f32 %v5590, %v959
  %v5851 = vmul.f32 %v5591, %v959
  %v5852 = vmul.f32 %v5592, %v959
  %v5853 = vmul.f32 %v5593, %v959
  %v5854 = vmul.f32 %v5594, %v959
  %v5855 = vmul.f32 %v5595, %v959
  %v5856 = vmul.f32 %v5596, %v959
  %v5857 = vmul.f32 %v5597, %v959
  %v5858 = vmul.f32 %v5598, %v959
  %v5859 = vmul.f32 %v5599, %v959
  %v5860 = vmul.f32 %v5600, %v959
  %v5861 = vmul.f32 %v5601, %v959
  %v5862 = vmul.f32 %v5602, %v959
  %v5863 = vmul.f32 %v5603, %v959
  %v5864 = vmul.f32 %v5604, %v959
  %v5865 = vmul.f32 %v5605, %v959
  %v5866 = vmul.f32 %v5606, %v959
  %v5867 = vmul.f32 %v5607, %v959
  %v5868 = vmul.f32 %v5608, %v959
  %v5869 = vmul.f32 %v5609, %v959
  %v5870 = vmul.f32 %v5610, %v959
  %v5871 = vmul.f32 %v5611, %v959
  %v5872 = vmul.f32 %v5612, %v959
  %v5873 = vmul.f32 %v5613, %v959
  %v5874 = vmul.f32 %v5614, %v959
  %v5875 = vmul.f32 %v5615, %v959
  %v5876 = vmul.f32 %v5616, %v959
  %v5877 = vmul.f32 %v5617, %v959
  %v5878 = vmul.f32 %v5618, %v959
  %v5879 = vmul.f32 %v5619, %v959
  %v5880 = vadd.f32 %v5752, %v5816
  %v5881 = vadd.f32 %v5753, %v5817
  %v5882 = vadd.f32 %v5754, %v5818
  %v5883 = vadd.f32 %v5755, %v5819
  %v5884 = vadd.f32 %v5756, %v5820
  %v5885 = vadd.f32 %v5757, %v5821
  %v5886 = vadd.f32 %v5758, %v5822
  %v5887 = vadd.f32 %v5759, %v5823
  %v5888 = vadd.f32 %v5760, %v5824
  %v5889 = vadd.f32 %v5761, %v5825
  %v5890 = vadd.f32 %v5762, %v5826
  %v5891 = vadd.f32 %v5763, %v5827
  %v5892 = vadd.f32 %v5764, %v5828
  %v5893 = vadd.f32 %v5765, %v5829
  %v5894 = vadd.f32 %v5766, %v5830
  %v5895 = vadd.f32 %v5767, %v5831
  %v5896 = vadd.f32 %v5768, %v5832
  %v5897 = vadd.f32 %v5769, %v5833
  %v5898 = vadd.f32 %v5770, %v5834
  %v5899 = vadd.f32 %v5771, %v5835
  %v5900 = vadd.f32 %v5772, %v5836
  %v5901 = vadd.f32 %v5773, %v5837
  %v5902 = vadd.f32 %v5774, %v5838
  %v5903 = vadd.f32 %v5775, %v5839
  %v5904 = vadd.f32 %v5776, %v5840
  %v5905 = vadd.f32 %v5777, %v5841
  %v5906 = vadd.f32 %v5778, %v5842
  %v5907 = vadd.f32 %v5779, %v5843
  %v5908 = vadd.f32 %v5780, %v5844
  %v5909 = vadd.f32 %v5781, %v5845
  %v5910 = vadd.f32 %v5782, %v5846
  %v5911 = vadd.f32 %v5783, %v5847
  %v5912 = vadd.f32 %v5784, %v5848
  %v5913 = vadd.f32 %v5785, %v5849
  %v5914 = vadd.f32 %v5786, %v5850
  %v5915 = vadd.f32 %v5787, %v5851
  %v5916 = vadd.f32 %v5788, %v5852
  %v5917 = vadd.f32 %v5789, %v5853
  %v5918 = vadd.f32 %v5790, %v5854
  %v5919 = vadd.f32 %v5791, %v5855
  %v5920 = vadd.f32 %v5792, %v5856
  %v5921 = vadd.f32 %v5793, %v5857
  %v5922 = vadd.f32 %v5794, %v5858
  %v5923 = vadd.f32 %v5795, %v5859
  %v5924 = vadd.f32 %v5796, %v5860
  %v5925 = vadd.f32 %v5797, %v5861
  %v5926 = vadd.f32 %v5798, %v5862
  %v5927 = vadd.f32 %v5799, %v5863
  %v5928 = vadd.f32 %v5800, %v5864
  %v5929 = vadd.f32 %v5801, %v5865
  %v5930 = vadd.f32 %v5802, %v5866
  %v5931 = vadd.f32 %v5803, %v5867
  %v5932 = vadd.f32 %v5804, %v5868
  %v5933 = vadd.f32 %v5805, %v5869
  %v5934 = vadd.f32 %v5806, %v5870
  %v5935 = vadd.f32 %v5807, %v5871
  %v5936 = vadd.f32 %v5808, %v5872
  %v5937 = vadd.f32 %v5809, %v5873
  %v5938 = vadd.f32 %v5810, %v5874
  %v5939 = vadd.f32 %v5811, %v5875
  %v5940 = vadd.f32 %v5812, %v5876
  %v5941 = vadd.f32 %v5813, %v5877
  %v5942 = vadd.f32 %v5814, %v5878
  %v5943 = vadd.f32 %v5815, %v5879
  %v5944 = vmul.f32 %v5338, %v1091
  %v5945 = vmul.f32 %v5339, %v1091
  %v5946 = vmul.f32 %v5340, %v1091
  %v5947 = vmul.f32 %v5341, %v1091
  %v5948 = vmul.f32 %v5342, %v1091
  %v5949 = vmul.f32 %v5343, %v1091
  %v5950 = vmul.f32 %v5344, %v1091
  %v5951 = vmul.f32 %v5345, %v1091
  %v5952 = vmul.f32 %v5346, %v1091
  %v5953 = vmul.f32 %v5347, %v1091
  %v5954 = vmul.f32 %v5348, %v1091
  %v5955 = vmul.f32 %v5349, %v1091
  %v5956 = vmul.f32 %v5350, %v1091
  %v5957 = vmul.f32 %v5351, %v1091
  %v5958 = vmul.f32 %v5352, %v1091
  %v5959 = vmul.f32 %v5353, %v1091
  %v5960 = vmul.f32 %v5354, %v1091
  %v5961 = vmul.f32 %v5355, %v1091
  %v5962 = vmul.f32 %v5356, %v1091
  %v5963 = vmul.f32 %v5357, %v1091
  %v5964 = vmul.f32 %v5358, %v1091
  %v5965 = vmul.f32 %v5359, %v1091
  %v5966 = vmul.f32 %v5360, %v1091
  %v5967 = vmul.f32 %v5361, %v1091
  %v5968 = vmul.f32 %v5362, %v1091
  %v5969 = vmul.f32 %v5363, %v1091
  %v5970 = vmul.f32 %v5364, %v1091
  %v5971 = vmul.f32 %v5365, %v1091
  %v5972 = vmul.f32 %v5366, %v1091
  %v5973 = vmul.f32 %v5367, %v1091
  %v5974 = vmul.f32 %v5368, %v1091
  %v5975 = vmul.f32 %v5369, %v1091
  %v5976 = vmul.f32 %v5374, %v1091
  %v5977 = vmul.f32 %v5375, %v1091
  %v5978 = vmul.f32 %v5376, %v1091
  %v5979 = vmul.f32 %v5377, %v1091
  %v5980 = vmul.f32 %v5378, %v1091
  %v5981 = vmul.f32 %v5379, %v1091
  %v5982 = vmul.f32 %v5380, %v1091
  %v5983 = vmul.f32 %v5381, %v1091
  %v5984 = vmul.f32 %v5382, %v1091
  %v5985 = vmul.f32 %v5383, %v1091
  %v5986 = vmul.f32 %v5384, %v1091
  %v5987 = vmul.f32 %v5385, %v1091
  %v5988 = vmul.f32 %v5386, %v1091
  %v5989 = vmul.f32 %v5387, %v1091
  %v5990 = vmul.f32 %v5388, %v1091
  %v5991 = vmul.f32 %v5389, %v1091
  %v5992 = vmul.f32 %v5390, %v1091
  %v5993 = vmul.f32 %v5391, %v1091
  %v5994 = vmul.f32 %v5392, %v1091
  %v5995 = vmul.f32 %v5393, %v1091
  %v5996 = vmul.f32 %v5394, %v1091
  %v5997 = vmul.f32 %v5395, %v1091
  %v5998 = vmul.f32 %v5396, %v1091
  %v5999 = vmul.f32 %v5397, %v1091
  %v6000 = vmul.f32 %v5398, %v1091
  %v6001 = vmul.f32 %v5399, %v1091
  %v6002 = vmul.f32 %v5400, %v1091
  %v6003 = vmul.f32 %v5401, %v1091
  %v6004 = vmul.f32 %v5402, %v1091
  %v6005 = vmul.f32 %v5403, %v1091
  %v6006 = vmul.f32 %v5404, %v1091
  %v6007 = vmul.f32 %v5405, %v1091
  %v6008 = vmul.f32 %v5122, %v1159
  %v6009 = vmul.f32 %v5123, %v1159
  %v6010 = vmul.f32 %v5124, %v1159
  %v6011 = vmul.f32 %v5125, %v1159
  %v6012 = vmul.f32 %v5126, %v1159
  %v6013 = vmul.f32 %v5127, %v1159
  %v6014 = vmul.f32 %v5128, %v1159
  %v6015 = vmul.f32 %v5129, %v1159
  %v6016 = vmul.f32 %v5130, %v1159
  %v6017 = vmul.f32 %v5131, %v1159
  %v6018 = vmul.f32 %v5132, %v1159
  %v6019 = vmul.f32 %v5133, %v1159
  %v6020 = vmul.f32 %v5134, %v1159
  %v6021 = vmul.f32 %v5135, %v1159
  %v6022 = vmul.f32 %v5136, %v1159
  %v6023 = vmul.f32 %v5137, %v1159
  %v6024 = vmul.f32 %v5138, %v1159
  %v6025 = vmul.f32 %v5139, %v1159
  %v6026 = vmul.f32 %v5140, %v1159
  %v6027 = vmul.f32 %v5141, %v1159
  %v6028 = vmul.f32 %v5142, %v1159
  %v6029 = vmul.f32 %v5143, %v1159
  %v6030 = vmul.f32 %v5144, %v1159
  %v6031 = vmul.f32 %v5145, %v1159
  %v6032 = vmul.f32 %v5146, %v1159
  %v6033 = vmul.f32 %v5147, %v1159
  %v6034 = vmul.f32 %v5148, %v1159
  %v6035 = vmul.f32 %v5149, %v1159
  %v6036 = vmul.f32 %v5150, %v1159
  %v6037 = vmul.f32 %v5151, %v1159
  %v6038 = vmul.f32 %v5152, %v1159
  %v6039 = vmul.f32 %v5153, %v1159
  %v6040 = vmul.f32 %v5158, %v1159
  %v6041 = vmul.f32 %v5159, %v1159
  %v6042 = vmul.f32 %v5160, %v1159
  %v6043 = vmul.f32 %v5161, %v1159
  %v6044 = vmul.f32 %v5162, %v1159
  %v6045 = vmul.f32 %v5163, %v1159
  %v6046 = vmul.f32 %v5164, %v1159
  %v6047 = vmul.f32 %v5165, %v1159
  %v6048 = vmul.f32 %v5166, %v1159
  %v6049 = vmul.f32 %v5167, %v1159
  %v6050 = vmul.f32 %v5168, %v1159
  %v6051 = vmul.f32 %v5169, %v1159
  %v6052 = vmul.f32 %v5170, %v1159
  %v6053 = vmul.f32 %v5171, %v1159
  %v6054 = vmul.f32 %v5172, %v1159
  %v6055 = vmul.f32 %v5173, %v1159
  %v6056 = vmul.f32 %v5174, %v1159
  %v6057 = vmul.f32 %v5175, %v1159
  %v6058 = vmul.f32 %v5176, %v1159
  %v6059 = vmul.f32 %v5177, %v1159
  %v6060 = vmul.f32 %v5178, %v1159
  %v6061 = vmul.f32 %v5179, %v1159
  %v6062 = vmul.f32 %v5180, %v1159
  %v6063 = vmul.f32 %v5181, %v1159
  %v6064 = vmul.f32 %v5182, %v1159
  %v6065 = vmul.f32 %v5183, %v1159
  %v6066 = vmul.f32 %v5184, %v1159
  %v6067 = vmul.f32 %v5185, %v1159
  %v6068 = vmul.f32 %v5186, %v1159
  %v6069 = vmul.f32 %v5187, %v1159
  %v6070 = vmul.f32 %v5188, %v1159
  %v6071 = vmul.f32 %v5189, %v1159
  %v6072 = vadd.f32 %v5944, %v6008
  %v6073 = vadd.f32 %v5945, %v6009
  %v6074 = vadd.f32 %v5946, %v6010
  %v6075 = vadd.f32 %v5947, %v6011
  %v6076 = vadd.f32 %v5948, %v6012
  %v6077 = vadd.f32 %v5949, %v6013
  %v6078 = vadd.f32 %v5950, %v6014
  %v6079 = vadd.f32 %v5951, %v6015
  %v6080 = vadd.f32 %v5952, %v6016
  %v6081 = vadd.f32 %v5953, %v6017
  %v6082 = vadd.f32 %v5954, %v6018
  %v6083 = vadd.f32 %v5955, %v6019
  %v6084 = vadd.f32 %v5956, %v6020
  %v6085 = vadd.f32 %v5957, %v6021
  %v6086 = vadd.f32 %v5958, %v6022
  %v6087 = vadd.f32 %v5959, %v6023
  %v6088 = vadd.f32 %v5960, %v6024
  %v6089 = vadd.f32 %v5961, %v6025
  %v6090 = vadd.f32 %v5962, %v6026
  %v6091 = vadd.f32 %v5963, %v6027
  %v6092 = vadd.f32 %v5964, %v6028
  %v6093 = vadd.f32 %v5965, %v6029
  %v6094 = vadd.f32 %v5966, %v6030
  %v6095 = vadd.f32 %v5967, %v6031
  %v6096 = vadd.f32 %v5968, %v6032
  %v6097 = vadd.f32 %v5969, %v6033
  %v6098 = vadd.f32 %v5970, %v6034
  %v6099 = vadd.f32 %v5971, %v6035
  %v6100 = vadd.f32 %v5972, %v6036
  %v6101 = vadd.f32 %v5973, %v6037
  %v6102 = vadd.f32 %v5974, %v6038
  %v6103 = vadd.f32 %v5975, %v6039
  %v6104 = vadd.f32 %v5976, %v6040
  %v6105 = vadd.f32 %v5977, %v6041
  %v6106 = vadd.f32 %v5978, %v6042
  %v6107 = vadd.f32 %v5979, %v6043
  %v6108 = vadd.f32 %v5980, %v6044
  %v6109 = vadd.f32 %v5981, %v6045
  %v6110 = vadd.f32 %v5982, %v6046
  %v6111 = vadd.f32 %v5983, %v6047
  %v6112 = vadd.f32 %v5984, %v6048
  %v6113 = vadd.f32 %v5985, %v6049
  %v6114 = vadd.f32 %v5986, %v6050
  %v6115 = vadd.f32 %v5987, %v6051
  %v6116 = vadd.f32 %v5988, %v6052
  %v6117 = vadd.f32 %v5989, %v6053
  %v6118 = vadd.f32 %v5990, %v6054
  %v6119 = vadd.f32 %v5991, %v6055
  %v6120 = vadd.f32 %v5992, %v6056
  %v6121 = vadd.f32 %v5993, %v6057
  %v6122 = vadd.f32 %v5994, %v6058
  %v6123 = vadd.f32 %v5995, %v6059
  %v6124 = vadd.f32 %v5996, %v6060
  %v6125 = vadd.f32 %v5997, %v6061
  %v6126 = vadd.f32 %v5998, %v6062
  %v6127 = vadd.f32 %v5999, %v6063
  %v6128 = vadd.f32 %v6000, %v6064
  %v6129 = vadd.f32 %v6001, %v6065
  %v6130 = vadd.f32 %v6002, %v6066
  %v6131 = vadd.f32 %v6003, %v6067
  %v6132 = vadd.f32 %v6004, %v6068
  %v6133 = vadd.f32 %v6005, %v6069
  %v6134 = vadd.f32 %v6006, %v6070
  %v6135 = vadd.f32 %v6007, %v6071
  %v6136 = vmul.f32 %v5554, %v1291
  %v6137 = vmul.f32 %v5555, %v1291
  %v6138 = vmul.f32 %v5556, %v1291
  %v6139 = vmul.f32 %v5557, %v1291
  %v6140 = vmul.f32 %v5558, %v1291
  %v6141 = vmul.f32 %v5559, %v1291
  %v6142 = vmul.f32 %v5560, %v1291
  %v6143 = vmul.f32 %v5561, %v1291
  %v6144 = vmul.f32 %v5562, %v1291
  %v6145 = vmul.f32 %v5563, %v1291
  %v6146 = vmul.f32 %v5564, %v1291
  %v6147 = vmul.f32 %v5565, %v1291
  %v6148 = vmul.f32 %v5566, %v1291
  %v6149 = vmul.f32 %v5567, %v1291
  %v6150 = vmul.f32 %v5568, %v1291
  %v6151 = vmul.f32 %v5569, %v1291
  %v6152 = vmul.f32 %v5570, %v1291
  %v6153 = vmul.f32 %v5571, %v1291
  %v6154 = vmul.f32 %v5572, %v1291
  %v6155 = vmul.f32 %v5573, %v1291
  %v6156 = vmul.f32 %v5574, %v1291
  %v6157 = vmul.f32 %v5575, %v1291
  %v6158 = vmul.f32 %v5576, %v1291
  %v6159 = vmul.f32 %v5577, %v1291
  %v6160 = vmul.f32 %v5578, %v1291
  %v6161 = vmul.f32 %v5579, %v1291
  %v6162 = vmul.f32 %v5580, %v1291
  %v6163 = vmul.f32 %v5581, %v1291
  %v6164 = vmul.f32 %v5582, %v1291
  %v6165 = vmul.f32 %v5583, %v1291
  %v6166 = vmul.f32 %v5584, %v1291
  %v6167 = vmul.f32 %v5585, %v1291
  %v6168 = vmul.f32 %v5590, %v1291
  %v6169 = vmul.f32 %v5591, %v1291
  %v6170 = vmul.f32 %v5592, %v1291
  %v6171 = vmul.f32 %v5593, %v1291
  %v6172 = vmul.f32 %v5594, %v1291
  %v6173 = vmul.f32 %v5595, %v1291
  %v6174 = vmul.f32 %v5596, %v1291
  %v6175 = vmul.f32 %v5597, %v1291
  %v6176 = vmul.f32 %v5598, %v1291
  %v6177 = vmul.f32 %v5599, %v1291
  %v6178 = vmul.f32 %v5600, %v1291
  %v6179 = vmul.f32 %v5601, %v1291
  %v6180 = vmul.f32 %v5602, %v1291
  %v6181 = vmul.f32 %v5603, %v1291
  %v6182 = vmul.f32 %v5604, %v1291
  %v6183 = vmul.f32 %v5605, %v1291
  %v6184 = vmul.f32 %v5606, %v1291
  %v6185 = vmul.f32 %v5607, %v1291
  %v6186 = vmul.f32 %v5608, %v1291
  %v6187 = vmul.f32 %v5609, %v1291
  %v6188 = vmul.f32 %v5610, %v1291
  %v6189 = vmul.f32 %v5611, %v1291
  %v6190 = vmul.f32 %v5612, %v1291
  %v6191 = vmul.f32 %v5613, %v1291
  %v6192 = vmul.f32 %v5614, %v1291
  %v6193 = vmul.f32 %v5615, %v1291
  %v6194 = vmul.f32 %v5616, %v1291
  %v6195 = vmul.f32 %v5617, %v1291
  %v6196 = vmul.f32 %v5618, %v1291
  %v6197 = vmul.f32 %v5619, %v1291
  %v6198 = vmul.f32 %v5620, %v1291
  %v6199 = vmul.f32 %v5621, %v1291
  %v6200 = vadd.f32 %v6072, %v6136
  %v6201 = vadd.f32 %v6073, %v6137
  %v6202 = vadd.f32 %v6074, %v6138
  %v6203 = vadd.f32 %v6075, %v6139
  %v6204 = vadd.f32 %v6076, %v6140
  %v6205 = vadd.f32 %v6077, %v6141
  %v6206 = vadd.f32 %v6078, %v6142
  %v6207 = vadd.f32 %v6079, %v6143
  %v6208 = vadd.f32 %v6080, %v6144
  %v6209 = vadd.f32 %v6081, %v6145
  %v6210 = vadd.f32 %v6082, %v6146
  %v6211 = vadd.f32 %v6083, %v6147
  %v6212 = vadd.f32 %v6084, %v6148
  %v6213 = vadd.f32 %v6085, %v6149
  %v6214 = vadd.f32 %v6086, %v6150
  %v6215 = vadd.f32 %v6087, %v6151
  %v6216 = vadd.f32 %v6088, %v6152
  %v6217 = vadd.f32 %v6089, %v6153
  %v6218 = vadd.f32 %v6090, %v6154
  %v6219 = vadd.f32 %v6091, %v6155
  %v6220 = vadd.f32 %v6092, %v6156
  %v6221 = vadd.f32 %v6093, %v6157
  %v6222 = vadd.f32 %v6094, %v6158
  %v6223 = vadd.f32 %v6095, %v6159
  %v6224 = vadd.f32 %v6096, %v6160
  %v6225 = vadd.f32 %v6097, %v6161
  %v6226 = vadd.f32 %v6098, %v6162
  %v6227 = vadd.f32 %v6099, %v6163
  %v6228 = vadd.f32 %v6100, %v6164
  %v6229 = vadd.f32 %v6101, %v6165
  %v6230 = vadd.f32 %v6102, %v6166
  %v6231 = vadd.f32 %v6103, %v6167
  %v6232 = vadd.f32 %v6104, %v6168
  %v6233 = vadd.f32 %v6105, %v6169
  %v6234 = vadd.f32 %v6106, %v6170
  %v6235 = vadd.f32 %v6107, %v6171
  %v6236 = vadd.f32 %v6108, %v6172
  %v6237 = vadd.f32 %v6109, %v6173
  %v6238 = vadd.f32 %v6110, %v6174
  %v6239 = vadd.f32 %v6111, %v6175
  %v6240 = vadd.f32 %v6112, %v6176
  %v6241 = vadd.f32 %v6113, %v6177
  %v6242 = vadd.f32 %v6114, %v6178
  %v6243 = vadd.f32 %v6115, %v6179
  %v6244 = vadd.f32 %v6116, %v6180
  %v6245 = vadd.f32 %v6117, %v6181
  %v6246 = vadd.f32 %v6118, %v6182
  %v6247 = vadd.f32 %v6119, %v6183
  %v6248 = vadd.f32 %v6120, %v6184
  %v6249 = vadd.f32 %v6121, %v6185
  %v6250 = vadd.f32 %v6122, %v6186
  %v6251 = vadd.f32 %v6123, %v6187
  %v6252 = vadd.f32 %v6124, %v6188
  %v6253 = vadd.f32 %v6125, %v6189
  %v6254 = vadd.f32 %v6126, %v6190
  %v6255 = vadd.f32 %v6127, %v6191
  %v6256 = vadd.f32 %v6128, %v6192
  %v6257 = vadd.f32 %v6129, %v6193
  %v6258 = vadd.f32 %v6130, %v6194
  %v6259 = vadd.f32 %v6131, %v6195
  %v6260 = vadd.f32 %v6132, %v6196
  %v6261 = vadd.f32 %v6133, %v6197
  %v6262 = vadd.f32 %v6134, %v6198
  %v6263 = vadd.f32 %v6135, %v6199
  %v6264 = vadd.f32 %v5880, %v6200
  %v6265 = vadd.f32 %v5881, %v6201
  %v6266 = vadd.f32 %v5882, %v6202
  %v6267 = vadd.f32 %v5883, %v6203
  %v6268 = vadd.f32 %v5884, %v6204
  %v6269 = vadd.f32 %v5885, %v6205
  %v6270 = vadd.f32 %v5886, %v6206
  %v6271 = vadd.f32 %v5887, %v6207
  %v6272 = vadd.f32 %v5888, %v6208
  %v6273 = vadd.f32 %v5889, %v6209
  %v6274 = vadd.f32 %v5890, %v6210
  %v6275 = vadd.f32 %v5891, %v6211
  %v6276 = vadd.f32 %v5892, %v6212
  %v6277 = vadd.f32 %v5893, %v6213
  %v6278 = vadd.f32 %v5894, %v6214
  %v6279 = vadd.f32 %v5895, %v6215
  %v6280 = vadd.f32 %v5896, %v6216
  %v6281 = vadd.f32 %v5897, %v6217
  %v6282 = vadd.f32 %v5898, %v6218
  %v6283 = vadd.f32 %v5899, %v6219
  %v6284 = vadd.f32 %v5900, %v6220
  %v6285 = vadd.f32 %v5901, %v6221
  %v6286 = vadd.f32 %v5902, %v6222
  %v6287 = vadd.f32 %v5903, %v6223
  %v6288 = vadd.f32 %v5904, %v6224
  %v6289 = vadd.f32 %v5905, %v6225
  %v6290 = vadd.f32 %v5906, %v6226
  %v6291 = vadd.f32 %v5907, %v6227
  %v6292 = vadd.f32 %v5908, %v6228
  %v6293 = vadd.f32 %v5909, %v6229
  %v6294 = vadd.f32 %v5910, %v6230
  %v6295 = vadd.f32 %v5911, %v6231
  %v6296 = vadd.f32 %v5912, %v6232
  %v6297 = vadd.f32 %v5913, %v6233
  %v6298 = vadd.f32 %v5914, %v6234
  %v6299 = vadd.f32 %v5915, %v6235
  %v6300 = vadd.f32 %v5916, %v6236
  %v6301 = vadd.f32 %v5917, %v6237
  %v6302 = vadd.f32 %v5918, %v6238
  %v6303 = vadd.f32 %v5919, %v6239
  %v6304 = vadd.f32 %v5920, %v6240
  %v6305 = vadd.f32 %v5921, %v6241
  %v6306 = vadd.f32 %v5922, %v6242
  %v6307 = vadd.f32 %v5923, %v6243
  %v6308 = vadd.f32 %v5924, %v6244
  %v6309 = vadd.f32 %v5925, %v6245
  %v6310 = vadd.f32 %v5926, %v6246
  %v6311 = vadd.f32 %v5927, %v6247
  %v6312 = vadd.f32 %v5928, %v6248
  %v6313 = vadd.f32 %v5929, %v6249
  %v6314 = vadd.f32 %v5930, %v6250
  %v6315 = vadd.f32 %v5931, %v6251
  %v6316 = vadd.f32 %v5932, %v6252
  %v6317 = vadd.f32 %v5933, %v6253
  %v6318 = vadd.f32 %v5934, %v6254
  %v6319 = vadd.f32 %v5935, %v6255
  %v6320 = vadd.f32 %v5936, %v6256
  %v6321 = vadd.f32 %v5937, %v6257
  %v6322 = vadd.f32 %v5938, %v6258
  %v6323 = vadd.f32 %v5939, %v6259
  %v6324 = vadd.f32 %v5940, %v6260
  %v6325 = vadd.f32 %v5941, %v6261
  %v6326 = vadd.f32 %v5942, %v6262
  %v6327 = vadd.f32 %v5943, %v6263
  %v6328 = vmul.f32 %v5340, %v1487
  %v6329 = vmul.f32 %v5341, %v1487
  %v6330 = vmul.f32 %v5342, %v1487
  %v6331 = vmul.f32 %v5343, %v1487
  %v6332 = vmul.f32 %v5344, %v1487
  %v6333 = vmul.f32 %v5345, %v1487
  %v6334 = vmul.f32 %v5346, %v1487
  %v6335 = vmul.f32 %v5347, %v1487
  %v6336 = vmul.f32 %v5348, %v1487
  %v6337 = vmul.f32 %v5349, %v1487
  %v6338 = vmul.f32 %v5350, %v1487
  %v6339 = vmul.f32 %v5351, %v1487
  %v6340 = vmul.f32 %v5352, %v1487
  %v6341 = vmul.f32 %v5353, %v1487
  %v6342 = vmul.f32 %v5354, %v1487
  %v6343 = vmul.f32 %v5355, %v1487
  %v6344 = vmul.f32 %v5356, %v1487
  %v6345 = vmul.f32 %v5357, %v1487
  %v6346 = vmul.f32 %v5358, %v1487
  %v6347 = vmul.f32 %v5359, %v1487
  %v6348 = vmul.f32 %v5360, %v1487
  %v6349 = vmul.f32 %v5361, %v1487
  %v6350 = vmul.f32 %v5362, %v1487
  %v6351 = vmul.f32 %v5363, %v1487
  %v6352 = vmul.f32 %v5364, %v1487
  %v6353 = vmul.f32 %v5365, %v1487
  %v6354 = vmul.f32 %v5366, %v1487
  %v6355 = vmul.f32 %v5367, %v1487
  %v6356 = vmul.f32 %v5368, %v1487
  %v6357 = vmul.f32 %v5369, %v1487
  %v6358 = vmul.f32 %v5370, %v1487
  %v6359 = vmul.f32 %v5371, %v1487
  %v6360 = vmul.f32 %v5376, %v1487
  %v6361 = vmul.f32 %v5377, %v1487
  %v6362 = vmul.f32 %v5378, %v1487
  %v6363 = vmul.f32 %v5379, %v1487
  %v6364 = vmul.f32 %v5380, %v1487
  %v6365 = vmul.f32 %v5381, %v1487
  %v6366 = vmul.f32 %v5382, %v1487
  %v6367 = vmul.f32 %v5383, %v1487
  %v6368 = vmul.f32 %v5384, %v1487
  %v6369 = vmul.f32 %v5385, %v1487
  %v6370 = vmul.f32 %v5386, %v1487
  %v6371 = vmul.f32 %v5387, %v1487
  %v6372 = vmul.f32 %v5388, %v1487
  %v6373 = vmul.f32 %v5389, %v1487
  %v6374 = vmul.f32 %v5390, %v1487
  %v6375 = vmul.f32 %v5391, %v1487
  %v6376 = vmul.f32 %v5392, %v1487
  %v6377 = vmul.f32 %v5393, %v1487
  %v6378 = vmul.f32 %v5394, %v1487
  %v6379 = vmul.f32 %v5395, %v1487
  %v6380 = vmul.f32 %v5396, %v1487
  %v6381 = vmul.f32 %v5397, %v1487
  %v6382 = vmul.f32 %v5398, %v1487
  %v6383 = vmul.f32 %v5399, %v1487
  %v6384 = vmul.f32 %v5400, %v1487
  %v6385 = vmul.f32 %v5401, %v1487
  %v6386 = vmul.f32 %v5402, %v1487
  %v6387 = vmul.f32 %v5403, %v1487
  %v6388 = vmul.f32 %v5404, %v1487
  %v6389 = vmul.f32 %v5405, %v1487
  %v6390 = vmul.f32 %v5406, %v1487
  %v6391 = vmul.f32 %v5407, %v1487
  %v6392 = vmul.f32 %v5124, %v1555
  %v6393 = vmul.f32 %v5125, %v1555
  %v6394 = vmul.f32 %v5126, %v1555
  %v6395 = vmul.f32 %v5127, %v1555
  %v6396 = vmul.f32 %v5128, %v1555
  %v6397 = vmul.f32 %v5129, %v1555
  %v6398 = vmul.f32 %v5130, %v1555
  %v6399 = vmul.f32 %v5131, %v1555
  %v6400 = vmul.f32 %v5132, %v1555
  %v6401 = vmul.f32 %v5133, %v1555
  %v6402 = vmul.f32 %v5134, %v1555
  %v6403 = vmul.f32 %v5135, %v1555
  %v6404 = vmul.f32 %v5136, %v1555
  %v6405 = vmul.f32 %v5137, %v1555
  %v6406 = vmul.f32 %v5138, %v1555
  %v6407 = vmul.f32 %v5139, %v1555
  %v6408 = vmul.f32 %v5140, %v1555
  %v6409 = vmul.f32 %v5141, %v1555
  %v6410 = vmul.f32 %v5142, %v1555
  %v6411 = vmul.f32 %v5143, %v1555
  %v6412 = vmul.f32 %v5144, %v1555
  %v6413 = vmul.f32 %v5145, %v1555
  %v6414 = vmul.f32 %v5146, %v1555
  %v6415 = vmul.f32 %v5147, %v1555
  %v6416 = vmul.f32 %v5148, %v1555
  %v6417 = vmul.f32 %v5149, %v1555
  %v6418 = vmul.f32 %v5150, %v1555
  %v6419 = vmul.f32 %v5151, %v1555
  %v6420 = vmul.f32 %v5152, %v1555
  %v6421 = vmul.f32 %v5153, %v1555
  %v6422 = vmul.f32 %v5154, %v1555
  %v6423 = vmul.f32 %v5155, %v1555
  %v6424 = vmul.f32 %v5160, %v1555
  %v6425 = vmul.f32 %v5161, %v1555
  %v6426 = vmul.f32 %v5162, %v1555
  %v6427 = vmul.f32 %v5163, %v1555
  %v6428 = vmul.f32 %v5164, %v1555
  %v6429 = vmul.f32 %v5165, %v1555
  %v6430 = vmul.f32 %v5166, %v1555
  %v6431 = vmul.f32 %v5167, %v1555
  %v6432 = vmul.f32 %v5168, %v1555
  %v6433 = vmul.f32 %v5169, %v1555
  %v6434 = vmul.f32 %v5170, %v1555
  %v6435 = vmul.f32 %v5171, %v1555
  %v6436 = vmul.f32 %v5172, %v1555
  %v6437 = vmul.f32 %v5173, %v1555
  %v6438 = vmul.f32 %v5174, %v1555
  %v6439 = vmul.f32 %v5175, %v1555
  %v6440 = vmul.f32 %v5176, %v1555
  %v6441 = vmul.f32 %v5177, %v1555
  %v6442 = vmul.f32 %v5178, %v1555
  %v6443 = vmul.f32 %v5179, %v1555
  %v6444 = vmul.f32 %v5180, %v1555
  %v6445 = vmul.f32 %v5181, %v1555
  %v6446 = vmul.f32 %v5182, %v1555
  %v6447 = vmul.f32 %v5183, %v1555
  %v6448 = vmul.f32 %v5184, %v1555
  %v6449 = vmul.f32 %v5185, %v1555
  %v6450 = vmul.f32 %v5186, %v1555
  %v6451 = vmul.f32 %v5187, %v1555
  %v6452 = vmul.f32 %v5188, %v1555
  %v6453 = vmul.f32 %v5189, %v1555
  %v6454 = vmul.f32 %v5190, %v1555
  %v6455 = vmul.f32 %v5191, %v1555
  %v6456 = vadd.f32 %v6328, %v6392
  %v6457 = vadd.f32 %v6329, %v6393
  %v6458 = vadd.f32 %v6330, %v6394
  %v6459 = vadd.f32 %v6331, %v6395
  %v6460 = vadd.f32 %v6332, %v6396
  %v6461 = vadd.f32 %v6333, %v6397
  %v6462 = vadd.f32 %v6334, %v6398
  %v6463 = vadd.f32 %v6335, %v6399
  %v6464 = vadd.f32 %v6336, %v6400
  %v6465 = vadd.f32 %v6337, %v6401
  %v6466 = vadd.f32 %v6338, %v6402
  %v6467 = vadd.f32 %v6339, %v6403
  %v6468 = vadd.f32 %v6340, %v6404
  %v6469 = vadd.f32 %v6341, %v6405
  %v6470 = vadd.f32 %v6342, %v6406
  %v6471 = vadd.f32 %v6343, %v6407
  %v6472 = vadd.f32 %v6344, %v6408
  %v6473 = vadd.f32 %v6345, %v6409
  %v6474 = vadd.f32 %v6346, %v6410
  %v6475 = vadd.f32 %v6347, %v6411
  %v6476 = vadd.f32 %v6348, %v6412
  %v6477 = vadd.f32 %v6349, %v6413
  %v6478 = vadd.f32 %v6350, %v6414
  %v6479 = vadd.f32 %v6351, %v6415
  %v6480 = vadd.f32 %v6352, %v6416
  %v6481 = vadd.f32 %v6353, %v6417
  %v6482 = vadd.f32 %v6354, %v6418
  %v6483 = vadd.f32 %v6355, %v6419
  %v6484 = vadd.f32 %v6356, %v6420
  %v6485 = vadd.f32 %v6357, %v6421
  %v6486 = vadd.f32 %v6358, %v6422
  %v6487 = vadd.f32 %v6359, %v6423
  %v6488 = vadd.f32 %v6360, %v6424
  %v6489 = vadd.f32 %v6361, %v6425
  %v6490 = vadd.f32 %v6362, %v6426
  %v6491 = vadd.f32 %v6363, %v6427
  %v6492 = vadd.f32 %v6364, %v6428
  %v6493 = vadd.f32 %v6365, %v6429
  %v6494 = vadd.f32 %v6366, %v6430
  %v6495 = vadd.f32 %v6367, %v6431
  %v6496 = vadd.f32 %v6368, %v6432
  %v6497 = vadd.f32 %v6369, %v6433
  %v6498 = vadd.f32 %v6370, %v6434
  %v6499 = vadd.f32 %v6371, %v6435
  %v6500 = vadd.f32 %v6372, %v6436
  %v6501 = vadd.f32 %v6373, %v6437
  %v6502 = vadd.f32 %v6374, %v6438
  %v6503 = vadd.f32 %v6375, %v6439
  %v6504 = vadd.f32 %v6376, %v6440
  %v6505 = vadd.f32 %v6377, %v6441
  %v6506 = vadd.f32 %v6378, %v6442
  %v6507 = vadd.f32 %v6379, %v6443
  %v6508 = vadd.f32 %v6380, %v6444
  %v6509 = vadd.f32 %v6381, %v6445
  %v6510 = vadd.f32 %v6382, %v6446
  %v6511 = vadd.f32 %v6383, %v6447
  %v6512 = vadd.f32 %v6384, %v6448
  %v6513 = vadd.f32 %v6385, %v6449
  %v6514 = vadd.f32 %v6386, %v6450
  %v6515 = vadd.f32 %v6387, %v6451
  %v6516 = vadd.f32 %v6388, %v6452
  %v6517 = vadd.f32 %v6389, %v6453
  %v6518 = vadd.f32 %v6390, %v6454
  %v6519 = vadd.f32 %v6391, %v6455
  %v6520 = vmul.f32 %v5556, %v1687
  %v6521 = vmul.f32 %v5557, %v1687
  %v6522 = vmul.f32 %v5558, %v1687
  %v6523 = vmul.f32 %v5559, %v1687
  %v6524 = vmul.f32 %v5560, %v1687
  %v6525 = vmul.f32 %v5561, %v1687
  %v6526 = vmul.f32 %v5562, %v1687
  %v6527 = vmul.f32 %v5563, %v1687
  %v6528 = vmul.f32 %v5564, %v1687
  %v6529 = vmul.f32 %v5565, %v1687
  %v6530 = vmul.f32 %v5566, %v1687
  %v6531 = vmul.f32 %v5567, %v1687
  %v6532 = vmul.f32 %v5568, %v1687
  %v6533 = vmul.f32 %v5569, %v1687
  %v6534 = vmul.f32 %v5570, %v1687
  %v6535 = vmul.f32 %v5571, %v1687
  %v6536 = vmul.f32 %v5572, %v1687
  %v6537 = vmul.f32 %v5573, %v1687
  %v6538 = vmul.f32 %v5574, %v1687
  %v6539 = vmul.f32 %v5575, %v1687
  %v6540 = vmul.f32 %v5576, %v1687
  %v6541 = vmul.f32 %v5577, %v1687
  %v6542 = vmul.f32 %v5578, %v1687
  %v6543 = vmul.f32 %v5579, %v1687
  %v6544 = vmul.f32 %v5580, %v1687
  %v6545 = vmul.f32 %v5581, %v1687
  %v6546 = vmul.f32 %v5582, %v1687
  %v6547 = vmul.f32 %v5583, %v1687
  %v6548 = vmul.f32 %v5584, %v1687
  %v6549 = vmul.f32 %v5585, %v1687
  %v6550 = vmul.f32 %v5586, %v1687
  %v6551 = vmul.f32 %v5587, %v1687
  %v6552 = vmul.f32 %v5592, %v1687
  %v6553 = vmul.f32 %v5593, %v1687
  %v6554 = vmul.f32 %v5594, %v1687
  %v6555 = vmul.f32 %v5595, %v1687
  %v6556 = vmul.f32 %v5596, %v1687
  %v6557 = vmul.f32 %v5597, %v1687
  %v6558 = vmul.f32 %v5598, %v1687
  %v6559 = vmul.f32 %v5599, %v1687
  %v6560 = vmul.f32 %v5600, %v1687
  %v6561 = vmul.f32 %v5601, %v1687
  %v6562 = vmul.f32 %v5602, %v1687
  %v6563 = vmul.f32 %v5603, %v1687
  %v6564 = vmul.f32 %v5604, %v1687
  %v6565 = vmul.f32 %v5605, %v1687
  %v6566 = vmul.f32 %v5606, %v1687
  %v6567 = vmul.f32 %v5607, %v1687
  %v6568 = vmul.f32 %v5608, %v1687
  %v6569 = vmul.f32 %v5609, %v1687
  %v6570 = vmul.f32 %v5610, %v1687
  %v6571 = vmul.f32 %v5611, %v1687
  %v6572 = vmul.f32 %v5612, %v1687
  %v6573 = vmul.f32 %v5613, %v1687
  %v6574 = vmul.f32 %v5614, %v1687
  %v6575 = vmul.f32 %v5615, %v1687
  %v6576 = vmul.f32 %v5616, %v1687
  %v6577 = vmul.f32 %v5617, %v1687
  %v6578 = vmul.f32 %v5618, %v1687
  %v6579 = vmul.f32 %v5619, %v1687
  %v6580 = vmul.f32 %v5620, %v1687
  %v6581 = vmul.f32 %v5621, %v1687
  %v6582 = vmul.f32 %v5622, %v1687
  %v6583 = vmul.f32 %v5623, %v1687
  %v6584 = vadd.f32 %v6456, %v6520
  %v6585 = vadd.f32 %v6457, %v6521
  %v6586 = vadd.f32 %v6458, %v6522
  %v6587 = vadd.f32 %v6459, %v6523
  %v6588 = vadd.f32 %v6460, %v6524
  %v6589 = vadd.f32 %v6461, %v6525
  %v6590 = vadd.f32 %v6462, %v6526
  %v6591 = vadd.f32 %v6463, %v6527
  %v6592 = vadd.f32 %v6464, %v6528
  %v6593 = vadd.f32 %v6465, %v6529
  %v6594 = vadd.f32 %v6466, %v6530
  %v6595 = vadd.f32 %v6467, %v6531
  %v6596 = vadd.f32 %v6468, %v6532
  %v6597 = vadd.f32 %v6469, %v6533
  %v6598 = vadd.f32 %v6470, %v6534
  %v6599 = vadd.f32 %v6471, %v6535
  %v6600 = vadd.f32 %v6472, %v6536
  %v6601 = vadd.f32 %v6473, %v6537
  %v6602 = vadd.f32 %v6474, %v6538
  %v6603 = vadd.f32 %v6475, %v6539
  %v6604 = vadd.f32 %v6476, %v6540
  %v6605 = vadd.f32 %v6477, %v6541
  %v6606 = vadd.f32 %v6478, %v6542
  %v6607 = vadd.f32 %v6479, %v6543
  %v6608 = vadd.f32 %v6480, %v6544
  %v6609 = vadd.f32 %v6481, %v6545
  %v6610 = vadd.f32 %v6482, %v6546
  %v6611 = vadd.f32 %v6483, %v6547
  %v6612 = vadd.f32 %v6484, %v6548
  %v6613 = vadd.f32 %v6485, %v6549
  %v6614 = vadd.f32 %v6486, %v6550
  %v6615 = vadd.f32 %v6487, %v6551
  %v6616 = vadd.f32 %v6488, %v6552
  %v6617 = vadd.f32 %v6489, %v6553
  %v6618 = vadd.f32 %v6490, %v6554
  %v6619 = vadd.f32 %v6491, %v6555
  %v6620 = vadd.f32 %v6492, %v6556
  %v6621 = vadd.f32 %v6493, %v6557
  %v6622 = vadd.f32 %v6494, %v6558
  %v6623 = vadd.f32 %v6495, %v6559
  %v6624 = vadd.f32 %v6496, %v6560
  %v6625 = vadd.f32 %v6497, %v6561
  %v6626 = vadd.f32 %v6498, %v6562
  %v6627 = vadd.f32 %v6499, %v6563
  %v6628 = vadd.f32 %v6500, %v6564
  %v6629 = vadd.f32 %v6501, %v6565
  %v6630 = vadd.f32 %v6502, %v6566
  %v6631 = vadd.f32 %v6503, %v6567
  %v6632 = vadd.f32 %v6504, %v6568
  %v6633 = vadd.f32 %v6505, %v6569
  %v6634 = vadd.f32 %v6506, %v6570
  %v6635 = vadd.f32 %v6507, %v6571
  %v6636 = vadd.f32 %v6508, %v6572
  %v6637 = vadd.f32 %v6509, %v6573
  %v6638 = vadd.f32 %v6510, %v6574
  %v6639 = vadd.f32 %v6511, %v6575
  %v6640 = vadd.f32 %v6512, %v6576
  %v6641 = vadd.f32 %v6513, %v6577
  %v6642 = vadd.f32 %v6514, %v6578
  %v6643 = vadd.f32 %v6515, %v6579
  %v6644 = vadd.f32 %v6516, %v6580
  %v6645 = vadd.f32 %v6517, %v6581
  %v6646 = vadd.f32 %v6518, %v6582
  %v6647 = vadd.f32 %v6519, %v6583
  %v6648 = vadd.f32 %v6264, %v6584
  %v6649 = vadd.f32 %v6265, %v6585
  %v6650 = vadd.f32 %v6266, %v6586
  %v6651 = vadd.f32 %v6267, %v6587
  %v6652 = vadd.f32 %v6268, %v6588
  %v6653 = vadd.f32 %v6269, %v6589
  %v6654 = vadd.f32 %v6270, %v6590
  %v6655 = vadd.f32 %v6271, %v6591
  %v6656 = vadd.f32 %v6272, %v6592
  %v6657 = vadd.f32 %v6273, %v6593
  %v6658 = vadd.f32 %v6274, %v6594
  %v6659 = vadd.f32 %v6275, %v6595
  %v6660 = vadd.f32 %v6276, %v6596
  %v6661 = vadd.f32 %v6277, %v6597
  %v6662 = vadd.f32 %v6278, %v6598
  %v6663 = vadd.f32 %v6279, %v6599
  %v6664 = vadd.f32 %v6280, %v6600
  %v6665 = vadd.f32 %v6281, %v6601
  %v6666 = vadd.f32 %v6282, %v6602
  %v6667 = vadd.f32 %v6283, %v6603
  %v6668 = vadd.f32 %v6284, %v6604
  %v6669 = vadd.f32 %v6285, %v6605
  %v6670 = vadd.f32 %v6286, %v6606
  %v6671 = vadd.f32 %v6287, %v6607
  %v6672 = vadd.f32 %v6288, %v6608
  %v6673 = vadd.f32 %v6289, %v6609
  %v6674 = vadd.f32 %v6290, %v6610
  %v6675 = vadd.f32 %v6291, %v6611
  %v6676 = vadd.f32 %v6292, %v6612
  %v6677 = vadd.f32 %v6293, %v6613
  %v6678 = vadd.f32 %v6294, %v6614
  %v6679 = vadd.f32 %v6295, %v6615
  %v6680 = vadd.f32 %v6296, %v6616
  %v6681 = vadd.f32 %v6297, %v6617
  %v6682 = vadd.f32 %v6298, %v6618
  %v6683 = vadd.f32 %v6299, %v6619
  %v6684 = vadd.f32 %v6300, %v6620
  %v6685 = vadd.f32 %v6301, %v6621
  %v6686 = vadd.f32 %v6302, %v6622
  %v6687 = vadd.f32 %v6303, %v6623
  %v6688 = vadd.f32 %v6304, %v6624
  %v6689 = vadd.f32 %v6305, %v6625
  %v6690 = vadd.f32 %v6306, %v6626
  %v6691 = vadd.f32 %v6307, %v6627
  %v6692 = vadd.f32 %v6308, %v6628
  %v6693 = vadd.f32 %v6309, %v6629
  %v6694 = vadd.f32 %v6310, %v6630
  %v6695 = vadd.f32 %v6311, %v6631
  %v6696 = vadd.f32 %v6312, %v6632
  %v6697 = vadd.f32 %v6313, %v6633
  %v6698 = vadd.f32 %v6314, %v6634
  %v6699 = vadd.f32 %v6315, %v6635
  %v6700 = vadd.f32 %v6316, %v6636
  %v6701 = vadd.f32 %v6317, %v6637
  %v6702 = vadd.f32 %v6318, %v6638
  %v6703 = vadd.f32 %v6319, %v6639
  %v6704 = vadd.f32 %v6320, %v6640
  %v6705 = vadd.f32 %v6321, %v6641
  %v6706 = vadd.f32 %v6322, %v6642
  %v6707 = vadd.f32 %v6323, %v6643
  %v6708 = vadd.f32 %v6324, %v6644
  %v6709 = vadd.f32 %v6325, %v6645
  %v6710 = vadd.f32 %v6326, %v6646
  %v6711 = vadd.f32 %v6327, %v6647
  %v6712 = vpack.c.bf16 %v6649, %v6648
  %v6713 = vpack.c.bf16 %v6651, %v6650
  %v6714 = vpack.c.bf16 %v6653, %v6652
  %v6715 = vpack.c.bf16 %v6655, %v6654
  %v6716 = vpack.c.bf16 %v6657, %v6656
  %v6717 = vpack.c.bf16 %v6659, %v6658
  %v6718 = vpack.c.bf16 %v6661, %v6660
  %v6719 = vpack.c.bf16 %v6663, %v6662
  %v6720 = vpack.c.bf16 %v6665, %v6664
  %v6721 = vpack.c.bf16 %v6667, %v6666
  %v6722 = vpack.c.bf16 %v6669, %v6668
  %v6723 = vpack.c.bf16 %v6671, %v6670
  %v6724 = vpack.c.bf16 %v6673, %v6672
  %v6725 = vpack.c.bf16 %v6675, %v6674
  %v6726 = vpack.c.bf16 %v6677, %v6676
  %v6727 = vpack.c.bf16 %v6679, %v6678
  %v6728 = vpack.c.bf16 %v6681, %v6680
  %v6729 = vpack.c.bf16 %v6683, %v6682
  %v6730 = vpack.c.bf16 %v6685, %v6684
  %v6731 = vpack.c.bf16 %v6687, %v6686
  %v6732 = vpack.c.bf16 %v6689, %v6688
  %v6733 = vpack.c.bf16 %v6691, %v6690
  %v6734 = vpack.c.bf16 %v6693, %v6692
  %v6735 = vpack.c.bf16 %v6695, %v6694
  %v6736 = vpack.c.bf16 %v6697, %v6696
  %v6737 = vpack.c.bf16 %v6699, %v6698
  %v6738 = vpack.c.bf16 %v6701, %v6700
  %v6739 = vpack.c.bf16 %v6703, %v6702
  %v6740 = vpack.c.bf16 %v6705, %v6704
  %v6741 = vpack.c.bf16 %v6707, %v6706
  %v6742 = vpack.c.bf16 %v6709, %v6708
  %v6743 = vpack.c.bf16 %v6711, %v6710
  %6744 = vmatprep.subr.bf16.mxu0 0
  %6745 = vmatpush1.bf16.msra.mxu0 %v1944
  %6746 = vmatprep.subr.bf16.mxu0 0
  %6747 = vmatpush1.bf16.msra.mxu0 %v1945
  %6748 = vmatprep.subr.bf16.mxu0 0
  %6749 = vmatpush1.bf16.msra.mxu0 %v1946
  %6750 = vmatprep.subr.bf16.mxu0 0
  %6751 = vmatpush1.bf16.msra.mxu0 %v1947
  %6752 = vmatprep.subr.bf16.mxu0 0
  %6753 = vmatpush1.bf16.msra.mxu0 %v1948
  %6754 = vmatprep.subr.bf16.mxu0 0
  %6755 = vmatpush1.bf16.msra.mxu0 %v1949
  %6756 = vmatprep.subr.bf16.mxu0 0
  %6757 = vmatpush1.bf16.msra.mxu0 %v1950
  %6758 = vmatprep.subr.bf16.mxu0 0
  %6759 = vmatpush1.bf16.msra.mxu0 %v1951
  %6760 = vmatprep.subr.bf16.mxu0 0
  %6761 = vmatpush1.bf16.msra.mxu0 0
  %6762 = vmatprep.subr.bf16.mxu0 0
  %6763 = vmatpush1.bf16.msra.mxu0 0
  %6764 = vmatprep.subr.bf16.mxu0 0
  %6765 = vmatpush1.bf16.msra.mxu0 0
  %6766 = vmatprep.subr.bf16.mxu0 0
  %6767 = vmatpush1.bf16.msra.mxu0 0
  %6768 = vmatprep.subr.bf16.mxu0 0
  %6769 = vmatpush1.bf16.msra.mxu0 0
  %6770 = vmatprep.subr.bf16.mxu0 0
  %6771 = vmatpush1.bf16.msra.mxu0 0
  %6772 = vmatprep.subr.bf16.mxu0 0
  %6773 = vmatpush1.bf16.msra.mxu0 0
  %6774 = vmatprep.subr.bf16.mxu0 0
  %6775 = vmatpush1.bf16.msra.mxu0 0
  %6776 = vmatprep.mubr.bf16.mxu0 0
  %6777 = vmatmul.mubr.bf16.gmra.mrb[0].mxu0 %v6712
  %v6778 = vpop.f32.mrb[0].mxu0
  %v6779 = vadd.f32 0.0, %v6778
  %v6780 = vpop.f32.mrb[0].mxu0
  %v6781 = vpop.f32.mrb[0].mxu0
  %v6782 = vadd.f32 0.0, %v6781
  %v6783 = vpop.f32.mrb[0].mxu0
  %6784 = vmatprep.mubr.bf16.mxu0 0
  %6785 = vmatmul.mubr.bf16.gmra.mrb[0].mxu0 %v6713
  %v6786 = vpop.f32.mrb[0].mxu0
  %v6787 = vadd.f32 0.0, %v6786
  %v6788 = vpop.f32.mrb[0].mxu0
  %v6789 = vpop.f32.mrb[0].mxu0
  %v6790 = vadd.f32 0.0, %v6789
  %v6791 = vpop.f32.mrb[0].mxu0
  %6792 = vmatprep.mubr.bf16.mxu0 0
  %6793 = vmatmul.mubr.bf16.gmra.mrb[0].mxu0 %v6714
  %v6794 = vpop.f32.mrb[0].mxu0
  %v6795 = vadd.f32 0.0, %v6794
  %v6796 = vpop.f32.mrb[0].mxu0
  %v6797 = vpop.f32.mrb[0].mxu0
  %v6798 = vadd.f32 0.0, %v6797
  %v6799 = vpop.f32.mrb[0].mxu0
  %6800 = vmatprep.mubr.bf16.mxu0 0
  %6801 = vmatmul.mubr.bf16.gmra.mrb[0].mxu0 %v6715
  %v6802 = vpop.f32.mrb[0].mxu0
  %v6803 = vadd.f32 0.0, %v6802
  %v6804 = vpop.f32.mrb[0].mxu0
  %v6805 = vpop.f32.mrb[0].mxu0
  %v6806 = vadd.f32 0.0, %v6805
  %v6807 = vpop.f32.mrb[0].mxu0
  %6808 = vmatprep.mubr.bf16.mxu0 0
  %6809 = vmatmul.mubr.bf16.gmra.mrb[0].mxu0 %v6716
  %v6810 = vpop.f32.mrb[0].mxu0
  %v6811 = vadd.f32 0.0, %v6810
  %v6812 = vpop.f32.mrb[0].mxu0
  %v6813 = vpop.f32.mrb[0].mxu0
  %v6814 = vadd.f32 0.0, %v6813
  %v6815 = vpop.f32.mrb[0].mxu0
  %6816 = vmatprep.mubr.bf16.mxu0 0
  %6817 = vmatmul.mubr.bf16.gmra.mrb[0].mxu0 %v6717
  %v6818 = vpop.f32.mrb[0].mxu0
  %v6819 = vadd.f32 0.0, %v6818
  %v6820 = vpop.f32.mrb[0].mxu0
  %v6821 = vpop.f32.mrb[0].mxu0
  %v6822 = vadd.f32 0.0, %v6821
  %v6823 = vpop.f32.mrb[0].mxu0
  %6824 = vmatprep.mubr.bf16.mxu0 0
  %6825 = vmatmul.mubr.bf16.gmra.mrb[0].mxu0 %v6718
  %v6826 = vpop.f32.mrb[0].mxu0
  %v6827 = vadd.f32 0.0, %v6826
  %v6828 = vpop.f32.mrb[0].mxu0
  %v6829 = vpop.f32.mrb[0].mxu0
  %v6830 = vadd.f32 0.0, %v6829
  %v6831 = vpop.f32.mrb[0].mxu0
  %6832 = vmatprep.mubr.bf16.mxu0 0
  %6833 = vmatmul.mubr.bf16.gmra.mrb[0].mxu0 %v6719
  %v6834 = vpop.f32.mrb[0].mxu0
  %v6835 = vadd.f32 0.0, %v6834
  %v6836 = vpop.f32.mrb[0].mxu0
  %v6837 = vpop.f32.mrb[0].mxu0
  %v6838 = vadd.f32 0.0, %v6837
  %v6839 = vpop.f32.mrb[0].mxu0
  %6840 = vmatprep.mubr.bf16.mxu0 0
  %6841 = vmatmul.mubr.bf16.gmra.mrb[0].mxu0 %v6720
  %v6842 = vpop.f32.mrb[0].mxu0
  %v6843 = vadd.f32 0.0, %v6842
  %v6844 = vpop.f32.mrb[0].mxu0
  %v6845 = vpop.f32.mrb[0].mxu0
  %v6846 = vadd.f32 0.0, %v6845
  %v6847 = vpop.f32.mrb[0].mxu0
  %6848 = vmatprep.mubr.bf16.mxu0 0
  %6849 = vmatmul.mubr.bf16.gmra.mrb[0].mxu0 %v6721
  %v6850 = vpop.f32.mrb[0].mxu0
  %v6851 = vadd.f32 0.0, %v6850
  %v6852 = vpop.f32.mrb[0].mxu0
  %v6853 = vpop.f32.mrb[0].mxu0
  %v6854 = vadd.f32 0.0, %v6853
  %v6855 = vpop.f32.mrb[0].mxu0
  %6856 = vmatprep.mubr.bf16.mxu0 0
  %6857 = vmatmul.mubr.bf16.gmra.mrb[0].mxu0 %v6722
  %v6858 = vpop.f32.mrb[0].mxu0
  %v6859 = vadd.f32 0.0, %v6858
  %v6860 = vpop.f32.mrb[0].mxu0
  %v6861 = vpop.f32.mrb[0].mxu0
  %v6862 = vadd.f32 0.0, %v6861
  %v6863 = vpop.f32.mrb[0].mxu0
  %6864 = vmatprep.mubr.bf16.mxu0 0
  %6865 = vmatmul.mubr.bf16.gmra.mrb[0].mxu0 %v6723
  %v6866 = vpop.f32.mrb[0].mxu0
  %v6867 = vadd.f32 0.0, %v6866
  %v6868 = vpop.f32.mrb[0].mxu0
  %v6869 = vpop.f32.mrb[0].mxu0
  %v6870 = vadd.f32 0.0, %v6869
  %v6871 = vpop.f32.mrb[0].mxu0
  %6872 = vmatprep.mubr.bf16.mxu0 0
  %6873 = vmatmul.mubr.bf16.gmra.mrb[0].mxu0 %v6724
  %v6874 = vpop.f32.mrb[0].mxu0
  %v6875 = vadd.f32 0.0, %v6874
  %v6876 = vpop.f32.mrb[0].mxu0
  %v6877 = vpop.f32.mrb[0].mxu0
  %v6878 = vadd.f32 0.0, %v6877
  %v6879 = vpop.f32.mrb[0].mxu0
  %6880 = vmatprep.mubr.bf16.mxu0 0
  %6881 = vmatmul.mubr.bf16.gmra.mrb[0].mxu0 %v6725
  %v6882 = vpop.f32.mrb[0].mxu0
  %v6883 = vadd.f32 0.0, %v6882
  %v6884 = vpop.f32.mrb[0].mxu0
  %v6885 = vpop.f32.mrb[0].mxu0
  %v6886 = vadd.f32 0.0, %v6885
  %v6887 = vpop.f32.mrb[0].mxu0
  %6888 = vmatprep.mubr.bf16.mxu0 0
  %6889 = vmatmul.mubr.bf16.gmra.mrb[0].mxu0 %v6726
  %v6890 = vpop.f32.mrb[0].mxu0
  %v6891 = vadd.f32 0.0, %v6890
  %v6892 = vpop.f32.mrb[0].mxu0
  %v6893 = vpop.f32.mrb[0].mxu0
  %v6894 = vadd.f32 0.0, %v6893
  %v6895 = vpop.f32.mrb[0].mxu0
  %6896 = vmatprep.mubr.bf16.mxu0 0
  %6897 = vmatmul.mubr.bf16.gmra.mrb[0].mxu0 %v6727
  %v6898 = vpop.f32.mrb[0].mxu0
  %v6899 = vadd.f32 0.0, %v6898
  %v6900 = vpop.f32.mrb[0].mxu0
  %v6901 = vpop.f32.mrb[0].mxu0
  %v6902 = vadd.f32 0.0, %v6901
  %v6903 = vpop.f32.mrb[0].mxu0
  %6904 = vmatprep.mubr.bf16.mxu0 0
  %6905 = vmatmul.mubr.bf16.gmra.mrb[0].mxu0 %v6728
  %v6906 = vpop.f32.mrb[0].mxu0
  %v6907 = vadd.f32 0.0, %v6906
  %v6908 = vpop.f32.mrb[0].mxu0
  %v6909 = vpop.f32.mrb[0].mxu0
  %v6910 = vadd.f32 0.0, %v6909
  %v6911 = vpop.f32.mrb[0].mxu0
  %6912 = vmatprep.mubr.bf16.mxu0 0
  %6913 = vmatmul.mubr.bf16.gmra.mrb[0].mxu0 %v6729
  %v6914 = vpop.f32.mrb[0].mxu0
  %v6915 = vadd.f32 0.0, %v6914
  %v6916 = vpop.f32.mrb[0].mxu0
  %v6917 = vpop.f32.mrb[0].mxu0
  %v6918 = vadd.f32 0.0, %v6917
  %v6919 = vpop.f32.mrb[0].mxu0
  %6920 = vmatprep.mubr.bf16.mxu0 0
  %6921 = vmatmul.mubr.bf16.gmra.mrb[0].mxu0 %v6730
  %v6922 = vpop.f32.mrb[0].mxu0
  %v6923 = vadd.f32 0.0, %v6922
  %v6924 = vpop.f32.mrb[0].mxu0
  %v6925 = vpop.f32.mrb[0].mxu0
  %v6926 = vadd.f32 0.0, %v6925
  %v6927 = vpop.f32.mrb[0].mxu0
  %6928 = vmatprep.mubr.bf16.mxu0 0
  %6929 = vmatmul.mubr.bf16.gmra.mrb[0].mxu0 %v6731
  %v6930 = vpop.f32.mrb[0].mxu0
  %v6931 = vadd.f32 0.0, %v6930
  %v6932 = vpop.f32.mrb[0].mxu0
  %v6933 = vpop.f32.mrb[0].mxu0
  %v6934 = vadd.f32 0.0, %v6933
  %v6935 = vpop.f32.mrb[0].mxu0
  %6936 = vmatprep.mubr.bf16.mxu0 0
  %6937 = vmatmul.mubr.bf16.gmra.mrb[0].mxu0 %v6732
  %v6938 = vpop.f32.mrb[0].mxu0
  %v6939 = vadd.f32 0.0, %v6938
  %v6940 = vpop.f32.mrb[0].mxu0
  %v6941 = vpop.f32.mrb[0].mxu0
  %v6942 = vadd.f32 0.0, %v6941
  %v6943 = vpop.f32.mrb[0].mxu0
  %6944 = vmatprep.mubr.bf16.mxu0 0
  %6945 = vmatmul.mubr.bf16.gmra.mrb[0].mxu0 %v6733
  %v6946 = vpop.f32.mrb[0].mxu0
  %v6947 = vadd.f32 0.0, %v6946
  %v6948 = vpop.f32.mrb[0].mxu0
  %v6949 = vpop.f32.mrb[0].mxu0
  %v6950 = vadd.f32 0.0, %v6949
  %v6951 = vpop.f32.mrb[0].mxu0
  %6952 = vmatprep.mubr.bf16.mxu0 0
  %6953 = vmatmul.mubr.bf16.gmra.mrb[0].mxu0 %v6734
  %v6954 = vpop.f32.mrb[0].mxu0
  %v6955 = vadd.f32 0.0, %v6954
  %v6956 = vpop.f32.mrb[0].mxu0
  %v6957 = vpop.f32.mrb[0].mxu0
  %v6958 = vadd.f32 0.0, %v6957
  %v6959 = vpop.f32.mrb[0].mxu0
  %6960 = vmatprep.mubr.bf16.mxu0 0
  %6961 = vmatmul.mubr.bf16.gmra.mrb[0].mxu0 %v6735
  %v6962 = vpop.f32.mrb[0].mxu0
  %v6963 = vadd.f32 0.0, %v6962
  %v6964 = vpop.f32.mrb[0].mxu0
  %v6965 = vpop.f32.mrb[0].mxu0
  %v6966 = vadd.f32 0.0, %v6965
  %v6967 = vpop.f32.mrb[0].mxu0
  %6968 = vmatprep.mubr.bf16.mxu0 0
  %6969 = vmatmul.mubr.bf16.gmra.mrb[0].mxu0 %v6736
  %v6970 = vpop.f32.mrb[0].mxu0
  %v6971 = vadd.f32 0.0, %v6970
  %v6972 = vpop.f32.mrb[0].mxu0
  %v6973 = vpop.f32.mrb[0].mxu0
  %v6974 = vadd.f32 0.0, %v6973
  %v6975 = vpop.f32.mrb[0].mxu0
  %6976 = vmatprep.mubr.bf16.mxu0 0
  %6977 = vmatmul.mubr.bf16.gmra.mrb[0].mxu0 %v6737
  %v6978 = vpop.f32.mrb[0].mxu0
  %v6979 = vadd.f32 0.0, %v6978
  %v6980 = vpop.f32.mrb[0].mxu0
  %v6981 = vpop.f32.mrb[0].mxu0
  %v6982 = vadd.f32 0.0, %v6981
  %v6983 = vpop.f32.mrb[0].mxu0
  %6984 = vmatprep.mubr.bf16.mxu0 0
  %6985 = vmatmul.mubr.bf16.gmra.mrb[0].mxu0 %v6738
  %v6986 = vpop.f32.mrb[0].mxu0
  %v6987 = vadd.f32 0.0, %v6986
  %v6988 = vpop.f32.mrb[0].mxu0
  %v6989 = vpop.f32.mrb[0].mxu0
  %v6990 = vadd.f32 0.0, %v6989
  %v6991 = vpop.f32.mrb[0].mxu0
  %6992 = vmatprep.mubr.bf16.mxu0 0
  %6993 = vmatmul.mubr.bf16.gmra.mrb[0].mxu0 %v6739
  %v6994 = vpop.f32.mrb[0].mxu0
  %v6995 = vadd.f32 0.0, %v6994
  %v6996 = vpop.f32.mrb[0].mxu0
  %v6997 = vpop.f32.mrb[0].mxu0
  %v6998 = vadd.f32 0.0, %v6997
  %v6999 = vpop.f32.mrb[0].mxu0
  %7000 = vmatprep.mubr.bf16.mxu0 0
  %7001 = vmatmul.mubr.bf16.gmra.mrb[0].mxu0 %v6740
  %v7002 = vpop.f32.mrb[0].mxu0
  %v7003 = vadd.f32 0.0, %v7002
  %v7004 = vpop.f32.mrb[0].mxu0
  %v7005 = vpop.f32.mrb[0].mxu0
  %v7006 = vadd.f32 0.0, %v7005
  %v7007 = vpop.f32.mrb[0].mxu0
  %7008 = vmatprep.mubr.bf16.mxu0 0
  %7009 = vmatmul.mubr.bf16.gmra.mrb[0].mxu0 %v6741
  %v7010 = vpop.f32.mrb[0].mxu0
  %v7011 = vadd.f32 0.0, %v7010
  %v7012 = vpop.f32.mrb[0].mxu0
  %v7013 = vpop.f32.mrb[0].mxu0
  %v7014 = vadd.f32 0.0, %v7013
  %v7015 = vpop.f32.mrb[0].mxu0
  %7016 = vmatprep.mubr.bf16.mxu0 0
  %7017 = vmatmul.mubr.bf16.gmra.mrb[0].mxu0 %v6742
  %v7018 = vpop.f32.mrb[0].mxu0
  %v7019 = vadd.f32 0.0, %v7018
  %v7020 = vpop.f32.mrb[0].mxu0
  %v7021 = vpop.f32.mrb[0].mxu0
  %v7022 = vadd.f32 0.0, %v7021
  %v7023 = vpop.f32.mrb[0].mxu0
  %7024 = vmatprep.mubr.bf16.mxu0 0
  %7025 = vmatmul.mubr.bf16.gmra.mrb[0].mxu0 %v6743
  %v7026 = vpop.f32.mrb[0].mxu0
  %v7027 = vadd.f32 0.0, %v7026
  %v7028 = vpop.f32.mrb[0].mxu0
  %v7029 = vpop.f32.mrb[0].mxu0
  %v7030 = vadd.f32 0.0, %v7029
  %v7031 = vpop.f32.mrb[0].mxu0
  %7032 = vdwg.mxu0
  %v7033 = vadd.f32 %v6779, %v6782
  %v7034 = vadd.f32 %v7033, %v6787
  %v7035 = vadd.f32 %v7034, %v6790
  %v7036 = vadd.f32 %v7035, %v6795
  %v7037 = vadd.f32 %v7036, %v6798
  %v7038 = vadd.f32 %v7037, %v6803
  %v7039 = vadd.f32 %v7038, %v6806
  %v7040 = vadd.f32 %v7039, %v6811
  %v7041 = vadd.f32 %v7040, %v6814
  %v7042 = vadd.f32 %v7041, %v6819
  %v7043 = vadd.f32 %v7042, %v6822
  %v7044 = vadd.f32 %v7043, %v6827
  %v7045 = vadd.f32 %v7044, %v6830
  %v7046 = vadd.f32 %v7045, %v6835
  %v7047 = vadd.f32 %v7046, %v6838
  %v7048 = vadd.f32 %v7047, %v6843
  %v7049 = vadd.f32 %v7048, %v6846
  %v7050 = vadd.f32 %v7049, %v6851
  %v7051 = vadd.f32 %v7050, %v6854
  %v7052 = vadd.f32 %v7051, %v6859
  %v7053 = vadd.f32 %v7052, %v6862
  %v7054 = vadd.f32 %v7053, %v6867
  %v7055 = vadd.f32 %v7054, %v6870
  %v7056 = vadd.f32 %v7055, %v6875
  %v7057 = vadd.f32 %v7056, %v6878
  %v7058 = vadd.f32 %v7057, %v6883
  %v7059 = vadd.f32 %v7058, %v6886
  %v7060 = vadd.f32 %v7059, %v6891
  %v7061 = vadd.f32 %v7060, %v6894
  %v7062 = vadd.f32 %v7061, %v6899
  %v7063 = vadd.f32 %v7062, %v6902
  %v7064 = vadd.f32 %v7063, %v6907
  %v7065 = vadd.f32 %v7064, %v6910
  %v7066 = vadd.f32 %v7065, %v6915
  %v7067 = vadd.f32 %v7066, %v6918
  %v7068 = vadd.f32 %v7067, %v6923
  %v7069 = vadd.f32 %v7068, %v6926
  %v7070 = vadd.f32 %v7069, %v6931
  %v7071 = vadd.f32 %v7070, %v6934
  %v7072 = vadd.f32 %v7071, %v6939
  %v7073 = vadd.f32 %v7072, %v6942
  %v7074 = vadd.f32 %v7073, %v6947
  %v7075 = vadd.f32 %v7074, %v6950
  %v7076 = vadd.f32 %v7075, %v6955
  %v7077 = vadd.f32 %v7076, %v6958
  %v7078 = vadd.f32 %v7077, %v6963
  %v7079 = vadd.f32 %v7078, %v6966
  %v7080 = vadd.f32 %v7079, %v6971
  %v7081 = vadd.f32 %v7080, %v6974
  %v7082 = vadd.f32 %v7081, %v6979
  %v7083 = vadd.f32 %v7082, %v6982
  %v7084 = vadd.f32 %v7083, %v6987
  %v7085 = vadd.f32 %v7084, %v6990
  %v7086 = vadd.f32 %v7085, %v6995
  %v7087 = vadd.f32 %v7086, %v6998
  %v7088 = vadd.f32 %v7087, %v7003
  %v7089 = vadd.f32 %v7088, %v7006
  %v7090 = vadd.f32 %v7089, %v7011
  %v7091 = vadd.f32 %v7090, %v7014
  %v7092 = vadd.f32 %v7091, %v7019
  %v7093 = vadd.f32 %v7092, %v7022
  %v7094 = vadd.f32 %v7093, %v7027
  %v7095 = vadd.f32 %v7094, %v7030
  %v7096 = vrot.slane %v7095, 4
  %v7097 = vadd.f32 %v7095, %v7096
  %v7098 = vrot.slane %v7097, 2
  %v7099 = vadd.f32 %v7097, %v7098
  %v7100 = vrot.slane %v7099, 1
  %v7101 = vadd.f32 %v7099, %v7100
  %v7102 = vmul.f32 %v6779, %v6779
  %v7103 = vmul.f32 %v6782, %v6782
  %v7104 = vmul.f32 %v6787, %v6787
  %v7105 = vmul.f32 %v6790, %v6790
  %v7106 = vmul.f32 %v6795, %v6795
  %v7107 = vmul.f32 %v6798, %v6798
  %v7108 = vmul.f32 %v6803, %v6803
  %v7109 = vmul.f32 %v6806, %v6806
  %v7110 = vmul.f32 %v6811, %v6811
  %v7111 = vmul.f32 %v6814, %v6814
  %v7112 = vmul.f32 %v6819, %v6819
  %v7113 = vmul.f32 %v6822, %v6822
  %v7114 = vmul.f32 %v6827, %v6827
  %v7115 = vmul.f32 %v6830, %v6830
  %v7116 = vmul.f32 %v6835, %v6835
  %v7117 = vmul.f32 %v6838, %v6838
  %v7118 = vmul.f32 %v6843, %v6843
  %v7119 = vmul.f32 %v6846, %v6846
  %v7120 = vmul.f32 %v6851, %v6851
  %v7121 = vmul.f32 %v6854, %v6854
  %v7122 = vmul.f32 %v6859, %v6859
  %v7123 = vmul.f32 %v6862, %v6862
  %v7124 = vmul.f32 %v6867, %v6867
  %v7125 = vmul.f32 %v6870, %v6870
  %v7126 = vmul.f32 %v6875, %v6875
  %v7127 = vmul.f32 %v6878, %v6878
  %v7128 = vmul.f32 %v6883, %v6883
  %v7129 = vmul.f32 %v6886, %v6886
  %v7130 = vmul.f32 %v6891, %v6891
  %v7131 = vmul.f32 %v6894, %v6894
  %v7132 = vmul.f32 %v6899, %v6899
  %v7133 = vmul.f32 %v6902, %v6902
  %v7134 = vmul.f32 %v6907, %v6907
  %v7135 = vmul.f32 %v6910, %v6910
  %v7136 = vmul.f32 %v6915, %v6915
  %v7137 = vmul.f32 %v6918, %v6918
  %v7138 = vmul.f32 %v6923, %v6923
  %v7139 = vmul.f32 %v6926, %v6926
  %v7140 = vmul.f32 %v6931, %v6931
  %v7141 = vmul.f32 %v6934, %v6934
  %v7142 = vmul.f32 %v6939, %v6939
  %v7143 = vmul.f32 %v6942, %v6942
  %v7144 = vmul.f32 %v6947, %v6947
  %v7145 = vmul.f32 %v6950, %v6950
  %v7146 = vmul.f32 %v6955, %v6955
  %v7147 = vmul.f32 %v6958, %v6958
  %v7148 = vmul.f32 %v6963, %v6963
  %v7149 = vmul.f32 %v6966, %v6966
  %v7150 = vmul.f32 %v6971, %v6971
  %v7151 = vmul.f32 %v6974, %v6974
  %v7152 = vmul.f32 %v6979, %v6979
  %v7153 = vmul.f32 %v6982, %v6982
  %v7154 = vmul.f32 %v6987, %v6987
  %v7155 = vmul.f32 %v6990, %v6990
  %v7156 = vmul.f32 %v6995, %v6995
  %v7157 = vmul.f32 %v6998, %v6998
  %v7158 = vmul.f32 %v7003, %v7003
  %v7159 = vmul.f32 %v7006, %v7006
  %v7160 = vmul.f32 %v7011, %v7011
  %v7161 = vmul.f32 %v7014, %v7014
  %v7162 = vmul.f32 %v7019, %v7019
  %v7163 = vmul.f32 %v7022, %v7022
  %v7164 = vmul.f32 %v7027, %v7027
  %v7165 = vmul.f32 %v7030, %v7030
  %v7166 = vadd.f32 %v7102, %v7103
  %v7167 = vadd.f32 %v7166, %v7104
  %v7168 = vadd.f32 %v7167, %v7105
  %v7169 = vadd.f32 %v7168, %v7106
  %v7170 = vadd.f32 %v7169, %v7107
  %v7171 = vadd.f32 %v7170, %v7108
  %v7172 = vadd.f32 %v7171, %v7109
  %v7173 = vadd.f32 %v7172, %v7110
  %v7174 = vadd.f32 %v7173, %v7111
  %v7175 = vadd.f32 %v7174, %v7112
  %v7176 = vadd.f32 %v7175, %v7113
  %v7177 = vadd.f32 %v7176, %v7114
  %v7178 = vadd.f32 %v7177, %v7115
  %v7179 = vadd.f32 %v7178, %v7116
  %v7180 = vadd.f32 %v7179, %v7117
  %v7181 = vadd.f32 %v7180, %v7118
  %v7182 = vadd.f32 %v7181, %v7119
  %v7183 = vadd.f32 %v7182, %v7120
  %v7184 = vadd.f32 %v7183, %v7121
  %v7185 = vadd.f32 %v7184, %v7122
  %v7186 = vadd.f32 %v7185, %v7123
  %v7187 = vadd.f32 %v7186, %v7124
  %v7188 = vadd.f32 %v7187, %v7125
  %v7189 = vadd.f32 %v7188, %v7126
  %v7190 = vadd.f32 %v7189, %v7127
  %v7191 = vadd.f32 %v7190, %v7128
  %v7192 = vadd.f32 %v7191, %v7129
  %v7193 = vadd.f32 %v7192, %v7130
  %v7194 = vadd.f32 %v7193, %v7131
  %v7195 = vadd.f32 %v7194, %v7132
  %v7196 = vadd.f32 %v7195, %v7133
  %v7197 = vadd.f32 %v7196, %v7134
  %v7198 = vadd.f32 %v7197, %v7135
  %v7199 = vadd.f32 %v7198, %v7136
  %v7200 = vadd.f32 %v7199, %v7137
  %v7201 = vadd.f32 %v7200, %v7138
  %v7202 = vadd.f32 %v7201, %v7139
  %v7203 = vadd.f32 %v7202, %v7140
  %v7204 = vadd.f32 %v7203, %v7141
  %v7205 = vadd.f32 %v7204, %v7142
  %v7206 = vadd.f32 %v7205, %v7143
  %v7207 = vadd.f32 %v7206, %v7144
  %v7208 = vadd.f32 %v7207, %v7145
  %v7209 = vadd.f32 %v7208, %v7146
  %v7210 = vadd.f32 %v7209, %v7147
  %v7211 = vadd.f32 %v7210, %v7148
  %v7212 = vadd.f32 %v7211, %v7149
  %v7213 = vadd.f32 %v7212, %v7150
  %v7214 = vadd.f32 %v7213, %v7151
  %v7215 = vadd.f32 %v7214, %v7152
  %v7216 = vadd.f32 %v7215, %v7153
  %v7217 = vadd.f32 %v7216, %v7154
  %v7218 = vadd.f32 %v7217, %v7155
  %v7219 = vadd.f32 %v7218, %v7156
  %v7220 = vadd.f32 %v7219, %v7157
  %v7221 = vadd.f32 %v7220, %v7158
  %v7222 = vadd.f32 %v7221, %v7159
  %v7223 = vadd.f32 %v7222, %v7160
  %v7224 = vadd.f32 %v7223, %v7161
  %v7225 = vadd.f32 %v7224, %v7162
  %v7226 = vadd.f32 %v7225, %v7163
  %v7227 = vadd.f32 %v7226, %v7164
  %v7228 = vadd.f32 %v7227, %v7165
  %v7229 = vrot.slane %v7228, 4
  %v7230 = vadd.f32 %v7228, %v7229
  %v7231 = vrot.slane %v7230, 2
  %v7232 = vadd.f32 %v7230, %v7231
  %v7233 = vrot.slane %v7232, 1
  %v7234 = vadd.f32 %v7232, %v7233
  %v7235 = vmul.f32 %v7101, 0.001953125
  %v7236 = vmul.f32 %v7234, 0.001953125
  %v7237 = vmul.f32 %v7235, %v7235
  %v7238 = vsub.f32 %v7236, %v7237
  %v7239 = vadd.f32 %v7238, 1e-05
  %v7240 = vrsqrt.pop %v7239
  %v7241 = vmul.f32 %v48, %v7240
  %v7242 = vmul.f32 %v7235, %v7241
  %v7243 = vsub.f32 %v49, %v7242
  %v7245 = vlaneseq
  %v7246 = vshrl.u32 %v7245, 7
  %v7247 = vsub.s32 0, %v7246
  %v7248 = vrot.slane %v7241, %v7247
  %v7250 = vmul.f32 %v6779, %v7248
  %v7251 = vmul.f32 %v6782, %v7248
  %v7252 = vmul.f32 %v6787, %v7248
  %v7253 = vmul.f32 %v6790, %v7248
  %v7254 = vmul.f32 %v6795, %v7248
  %v7255 = vmul.f32 %v6798, %v7248
  %v7256 = vmul.f32 %v6803, %v7248
  %v7257 = vmul.f32 %v6806, %v7248
  %v7258 = vmul.f32 %v6811, %v7248
  %v7259 = vmul.f32 %v6814, %v7248
  %v7260 = vmul.f32 %v6819, %v7248
  %v7261 = vmul.f32 %v6822, %v7248
  %v7262 = vmul.f32 %v6827, %v7248
  %v7263 = vmul.f32 %v6830, %v7248
  %v7264 = vmul.f32 %v6835, %v7248
  %v7265 = vmul.f32 %v6838, %v7248
  %v7266 = vmul.f32 %v6843, %v7248
  %v7267 = vmul.f32 %v6846, %v7248
  %v7268 = vmul.f32 %v6851, %v7248
  %v7269 = vmul.f32 %v6854, %v7248
  %v7270 = vmul.f32 %v6859, %v7248
  %v7271 = vmul.f32 %v6862, %v7248
  %v7272 = vmul.f32 %v6867, %v7248
  %v7273 = vmul.f32 %v6870, %v7248
  %v7274 = vmul.f32 %v6875, %v7248
  %v7275 = vmul.f32 %v6878, %v7248
  %v7276 = vmul.f32 %v6883, %v7248
  %v7277 = vmul.f32 %v6886, %v7248
  %v7278 = vmul.f32 %v6891, %v7248
  %v7279 = vmul.f32 %v6894, %v7248
  %v7280 = vmul.f32 %v6899, %v7248
  %v7281 = vmul.f32 %v6902, %v7248
  %v7282 = vmul.f32 %v6907, %v7248
  %v7283 = vmul.f32 %v6910, %v7248
  %v7284 = vmul.f32 %v6915, %v7248
  %v7285 = vmul.f32 %v6918, %v7248
  %v7286 = vmul.f32 %v6923, %v7248
  %v7287 = vmul.f32 %v6926, %v7248
  %v7288 = vmul.f32 %v6931, %v7248
  %v7289 = vmul.f32 %v6934, %v7248
  %v7290 = vmul.f32 %v6939, %v7248
  %v7291 = vmul.f32 %v6942, %v7248
  %v7292 = vmul.f32 %v6947, %v7248
  %v7293 = vmul.f32 %v6950, %v7248
  %v7294 = vmul.f32 %v6955, %v7248
  %v7295 = vmul.f32 %v6958, %v7248
  %v7296 = vmul.f32 %v6963, %v7248
  %v7297 = vmul.f32 %v6966, %v7248
  %v7298 = vmul.f32 %v6971, %v7248
  %v7299 = vmul.f32 %v6974, %v7248
  %v7300 = vmul.f32 %v6979, %v7248
  %v7301 = vmul.f32 %v6982, %v7248
  %v7302 = vmul.f32 %v6987, %v7248
  %v7303 = vmul.f32 %v6990, %v7248
  %v7304 = vmul.f32 %v6995, %v7248
  %v7305 = vmul.f32 %v6998, %v7248
  %v7306 = vmul.f32 %v7003, %v7248
  %v7307 = vmul.f32 %v7006, %v7248
  %v7308 = vmul.f32 %v7011, %v7248
  %v7309 = vmul.f32 %v7014, %v7248
  %v7310 = vmul.f32 %v7019, %v7248
  %v7311 = vmul.f32 %v7022, %v7248
  %v7312 = vmul.f32 %v7027, %v7248
  %v7313 = vmul.f32 %v7030, %v7248
  %v7315 = vlaneseq
  %v7316 = vshrl.u32 %v7315, 7
  %v7317 = vsub.s32 0, %v7316
  %v7318 = vrot.slane %v7243, %v7317
  %v7320 = vadd.f32 %v7250, %v7318
  %v7321 = vadd.f32 %v7251, %v7318
  %v7322 = vadd.f32 %v7252, %v7318
  %v7323 = vadd.f32 %v7253, %v7318
  %v7324 = vadd.f32 %v7254, %v7318
  %v7325 = vadd.f32 %v7255, %v7318
  %v7326 = vadd.f32 %v7256, %v7318
  %v7327 = vadd.f32 %v7257, %v7318
  %v7328 = vadd.f32 %v7258, %v7318
  %v7329 = vadd.f32 %v7259, %v7318
  %v7330 = vadd.f32 %v7260, %v7318
  %v7331 = vadd.f32 %v7261, %v7318
  %v7332 = vadd.f32 %v7262, %v7318
  %v7333 = vadd.f32 %v7263, %v7318
  %v7334 = vadd.f32 %v7264, %v7318
  %v7335 = vadd.f32 %v7265, %v7318
  %v7336 = vadd.f32 %v7266, %v7318
  %v7337 = vadd.f32 %v7267, %v7318
  %v7338 = vadd.f32 %v7268, %v7318
  %v7339 = vadd.f32 %v7269, %v7318
  %v7340 = vadd.f32 %v7270, %v7318
  %v7341 = vadd.f32 %v7271, %v7318
  %v7342 = vadd.f32 %v7272, %v7318
  %v7343 = vadd.f32 %v7273, %v7318
  %v7344 = vadd.f32 %v7274, %v7318
  %v7345 = vadd.f32 %v7275, %v7318
  %v7346 = vadd.f32 %v7276, %v7318
  %v7347 = vadd.f32 %v7277, %v7318
  %v7348 = vadd.f32 %v7278, %v7318
  %v7349 = vadd.f32 %v7279, %v7318
  %v7350 = vadd.f32 %v7280, %v7318
  %v7351 = vadd.f32 %v7281, %v7318
  %v7352 = vadd.f32 %v7282, %v7318
  %v7353 = vadd.f32 %v7283, %v7318
  %v7354 = vadd.f32 %v7284, %v7318
  %v7355 = vadd.f32 %v7285, %v7318
  %v7356 = vadd.f32 %v7286, %v7318
  %v7357 = vadd.f32 %v7287, %v7318
  %v7358 = vadd.f32 %v7288, %v7318
  %v7359 = vadd.f32 %v7289, %v7318
  %v7360 = vadd.f32 %v7290, %v7318
  %v7361 = vadd.f32 %v7291, %v7318
  %v7362 = vadd.f32 %v7292, %v7318
  %v7363 = vadd.f32 %v7293, %v7318
  %v7364 = vadd.f32 %v7294, %v7318
  %v7365 = vadd.f32 %v7295, %v7318
  %v7366 = vadd.f32 %v7296, %v7318
  %v7367 = vadd.f32 %v7297, %v7318
  %v7368 = vadd.f32 %v7298, %v7318
  %v7369 = vadd.f32 %v7299, %v7318
  %v7370 = vadd.f32 %v7300, %v7318
  %v7371 = vadd.f32 %v7301, %v7318
  %v7372 = vadd.f32 %v7302, %v7318
  %v7373 = vadd.f32 %v7303, %v7318
  %v7374 = vadd.f32 %v7304, %v7318
  %v7375 = vadd.f32 %v7305, %v7318
  %v7376 = vadd.f32 %v7306, %v7318
  %v7377 = vadd.f32 %v7307, %v7318
  %v7378 = vadd.f32 %v7308, %v7318
  %v7379 = vadd.f32 %v7309, %v7318
  %v7380 = vadd.f32 %v7310, %v7318
  %v7381 = vadd.f32 %v7311, %v7318
  %v7382 = vadd.f32 %v7312, %v7318
  %v7383 = vadd.f32 %v7313, %v7318
  %v7384 = vld [vmem:[%s0] sm:$0xff]
  %v7385 = vld [vmem:[%s0 + $0x8] sm:$0xff]
  %v7386 = vld [vmem:[%s0 + $0x10] sm:$0xff]
  %v7387 = vld [vmem:[%s0 + $0x18] sm:$0xff]
  %v7388 = vld [vmem:[%s0 + $0x20] sm:$0xff]
  %v7389 = vld [vmem:[%s0 + $0x28] sm:$0xff]
  %v7390 = vld [vmem:[%s0 + $0x30] sm:$0xff]
  %v7391 = vld [vmem:[%s0 + $0x38] sm:$0xff]
  %v7392 = vld [vmem:[%s0 + $0x40] sm:$0xff]
  %v7393 = vld [vmem:[%s0 + $0x48] sm:$0xff]
  %v7394 = vld [vmem:[%s0 + $0x50] sm:$0xff]
  %v7395 = vld [vmem:[%s0 + $0x58] sm:$0xff]
  %v7396 = vld [vmem:[%s0 + $0x60] sm:$0xff]
  %v7397 = vld [vmem:[%s0 + $0x68] sm:$0xff]
  %v7398 = vld [vmem:[%s0 + $0x70] sm:$0xff]
  %v7399 = vld [vmem:[%s0 + $0x78] sm:$0xff]
  %v7400 = vld [vmem:[%s0 + $0x80] sm:$0xff]
  %v7401 = vld [vmem:[%s0 + $0x88] sm:$0xff]
  %v7402 = vld [vmem:[%s0 + $0x90] sm:$0xff]
  %v7403 = vld [vmem:[%s0 + $0x98] sm:$0xff]
  %v7404 = vld [vmem:[%s0 + $0xa0] sm:$0xff]
  %v7405 = vld [vmem:[%s0 + $0xa8] sm:$0xff]
  %v7406 = vld [vmem:[%s0 + $0xb0] sm:$0xff]
  %v7407 = vld [vmem:[%s0 + $0xb8] sm:$0xff]
  %v7408 = vld [vmem:[%s0 + $0xc0] sm:$0xff]
  %v7409 = vld [vmem:[%s0 + $0xc8] sm:$0xff]
  %v7410 = vld [vmem:[%s0 + $0xd0] sm:$0xff]
  %v7411 = vld [vmem:[%s0 + $0xd8] sm:$0xff]
  %v7412 = vld [vmem:[%s0 + $0xe0] sm:$0xff]
  %v7413 = vld [vmem:[%s0 + $0xe8] sm:$0xff]
  %v7414 = vld [vmem:[%s0 + $0xf0] sm:$0xff]
  %v7415 = vld [vmem:[%s0 + $0xf8] sm:$0xff]
  %v7416 = vld [vmem:[%s0 + $0x100] sm:$0xff]
  %v7417 = vld [vmem:[%s0 + $0x108] sm:$0xff]
  %v7418 = vld [vmem:[%s0 + $0x110] sm:$0xff]
  %v7419 = vld [vmem:[%s0 + $0x118] sm:$0xff]
  %v7420 = vld [vmem:[%s0 + $0x120] sm:$0xff]
  %v7421 = vld [vmem:[%s0 + $0x128] sm:$0xff]
  %v7422 = vld [vmem:[%s0 + $0x130] sm:$0xff]
  %v7423 = vld [vmem:[%s0 + $0x138] sm:$0xff]
  %v7424 = vld [vmem:[%s0 + $0x140] sm:$0xff]
  %v7425 = vld [vmem:[%s0 + $0x148] sm:$0xff]
  %v7426 = vld [vmem:[%s0 + $0x150] sm:$0xff]
  %v7427 = vld [vmem:[%s0 + $0x158] sm:$0xff]
  %v7428 = vld [vmem:[%s0 + $0x160] sm:$0xff]
  %v7429 = vld [vmem:[%s0 + $0x168] sm:$0xff]
  %v7430 = vld [vmem:[%s0 + $0x170] sm:$0xff]
  %v7431 = vld [vmem:[%s0 + $0x178] sm:$0xff]
  %v7432 = vld [vmem:[%s0 + $0x180] sm:$0xff]
  %v7433 = vld [vmem:[%s0 + $0x188] sm:$0xff]
  %v7434 = vld [vmem:[%s0 + $0x190] sm:$0xff]
  %v7435 = vld [vmem:[%s0 + $0x198] sm:$0xff]
  %v7436 = vld [vmem:[%s0 + $0x1a0] sm:$0xff]
  %v7437 = vld [vmem:[%s0 + $0x1a8] sm:$0xff]
  %v7438 = vld [vmem:[%s0 + $0x1b0] sm:$0xff]
  %v7439 = vld [vmem:[%s0 + $0x1b8] sm:$0xff]
  %v7440 = vld [vmem:[%s0 + $0x1c0] sm:$0xff]
  %v7441 = vld [vmem:[%s0 + $0x1c8] sm:$0xff]
  %v7442 = vld [vmem:[%s0 + $0x1d0] sm:$0xff]
  %v7443 = vld [vmem:[%s0 + $0x1d8] sm:$0xff]
  %v7444 = vld [vmem:[%s0 + $0x1e0] sm:$0xff]
  %v7445 = vld [vmem:[%s0 + $0x1e8] sm:$0xff]
  %v7446 = vld [vmem:[%s0 + $0x1f0] sm:$0xff]
  %v7447 = vld [vmem:[%s0 + $0x1f8] sm:$0xff]
  %v7448 = vmax.f32 %v7384, 0.0
  %v7449 = vmax.f32 %v7385, 0.0
  %v7450 = vmax.f32 %v7386, 0.0
  %v7451 = vmax.f32 %v7387, 0.0
  %v7452 = vmax.f32 %v7388, 0.0
  %v7453 = vmax.f32 %v7389, 0.0
  %v7454 = vmax.f32 %v7390, 0.0
  %v7455 = vmax.f32 %v7391, 0.0
  %v7456 = vmax.f32 %v7392, 0.0
  %v7457 = vmax.f32 %v7393, 0.0
  %v7458 = vmax.f32 %v7394, 0.0
  %v7459 = vmax.f32 %v7395, 0.0
  %v7460 = vmax.f32 %v7396, 0.0
  %v7461 = vmax.f32 %v7397, 0.0
  %v7462 = vmax.f32 %v7398, 0.0
  %v7463 = vmax.f32 %v7399, 0.0
  %v7464 = vmax.f32 %v7400, 0.0
  %v7465 = vmax.f32 %v7401, 0.0
  %v7466 = vmax.f32 %v7402, 0.0
  %v7467 = vmax.f32 %v7403, 0.0
  %v7468 = vmax.f32 %v7404, 0.0
  %v7469 = vmax.f32 %v7405, 0.0
  %v7470 = vmax.f32 %v7406, 0.0
  %v7471 = vmax.f32 %v7407, 0.0
  %v7472 = vmax.f32 %v7408, 0.0
  %v7473 = vmax.f32 %v7409, 0.0
  %v7474 = vmax.f32 %v7410, 0.0
  %v7475 = vmax.f32 %v7411, 0.0
  %v7476 = vmax.f32 %v7412, 0.0
  %v7477 = vmax.f32 %v7413, 0.0
  %v7478 = vmax.f32 %v7414, 0.0
  %v7479 = vmax.f32 %v7415, 0.0
  %v7480 = vmax.f32 %v7416, 0.0
  %v7481 = vmax.f32 %v7417, 0.0
  %v7482 = vmax.f32 %v7418, 0.0
  %v7483 = vmax.f32 %v7419, 0.0
  %v7484 = vmax.f32 %v7420, 0.0
  %v7485 = vmax.f32 %v7421, 0.0
  %v7486 = vmax.f32 %v7422, 0.0
  %v7487 = vmax.f32 %v7423, 0.0
  %v7488 = vmax.f32 %v7424, 0.0
  %v7489 = vmax.f32 %v7425, 0.0
  %v7490 = vmax.f32 %v7426, 0.0
  %v7491 = vmax.f32 %v7427, 0.0
  %v7492 = vmax.f32 %v7428, 0.0
  %v7493 = vmax.f32 %v7429, 0.0
  %v7494 = vmax.f32 %v7430, 0.0
  %v7495 = vmax.f32 %v7431, 0.0
  %v7496 = vmax.f32 %v7432, 0.0
  %v7497 = vmax.f32 %v7433, 0.0
  %v7498 = vmax.f32 %v7434, 0.0
  %v7499 = vmax.f32 %v7435, 0.0
  %v7500 = vmax.f32 %v7436, 0.0
  %v7501 = vmax.f32 %v7437, 0.0
  %v7502 = vmax.f32 %v7438, 0.0
  %v7503 = vmax.f32 %v7439, 0.0
  %v7504 = vmax.f32 %v7440, 0.0
  %v7505 = vmax.f32 %v7441, 0.0
  %v7506 = vmax.f32 %v7442, 0.0
  %v7507 = vmax.f32 %v7443, 0.0
  %v7508 = vmax.f32 %v7444, 0.0
  %v7509 = vmax.f32 %v7445, 0.0
  %v7510 = vmax.f32 %v7446, 0.0
  %v7511 = vmax.f32 %v7447, 0.0
  %v7512 = vadd.f32 %v7320, %v7448
  %v7513 = vadd.f32 %v7321, %v7449
  %v7514 = vadd.f32 %v7322, %v7450
  %v7515 = vadd.f32 %v7323, %v7451
  %v7516 = vadd.f32 %v7324, %v7452
  %v7517 = vadd.f32 %v7325, %v7453
  %v7518 = vadd.f32 %v7326, %v7454
  %v7519 = vadd.f32 %v7327, %v7455
  %v7520 = vadd.f32 %v7328, %v7456
  %v7521 = vadd.f32 %v7329, %v7457
  %v7522 = vadd.f32 %v7330, %v7458
  %v7523 = vadd.f32 %v7331, %v7459
  %v7524 = vadd.f32 %v7332, %v7460
  %v7525 = vadd.f32 %v7333, %v7461
  %v7526 = vadd.f32 %v7334, %v7462
  %v7527 = vadd.f32 %v7335, %v7463
  %v7528 = vadd.f32 %v7336, %v7464
  %v7529 = vadd.f32 %v7337, %v7465
  %v7530 = vadd.f32 %v7338, %v7466
  %v7531 = vadd.f32 %v7339, %v7467
  %v7532 = vadd.f32 %v7340, %v7468
  %v7533 = vadd.f32 %v7341, %v7469
  %v7534 = vadd.f32 %v7342, %v7470
  %v7535 = vadd.f32 %v7343, %v7471
  %v7536 = vadd.f32 %v7344, %v7472
  %v7537 = vadd.f32 %v7345, %v7473
  %v7538 = vadd.f32 %v7346, %v7474
  %v7539 = vadd.f32 %v7347, %v7475
  %v7540 = vadd.f32 %v7348, %v7476
  %v7541 = vadd.f32 %v7349, %v7477
  %v7542 = vadd.f32 %v7350, %v7478
  %v7543 = vadd.f32 %v7351, %v7479
  %v7544 = vadd.f32 %v7352, %v7480
  %v7545 = vadd.f32 %v7353, %v7481
  %v7546 = vadd.f32 %v7354, %v7482
  %v7547 = vadd.f32 %v7355, %v7483
  %v7548 = vadd.f32 %v7356, %v7484
  %v7549 = vadd.f32 %v7357, %v7485
  %v7550 = vadd.f32 %v7358, %v7486
  %v7551 = vadd.f32 %v7359, %v7487
  %v7552 = vadd.f32 %v7360, %v7488
  %v7553 = vadd.f32 %v7361, %v7489
  %v7554 = vadd.f32 %v7362, %v7490
  %v7555 = vadd.f32 %v7363, %v7491
  %v7556 = vadd.f32 %v7364, %v7492
  %v7557 = vadd.f32 %v7365, %v7493
  %v7558 = vadd.f32 %v7366, %v7494
  %v7559 = vadd.f32 %v7367, %v7495
  %v7560 = vadd.f32 %v7368, %v7496
  %v7561 = vadd.f32 %v7369, %v7497
  %v7562 = vadd.f32 %v7370, %v7498
  %v7563 = vadd.f32 %v7371, %v7499
  %v7564 = vadd.f32 %v7372, %v7500
  %v7565 = vadd.f32 %v7373, %v7501
  %v7566 = vadd.f32 %v7374, %v7502
  %v7567 = vadd.f32 %v7375, %v7503
  %v7568 = vadd.f32 %v7376, %v7504
  %v7569 = vadd.f32 %v7377, %v7505
  %v7570 = vadd.f32 %v7378, %v7506
  %v7571 = vadd.f32 %v7379, %v7507
  %v7572 = vadd.f32 %v7380, %v7508
  %v7573 = vadd.f32 %v7381, %v7509
  %v7574 = vadd.f32 %v7382, %v7510
  %v7575 = vadd.f32 %v7383, %v7511
  %7576 = vst [vmem:[%s5] sm:$0xff] %v7512
  %7577 = vst [vmem:[%s5 + $0x8] sm:$0xff] %v7513
  %7578 = vst [vmem:[%s5 + $0x10] sm:$0xff] %v7514
  %7579 = vst [vmem:[%s5 + $0x18] sm:$0xff] %v7515
  %7580 = vst [vmem:[%s5 + $0x20] sm:$0xff] %v7516
  %7581 = vst [vmem:[%s5 + $0x28] sm:$0xff] %v7517
  %7582 = vst [vmem:[%s5 + $0x30] sm:$0xff] %v7518
  %7583 = vst [vmem:[%s5 + $0x38] sm:$0xff] %v7519
  %7584 = vst [vmem:[%s5 + $0x40] sm:$0xff] %v7520
  %7585 = vst [vmem:[%s5 + $0x48] sm:$0xff] %v7521
  %7586 = vst [vmem:[%s5 + $0x50] sm:$0xff] %v7522
  %7587 = vst [vmem:[%s5 + $0x58] sm:$0xff] %v7523
  %7588 = vst [vmem:[%s5 + $0x60] sm:$0xff] %v7524
  %7589 = vst [vmem:[%s5 + $0x68] sm:$0xff] %v7525
  %7590 = vst [vmem:[%s5 + $0x70] sm:$0xff] %v7526
  %7591 = vst [vmem:[%s5 + $0x78] sm:$0xff] %v7527
  %7592 = vst [vmem:[%s5 + $0x80] sm:$0xff] %v7528
  %7593 = vst [vmem:[%s5 + $0x88] sm:$0xff] %v7529
  %7594 = vst [vmem:[%s5 + $0x90] sm:$0xff] %v7530
  %7595 = vst [vmem:[%s5 + $0x98] sm:$0xff] %v7531
  %7596 = vst [vmem:[%s5 + $0xa0] sm:$0xff] %v7532
  %7597 = vst [vmem:[%s5 + $0xa8] sm:$0xff] %v7533
  %7598 = vst [vmem:[%s5 + $0xb0] sm:$0xff] %v7534
  %7599 = vst [vmem:[%s5 + $0xb8] sm:$0xff] %v7535
  %7600 = vst [vmem:[%s5 + $0xc0] sm:$0xff] %v7536
  %7601 = vst [vmem:[%s5 + $0xc8] sm:$0xff] %v7537
  %7602 = vst [vmem:[%s5 + $0xd0] sm:$0xff] %v7538
  %7603 = vst [vmem:[%s5 + $0xd8] sm:$0xff] %v7539
  %7604 = vst [vmem:[%s5 + $0xe0] sm:$0xff] %v7540
  %7605 = vst [vmem:[%s5 + $0xe8] sm:$0xff] %v7541
  %7606 = vst [vmem:[%s5 + $0xf0] sm:$0xff] %v7542
  %7607 = vst [vmem:[%s5 + $0xf8] sm:$0xff] %v7543
  %7608 = vst [vmem:[%s5 + $0x100] sm:$0xff] %v7544
  %7609 = vst [vmem:[%s5 + $0x108] sm:$0xff] %v7545
  %7610 = vst [vmem:[%s5 + $0x110] sm:$0xff] %v7546
  %7611 = vst [vmem:[%s5 + $0x118] sm:$0xff] %v7547
  %7612 = vst [vmem:[%s5 + $0x120] sm:$0xff] %v7548
  %7613 = vst [vmem:[%s5 + $0x128] sm:$0xff] %v7549
  %7614 = vst [vmem:[%s5 + $0x130] sm:$0xff] %v7550
  %7615 = vst [vmem:[%s5 + $0x138] sm:$0xff] %v7551
  %7616 = vst [vmem:[%s5 + $0x140] sm:$0xff] %v7552
  %7617 = vst [vmem:[%s5 + $0x148] sm:$0xff] %v7553
  %7618 = vst [vmem:[%s5 + $0x150] sm:$0xff] %v7554
  %7619 = vst [vmem:[%s5 + $0x158] sm:$0xff] %v7555
  %7620 = vst [vmem:[%s5 + $0x160] sm:$0xff] %v7556
  %7621 = vst [vmem:[%s5 + $0x168] sm:$0xff] %v7557
  %7622 = vst [vmem:[%s5 + $0x170] sm:$0xff] %v7558
  %7623 = vst [vmem:[%s5 + $0x178] sm:$0xff] %v7559
  %7624 = vst [vmem:[%s5 + $0x180] sm:$0xff] %v7560
  %7625 = vst [vmem:[%s5 + $0x188] sm:$0xff] %v7561
  %7626 = vst [vmem:[%s5 + $0x190] sm:$0xff] %v7562
  %7627 = vst [vmem:[%s5 + $0x198] sm:$0xff] %v7563
  %7628 = vst [vmem:[%s5 + $0x1a0] sm:$0xff] %v7564
  %7629 = vst [vmem:[%s5 + $0x1a8] sm:$0xff] %v7565
  %7630 = vst [vmem:[%s5 + $0x1b0] sm:$0xff] %v7566
  %7631 = vst [vmem:[%s5 + $0x1b8] sm:$0xff] %v7567
  %7632 = vst [vmem:[%s5 + $0x1c0] sm:$0xff] %v7568
  %7633 = vst [vmem:[%s5 + $0x1c8] sm:$0xff] %v7569
  %7634 = vst [vmem:[%s5 + $0x1d0] sm:$0xff] %v7570
  %7635 = vst [vmem:[%s5 + $0x1d8] sm:$0xff] %v7571
  %7636 = vst [vmem:[%s5 + $0x1e0] sm:$0xff] %v7572
  %7637 = vst [vmem:[%s5 + $0x1e8] sm:$0xff] %v7573
  %7638 = vst [vmem:[%s5 + $0x1f0] sm:$0xff] %v7574
  %7639 = vst [vmem:[%s5 + $0x1f8] sm:$0xff] %v7575
  // Predicated region
  $region22: #{middleflow_pallas.1} parent=0 // pred_check
    _
  $region23: #{middleflow_pallas.1} parent=0 // pred_check_branch
    %7641 = sbr.rel (0) target = $region25
  $region24: #{middleflow_pallas.1} parent=0 // pred_region
    _
  $region25: #{middleflow_pallas.1} parent=0 // pred_fallthru
    _
  // Predicated region
  $region26: #{middleflow_pallas.1} parent=0 // pred_check
    _
  $region27: #{middleflow_pallas.1} parent=0 // pred_check_branch
    %7643 = sbr.rel (0) target = $region29
  $region28: #{middleflow_pallas.1} parent=0 // pred_region
    _
  $region29: #{middleflow_pallas.1} parent=0 // pred_fallthru
    _

</llo_original>
